<compile_context>
chip_gen: v7x
topology: tpu7x:2x2x1
jax: 0.10.0
libtpu: 0.0.40
codegen_flags: <defaults>
</compile_context>

<pallas_src>
import functools

import jax
import jax.numpy as jnp
from jax.experimental import pallas as pl
from jax.experimental.pallas import tpu as pltpu


# --------------------------- torch-equivalent config ---------------------------

def get_cfgs(feature_channels):
    return {
        'vgg11': [feature_channels[0], 'M', feature_channels[1], 'M',
                  feature_channels[2], feature_channels[2], 'M',
                  feature_channels[3], feature_channels[3], 'M',
                  feature_channels[3], feature_channels[3], 'M'],
        'vgg13': [feature_channels[0], feature_channels[0], 'M',
                  feature_channels[1], feature_channels[1], 'M',
                  feature_channels[2], feature_channels[2], 'M',
                  feature_channels[3], feature_channels[3], 'M',
                  feature_channels[3], feature_channels[3], 'M'],
    }


def _round_up(x, m):
    return (x + m - 1) // m * m


# ------------------------------- Pallas kernel -------------------------------
#
# Conv3d(kernel_size=3, padding=1) + bias + ReLU, internal layout:
#   input   (N, D+2, Cin,  LP)      lanes = flattened padded (h, w) plane
#   output  (N, D,   Cout, L_PAD)   valid results at lanes h*(W+2)+w (w < W);
#                                   junk lanes sliced off by the wrapper.

def _conv3d_k3p1_kernel(x_ref, w_ref, b_ref, o_ref, acc_ref, *,
                        wp, l_pad, cin, relu):
    kd = pl.program_id(2)

    @pl.when(kd == 0)
    def _init():
        acc_ref[...] = jnp.zeros_like(acc_ref)

    acc = acc_ref[...]
    for kh in range(3):
        for kw in range(3):
            off = kh * wp + kw                              # static lane shift
            xs = x_ref[0, 0, :, off:off + l_pad]            # (Cin, L_PAD) bf16
            wt = w_ref[0, kh, kw]                           # (Cout, Cin) bf16
            if cin == 1:
                # Degenerate K=1 contraction -> broadcast multiply (VPU, fp32).
                acc = acc + wt.astype(jnp.float32) * xs.astype(jnp.float32)
            else:
                acc = acc + jnp.dot(wt, xs, preferred_element_type=jnp.float32)
    acc_ref[...] = acc

    @pl.when(kd == pl.num_programs(2) - 1)
    def _finalize():
        r = acc_ref[...] + b_ref[...]                       # fp32 bias
        if relu:
            r = jnp.maximum(r, 0.0)
        o_ref[0, 0, :, :] = r.astype(o_ref.dtype)


def conv3d_k3p1_relu(x, w, b, relu=True):
    """x: (N, D, Cin, H, W) fp32 internal layout.
       w: (3, 3, 3, Cout, Cin) bf16;  b: (Cout, 1) fp32.
       Returns (N, D, Cout, H, W) fp32."""
    N, D, Cin, H, W = x.shape
    Cout = w.shape[3]
    Dp, Hp, Wp = D + 2, H + 2, W + 2
    l_out = H * Wp                                 # valid lanes per depth slice
    l_pad = _round_up(l_out, 128)                  # lane-dense (unmasked) stores
    lp = _round_up(2 * Wp + 2 + l_pad, 128)        # input row covers max tap read

    xb = x.astype(jnp.bfloat16)
    xp = jnp.pad(xb, ((0, 0), (1, 1), (0, 0), (1, 1), (1, 1)))  # (N, Dp, Cin, Hp, Wp)
    xf = xp.reshape(N, Dp, Cin, Hp * Wp)                         # free regroup
    xf = jnp.pad(xf, ((0, 0), (0, 0), (0, 0), (0, lp - Hp * Wp)))

    kernel = functools.partial(_conv3d_k3p1_kernel,
                               wp=Wp, l_pad=l_pad, cin=Cin, relu=relu)
    out = pl.pallas_call(
        kernel,
        out_shape=jax.ShapeDtypeStruct((N, D, Cout, l_pad), jnp.float32),
        grid_spec=pltpu.PrefetchScalarGridSpec(
            num_scalar_prefetch=0,
            grid=(N, D, 3),
            in_specs=[
                pl.BlockSpec((1, 1, Cin, lp),
                             lambda n, d, kd: (n, d + kd, 0, 0)),
                pl.BlockSpec((1, 3, 3, Cout, Cin),
                             lambda n, d, kd: (kd, 0, 0, 0, 0)),
                pl.BlockSpec((Cout, 1), lambda n, d, kd: (0, 0)),
            ],
            out_specs=pl.BlockSpec((1, 1, Cout, l_pad),
                                   lambda n, d, kd: (n, d, 0, 0)),
            scratch_shapes=[pltpu.VMEM((Cout, l_pad), jnp.float32)],
        ),
        compiler_params=pltpu.CompilerParams(
            dimension_semantics=("parallel", "parallel", "arbitrary"),
            vmem_limit_bytes=48 * 1024 * 1024),
    )(xf, w, b)

    # (N, D, Cout, l_pad) -> keep valid lanes -> (N, D, Cout, H, Wp) -> drop 2
    # junk columns coming from width padding.
    return out[..., :l_out].reshape(N, D, Cout, H, Wp)[..., :W]


# ------------------------------ non-Pallas pieces ------------------------------

def maxpool3d_k2s2(x):
    """PyTorch MaxPool3d(kernel_size=2, stride=2) in (N, D, C, H, W) layout."""
    # TODO(synk): done as a free reshape + single fused XLA max-reduce (no HBM
    # transpose); fusing the 2x2x2 max into the conv kernel epilogue is future work.
    N, D, C, H, W = x.shape
    xr = x.reshape(N, D // 2, 2, C, H // 2, 2, W // 2, 2)
    return jnp.max(xr, axis=(2, 5, 7))


def _conv3d_k3p1_relu_ref(x, w, b, relu=True):
    """Pure-JAX reference of the same math (bf16 inputs, fp32 accumulate)."""
    N, D, Cin, H, W = x.shape
    Cout = w.shape[3]
    xp = jnp.pad(x.astype(jnp.bfloat16),
                 ((0, 0), (1, 1), (0, 0), (1, 1), (1, 1))).astype(jnp.float32)
    wf = w.astype(jnp.float32)
    acc = jnp.zeros((N, D, Cout, H, W), jnp.float32)
    for kd in range(3):
        for kh in range(3):
            for kw in range(3):
                xs = xp[:, kd:kd + D, :, kh:kh + H, kw:kw + W]
                acc = acc + jnp.einsum('oi,ndihw->ndohw', wf[kd, kh, kw], xs)
    acc = acc + b.reshape(1, 1, Cout, 1, 1)
    return jnp.maximum(acc, 0.0) if relu else acc


# ------------------------ parameters (deterministic init) ------------------------

def _init_conv(key, cin, cout, k=3):
    """Mirrors nn.Conv3d default init; stores weight as (k,k,k,Cout,Cin) bf16."""
    k1, k2 = jax.random.split(key)
    bound = 1.0 / float(cin * k ** 3) ** 0.5
    w = jax.random.uniform(k1, (cout, cin, k, k, k), jnp.float32, -bound, bound)
    b = jax.random.uniform(k2, (cout,), jnp.float32, -bound, bound)
    w_t = jnp.transpose(w, (2, 3, 4, 0, 1)).astype(jnp.bfloat16)
    return w_t, b.reshape(cout, 1)


def build_vgg_encoder3d_params(key, feature_channels, in_channels=1, cfg='vgg11'):
    """Mirrors make_vgg_encoder_3d(get_cfgs(fc)[cfg], batch_norm=False, in_channels)."""
    cfg_list = get_cfgs(feature_channels)[cfg]
    layers = []
    c = in_channels
    for v in cfg_list:
        if v == 'M':
            layers.append(('pool', None))
        else:
            v = int(v)
            key, kc = jax.random.split(key)
            layers.append(('conv', _init_conv(kc, c, v)))
            c = v
    return layers


def vgg_encoder3d_forward(layers, x_ncdhw, use_pallas=True):
    # NCDHW -> internal (N, D, C, H, W) layout (single cheap transpose, Cin=1).
    x = jnp.transpose(x_ncdhw, (0, 2, 1, 3, 4))
    for kind, p in layers:
        if kind == 'pool':
            x = maxpool3d_k2s2(x)
        else:
            w, b = p
            if use_pallas:
                x = conv3d_k3p1_relu(x, w, b, relu=True)
            else:
                x = _conv3d_k3p1_relu_ref(x, w, b, relu=True)
    return jnp.transpose(x, (0, 2, 1, 3, 4))     # back to NCDHW


# ----------------------------------- demo -----------------------------------

if __name__ == "__main__":
    # Small synthetic config (same structure as VGGEncoder3d, smaller channels).
    feature_channels = [4, 8, 8, 16]
    in_channels = 1

    key = jax.random.PRNGKey(0)
    key, pkey, xkey = jax.random.split(key, 3)
    layers = build_vgg_encoder3d_params(pkey, feature_channels,
                                        in_channels=in_channels, cfg='vgg11')

    # Input (N, C, D, H, W) = (2, 1, 32, 32, 32); 5 maxpools -> (2, 16, 1, 1, 1).
    x = jax.random.normal(xkey, (2, in_channels, 32, 32, 32), dtype=jnp.float32)

    run = jax.jit(lambda xin: vgg_encoder3d_forward(layers, xin, use_pallas=True))
    out = jax.block_until_ready(run(x))
    assert out.shape == (2, feature_channels[3], 1, 1, 1), out.shape

    # Cross-check the Pallas path against a pure-JAX reference of the same math.
    ref_fn = jax.jit(lambda xin: vgg_encoder3d_forward(layers, xin, use_pallas=False))
    ref = jax.block_until_ready(ref_fn(x))
    if not jnp.allclose(out, ref, atol=2e-3, rtol=2e-3):
        err = float(jnp.max(jnp.abs(out - ref)))
        raise AssertionError(f"Pallas output mismatch vs JAX reference (max abs err={err})")

    print("KERNEL_OK")
</pallas_src>

<mosaic_0001>
module attributes {stable_mosaic.version = 11 : i64} {
  func.func @_conv3d_k3p1_kernel(%arg0: i32, %arg1: i32, %arg2: i32, %arg3: memref<1x1x1x1280xbf16, #tpu.memory_space<vmem>>, %arg4: memref<1x3x3x4x1xbf16, #tpu.memory_space<vmem>>, %arg5: memref<4x1xf32, #tpu.memory_space<vmem>>, %arg6: memref<1x1x4x1152xf32, #tpu.memory_space<vmem>>, %arg7: memref<4x1152xf32, #tpu.memory_space<vmem>>) attributes {dimension_semantics = [#tpu.dimension_semantics<parallel>, #tpu.dimension_semantics<parallel>, #tpu.dimension_semantics<arbitrary>], iteration_bounds = array<i64: 2, 32, 3>, scalar_prefetch = 0 : i64, scratch_operands = 1 : i64, tpu.core_type = #tpu.core_type<tc>, window_params = [{transform_indices = @transform_0, window_bounds = array<i64: 1, 1, 1, 1280>}, {transform_indices = @transform_1, window_bounds = array<i64: 1, 3, 3, 4, 1>}, {pipeline_mode = #tpu.pipeline_mode<synchronous>, transform_indices = @transform_2, window_bounds = array<i64: 4, 1>}, {transform_indices = @transform_3, window_bounds = array<i64: 1, 1, 4, 1152>}]} {
    %c0_i32 = arith.constant 0 : i32
    %0 = arith.cmpi eq, %arg2, %c0_i32 : i32
    %1 = arith.extui %0 : i1 to i32
    %c0_i32_0 = arith.constant 0 : i32
    %2 = arith.cmpi ne, %1, %c0_i32_0 : i32
    scf.if %2 {
      %cst = arith.constant 0.000000e+00 : f32
      %98 = vector.broadcast %cst : f32 to vector<4x1152xf32>
      %c0_78 = arith.constant 0 : index
      %c0_79 = arith.constant 0 : index
      %99 = vector.load %arg7[%c0_78, %c0_79] : memref<4x1152xf32, #tpu.memory_space<vmem>>, vector<4x1152xf32>
      tpu.vector_store %arg7[%c0_78, %c0_79], %98 {strides = array<i32>} : memref<4x1152xf32, #tpu.memory_space<vmem>>, vector<4x1152xf32>,
    } else {
    }
    %c0 = arith.constant 0 : index
    %c0_1 = arith.constant 0 : index
    %3 = vector.load %arg7[%c0, %c0_1] : memref<4x1152xf32, #tpu.memory_space<vmem>>, vector<4x1152xf32>
    %c0_2 = arith.constant 0 : index
    %c0_3 = arith.constant 0 : index
    %c0_4 = arith.constant 0 : index
    %c0_5 = arith.constant 0 : index
    %4 = vector.load %arg3[%c0_2, %c0_3, %c0_4, %c0_5] : memref<1x1x1x1280xbf16, #tpu.memory_space<vmem>>, vector<1x1x1x1152xbf16>
    %5 = vector.shape_cast %4 : vector<1x1x1x1152xbf16> to vector<1x1152xbf16>
    %c0_6 = arith.constant 0 : index
    %c0_7 = arith.constant 0 : index
    %c0_8 = arith.constant 0 : index
    %c0_9 = arith.constant 0 : index
    %c0_10 = arith.constant 0 : index
    %6 = vector.load %arg4[%c0_6, %c0_7, %c0_8, %c0_9, %c0_10] : memref<1x3x3x4x1xbf16, #tpu.memory_space<vmem>>, vector<1x1x1x4x1xbf16>
    %7 = vector.shape_cast %6 : vector<1x1x1x4x1xbf16> to vector<4x1xbf16>
    %8 = arith.extf %7 : vector<4x1xbf16> to vector<4x1xf32>
    %9 = arith.extf %5 : vector<1x1152xbf16> to vector<1x1152xf32>
    %10 = vector.broadcast %8 : vector<4x1xf32> to vector<4x1152xf32>
    %11 = vector.broadcast %9 : vector<1x1152xf32> to vector<4x1152xf32>
    %12 = arith.mulf %10, %11 : vector<4x1152xf32>
    %13 = arith.addf %3, %12 : vector<4x1152xf32>
    %c0_11 = arith.constant 0 : index
    %c0_12 = arith.constant 0 : index
    %c0_13 = arith.constant 0 : index
    %c1 = arith.constant 1 : index
    %14 = vector.load %arg3[%c0_11, %c0_12, %c0_13, %c1] : memref<1x1x1x1280xbf16, #tpu.memory_space<vmem>>, vector<1x1x1x1152xbf16>
    %15 = vector.shape_cast %14 : vector<1x1x1x1152xbf16> to vector<1x1152xbf16>
    %c0_14 = arith.constant 0 : index
    %c0_15 = arith.constant 0 : index
    %c1_16 = arith.constant 1 : index
    %c0_17 = arith.constant 0 : index
    %c0_18 = arith.constant 0 : index
    %16 = vector.load %arg4[%c0_14, %c0_15, %c1_16, %c0_17, %c0_18] : memref<1x3x3x4x1xbf16, #tpu.memory_space<vmem>>, vector<1x1x1x4x1xbf16>
    %17 = vector.shape_cast %16 : vector<1x1x1x4x1xbf16> to vector<4x1xbf16>
    %18 = arith.extf %17 : vector<4x1xbf16> to vector<4x1xf32>
    %19 = arith.extf %15 : vector<1x1152xbf16> to vector<1x1152xf32>
    %20 = vector.broadcast %18 : vector<4x1xf32> to vector<4x1152xf32>
    %21 = vector.broadcast %19 : vector<1x1152xf32> to vector<4x1152xf32>
    %22 = arith.mulf %20, %21 : vector<4x1152xf32>
    %23 = arith.addf %13, %22 : vector<4x1152xf32>
    %c0_19 = arith.constant 0 : index
    %c0_20 = arith.constant 0 : index
    %c0_21 = arith.constant 0 : index
    %c2 = arith.constant 2 : index
    %24 = vector.load %arg3[%c0_19, %c0_20, %c0_21, %c2] : memref<1x1x1x1280xbf16, #tpu.memory_space<vmem>>, vector<1x1x1x1152xbf16>
    %25 = vector.shape_cast %24 : vector<1x1x1x1152xbf16> to vector<1x1152xbf16>
    %c0_22 = arith.constant 0 : index
    %c0_23 = arith.constant 0 : index
    %c2_24 = arith.constant 2 : index
    %c0_25 = arith.constant 0 : index
    %c0_26 = arith.constant 0 : index
    %26 = vector.load %arg4[%c0_22, %c0_23, %c2_24, %c0_25, %c0_26] : memref<1x3x3x4x1xbf16, #tpu.memory_space<vmem>>, vector<1x1x1x4x1xbf16>
    %27 = vector.shape_cast %26 : vector<1x1x1x4x1xbf16> to vector<4x1xbf16>
    %28 = arith.extf %27 : vector<4x1xbf16> to vector<4x1xf32>
    %29 = arith.extf %25 : vector<1x1152xbf16> to vector<1x1152xf32>
    %30 = vector.broadcast %28 : vector<4x1xf32> to vector<4x1152xf32>
    %31 = vector.broadcast %29 : vector<1x1152xf32> to vector<4x1152xf32>
    %32 = arith.mulf %30, %31 : vector<4x1152xf32>
    %33 = arith.addf %23, %32 : vector<4x1152xf32>
    %c0_27 = arith.constant 0 : index
    %c0_28 = arith.constant 0 : index
    %c0_29 = arith.constant 0 : index
    %c34 = arith.constant 34 : index
    %34 = vector.load %arg3[%c0_27, %c0_28, %c0_29, %c34] : memref<1x1x1x1280xbf16, #tpu.memory_space<vmem>>, vector<1x1x1x1152xbf16>
    %35 = vector.shape_cast %34 : vector<1x1x1x1152xbf16> to vector<1x1152xbf16>
    %c0_30 = arith.constant 0 : index
    %c1_31 = arith.constant 1 : index
    %c0_32 = arith.constant 0 : index
    %c0_33 = arith.constant 0 : index
    %c0_34 = arith.constant 0 : index
    %36 = vector.load %arg4[%c0_30, %c1_31, %c0_32, %c0_33, %c0_34] : memref<1x3x3x4x1xbf16, #tpu.memory_space<vmem>>, vector<1x1x1x4x1xbf16>
    %37 = vector.shape_cast %36 : vector<1x1x1x4x1xbf16> to vector<4x1xbf16>
    %38 = arith.extf %37 : vector<4x1xbf16> to vector<4x1xf32>
    %39 = arith.extf %35 : vector<1x1152xbf16> to vector<1x1152xf32>
    %40 = vector.broadcast %38 : vector<4x1xf32> to vector<4x1152xf32>
    %41 = vector.broadcast %39 : vector<1x1152xf32> to vector<4x1152xf32>
    %42 = arith.mulf %40, %41 : vector<4x1152xf32>
    %43 = arith.addf %33, %42 : vector<4x1152xf32>
    %c0_35 = arith.constant 0 : index
    %c0_36 = arith.constant 0 : index
    %c0_37 = arith.constant 0 : index
    %c35 = arith.constant 35 : index
    %44 = vector.load %arg3[%c0_35, %c0_36, %c0_37, %c35] : memref<1x1x1x1280xbf16, #tpu.memory_space<vmem>>, vector<1x1x1x1152xbf16>
    %45 = vector.shape_cast %44 : vector<1x1x1x1152xbf16> to vector<1x1152xbf16>
    %c0_38 = arith.constant 0 : index
    %c1_39 = arith.constant 1 : index
    %c1_40 = arith.constant 1 : index
    %c0_41 = arith.constant 0 : index
    %c0_42 = arith.constant 0 : index
    %46 = vector.load %arg4[%c0_38, %c1_39, %c1_40, %c0_41, %c0_42] : memref<1x3x3x4x1xbf16, #tpu.memory_space<vmem>>, vector<1x1x1x4x1xbf16>
    %47 = vector.shape_cast %46 : vector<1x1x1x4x1xbf16> to vector<4x1xbf16>
    %48 = arith.extf %47 : vector<4x1xbf16> to vector<4x1xf32>
    %49 = arith.extf %45 : vector<1x1152xbf16> to vector<1x1152xf32>
    %50 = vector.broadcast %48 : vector<4x1xf32> to vector<4x1152xf32>
    %51 = vector.broadcast %49 : vector<1x1152xf32> to vector<4x1152xf32>
    %52 = arith.mulf %50, %51 : vector<4x1152xf32>
    %53 = arith.addf %43, %52 : vector<4x1152xf32>
    %c0_43 = arith.constant 0 : index
    %c0_44 = arith.constant 0 : index
    %c0_45 = arith.constant 0 : index
    %c36 = arith.constant 36 : index
    %54 = vector.load %arg3[%c0_43, %c0_44, %c0_45, %c36] : memref<1x1x1x1280xbf16, #tpu.memory_space<vmem>>, vector<1x1x1x1152xbf16>
    %55 = vector.shape_cast %54 : vector<1x1x1x1152xbf16> to vector<1x1152xbf16>
    %c0_46 = arith.constant 0 : index
    %c1_47 = arith.constant 1 : index
    %c2_48 = arith.constant 2 : index
    %c0_49 = arith.constant 0 : index
    %c0_50 = arith.constant 0 : index
    %56 = vector.load %arg4[%c0_46, %c1_47, %c2_48, %c0_49, %c0_50] : memref<1x3x3x4x1xbf16, #tpu.memory_space<vmem>>, vector<1x1x1x4x1xbf16>
    %57 = vector.shape_cast %56 : vector<1x1x1x4x1xbf16> to vector<4x1xbf16>
    %58 = arith.extf %57 : vector<4x1xbf16> to vector<4x1xf32>
    %59 = arith.extf %55 : vector<1x1152xbf16> to vector<1x1152xf32>
    %60 = vector.broadcast %58 : vector<4x1xf32> to vector<4x1152xf32>
    %61 = vector.broadcast %59 : vector<1x1152xf32> to vector<4x1152xf32>
    %62 = arith.mulf %60, %61 : vector<4x1152xf32>
    %63 = arith.addf %53, %62 : vector<4x1152xf32>
    %c0_51 = arith.constant 0 : index
    %c0_52 = arith.constant 0 : index
    %c0_53 = arith.constant 0 : index
    %c68 = arith.constant 68 : index
    %64 = vector.load %arg3[%c0_51, %c0_52, %c0_53, %c68] : memref<1x1x1x1280xbf16, #tpu.memory_space<vmem>>, vector<1x1x1x1152xbf16>
    %65 = vector.shape_cast %64 : vector<1x1x1x1152xbf16> to vector<1x1152xbf16>
    %c0_54 = arith.constant 0 : index
    %c2_55 = arith.constant 2 : index
    %c0_56 = arith.constant 0 : index
    %c0_57 = arith.constant 0 : index
    %c0_58 = arith.constant 0 : index
    %66 = vector.load %arg4[%c0_54, %c2_55, %c0_56, %c0_57, %c0_58] : memref<1x3x3x4x1xbf16, #tpu.memory_space<vmem>>, vector<1x1x1x4x1xbf16>
    %67 = vector.shape_cast %66 : vector<1x1x1x4x1xbf16> to vector<4x1xbf16>
    %68 = arith.extf %67 : vector<4x1xbf16> to vector<4x1xf32>
    %69 = arith.extf %65 : vector<1x1152xbf16> to vector<1x1152xf32>
    %70 = vector.broadcast %68 : vector<4x1xf32> to vector<4x1152xf32>
    %71 = vector.broadcast %69 : vector<1x1152xf32> to vector<4x1152xf32>
    %72 = arith.mulf %70, %71 : vector<4x1152xf32>
    %73 = arith.addf %63, %72 : vector<4x1152xf32>
    %c0_59 = arith.constant 0 : index
    %c0_60 = arith.constant 0 : index
    %c0_61 = arith.constant 0 : index
    %c69 = arith.constant 69 : index
    %74 = vector.load %arg3[%c0_59, %c0_60, %c0_61, %c69] : memref<1x1x1x1280xbf16, #tpu.memory_space<vmem>>, vector<1x1x1x1152xbf16>
    %75 = vector.shape_cast %74 : vector<1x1x1x1152xbf16> to vector<1x1152xbf16>
    %c0_62 = arith.constant 0 : index
    %c2_63 = arith.constant 2 : index
    %c1_64 = arith.constant 1 : index
    %c0_65 = arith.constant 0 : index
    %c0_66 = arith.constant 0 : index
    %76 = vector.load %arg4[%c0_62, %c2_63, %c1_64, %c0_65, %c0_66] : memref<1x3x3x4x1xbf16, #tpu.memory_space<vmem>>, vector<1x1x1x4x1xbf16>
    %77 = vector.shape_cast %76 : vector<1x1x1x4x1xbf16> to vector<4x1xbf16>
    %78 = arith.extf %77 : vector<4x1xbf16> to vector<4x1xf32>
    %79 = arith.extf %75 : vector<1x1152xbf16> to vector<1x1152xf32>
    %80 = vector.broadcast %78 : vector<4x1xf32> to vector<4x1152xf32>
    %81 = vector.broadcast %79 : vector<1x1152xf32> to vector<4x1152xf32>
    %82 = arith.mulf %80, %81 : vector<4x1152xf32>
    %83 = arith.addf %73, %82 : vector<4x1152xf32>
    %c0_67 = arith.constant 0 : index
    %c0_68 = arith.constant 0 : index
    %c0_69 = arith.constant 0 : index
    %c70 = arith.constant 70 : index
    %84 = vector.load %arg3[%c0_67, %c0_68, %c0_69, %c70] : memref<1x1x1x1280xbf16, #tpu.memory_space<vmem>>, vector<1x1x1x1152xbf16>
    %85 = vector.shape_cast %84 : vector<1x1x1x1152xbf16> to vector<1x1152xbf16>
    %c0_70 = arith.constant 0 : index
    %c2_71 = arith.constant 2 : index
    %c2_72 = arith.constant 2 : index
    %c0_73 = arith.constant 0 : index
    %c0_74 = arith.constant 0 : index
    %86 = vector.load %arg4[%c0_70, %c2_71, %c2_72, %c0_73, %c0_74] : memref<1x3x3x4x1xbf16, #tpu.memory_space<vmem>>, vector<1x1x1x4x1xbf16>
    %87 = vector.shape_cast %86 : vector<1x1x1x4x1xbf16> to vector<4x1xbf16>
    %88 = arith.extf %87 : vector<4x1xbf16> to vector<4x1xf32>
    %89 = arith.extf %85 : vector<1x1152xbf16> to vector<1x1152xf32>
    %90 = vector.broadcast %88 : vector<4x1xf32> to vector<4x1152xf32>
    %91 = vector.broadcast %89 : vector<1x1152xf32> to vector<4x1152xf32>
    %92 = arith.mulf %90, %91 : vector<4x1152xf32>
    %93 = arith.addf %83, %92 : vector<4x1152xf32>
    %c0_75 = arith.constant 0 : index
    %c0_76 = arith.constant 0 : index
    %94 = vector.load %arg7[%c0_75, %c0_76] : memref<4x1152xf32, #tpu.memory_space<vmem>>, vector<4x1152xf32>
    tpu.vector_store %arg7[%c0_75, %c0_76], %93 {strides = array<i32>} : memref<4x1152xf32, #tpu.memory_space<vmem>>, vector<4x1152xf32>,
    %c2_i32 = arith.constant 2 : i32
    %95 = arith.cmpi eq, %arg2, %c2_i32 : i32
    %96 = arith.extui %95 : i1 to i32
    %c0_i32_77 = arith.constant 0 : i32
    %97 = arith.cmpi ne, %96, %c0_i32_77 : i32
    scf.if %97 {
      %c0_78 = arith.constant 0 : index
      %c0_79 = arith.constant 0 : index
      %98 = vector.load %arg7[%c0_78, %c0_79] : memref<4x1152xf32, #tpu.memory_space<vmem>>, vector<4x1152xf32>
      %c0_80 = arith.constant 0 : index
      %c0_81 = arith.constant 0 : index
      %99 = vector.load %arg5[%c0_80, %c0_81] : memref<4x1xf32, #tpu.memory_space<vmem>>, vector<4x1xf32>
      %100 = vector.broadcast %99 : vector<4x1xf32> to vector<4x1152xf32>
      %101 = arith.addf %98, %100 : vector<4x1152xf32>
      %cst = arith.constant 0.000000e+00 : f32
      %102 = vector.broadcast %cst : f32 to vector<4x1152xf32>
      %103 = arith.maximumf %101, %102 : vector<4x1152xf32>
      %c0_82 = arith.constant 0 : index
      %c0_83 = arith.constant 0 : index
      %c0_84 = arith.constant 0 : index
      %c0_85 = arith.constant 0 : index
      %104 = vector.load %arg6[%c0_82, %c0_83, %c0_84, %c0_85] : memref<1x1x4x1152xf32, #tpu.memory_space<vmem>>, vector<1x1x4x1152xf32>
      %105 = vector.shape_cast %104 : vector<1x1x4x1152xf32> to vector<4x1152xf32>
      %106 = vector.shape_cast %103 : vector<4x1152xf32> to vector<1x1x4x1152xf32>
      tpu.vector_store %arg6[%c0_82, %c0_83, %c0_84, %c0_85], %106 {strides = array<i32>} : memref<1x1x4x1152xf32, #tpu.memory_space<vmem>>, vector<1x1x4x1152xf32>,
    } else {
    }
    return
  }
  func.func @transform_0(%arg0: i32, %arg1: i32, %arg2: i32) -> (i32, i32, i32, i32) {
    %0 = arith.addi %arg1, %arg2 : i32
    %c0_i32 = arith.constant 0 : i32
    %c0_i32_0 = arith.constant 0 : i32
    %c0_i32_1 = arith.constant 0 : i32
    return %arg0, %0, %c0_i32, %c0_i32_0 : i32, i32, i32, i32
  }
  func.func @transform_1(%arg0: i32, %arg1: i32, %arg2: i32) -> (i32, i32, i32, i32, i32) {
    %c0_i32 = arith.constant 0 : i32
    %c0_i32_0 = arith.constant 0 : i32
    %c0_i32_1 = arith.constant 0 : i32
    %c0_i32_2 = arith.constant 0 : i32
    %c0_i32_3 = arith.constant 0 : i32
    return %arg2, %c0_i32, %c0_i32_0, %c0_i32_1, %c0_i32_2 : i32, i32, i32, i32, i32
  }
  func.func @transform_2(%arg0: i32, %arg1: i32, %arg2: i32) -> (i32, i32) {
    %c0_i32 = arith.constant 0 : i32
    %c0_i32_0 = arith.constant 0 : i32
    %c0_i32_1 = arith.constant 0 : i32
    return %c0_i32, %c0_i32_0 : i32, i32
  }
  func.func @transform_3(%arg0: i32, %arg1: i32, %arg2: i32) -> (i32, i32, i32, i32) {
    %c0_i32 = arith.constant 0 : i32
    %c0_i32_0 = arith.constant 0 : i32
    %c0_i32_1 = arith.constant 0 : i32
    return %arg0, %arg1, %c0_i32, %c0_i32_0 : i32, i32, i32, i32
  }
}

module attributes {stable_mosaic.version = 11 : i64} {
  func.func @_conv3d_k3p1_kernel(%arg0: i32, %arg1: i32, %arg2: i32, %arg3: memref<1x1x4x512xbf16, #tpu.memory_space<vmem>>, %arg4: memref<1x3x3x8x4xbf16, #tpu.memory_space<vmem>>, %arg5: memref<8x1xf32, #tpu.memory_space<vmem>>, %arg6: memref<1x1x8x384xf32, #tpu.memory_space<vmem>>, %arg7: memref<8x384xf32, #tpu.memory_space<vmem>>) attributes {dimension_semantics = [#tpu.dimension_semantics<parallel>, #tpu.dimension_semantics<parallel>, #tpu.dimension_semantics<arbitrary>], iteration_bounds = array<i64: 2, 16, 3>, scalar_prefetch = 0 : i64, scratch_operands = 1 : i64, tpu.core_type = #tpu.core_type<tc>, window_params = [{transform_indices = @transform_0, window_bounds = array<i64: 1, 1, 4, 512>}, {transform_indices = @transform_1, window_bounds = array<i64: 1, 3, 3, 8, 4>}, {pipeline_mode = #tpu.pipeline_mode<synchronous>, transform_indices = @transform_2, window_bounds = array<i64: 8, 1>}, {transform_indices = @transform_3, window_bounds = array<i64: 1, 1, 8, 384>}]} {
    %c0_i32 = arith.constant 0 : i32
    %0 = arith.cmpi eq, %arg2, %c0_i32 : i32
    %1 = arith.extui %0 : i1 to i32
    %c0_i32_0 = arith.constant 0 : i32
    %2 = arith.cmpi ne, %1, %c0_i32_0 : i32
    scf.if %2 {
      %cst_86 = arith.constant 0.000000e+00 : f32
      %62 = vector.broadcast %cst_86 : f32 to vector<8x384xf32>
      %c0_87 = arith.constant 0 : index
      %c0_88 = arith.constant 0 : index
      %63 = vector.load %arg7[%c0_87, %c0_88] : memref<8x384xf32, #tpu.memory_space<vmem>>, vector<8x384xf32>
      tpu.vector_store %arg7[%c0_87, %c0_88], %62 {strides = array<i32>} : memref<8x384xf32, #tpu.memory_space<vmem>>, vector<8x384xf32>,
    } else {
    }
    %c0 = arith.constant 0 : index
    %c0_1 = arith.constant 0 : index
    %3 = vector.load %arg7[%c0, %c0_1] : memref<8x384xf32, #tpu.memory_space<vmem>>, vector<8x384xf32>
    %c0_2 = arith.constant 0 : index
    %c0_3 = arith.constant 0 : index
    %c0_4 = arith.constant 0 : index
    %c0_5 = arith.constant 0 : index
    %4 = vector.load %arg3[%c0_2, %c0_3, %c0_4, %c0_5] : memref<1x1x4x512xbf16, #tpu.memory_space<vmem>>, vector<1x1x4x384xbf16>
    %5 = vector.shape_cast %4 : vector<1x1x4x384xbf16> to vector<4x384xbf16>
    %c0_6 = arith.constant 0 : index
    %c0_7 = arith.constant 0 : index
    %c0_8 = arith.constant 0 : index
    %c0_9 = arith.constant 0 : index
    %c0_10 = arith.constant 0 : index
    %6 = vector.load %arg4[%c0_6, %c0_7, %c0_8, %c0_9, %c0_10] : memref<1x3x3x8x4xbf16, #tpu.memory_space<vmem>>, vector<1x1x1x8x4xbf16>
    %7 = vector.shape_cast %6 : vector<1x1x1x8x4xbf16> to vector<8x4xbf16>
    %cst = arith.constant dense<0.000000e+00> : vector<8x384xf32>
    %8 = tpu.matmul %7, %5, %cst {dimension_numbers = #tpu.dot_dimension_numbers<[1], [0], [0], [1], [0, 0, 1, 1], [], []>} : vector<8x4xbf16>, vector<4x384xbf16>, vector<8x384xf32> -> vector<8x384xf32>
    %9 = arith.addf %3, %8 : vector<8x384xf32>
    %c0_11 = arith.constant 0 : index
    %c0_12 = arith.constant 0 : index
    %c0_13 = arith.constant 0 : index
    %c1 = arith.constant 1 : index
    %10 = vector.load %arg3[%c0_11, %c0_12, %c0_13, %c1] : memref<1x1x4x512xbf16, #tpu.memory_space<vmem>>, vector<1x1x4x384xbf16>
    %11 = vector.shape_cast %10 : vector<1x1x4x384xbf16> to vector<4x384xbf16>
    %c0_14 = arith.constant 0 : index
    %c0_15 = arith.constant 0 : index
    %c1_16 = arith.constant 1 : index
    %c0_17 = arith.constant 0 : index
    %c0_18 = arith.constant 0 : index
    %12 = vector.load %arg4[%c0_14, %c0_15, %c1_16, %c0_17, %c0_18] : memref<1x3x3x8x4xbf16, #tpu.memory_space<vmem>>, vector<1x1x1x8x4xbf16>
    %13 = vector.shape_cast %12 : vector<1x1x1x8x4xbf16> to vector<8x4xbf16>
    %cst_19 = arith.constant dense<0.000000e+00> : vector<8x384xf32>
    %14 = tpu.matmul %13, %11, %cst_19 {dimension_numbers = #tpu.dot_dimension_numbers<[1], [0], [0], [1], [0, 0, 1, 1], [], []>} : vector<8x4xbf16>, vector<4x384xbf16>, vector<8x384xf32> -> vector<8x384xf32>
    %15 = arith.addf %9, %14 : vector<8x384xf32>
    %c0_20 = arith.constant 0 : index
    %c0_21 = arith.constant 0 : index
    %c0_22 = arith.constant 0 : index
    %c2 = arith.constant 2 : index
    %16 = vector.load %arg3[%c0_20, %c0_21, %c0_22, %c2] : memref<1x1x4x512xbf16, #tpu.memory_space<vmem>>, vector<1x1x4x384xbf16>
    %17 = vector.shape_cast %16 : vector<1x1x4x384xbf16> to vector<4x384xbf16>
    %c0_23 = arith.constant 0 : index
    %c0_24 = arith.constant 0 : index
    %c2_25 = arith.constant 2 : index
    %c0_26 = arith.constant 0 : index
    %c0_27 = arith.constant 0 : index
    %18 = vector.load %arg4[%c0_23, %c0_24, %c2_25, %c0_26, %c0_27] : memref<1x3x3x8x4xbf16, #tpu.memory_space<vmem>>, vector<1x1x1x8x4xbf16>
    %19 = vector.shape_cast %18 : vector<1x1x1x8x4xbf16> to vector<8x4xbf16>
    %cst_28 = arith.constant dense<0.000000e+00> : vector<8x384xf32>
    %20 = tpu.matmul %19, %17, %cst_28 {dimension_numbers = #tpu.dot_dimension_numbers<[1], [0], [0], [1], [0, 0, 1, 1], [], []>} : vector<8x4xbf16>, vector<4x384xbf16>, vector<8x384xf32> -> vector<8x384xf32>
    %21 = arith.addf %15, %20 : vector<8x384xf32>
    %c0_29 = arith.constant 0 : index
    %c0_30 = arith.constant 0 : index
    %c0_31 = arith.constant 0 : index
    %c18 = arith.constant 18 : index
    %22 = vector.load %arg3[%c0_29, %c0_30, %c0_31, %c18] : memref<1x1x4x512xbf16, #tpu.memory_space<vmem>>, vector<1x1x4x384xbf16>
    %23 = vector.shape_cast %22 : vector<1x1x4x384xbf16> to vector<4x384xbf16>
    %c0_32 = arith.constant 0 : index
    %c1_33 = arith.constant 1 : index
    %c0_34 = arith.constant 0 : index
    %c0_35 = arith.constant 0 : index
    %c0_36 = arith.constant 0 : index
    %24 = vector.load %arg4[%c0_32, %c1_33, %c0_34, %c0_35, %c0_36] : memref<1x3x3x8x4xbf16, #tpu.memory_space<vmem>>, vector<1x1x1x8x4xbf16>
    %25 = vector.shape_cast %24 : vector<1x1x1x8x4xbf16> to vector<8x4xbf16>
    %cst_37 = arith.constant dense<0.000000e+00> : vector<8x384xf32>
    %26 = tpu.matmul %25, %23, %cst_37 {dimension_numbers = #tpu.dot_dimension_numbers<[1], [0], [0], [1], [0, 0, 1, 1], [], []>} : vector<8x4xbf16>, vector<4x384xbf16>, vector<8x384xf32> -> vector<8x384xf32>
    %27 = arith.addf %21, %26 : vector<8x384xf32>
    %c0_38 = arith.constant 0 : index
    %c0_39 = arith.constant 0 : index
    %c0_40 = arith.constant 0 : index
    %c19 = arith.constant 19 : index
    %28 = vector.load %arg3[%c0_38, %c0_39, %c0_40, %c19] : memref<1x1x4x512xbf16, #tpu.memory_space<vmem>>, vector<1x1x4x384xbf16>
    %29 = vector.shape_cast %28 : vector<1x1x4x384xbf16> to vector<4x384xbf16>
    %c0_41 = arith.constant 0 : index
    %c1_42 = arith.constant 1 : index
    %c1_43 = arith.constant 1 : index
    %c0_44 = arith.constant 0 : index
    %c0_45 = arith.constant 0 : index
    %30 = vector.load %arg4[%c0_41, %c1_42, %c1_43, %c0_44, %c0_45] : memref<1x3x3x8x4xbf16, #tpu.memory_space<vmem>>, vector<1x1x1x8x4xbf16>
    %31 = vector.shape_cast %30 : vector<1x1x1x8x4xbf16> to vector<8x4xbf16>
    %cst_46 = arith.constant dense<0.000000e+00> : vector<8x384xf32>
    %32 = tpu.matmul %31, %29, %cst_46 {dimension_numbers = #tpu.dot_dimension_numbers<[1], [0], [0], [1], [0, 0, 1, 1], [], []>} : vector<8x4xbf16>, vector<4x384xbf16>, vector<8x384xf32> -> vector<8x384xf32>
    %33 = arith.addf %27, %32 : vector<8x384xf32>
    %c0_47 = arith.constant 0 : index
    %c0_48 = arith.constant 0 : index
    %c0_49 = arith.constant 0 : index
    %c20 = arith.constant 20 : index
    %34 = vector.load %arg3[%c0_47, %c0_48, %c0_49, %c20] : memref<1x1x4x512xbf16, #tpu.memory_space<vmem>>, vector<1x1x4x384xbf16>
    %35 = vector.shape_cast %34 : vector<1x1x4x384xbf16> to vector<4x384xbf16>
    %c0_50 = arith.constant 0 : index
    %c1_51 = arith.constant 1 : index
    %c2_52 = arith.constant 2 : index
    %c0_53 = arith.constant 0 : index
    %c0_54 = arith.constant 0 : index
    %36 = vector.load %arg4[%c0_50, %c1_51, %c2_52, %c0_53, %c0_54] : memref<1x3x3x8x4xbf16, #tpu.memory_space<vmem>>, vector<1x1x1x8x4xbf16>
    %37 = vector.shape_cast %36 : vector<1x1x1x8x4xbf16> to vector<8x4xbf16>
    %cst_55 = arith.constant dense<0.000000e+00> : vector<8x384xf32>
    %38 = tpu.matmul %37, %35, %cst_55 {dimension_numbers = #tpu.dot_dimension_numbers<[1], [0], [0], [1], [0, 0, 1, 1], [], []>} : vector<8x4xbf16>, vector<4x384xbf16>, vector<8x384xf32> -> vector<8x384xf32>
    %39 = arith.addf %33, %38 : vector<8x384xf32>
    %c0_56 = arith.constant 0 : index
    %c0_57 = arith.constant 0 : index
    %c0_58 = arith.constant 0 : index
    %c36 = arith.constant 36 : index
    %40 = vector.load %arg3[%c0_56, %c0_57, %c0_58, %c36] : memref<1x1x4x512xbf16, #tpu.memory_space<vmem>>, vector<1x1x4x384xbf16>
    %41 = vector.shape_cast %40 : vector<1x1x4x384xbf16> to vector<4x384xbf16>
    %c0_59 = arith.constant 0 : index
    %c2_60 = arith.constant 2 : index
    %c0_61 = arith.constant 0 : index
    %c0_62 = arith.constant 0 : index
    %c0_63 = arith.constant 0 : index
    %42 = vector.load %arg4[%c0_59, %c2_60, %c0_61, %c0_62, %c0_63] : memref<1x3x3x8x4xbf16, #tpu.memory_space<vmem>>, vector<1x1x1x8x4xbf16>
    %43 = vector.shape_cast %42 : vector<1x1x1x8x4xbf16> to vector<8x4xbf16>
    %cst_64 = arith.constant dense<0.000000e+00> : vector<8x384xf32>
    %44 = tpu.matmul %43, %41, %cst_64 {dimension_numbers = #tpu.dot_dimension_numbers<[1], [0], [0], [1], [0, 0, 1, 1], [], []>} : vector<8x4xbf16>, vector<4x384xbf16>, vector<8x384xf32> -> vector<8x384xf32>
    %45 = arith.addf %39, %44 : vector<8x384xf32>
    %c0_65 = arith.constant 0 : index
    %c0_66 = arith.constant 0 : index
    %c0_67 = arith.constant 0 : index
    %c37 = arith.constant 37 : index
    %46 = vector.load %arg3[%c0_65, %c0_66, %c0_67, %c37] : memref<1x1x4x512xbf16, #tpu.memory_space<vmem>>, vector<1x1x4x384xbf16>
    %47 = vector.shape_cast %46 : vector<1x1x4x384xbf16> to vector<4x384xbf16>
    %c0_68 = arith.constant 0 : index
    %c2_69 = arith.constant 2 : index
    %c1_70 = arith.constant 1 : index
    %c0_71 = arith.constant 0 : index
    %c0_72 = arith.constant 0 : index
    %48 = vector.load %arg4[%c0_68, %c2_69, %c1_70, %c0_71, %c0_72] : memref<1x3x3x8x4xbf16, #tpu.memory_space<vmem>>, vector<1x1x1x8x4xbf16>
    %49 = vector.shape_cast %48 : vector<1x1x1x8x4xbf16> to vector<8x4xbf16>
    %cst_73 = arith.constant dense<0.000000e+00> : vector<8x384xf32>
    %50 = tpu.matmul %49, %47, %cst_73 {dimension_numbers = #tpu.dot_dimension_numbers<[1], [0], [0], [1], [0, 0, 1, 1], [], []>} : vector<8x4xbf16>, vector<4x384xbf16>, vector<8x384xf32> -> vector<8x384xf32>
    %51 = arith.addf %45, %50 : vector<8x384xf32>
    %c0_74 = arith.constant 0 : index
    %c0_75 = arith.constant 0 : index
    %c0_76 = arith.constant 0 : index
    %c38 = arith.constant 38 : index
    %52 = vector.load %arg3[%c0_74, %c0_75, %c0_76, %c38] : memref<1x1x4x512xbf16, #tpu.memory_space<vmem>>, vector<1x1x4x384xbf16>
    %53 = vector.shape_cast %52 : vector<1x1x4x384xbf16> to vector<4x384xbf16>
    %c0_77 = arith.constant 0 : index
    %c2_78 = arith.constant 2 : index
    %c2_79 = arith.constant 2 : index
    %c0_80 = arith.constant 0 : index
    %c0_81 = arith.constant 0 : index
    %54 = vector.load %arg4[%c0_77, %c2_78, %c2_79, %c0_80, %c0_81] : memref<1x3x3x8x4xbf16, #tpu.memory_space<vmem>>, vector<1x1x1x8x4xbf16>
    %55 = vector.shape_cast %54 : vector<1x1x1x8x4xbf16> to vector<8x4xbf16>
    %cst_82 = arith.constant dense<0.000000e+00> : vector<8x384xf32>
    %56 = tpu.matmul %55, %53, %cst_82 {dimension_numbers = #tpu.dot_dimension_numbers<[1], [0], [0], [1], [0, 0, 1, 1], [], []>} : vector<8x4xbf16>, vector<4x384xbf16>, vector<8x384xf32> -> vector<8x384xf32>
    %57 = arith.addf %51, %56 : vector<8x384xf32>
    %c0_83 = arith.constant 0 : index
    %c0_84 = arith.constant 0 : index
    %58 = vector.load %arg7[%c0_83, %c0_84] : memref<8x384xf32, #tpu.memory_space<vmem>>, vector<8x384xf32>
    tpu.vector_store %arg7[%c0_83, %c0_84], %57 {strides = array<i32>} : memref<8x384xf32, #tpu.memory_space<vmem>>, vector<8x384xf32>,
    %c2_i32 = arith.constant 2 : i32
    %59 = arith.cmpi eq, %arg2, %c2_i32 : i32
    %60 = arith.extui %59 : i1 to i32
    %c0_i32_85 = arith.constant 0 : i32
    %61 = arith.cmpi ne, %60, %c0_i32_85 : i32
    scf.if %61 {
      %c0_86 = arith.constant 0 : index
      %c0_87 = arith.constant 0 : index
      %62 = vector.load %arg7[%c0_86, %c0_87] : memref<8x384xf32, #tpu.memory_space<vmem>>, vector<8x384xf32>
      %c0_88 = arith.constant 0 : index
      %c0_89 = arith.constant 0 : index
      %63 = vector.load %arg5[%c0_88, %c0_89] : memref<8x1xf32, #tpu.memory_space<vmem>>, vector<8x1xf32>
      %64 = vector.broadcast %63 : vector<8x1xf32> to vector<8x384xf32>
      %65 = arith.addf %62, %64 : vector<8x384xf32>
      %cst_90 = arith.constant 0.000000e+00 : f32
      %66 = vector.broadcast %cst_90 : f32 to vector<8x384xf32>
      %67 = arith.maximumf %65, %66 : vector<8x384xf32>
      %c0_91 = arith.constant 0 : index
      %c0_92 = arith.constant 0 : index
      %c0_93 = arith.constant 0 : index
      %c0_94 = arith.constant 0 : index
      %68 = vector.load %arg6[%c0_91, %c0_92, %c0_93, %c0_94] : memref<1x1x8x384xf32, #tpu.memory_space<vmem>>, vector<1x1x8x384xf32>
      %69 = vector.shape_cast %68 : vector<1x1x8x384xf32> to vector<8x384xf32>
      %70 = vector.shape_cast %67 : vector<8x384xf32> to vector<1x1x8x384xf32>
      tpu.vector_store %arg6[%c0_91, %c0_92, %c0_93, %c0_94], %70 {strides = array<i32>} : memref<1x1x8x384xf32, #tpu.memory_space<vmem>>, vector<1x1x8x384xf32>,
    } else {
    }
    return
  }
  func.func @transform_0(%arg0: i32, %arg1: i32, %arg2: i32) -> (i32, i32, i32, i32) {
    %0 = arith.addi %arg1, %arg2 : i32
    %c0_i32 = arith.constant 0 : i32
    %c0_i32_0 = arith.constant 0 : i32
    %c0_i32_1 = arith.constant 0 : i32
    return %arg0, %0, %c0_i32, %c0_i32_0 : i32, i32, i32, i32
  }
  func.func @transform_1(%arg0: i32, %arg1: i32, %arg2: i32) -> (i32, i32, i32, i32, i32) {
    %c0_i32 = arith.constant 0 : i32
    %c0_i32_0 = arith.constant 0 : i32
    %c0_i32_1 = arith.constant 0 : i32
    %c0_i32_2 = arith.constant 0 : i32
    %c0_i32_3 = arith.constant 0 : i32
    return %arg2, %c0_i32, %c0_i32_0, %c0_i32_1, %c0_i32_2 : i32, i32, i32, i32, i32
  }
  func.func @transform_2(%arg0: i32, %arg1: i32, %arg2: i32) -> (i32, i32) {
    %c0_i32 = arith.constant 0 : i32
    %c0_i32_0 = arith.constant 0 : i32
    %c0_i32_1 = arith.constant 0 : i32
    return %c0_i32, %c0_i32_0 : i32, i32
  }
  func.func @transform_3(%arg0: i32, %arg1: i32, %arg2: i32) -> (i32, i32, i32, i32) {
    %c0_i32 = arith.constant 0 : i32
    %c0_i32_0 = arith.constant 0 : i32
    %c0_i32_1 = arith.constant 0 : i32
    return %arg0, %arg1, %c0_i32, %c0_i32_0 : i32, i32, i32, i32
  }
}

module attributes {stable_mosaic.version = 11 : i64} {
  func.func @_conv3d_k3p1_kernel(%arg0: i32, %arg1: i32, %arg2: i32, %arg3: memref<1x1x8x256xbf16, #tpu.memory_space<vmem>>, %arg4: memref<1x3x3x8x8xbf16, #tpu.memory_space<vmem>>, %arg5: memref<8x1xf32, #tpu.memory_space<vmem>>, %arg6: memref<1x1x8x128xf32, #tpu.memory_space<vmem>>, %arg7: memref<8x128xf32, #tpu.memory_space<vmem>>) attributes {dimension_semantics = [#tpu.dimension_semantics<parallel>, #tpu.dimension_semantics<parallel>, #tpu.dimension_semantics<arbitrary>], iteration_bounds = array<i64: 2, 8, 3>, scalar_prefetch = 0 : i64, scratch_operands = 1 : i64, tpu.core_type = #tpu.core_type<tc>, window_params = [{transform_indices = @transform_0, window_bounds = array<i64: 1, 1, 8, 256>}, {transform_indices = @transform_1, window_bounds = array<i64: 1, 3, 3, 8, 8>}, {pipeline_mode = #tpu.pipeline_mode<synchronous>, transform_indices = @transform_2, window_bounds = array<i64: 8, 1>}, {transform_indices = @transform_3, window_bounds = array<i64: 1, 1, 8, 128>}]} {
    %c0_i32 = arith.constant 0 : i32
    %0 = arith.cmpi eq, %arg2, %c0_i32 : i32
    %1 = arith.extui %0 : i1 to i32
    %c0_i32_0 = arith.constant 0 : i32
    %2 = arith.cmpi ne, %1, %c0_i32_0 : i32
    scf.if %2 {
      %cst_86 = arith.constant 0.000000e+00 : f32
      %62 = vector.broadcast %cst_86 : f32 to vector<8x128xf32>
      %c0_87 = arith.constant 0 : index
      %c0_88 = arith.constant 0 : index
      %63 = vector.load %arg7[%c0_87, %c0_88] : memref<8x128xf32, #tpu.memory_space<vmem>>, vector<8x128xf32>
      tpu.vector_store %arg7[%c0_87, %c0_88], %62 {strides = array<i32>} : memref<8x128xf32, #tpu.memory_space<vmem>>, vector<8x128xf32>,
    } else {
    }
    %c0 = arith.constant 0 : index
    %c0_1 = arith.constant 0 : index
    %3 = vector.load %arg7[%c0, %c0_1] : memref<8x128xf32, #tpu.memory_space<vmem>>, vector<8x128xf32>
    %c0_2 = arith.constant 0 : index
    %c0_3 = arith.constant 0 : index
    %c0_4 = arith.constant 0 : index
    %c0_5 = arith.constant 0 : index
    %4 = vector.load %arg3[%c0_2, %c0_3, %c0_4, %c0_5] : memref<1x1x8x256xbf16, #tpu.memory_space<vmem>>, vector<1x1x8x128xbf16>
    %5 = vector.shape_cast %4 : vector<1x1x8x128xbf16> to vector<8x128xbf16>
    %c0_6 = arith.constant 0 : index
    %c0_7 = arith.constant 0 : index
    %c0_8 = arith.constant 0 : index
    %c0_9 = arith.constant 0 : index
    %c0_10 = arith.constant 0 : index
    %6 = vector.load %arg4[%c0_6, %c0_7, %c0_8, %c0_9, %c0_10] : memref<1x3x3x8x8xbf16, #tpu.memory_space<vmem>>, vector<1x1x1x8x8xbf16>
    %7 = vector.shape_cast %6 : vector<1x1x1x8x8xbf16> to vector<8x8xbf16>
    %cst = arith.constant dense<0.000000e+00> : vector<8x128xf32>
    %8 = tpu.matmul %7, %5, %cst {dimension_numbers = #tpu.dot_dimension_numbers<[1], [0], [0], [1], [0, 0, 1, 1], [], []>} : vector<8x8xbf16>, vector<8x128xbf16>, vector<8x128xf32> -> vector<8x128xf32>
    %9 = arith.addf %3, %8 : vector<8x128xf32>
    %c0_11 = arith.constant 0 : index
    %c0_12 = arith.constant 0 : index
    %c0_13 = arith.constant 0 : index
    %c1 = arith.constant 1 : index
    %10 = vector.load %arg3[%c0_11, %c0_12, %c0_13, %c1] : memref<1x1x8x256xbf16, #tpu.memory_space<vmem>>, vector<1x1x8x128xbf16>
    %11 = vector.shape_cast %10 : vector<1x1x8x128xbf16> to vector<8x128xbf16>
    %c0_14 = arith.constant 0 : index
    %c0_15 = arith.constant 0 : index
    %c1_16 = arith.constant 1 : index
    %c0_17 = arith.constant 0 : index
    %c0_18 = arith.constant 0 : index
    %12 = vector.load %arg4[%c0_14, %c0_15, %c1_16, %c0_17, %c0_18] : memref<1x3x3x8x8xbf16, #tpu.memory_space<vmem>>, vector<1x1x1x8x8xbf16>
    %13 = vector.shape_cast %12 : vector<1x1x1x8x8xbf16> to vector<8x8xbf16>
    %cst_19 = arith.constant dense<0.000000e+00> : vector<8x128xf32>
    %14 = tpu.matmul %13, %11, %cst_19 {dimension_numbers = #tpu.dot_dimension_numbers<[1], [0], [0], [1], [0, 0, 1, 1], [], []>} : vector<8x8xbf16>, vector<8x128xbf16>, vector<8x128xf32> -> vector<8x128xf32>
    %15 = arith.addf %9, %14 : vector<8x128xf32>
    %c0_20 = arith.constant 0 : index
    %c0_21 = arith.constant 0 : index
    %c0_22 = arith.constant 0 : index
    %c2 = arith.constant 2 : index
    %16 = vector.load %arg3[%c0_20, %c0_21, %c0_22, %c2] : memref<1x1x8x256xbf16, #tpu.memory_space<vmem>>, vector<1x1x8x128xbf16>
    %17 = vector.shape_cast %16 : vector<1x1x8x128xbf16> to vector<8x128xbf16>
    %c0_23 = arith.constant 0 : index
    %c0_24 = arith.constant 0 : index
    %c2_25 = arith.constant 2 : index
    %c0_26 = arith.constant 0 : index
    %c0_27 = arith.constant 0 : index
    %18 = vector.load %arg4[%c0_23, %c0_24, %c2_25, %c0_26, %c0_27] : memref<1x3x3x8x8xbf16, #tpu.memory_space<vmem>>, vector<1x1x1x8x8xbf16>
    %19 = vector.shape_cast %18 : vector<1x1x1x8x8xbf16> to vector<8x8xbf16>
    %cst_28 = arith.constant dense<0.000000e+00> : vector<8x128xf32>
    %20 = tpu.matmul %19, %17, %cst_28 {dimension_numbers = #tpu.dot_dimension_numbers<[1], [0], [0], [1], [0, 0, 1, 1], [], []>} : vector<8x8xbf16>, vector<8x128xbf16>, vector<8x128xf32> -> vector<8x128xf32>
    %21 = arith.addf %15, %20 : vector<8x128xf32>
    %c0_29 = arith.constant 0 : index
    %c0_30 = arith.constant 0 : index
    %c0_31 = arith.constant 0 : index
    %c10 = arith.constant 10 : index
    %22 = vector.load %arg3[%c0_29, %c0_30, %c0_31, %c10] : memref<1x1x8x256xbf16, #tpu.memory_space<vmem>>, vector<1x1x8x128xbf16>
    %23 = vector.shape_cast %22 : vector<1x1x8x128xbf16> to vector<8x128xbf16>
    %c0_32 = arith.constant 0 : index
    %c1_33 = arith.constant 1 : index
    %c0_34 = arith.constant 0 : index
    %c0_35 = arith.constant 0 : index
    %c0_36 = arith.constant 0 : index
    %24 = vector.load %arg4[%c0_32, %c1_33, %c0_34, %c0_35, %c0_36] : memref<1x3x3x8x8xbf16, #tpu.memory_space<vmem>>, vector<1x1x1x8x8xbf16>
    %25 = vector.shape_cast %24 : vector<1x1x1x8x8xbf16> to vector<8x8xbf16>
    %cst_37 = arith.constant dense<0.000000e+00> : vector<8x128xf32>
    %26 = tpu.matmul %25, %23, %cst_37 {dimension_numbers = #tpu.dot_dimension_numbers<[1], [0], [0], [1], [0, 0, 1, 1], [], []>} : vector<8x8xbf16>, vector<8x128xbf16>, vector<8x128xf32> -> vector<8x128xf32>
    %27 = arith.addf %21, %26 : vector<8x128xf32>
    %c0_38 = arith.constant 0 : index
    %c0_39 = arith.constant 0 : index
    %c0_40 = arith.constant 0 : index
    %c11 = arith.constant 11 : index
    %28 = vector.load %arg3[%c0_38, %c0_39, %c0_40, %c11] : memref<1x1x8x256xbf16, #tpu.memory_space<vmem>>, vector<1x1x8x128xbf16>
    %29 = vector.shape_cast %28 : vector<1x1x8x128xbf16> to vector<8x128xbf16>
    %c0_41 = arith.constant 0 : index
    %c1_42 = arith.constant 1 : index
    %c1_43 = arith.constant 1 : index
    %c0_44 = arith.constant 0 : index
    %c0_45 = arith.constant 0 : index
    %30 = vector.load %arg4[%c0_41, %c1_42, %c1_43, %c0_44, %c0_45] : memref<1x3x3x8x8xbf16, #tpu.memory_space<vmem>>, vector<1x1x1x8x8xbf16>
    %31 = vector.shape_cast %30 : vector<1x1x1x8x8xbf16> to vector<8x8xbf16>
    %cst_46 = arith.constant dense<0.000000e+00> : vector<8x128xf32>
    %32 = tpu.matmul %31, %29, %cst_46 {dimension_numbers = #tpu.dot_dimension_numbers<[1], [0], [0], [1], [0, 0, 1, 1], [], []>} : vector<8x8xbf16>, vector<8x128xbf16>, vector<8x128xf32> -> vector<8x128xf32>
    %33 = arith.addf %27, %32 : vector<8x128xf32>
    %c0_47 = arith.constant 0 : index
    %c0_48 = arith.constant 0 : index
    %c0_49 = arith.constant 0 : index
    %c12 = arith.constant 12 : index
    %34 = vector.load %arg3[%c0_47, %c0_48, %c0_49, %c12] : memref<1x1x8x256xbf16, #tpu.memory_space<vmem>>, vector<1x1x8x128xbf16>
    %35 = vector.shape_cast %34 : vector<1x1x8x128xbf16> to vector<8x128xbf16>
    %c0_50 = arith.constant 0 : index
    %c1_51 = arith.constant 1 : index
    %c2_52 = arith.constant 2 : index
    %c0_53 = arith.constant 0 : index
    %c0_54 = arith.constant 0 : index
    %36 = vector.load %arg4[%c0_50, %c1_51, %c2_52, %c0_53, %c0_54] : memref<1x3x3x8x8xbf16, #tpu.memory_space<vmem>>, vector<1x1x1x8x8xbf16>
    %37 = vector.shape_cast %36 : vector<1x1x1x8x8xbf16> to vector<8x8xbf16>
    %cst_55 = arith.constant dense<0.000000e+00> : vector<8x128xf32>
    %38 = tpu.matmul %37, %35, %cst_55 {dimension_numbers = #tpu.dot_dimension_numbers<[1], [0], [0], [1], [0, 0, 1, 1], [], []>} : vector<8x8xbf16>, vector<8x128xbf16>, vector<8x128xf32> -> vector<8x128xf32>
    %39 = arith.addf %33, %38 : vector<8x128xf32>
    %c0_56 = arith.constant 0 : index
    %c0_57 = arith.constant 0 : index
    %c0_58 = arith.constant 0 : index
    %c20 = arith.constant 20 : index
    %40 = vector.load %arg3[%c0_56, %c0_57, %c0_58, %c20] : memref<1x1x8x256xbf16, #tpu.memory_space<vmem>>, vector<1x1x8x128xbf16>
    %41 = vector.shape_cast %40 : vector<1x1x8x128xbf16> to vector<8x128xbf16>
    %c0_59 = arith.constant 0 : index
    %c2_60 = arith.constant 2 : index
    %c0_61 = arith.constant 0 : index
    %c0_62 = arith.constant 0 : index
    %c0_63 = arith.constant 0 : index
    %42 = vector.load %arg4[%c0_59, %c2_60, %c0_61, %c0_62, %c0_63] : memref<1x3x3x8x8xbf16, #tpu.memory_space<vmem>>, vector<1x1x1x8x8xbf16>
    %43 = vector.shape_cast %42 : vector<1x1x1x8x8xbf16> to vector<8x8xbf16>
    %cst_64 = arith.constant dense<0.000000e+00> : vector<8x128xf32>
    %44 = tpu.matmul %43, %41, %cst_64 {dimension_numbers = #tpu.dot_dimension_numbers<[1], [0], [0], [1], [0, 0, 1, 1], [], []>} : vector<8x8xbf16>, vector<8x128xbf16>, vector<8x128xf32> -> vector<8x128xf32>
    %45 = arith.addf %39, %44 : vector<8x128xf32>
    %c0_65 = arith.constant 0 : index
    %c0_66 = arith.constant 0 : index
    %c0_67 = arith.constant 0 : index
    %c21 = arith.constant 21 : index
    %46 = vector.load %arg3[%c0_65, %c0_66, %c0_67, %c21] : memref<1x1x8x256xbf16, #tpu.memory_space<vmem>>, vector<1x1x8x128xbf16>
    %47 = vector.shape_cast %46 : vector<1x1x8x128xbf16> to vector<8x128xbf16>
    %c0_68 = arith.constant 0 : index
    %c2_69 = arith.constant 2 : index
    %c1_70 = arith.constant 1 : index
    %c0_71 = arith.constant 0 : index
    %c0_72 = arith.constant 0 : index
    %48 = vector.load %arg4[%c0_68, %c2_69, %c1_70, %c0_71, %c0_72] : memref<1x3x3x8x8xbf16, #tpu.memory_space<vmem>>, vector<1x1x1x8x8xbf16>
    %49 = vector.shape_cast %48 : vector<1x1x1x8x8xbf16> to vector<8x8xbf16>
    %cst_73 = arith.constant dense<0.000000e+00> : vector<8x128xf32>
    %50 = tpu.matmul %49, %47, %cst_73 {dimension_numbers = #tpu.dot_dimension_numbers<[1], [0], [0], [1], [0, 0, 1, 1], [], []>} : vector<8x8xbf16>, vector<8x128xbf16>, vector<8x128xf32> -> vector<8x128xf32>
    %51 = arith.addf %45, %50 : vector<8x128xf32>
    %c0_74 = arith.constant 0 : index
    %c0_75 = arith.constant 0 : index
    %c0_76 = arith.constant 0 : index
    %c22 = arith.constant 22 : index
    %52 = vector.load %arg3[%c0_74, %c0_75, %c0_76, %c22] : memref<1x1x8x256xbf16, #tpu.memory_space<vmem>>, vector<1x1x8x128xbf16>
    %53 = vector.shape_cast %52 : vector<1x1x8x128xbf16> to vector<8x128xbf16>
    %c0_77 = arith.constant 0 : index
    %c2_78 = arith.constant 2 : index
    %c2_79 = arith.constant 2 : index
    %c0_80 = arith.constant 0 : index
    %c0_81 = arith.constant 0 : index
    %54 = vector.load %arg4[%c0_77, %c2_78, %c2_79, %c0_80, %c0_81] : memref<1x3x3x8x8xbf16, #tpu.memory_space<vmem>>, vector<1x1x1x8x8xbf16>
    %55 = vector.shape_cast %54 : vector<1x1x1x8x8xbf16> to vector<8x8xbf16>
    %cst_82 = arith.constant dense<0.000000e+00> : vector<8x128xf32>
    %56 = tpu.matmul %55, %53, %cst_82 {dimension_numbers = #tpu.dot_dimension_numbers<[1], [0], [0], [1], [0, 0, 1, 1], [], []>} : vector<8x8xbf16>, vector<8x128xbf16>, vector<8x128xf32> -> vector<8x128xf32>
    %57 = arith.addf %51, %56 : vector<8x128xf32>
    %c0_83 = arith.constant 0 : index
    %c0_84 = arith.constant 0 : index
    %58 = vector.load %arg7[%c0_83, %c0_84] : memref<8x128xf32, #tpu.memory_space<vmem>>, vector<8x128xf32>
    tpu.vector_store %arg7[%c0_83, %c0_84], %57 {strides = array<i32>} : memref<8x128xf32, #tpu.memory_space<vmem>>, vector<8x128xf32>,
    %c2_i32 = arith.constant 2 : i32
    %59 = arith.cmpi eq, %arg2, %c2_i32 : i32
    %60 = arith.extui %59 : i1 to i32
    %c0_i32_85 = arith.constant 0 : i32
    %61 = arith.cmpi ne, %60, %c0_i32_85 : i32
    scf.if %61 {
      %c0_86 = arith.constant 0 : index
      %c0_87 = arith.constant 0 : index
      %62 = vector.load %arg7[%c0_86, %c0_87] : memref<8x128xf32, #tpu.memory_space<vmem>>, vector<8x128xf32>
      %c0_88 = arith.constant 0 : index
      %c0_89 = arith.constant 0 : index
      %63 = vector.load %arg5[%c0_88, %c0_89] : memref<8x1xf32, #tpu.memory_space<vmem>>, vector<8x1xf32>
      %64 = vector.broadcast %63 : vector<8x1xf32> to vector<8x128xf32>
      %65 = arith.addf %62, %64 : vector<8x128xf32>
      %cst_90 = arith.constant 0.000000e+00 : f32
      %66 = vector.broadcast %cst_90 : f32 to vector<8x128xf32>
      %67 = arith.maximumf %65, %66 : vector<8x128xf32>
      %c0_91 = arith.constant 0 : index
      %c0_92 = arith.constant 0 : index
      %c0_93 = arith.constant 0 : index
      %c0_94 = arith.constant 0 : index
      %68 = vector.load %arg6[%c0_91, %c0_92, %c0_93, %c0_94] : memref<1x1x8x128xf32, #tpu.memory_space<vmem>>, vector<1x1x8x128xf32>
      %69 = vector.shape_cast %68 : vector<1x1x8x128xf32> to vector<8x128xf32>
      %70 = vector.shape_cast %67 : vector<8x128xf32> to vector<1x1x8x128xf32>
      tpu.vector_store %arg6[%c0_91, %c0_92, %c0_93, %c0_94], %70 {strides = array<i32>} : memref<1x1x8x128xf32, #tpu.memory_space<vmem>>, vector<1x1x8x128xf32>,
    } else {
    }
    return
  }
  func.func @transform_0(%arg0: i32, %arg1: i32, %arg2: i32) -> (i32, i32, i32, i32) {
    %0 = arith.addi %arg1, %arg2 : i32
    %c0_i32 = arith.constant 0 : i32
    %c0_i32_0 = arith.constant 0 : i32
    %c0_i32_1 = arith.constant 0 : i32
    return %arg0, %0, %c0_i32, %c0_i32_0 : i32, i32, i32, i32
  }
  func.func @transform_1(%arg0: i32, %arg1: i32, %arg2: i32) -> (i32, i32, i32, i32, i32) {
    %c0_i32 = arith.constant 0 : i32
    %c0_i32_0 = arith.constant 0 : i32
    %c0_i32_1 = arith.constant 0 : i32
    %c0_i32_2 = arith.constant 0 : i32
    %c0_i32_3 = arith.constant 0 : i32
    return %arg2, %c0_i32, %c0_i32_0, %c0_i32_1, %c0_i32_2 : i32, i32, i32, i32, i32
  }
  func.func @transform_2(%arg0: i32, %arg1: i32, %arg2: i32) -> (i32, i32) {
    %c0_i32 = arith.constant 0 : i32
    %c0_i32_0 = arith.constant 0 : i32
    %c0_i32_1 = arith.constant 0 : i32
    return %c0_i32, %c0_i32_0 : i32, i32
  }
  func.func @transform_3(%arg0: i32, %arg1: i32, %arg2: i32) -> (i32, i32, i32, i32) {
    %c0_i32 = arith.constant 0 : i32
    %c0_i32_0 = arith.constant 0 : i32
    %c0_i32_1 = arith.constant 0 : i32
    return %arg0, %arg1, %c0_i32, %c0_i32_0 : i32, i32, i32, i32
  }
}

module attributes {stable_mosaic.version = 11 : i64} {
  func.func @_conv3d_k3p1_kernel(%arg0: i32, %arg1: i32, %arg2: i32, %arg3: memref<1x1x8x256xbf16, #tpu.memory_space<vmem>>, %arg4: memref<1x3x3x16x8xbf16, #tpu.memory_space<vmem>>, %arg5: memref<16x1xf32, #tpu.memory_space<vmem>>, %arg6: memref<1x1x16x128xf32, #tpu.memory_space<vmem>>, %arg7: memref<16x128xf32, #tpu.memory_space<vmem>>) attributes {dimension_semantics = [#tpu.dimension_semantics<parallel>, #tpu.dimension_semantics<parallel>, #tpu.dimension_semantics<arbitrary>], iteration_bounds = array<i64: 2, 4, 3>, scalar_prefetch = 0 : i64, scratch_operands = 1 : i64, tpu.core_type = #tpu.core_type<tc>, window_params = [{transform_indices = @transform_0, window_bounds = array<i64: 1, 1, 8, 256>}, {transform_indices = @transform_1, window_bounds = array<i64: 1, 3, 3, 16, 8>}, {pipeline_mode = #tpu.pipeline_mode<synchronous>, transform_indices = @transform_2, window_bounds = array<i64: 16, 1>}, {transform_indices = @transform_3, window_bounds = array<i64: 1, 1, 16, 128>}]} {
    %c0_i32 = arith.constant 0 : i32
    %0 = arith.cmpi eq, %arg2, %c0_i32 : i32
    %1 = arith.extui %0 : i1 to i32
    %c0_i32_0 = arith.constant 0 : i32
    %2 = arith.cmpi ne, %1, %c0_i32_0 : i32
    scf.if %2 {
      %cst_86 = arith.constant 0.000000e+00 : f32
      %62 = vector.broadcast %cst_86 : f32 to vector<16x128xf32>
      %c0_87 = arith.constant 0 : index
      %c0_88 = arith.constant 0 : index
      %63 = vector.load %arg7[%c0_87, %c0_88] : memref<16x128xf32, #tpu.memory_space<vmem>>, vector<16x128xf32>
      tpu.vector_store %arg7[%c0_87, %c0_88], %62 {strides = array<i32>} : memref<16x128xf32, #tpu.memory_space<vmem>>, vector<16x128xf32>,
    } else {
    }
    %c0 = arith.constant 0 : index
    %c0_1 = arith.constant 0 : index
    %3 = vector.load %arg7[%c0, %c0_1] : memref<16x128xf32, #tpu.memory_space<vmem>>, vector<16x128xf32>
    %c0_2 = arith.constant 0 : index
    %c0_3 = arith.constant 0 : index
    %c0_4 = arith.constant 0 : index
    %c0_5 = arith.constant 0 : index
    %4 = vector.load %arg3[%c0_2, %c0_3, %c0_4, %c0_5] : memref<1x1x8x256xbf16, #tpu.memory_space<vmem>>, vector<1x1x8x128xbf16>
    %5 = vector.shape_cast %4 : vector<1x1x8x128xbf16> to vector<8x128xbf16>
    %c0_6 = arith.constant 0 : index
    %c0_7 = arith.constant 0 : index
    %c0_8 = arith.constant 0 : index
    %c0_9 = arith.constant 0 : index
    %c0_10 = arith.constant 0 : index
    %6 = vector.load %arg4[%c0_6, %c0_7, %c0_8, %c0_9, %c0_10] : memref<1x3x3x16x8xbf16, #tpu.memory_space<vmem>>, vector<1x1x1x16x8xbf16>
    %7 = vector.shape_cast %6 : vector<1x1x1x16x8xbf16> to vector<16x8xbf16>
    %cst = arith.constant dense<0.000000e+00> : vector<16x128xf32>
    %8 = tpu.matmul %7, %5, %cst {dimension_numbers = #tpu.dot_dimension_numbers<[1], [0], [0], [1], [0, 0, 1, 1], [], []>} : vector<16x8xbf16>, vector<8x128xbf16>, vector<16x128xf32> -> vector<16x128xf32>
    %9 = arith.addf %3, %8 : vector<16x128xf32>
    %c0_11 = arith.constant 0 : index
    %c0_12 = arith.constant 0 : index
    %c0_13 = arith.constant 0 : index
    %c1 = arith.constant 1 : index
    %10 = vector.load %arg3[%c0_11, %c0_12, %c0_13, %c1] : memref<1x1x8x256xbf16, #tpu.memory_space<vmem>>, vector<1x1x8x128xbf16>
    %11 = vector.shape_cast %10 : vector<1x1x8x128xbf16> to vector<8x128xbf16>
    %c0_14 = arith.constant 0 : index
    %c0_15 = arith.constant 0 : index
    %c1_16 = arith.constant 1 : index
    %c0_17 = arith.constant 0 : index
    %c0_18 = arith.constant 0 : index
    %12 = vector.load %arg4[%c0_14, %c0_15, %c1_16, %c0_17, %c0_18] : memref<1x3x3x16x8xbf16, #tpu.memory_space<vmem>>, vector<1x1x1x16x8xbf16>
    %13 = vector.shape_cast %12 : vector<1x1x1x16x8xbf16> to vector<16x8xbf16>
    %cst_19 = arith.constant dense<0.000000e+00> : vector<16x128xf32>
    %14 = tpu.matmul %13, %11, %cst_19 {dimension_numbers = #tpu.dot_dimension_numbers<[1], [0], [0], [1], [0, 0, 1, 1], [], []>} : vector<16x8xbf16>, vector<8x128xbf16>, vector<16x128xf32> -> vector<16x128xf32>
    %15 = arith.addf %9, %14 : vector<16x128xf32>
    %c0_20 = arith.constant 0 : index
    %c0_21 = arith.constant 0 : index
    %c0_22 = arith.constant 0 : index
    %c2 = arith.constant 2 : index
    %16 = vector.load %arg3[%c0_20, %c0_21, %c0_22, %c2] : memref<1x1x8x256xbf16, #tpu.memory_space<vmem>>, vector<1x1x8x128xbf16>
    %17 = vector.shape_cast %16 : vector<1x1x8x128xbf16> to vector<8x128xbf16>
    %c0_23 = arith.constant 0 : index
    %c0_24 = arith.constant 0 : index
    %c2_25 = arith.constant 2 : index
    %c0_26 = arith.constant 0 : index
    %c0_27 = arith.constant 0 : index
    %18 = vector.load %arg4[%c0_23, %c0_24, %c2_25, %c0_26, %c0_27] : memref<1x3x3x16x8xbf16, #tpu.memory_space<vmem>>, vector<1x1x1x16x8xbf16>
    %19 = vector.shape_cast %18 : vector<1x1x1x16x8xbf16> to vector<16x8xbf16>
    %cst_28 = arith.constant dense<0.000000e+00> : vector<16x128xf32>
    %20 = tpu.matmul %19, %17, %cst_28 {dimension_numbers = #tpu.dot_dimension_numbers<[1], [0], [0], [1], [0, 0, 1, 1], [], []>} : vector<16x8xbf16>, vector<8x128xbf16>, vector<16x128xf32> -> vector<16x128xf32>
    %21 = arith.addf %15, %20 : vector<16x128xf32>
    %c0_29 = arith.constant 0 : index
    %c0_30 = arith.constant 0 : index
    %c0_31 = arith.constant 0 : index
    %c6 = arith.constant 6 : index
    %22 = vector.load %arg3[%c0_29, %c0_30, %c0_31, %c6] : memref<1x1x8x256xbf16, #tpu.memory_space<vmem>>, vector<1x1x8x128xbf16>
    %23 = vector.shape_cast %22 : vector<1x1x8x128xbf16> to vector<8x128xbf16>
    %c0_32 = arith.constant 0 : index
    %c1_33 = arith.constant 1 : index
    %c0_34 = arith.constant 0 : index
    %c0_35 = arith.constant 0 : index
    %c0_36 = arith.constant 0 : index
    %24 = vector.load %arg4[%c0_32, %c1_33, %c0_34, %c0_35, %c0_36] : memref<1x3x3x16x8xbf16, #tpu.memory_space<vmem>>, vector<1x1x1x16x8xbf16>
    %25 = vector.shape_cast %24 : vector<1x1x1x16x8xbf16> to vector<16x8xbf16>
    %cst_37 = arith.constant dense<0.000000e+00> : vector<16x128xf32>
    %26 = tpu.matmul %25, %23, %cst_37 {dimension_numbers = #tpu.dot_dimension_numbers<[1], [0], [0], [1], [0, 0, 1, 1], [], []>} : vector<16x8xbf16>, vector<8x128xbf16>, vector<16x128xf32> -> vector<16x128xf32>
    %27 = arith.addf %21, %26 : vector<16x128xf32>
    %c0_38 = arith.constant 0 : index
    %c0_39 = arith.constant 0 : index
    %c0_40 = arith.constant 0 : index
    %c7 = arith.constant 7 : index
    %28 = vector.load %arg3[%c0_38, %c0_39, %c0_40, %c7] : memref<1x1x8x256xbf16, #tpu.memory_space<vmem>>, vector<1x1x8x128xbf16>
    %29 = vector.shape_cast %28 : vector<1x1x8x128xbf16> to vector<8x128xbf16>
    %c0_41 = arith.constant 0 : index
    %c1_42 = arith.constant 1 : index
    %c1_43 = arith.constant 1 : index
    %c0_44 = arith.constant 0 : index
    %c0_45 = arith.constant 0 : index
    %30 = vector.load %arg4[%c0_41, %c1_42, %c1_43, %c0_44, %c0_45] : memref<1x3x3x16x8xbf16, #tpu.memory_space<vmem>>, vector<1x1x1x16x8xbf16>
    %31 = vector.shape_cast %30 : vector<1x1x1x16x8xbf16> to vector<16x8xbf16>
    %cst_46 = arith.constant dense<0.000000e+00> : vector<16x128xf32>
    %32 = tpu.matmul %31, %29, %cst_46 {dimension_numbers = #tpu.dot_dimension_numbers<[1], [0], [0], [1], [0, 0, 1, 1], [], []>} : vector<16x8xbf16>, vector<8x128xbf16>, vector<16x128xf32> -> vector<16x128xf32>
    %33 = arith.addf %27, %32 : vector<16x128xf32>
    %c0_47 = arith.constant 0 : index
    %c0_48 = arith.constant 0 : index
    %c0_49 = arith.constant 0 : index
    %c8 = arith.constant 8 : index
    %34 = vector.load %arg3[%c0_47, %c0_48, %c0_49, %c8] : memref<1x1x8x256xbf16, #tpu.memory_space<vmem>>, vector<1x1x8x128xbf16>
    %35 = vector.shape_cast %34 : vector<1x1x8x128xbf16> to vector<8x128xbf16>
    %c0_50 = arith.constant 0 : index
    %c1_51 = arith.constant 1 : index
    %c2_52 = arith.constant 2 : index
    %c0_53 = arith.constant 0 : index
    %c0_54 = arith.constant 0 : index
    %36 = vector.load %arg4[%c0_50, %c1_51, %c2_52, %c0_53, %c0_54] : memref<1x3x3x16x8xbf16, #tpu.memory_space<vmem>>, vector<1x1x1x16x8xbf16>
    %37 = vector.shape_cast %36 : vector<1x1x1x16x8xbf16> to vector<16x8xbf16>
    %cst_55 = arith.constant dense<0.000000e+00> : vector<16x128xf32>
    %38 = tpu.matmul %37, %35, %cst_55 {dimension_numbers = #tpu.dot_dimension_numbers<[1], [0], [0], [1], [0, 0, 1, 1], [], []>} : vector<16x8xbf16>, vector<8x128xbf16>, vector<16x128xf32> -> vector<16x128xf32>
    %39 = arith.addf %33, %38 : vector<16x128xf32>
    %c0_56 = arith.constant 0 : index
    %c0_57 = arith.constant 0 : index
    %c0_58 = arith.constant 0 : index
    %c12 = arith.constant 12 : index
    %40 = vector.load %arg3[%c0_56, %c0_57, %c0_58, %c12] : memref<1x1x8x256xbf16, #tpu.memory_space<vmem>>, vector<1x1x8x128xbf16>
    %41 = vector.shape_cast %40 : vector<1x1x8x128xbf16> to vector<8x128xbf16>
    %c0_59 = arith.constant 0 : index
    %c2_60 = arith.constant 2 : index
    %c0_61 = arith.constant 0 : index
    %c0_62 = arith.constant 0 : index
    %c0_63 = arith.constant 0 : index
    %42 = vector.load %arg4[%c0_59, %c2_60, %c0_61, %c0_62, %c0_63] : memref<1x3x3x16x8xbf16, #tpu.memory_space<vmem>>, vector<1x1x1x16x8xbf16>
    %43 = vector.shape_cast %42 : vector<1x1x1x16x8xbf16> to vector<16x8xbf16>
    %cst_64 = arith.constant dense<0.000000e+00> : vector<16x128xf32>
    %44 = tpu.matmul %43, %41, %cst_64 {dimension_numbers = #tpu.dot_dimension_numbers<[1], [0], [0], [1], [0, 0, 1, 1], [], []>} : vector<16x8xbf16>, vector<8x128xbf16>, vector<16x128xf32> -> vector<16x128xf32>
    %45 = arith.addf %39, %44 : vector<16x128xf32>
    %c0_65 = arith.constant 0 : index
    %c0_66 = arith.constant 0 : index
    %c0_67 = arith.constant 0 : index
    %c13 = arith.constant 13 : index
    %46 = vector.load %arg3[%c0_65, %c0_66, %c0_67, %c13] : memref<1x1x8x256xbf16, #tpu.memory_space<vmem>>, vector<1x1x8x128xbf16>
    %47 = vector.shape_cast %46 : vector<1x1x8x128xbf16> to vector<8x128xbf16>
    %c0_68 = arith.constant 0 : index
    %c2_69 = arith.constant 2 : index
    %c1_70 = arith.constant 1 : index
    %c0_71 = arith.constant 0 : index
    %c0_72 = arith.constant 0 : index
    %48 = vector.load %arg4[%c0_68, %c2_69, %c1_70, %c0_71, %c0_72] : memref<1x3x3x16x8xbf16, #tpu.memory_space<vmem>>, vector<1x1x1x16x8xbf16>
    %49 = vector.shape_cast %48 : vector<1x1x1x16x8xbf16> to vector<16x8xbf16>
    %cst_73 = arith.constant dense<0.000000e+00> : vector<16x128xf32>
    %50 = tpu.matmul %49, %47, %cst_73 {dimension_numbers = #tpu.dot_dimension_numbers<[1], [0], [0], [1], [0, 0, 1, 1], [], []>} : vector<16x8xbf16>, vector<8x128xbf16>, vector<16x128xf32> -> vector<16x128xf32>
    %51 = arith.addf %45, %50 : vector<16x128xf32>
    %c0_74 = arith.constant 0 : index
    %c0_75 = arith.constant 0 : index
    %c0_76 = arith.constant 0 : index
    %c14 = arith.constant 14 : index
    %52 = vector.load %arg3[%c0_74, %c0_75, %c0_76, %c14] : memref<1x1x8x256xbf16, #tpu.memory_space<vmem>>, vector<1x1x8x128xbf16>
    %53 = vector.shape_cast %52 : vector<1x1x8x128xbf16> to vector<8x128xbf16>
    %c0_77 = arith.constant 0 : index
    %c2_78 = arith.constant 2 : index
    %c2_79 = arith.constant 2 : index
    %c0_80 = arith.constant 0 : index
    %c0_81 = arith.constant 0 : index
    %54 = vector.load %arg4[%c0_77, %c2_78, %c2_79, %c0_80, %c0_81] : memref<1x3x3x16x8xbf16, #tpu.memory_space<vmem>>, vector<1x1x1x16x8xbf16>
    %55 = vector.shape_cast %54 : vector<1x1x1x16x8xbf16> to vector<16x8xbf16>
    %cst_82 = arith.constant dense<0.000000e+00> : vector<16x128xf32>
    %56 = tpu.matmul %55, %53, %cst_82 {dimension_numbers = #tpu.dot_dimension_numbers<[1], [0], [0], [1], [0, 0, 1, 1], [], []>} : vector<16x8xbf16>, vector<8x128xbf16>, vector<16x128xf32> -> vector<16x128xf32>
    %57 = arith.addf %51, %56 : vector<16x128xf32>
    %c0_83 = arith.constant 0 : index
    %c0_84 = arith.constant 0 : index
    %58 = vector.load %arg7[%c0_83, %c0_84] : memref<16x128xf32, #tpu.memory_space<vmem>>, vector<16x128xf32>
    tpu.vector_store %arg7[%c0_83, %c0_84], %57 {strides = array<i32>} : memref<16x128xf32, #tpu.memory_space<vmem>>, vector<16x128xf32>,
    %c2_i32 = arith.constant 2 : i32
    %59 = arith.cmpi eq, %arg2, %c2_i32 : i32
    %60 = arith.extui %59 : i1 to i32
    %c0_i32_85 = arith.constant 0 : i32
    %61 = arith.cmpi ne, %60, %c0_i32_85 : i32
    scf.if %61 {
      %c0_86 = arith.constant 0 : index
      %c0_87 = arith.constant 0 : index
      %62 = vector.load %arg7[%c0_86, %c0_87] : memref<16x128xf32, #tpu.memory_space<vmem>>, vector<16x128xf32>
      %c0_88 = arith.constant 0 : index
      %c0_89 = arith.constant 0 : index
      %63 = vector.load %arg5[%c0_88, %c0_89] : memref<16x1xf32, #tpu.memory_space<vmem>>, vector<16x1xf32>
      %64 = vector.broadcast %63 : vector<16x1xf32> to vector<16x128xf32>
      %65 = arith.addf %62, %64 : vector<16x128xf32>
      %cst_90 = arith.constant 0.000000e+00 : f32
      %66 = vector.broadcast %cst_90 : f32 to vector<16x128xf32>
      %67 = arith.maximumf %65, %66 : vector<16x128xf32>
      %c0_91 = arith.constant 0 : index
      %c0_92 = arith.constant 0 : index
      %c0_93 = arith.constant 0 : index
      %c0_94 = arith.constant 0 : index
      %68 = vector.load %arg6[%c0_91, %c0_92, %c0_93, %c0_94] : memref<1x1x16x128xf32, #tpu.memory_space<vmem>>, vector<1x1x16x128xf32>
      %69 = vector.shape_cast %68 : vector<1x1x16x128xf32> to vector<16x128xf32>
      %70 = vector.shape_cast %67 : vector<16x128xf32> to vector<1x1x16x128xf32>
      tpu.vector_store %arg6[%c0_91, %c0_92, %c0_93, %c0_94], %70 {strides = array<i32>} : memref<1x1x16x128xf32, #tpu.memory_space<vmem>>, vector<1x1x16x128xf32>,
    } else {
    }
    return
  }
  func.func @transform_0(%arg0: i32, %arg1: i32, %arg2: i32) -> (i32, i32, i32, i32) {
    %0 = arith.addi %arg1, %arg2 : i32
    %c0_i32 = arith.constant 0 : i32
    %c0_i32_0 = arith.constant 0 : i32
    %c0_i32_1 = arith.constant 0 : i32
    return %arg0, %0, %c0_i32, %c0_i32_0 : i32, i32, i32, i32
  }
  func.func @transform_1(%arg0: i32, %arg1: i32, %arg2: i32) -> (i32, i32, i32, i32, i32) {
    %c0_i32 = arith.constant 0 : i32
    %c0_i32_0 = arith.constant 0 : i32
    %c0_i32_1 = arith.constant 0 : i32
    %c0_i32_2 = arith.constant 0 : i32
    %c0_i32_3 = arith.constant 0 : i32
    return %arg2, %c0_i32, %c0_i32_0, %c0_i32_1, %c0_i32_2 : i32, i32, i32, i32, i32
  }
  func.func @transform_2(%arg0: i32, %arg1: i32, %arg2: i32) -> (i32, i32) {
    %c0_i32 = arith.constant 0 : i32
    %c0_i32_0 = arith.constant 0 : i32
    %c0_i32_1 = arith.constant 0 : i32
    return %c0_i32, %c0_i32_0 : i32, i32
  }
  func.func @transform_3(%arg0: i32, %arg1: i32, %arg2: i32) -> (i32, i32, i32, i32) {
    %c0_i32 = arith.constant 0 : i32
    %c0_i32_0 = arith.constant 0 : i32
    %c0_i32_1 = arith.constant 0 : i32
    return %arg0, %arg1, %c0_i32, %c0_i32_0 : i32, i32, i32, i32
  }
}

module attributes {stable_mosaic.version = 11 : i64} {
  func.func @_conv3d_k3p1_kernel(%arg0: i32, %arg1: i32, %arg2: i32, %arg3: memref<1x1x16x256xbf16, #tpu.memory_space<vmem>>, %arg4: memref<1x3x3x16x16xbf16, #tpu.memory_space<vmem>>, %arg5: memref<16x1xf32, #tpu.memory_space<vmem>>, %arg6: memref<1x1x16x128xf32, #tpu.memory_space<vmem>>, %arg7: memref<16x128xf32, #tpu.memory_space<vmem>>) attributes {dimension_semantics = [#tpu.dimension_semantics<parallel>, #tpu.dimension_semantics<parallel>, #tpu.dimension_semantics<arbitrary>], iteration_bounds = array<i64: 2, 4, 3>, scalar_prefetch = 0 : i64, scratch_operands = 1 : i64, tpu.core_type = #tpu.core_type<tc>, window_params = [{transform_indices = @transform_0, window_bounds = array<i64: 1, 1, 16, 256>}, {transform_indices = @transform_1, window_bounds = array<i64: 1, 3, 3, 16, 16>}, {pipeline_mode = #tpu.pipeline_mode<synchronous>, transform_indices = @transform_2, window_bounds = array<i64: 16, 1>}, {transform_indices = @transform_3, window_bounds = array<i64: 1, 1, 16, 128>}]} {
    %c0_i32 = arith.constant 0 : i32
    %0 = arith.cmpi eq, %arg2, %c0_i32 : i32
    %1 = arith.extui %0 : i1 to i32
    %c0_i32_0 = arith.constant 0 : i32
    %2 = arith.cmpi ne, %1, %c0_i32_0 : i32
    scf.if %2 {
      %cst_86 = arith.constant 0.000000e+00 : f32
      %62 = vector.broadcast %cst_86 : f32 to vector<16x128xf32>
      %c0_87 = arith.constant 0 : index
      %c0_88 = arith.constant 0 : index
      %63 = vector.load %arg7[%c0_87, %c0_88] : memref<16x128xf32, #tpu.memory_space<vmem>>, vector<16x128xf32>
      tpu.vector_store %arg7[%c0_87, %c0_88], %62 {strides = array<i32>} : memref<16x128xf32, #tpu.memory_space<vmem>>, vector<16x128xf32>,
    } else {
    }
    %c0 = arith.constant 0 : index
    %c0_1 = arith.constant 0 : index
    %3 = vector.load %arg7[%c0, %c0_1] : memref<16x128xf32, #tpu.memory_space<vmem>>, vector<16x128xf32>
    %c0_2 = arith.constant 0 : index
    %c0_3 = arith.constant 0 : index
    %c0_4 = arith.constant 0 : index
    %c0_5 = arith.constant 0 : index
    %4 = vector.load %arg3[%c0_2, %c0_3, %c0_4, %c0_5] : memref<1x1x16x256xbf16, #tpu.memory_space<vmem>>, vector<1x1x16x128xbf16>
    %5 = vector.shape_cast %4 : vector<1x1x16x128xbf16> to vector<16x128xbf16>
    %c0_6 = arith.constant 0 : index
    %c0_7 = arith.constant 0 : index
    %c0_8 = arith.constant 0 : index
    %c0_9 = arith.constant 0 : index
    %c0_10 = arith.constant 0 : index
    %6 = vector.load %arg4[%c0_6, %c0_7, %c0_8, %c0_9, %c0_10] : memref<1x3x3x16x16xbf16, #tpu.memory_space<vmem>>, vector<1x1x1x16x16xbf16>
    %7 = vector.shape_cast %6 : vector<1x1x1x16x16xbf16> to vector<16x16xbf16>
    %cst = arith.constant dense<0.000000e+00> : vector<16x128xf32>
    %8 = tpu.matmul %7, %5, %cst {dimension_numbers = #tpu.dot_dimension_numbers<[1], [0], [0], [1], [0, 0, 1, 1], [], []>} : vector<16x16xbf16>, vector<16x128xbf16>, vector<16x128xf32> -> vector<16x128xf32>
    %9 = arith.addf %3, %8 : vector<16x128xf32>
    %c0_11 = arith.constant 0 : index
    %c0_12 = arith.constant 0 : index
    %c0_13 = arith.constant 0 : index
    %c1 = arith.constant 1 : index
    %10 = vector.load %arg3[%c0_11, %c0_12, %c0_13, %c1] : memref<1x1x16x256xbf16, #tpu.memory_space<vmem>>, vector<1x1x16x128xbf16>
    %11 = vector.shape_cast %10 : vector<1x1x16x128xbf16> to vector<16x128xbf16>
    %c0_14 = arith.constant 0 : index
    %c0_15 = arith.constant 0 : index
    %c1_16 = arith.constant 1 : index
    %c0_17 = arith.constant 0 : index
    %c0_18 = arith.constant 0 : index
    %12 = vector.load %arg4[%c0_14, %c0_15, %c1_16, %c0_17, %c0_18] : memref<1x3x3x16x16xbf16, #tpu.memory_space<vmem>>, vector<1x1x1x16x16xbf16>
    %13 = vector.shape_cast %12 : vector<1x1x1x16x16xbf16> to vector<16x16xbf16>
    %cst_19 = arith.constant dense<0.000000e+00> : vector<16x128xf32>
    %14 = tpu.matmul %13, %11, %cst_19 {dimension_numbers = #tpu.dot_dimension_numbers<[1], [0], [0], [1], [0, 0, 1, 1], [], []>} : vector<16x16xbf16>, vector<16x128xbf16>, vector<16x128xf32> -> vector<16x128xf32>
    %15 = arith.addf %9, %14 : vector<16x128xf32>
    %c0_20 = arith.constant 0 : index
    %c0_21 = arith.constant 0 : index
    %c0_22 = arith.constant 0 : index
    %c2 = arith.constant 2 : index
    %16 = vector.load %arg3[%c0_20, %c0_21, %c0_22, %c2] : memref<1x1x16x256xbf16, #tpu.memory_space<vmem>>, vector<1x1x16x128xbf16>
    %17 = vector.shape_cast %16 : vector<1x1x16x128xbf16> to vector<16x128xbf16>
    %c0_23 = arith.constant 0 : index
    %c0_24 = arith.constant 0 : index
    %c2_25 = arith.constant 2 : index
    %c0_26 = arith.constant 0 : index
    %c0_27 = arith.constant 0 : index
    %18 = vector.load %arg4[%c0_23, %c0_24, %c2_25, %c0_26, %c0_27] : memref<1x3x3x16x16xbf16, #tpu.memory_space<vmem>>, vector<1x1x1x16x16xbf16>
    %19 = vector.shape_cast %18 : vector<1x1x1x16x16xbf16> to vector<16x16xbf16>
    %cst_28 = arith.constant dense<0.000000e+00> : vector<16x128xf32>
    %20 = tpu.matmul %19, %17, %cst_28 {dimension_numbers = #tpu.dot_dimension_numbers<[1], [0], [0], [1], [0, 0, 1, 1], [], []>} : vector<16x16xbf16>, vector<16x128xbf16>, vector<16x128xf32> -> vector<16x128xf32>
    %21 = arith.addf %15, %20 : vector<16x128xf32>
    %c0_29 = arith.constant 0 : index
    %c0_30 = arith.constant 0 : index
    %c0_31 = arith.constant 0 : index
    %c6 = arith.constant 6 : index
    %22 = vector.load %arg3[%c0_29, %c0_30, %c0_31, %c6] : memref<1x1x16x256xbf16, #tpu.memory_space<vmem>>, vector<1x1x16x128xbf16>
    %23 = vector.shape_cast %22 : vector<1x1x16x128xbf16> to vector<16x128xbf16>
    %c0_32 = arith.constant 0 : index
    %c1_33 = arith.constant 1 : index
    %c0_34 = arith.constant 0 : index
    %c0_35 = arith.constant 0 : index
    %c0_36 = arith.constant 0 : index
    %24 = vector.load %arg4[%c0_32, %c1_33, %c0_34, %c0_35, %c0_36] : memref<1x3x3x16x16xbf16, #tpu.memory_space<vmem>>, vector<1x1x1x16x16xbf16>
    %25 = vector.shape_cast %24 : vector<1x1x1x16x16xbf16> to vector<16x16xbf16>
    %cst_37 = arith.constant dense<0.000000e+00> : vector<16x128xf32>
    %26 = tpu.matmul %25, %23, %cst_37 {dimension_numbers = #tpu.dot_dimension_numbers<[1], [0], [0], [1], [0, 0, 1, 1], [], []>} : vector<16x16xbf16>, vector<16x128xbf16>, vector<16x128xf32> -> vector<16x128xf32>
    %27 = arith.addf %21, %26 : vector<16x128xf32>
    %c0_38 = arith.constant 0 : index
    %c0_39 = arith.constant 0 : index
    %c0_40 = arith.constant 0 : index
    %c7 = arith.constant 7 : index
    %28 = vector.load %arg3[%c0_38, %c0_39, %c0_40, %c7] : memref<1x1x16x256xbf16, #tpu.memory_space<vmem>>, vector<1x1x16x128xbf16>
    %29 = vector.shape_cast %28 : vector<1x1x16x128xbf16> to vector<16x128xbf16>
    %c0_41 = arith.constant 0 : index
    %c1_42 = arith.constant 1 : index
    %c1_43 = arith.constant 1 : index
    %c0_44 = arith.constant 0 : index
    %c0_45 = arith.constant 0 : index
    %30 = vector.load %arg4[%c0_41, %c1_42, %c1_43, %c0_44, %c0_45] : memref<1x3x3x16x16xbf16, #tpu.memory_space<vmem>>, vector<1x1x1x16x16xbf16>
    %31 = vector.shape_cast %30 : vector<1x1x1x16x16xbf16> to vector<16x16xbf16>
    %cst_46 = arith.constant dense<0.000000e+00> : vector<16x128xf32>
    %32 = tpu.matmul %31, %29, %cst_46 {dimension_numbers = #tpu.dot_dimension_numbers<[1], [0], [0], [1], [0, 0, 1, 1], [], []>} : vector<16x16xbf16>, vector<16x128xbf16>, vector<16x128xf32> -> vector<16x128xf32>
    %33 = arith.addf %27, %32 : vector<16x128xf32>
    %c0_47 = arith.constant 0 : index
    %c0_48 = arith.constant 0 : index
    %c0_49 = arith.constant 0 : index
    %c8 = arith.constant 8 : index
    %34 = vector.load %arg3[%c0_47, %c0_48, %c0_49, %c8] : memref<1x1x16x256xbf16, #tpu.memory_space<vmem>>, vector<1x1x16x128xbf16>
    %35 = vector.shape_cast %34 : vector<1x1x16x128xbf16> to vector<16x128xbf16>
    %c0_50 = arith.constant 0 : index
    %c1_51 = arith.constant 1 : index
    %c2_52 = arith.constant 2 : index
    %c0_53 = arith.constant 0 : index
    %c0_54 = arith.constant 0 : index
    %36 = vector.load %arg4[%c0_50, %c1_51, %c2_52, %c0_53, %c0_54] : memref<1x3x3x16x16xbf16, #tpu.memory_space<vmem>>, vector<1x1x1x16x16xbf16>
    %37 = vector.shape_cast %36 : vector<1x1x1x16x16xbf16> to vector<16x16xbf16>
    %cst_55 = arith.constant dense<0.000000e+00> : vector<16x128xf32>
    %38 = tpu.matmul %37, %35, %cst_55 {dimension_numbers = #tpu.dot_dimension_numbers<[1], [0], [0], [1], [0, 0, 1, 1], [], []>} : vector<16x16xbf16>, vector<16x128xbf16>, vector<16x128xf32> -> vector<16x128xf32>
    %39 = arith.addf %33, %38 : vector<16x128xf32>
    %c0_56 = arith.constant 0 : index
    %c0_57 = arith.constant 0 : index
    %c0_58 = arith.constant 0 : index
    %c12 = arith.constant 12 : index
    %40 = vector.load %arg3[%c0_56, %c0_57, %c0_58, %c12] : memref<1x1x16x256xbf16, #tpu.memory_space<vmem>>, vector<1x1x16x128xbf16>
    %41 = vector.shape_cast %40 : vector<1x1x16x128xbf16> to vector<16x128xbf16>
    %c0_59 = arith.constant 0 : index
    %c2_60 = arith.constant 2 : index
    %c0_61 = arith.constant 0 : index
    %c0_62 = arith.constant 0 : index
    %c0_63 = arith.constant 0 : index
    %42 = vector.load %arg4[%c0_59, %c2_60, %c0_61, %c0_62, %c0_63] : memref<1x3x3x16x16xbf16, #tpu.memory_space<vmem>>, vector<1x1x1x16x16xbf16>
    %43 = vector.shape_cast %42 : vector<1x1x1x16x16xbf16> to vector<16x16xbf16>
    %cst_64 = arith.constant dense<0.000000e+00> : vector<16x128xf32>
    %44 = tpu.matmul %43, %41, %cst_64 {dimension_numbers = #tpu.dot_dimension_numbers<[1], [0], [0], [1], [0, 0, 1, 1], [], []>} : vector<16x16xbf16>, vector<16x128xbf16>, vector<16x128xf32> -> vector<16x128xf32>
    %45 = arith.addf %39, %44 : vector<16x128xf32>
    %c0_65 = arith.constant 0 : index
    %c0_66 = arith.constant 0 : index
    %c0_67 = arith.constant 0 : index
    %c13 = arith.constant 13 : index
    %46 = vector.load %arg3[%c0_65, %c0_66, %c0_67, %c13] : memref<1x1x16x256xbf16, #tpu.memory_space<vmem>>, vector<1x1x16x128xbf16>
    %47 = vector.shape_cast %46 : vector<1x1x16x128xbf16> to vector<16x128xbf16>
    %c0_68 = arith.constant 0 : index
    %c2_69 = arith.constant 2 : index
    %c1_70 = arith.constant 1 : index
    %c0_71 = arith.constant 0 : index
    %c0_72 = arith.constant 0 : index
    %48 = vector.load %arg4[%c0_68, %c2_69, %c1_70, %c0_71, %c0_72] : memref<1x3x3x16x16xbf16, #tpu.memory_space<vmem>>, vector<1x1x1x16x16xbf16>
    %49 = vector.shape_cast %48 : vector<1x1x1x16x16xbf16> to vector<16x16xbf16>
    %cst_73 = arith.constant dense<0.000000e+00> : vector<16x128xf32>
    %50 = tpu.matmul %49, %47, %cst_73 {dimension_numbers = #tpu.dot_dimension_numbers<[1], [0], [0], [1], [0, 0, 1, 1], [], []>} : vector<16x16xbf16>, vector<16x128xbf16>, vector<16x128xf32> -> vector<16x128xf32>
    %51 = arith.addf %45, %50 : vector<16x128xf32>
    %c0_74 = arith.constant 0 : index
    %c0_75 = arith.constant 0 : index
    %c0_76 = arith.constant 0 : index
    %c14 = arith.constant 14 : index
    %52 = vector.load %arg3[%c0_74, %c0_75, %c0_76, %c14] : memref<1x1x16x256xbf16, #tpu.memory_space<vmem>>, vector<1x1x16x128xbf16>
    %53 = vector.shape_cast %52 : vector<1x1x16x128xbf16> to vector<16x128xbf16>
    %c0_77 = arith.constant 0 : index
    %c2_78 = arith.constant 2 : index
    %c2_79 = arith.constant 2 : index
    %c0_80 = arith.constant 0 : index
    %c0_81 = arith.constant 0 : index
    %54 = vector.load %arg4[%c0_77, %c2_78, %c2_79, %c0_80, %c0_81] : memref<1x3x3x16x16xbf16, #tpu.memory_space<vmem>>, vector<1x1x1x16x16xbf16>
    %55 = vector.shape_cast %54 : vector<1x1x1x16x16xbf16> to vector<16x16xbf16>
    %cst_82 = arith.constant dense<0.000000e+00> : vector<16x128xf32>
    %56 = tpu.matmul %55, %53, %cst_82 {dimension_numbers = #tpu.dot_dimension_numbers<[1], [0], [0], [1], [0, 0, 1, 1], [], []>} : vector<16x16xbf16>, vector<16x128xbf16>, vector<16x128xf32> -> vector<16x128xf32>
    %57 = arith.addf %51, %56 : vector<16x128xf32>
    %c0_83 = arith.constant 0 : index
    %c0_84 = arith.constant 0 : index
    %58 = vector.load %arg7[%c0_83, %c0_84] : memref<16x128xf32, #tpu.memory_space<vmem>>, vector<16x128xf32>
    tpu.vector_store %arg7[%c0_83, %c0_84], %57 {strides = array<i32>} : memref<16x128xf32, #tpu.memory_space<vmem>>, vector<16x128xf32>,
    %c2_i32 = arith.constant 2 : i32
    %59 = arith.cmpi eq, %arg2, %c2_i32 : i32
    %60 = arith.extui %59 : i1 to i32
    %c0_i32_85 = arith.constant 0 : i32
    %61 = arith.cmpi ne, %60, %c0_i32_85 : i32
    scf.if %61 {
      %c0_86 = arith.constant 0 : index
      %c0_87 = arith.constant 0 : index
      %62 = vector.load %arg7[%c0_86, %c0_87] : memref<16x128xf32, #tpu.memory_space<vmem>>, vector<16x128xf32>
      %c0_88 = arith.constant 0 : index
      %c0_89 = arith.constant 0 : index
      %63 = vector.load %arg5[%c0_88, %c0_89] : memref<16x1xf32, #tpu.memory_space<vmem>>, vector<16x1xf32>
      %64 = vector.broadcast %63 : vector<16x1xf32> to vector<16x128xf32>
      %65 = arith.addf %62, %64 : vector<16x128xf32>
      %cst_90 = arith.constant 0.000000e+00 : f32
      %66 = vector.broadcast %cst_90 : f32 to vector<16x128xf32>
      %67 = arith.maximumf %65, %66 : vector<16x128xf32>
      %c0_91 = arith.constant 0 : index
      %c0_92 = arith.constant 0 : index
      %c0_93 = arith.constant 0 : index
      %c0_94 = arith.constant 0 : index
      %68 = vector.load %arg6[%c0_91, %c0_92, %c0_93, %c0_94] : memref<1x1x16x128xf32, #tpu.memory_space<vmem>>, vector<1x1x16x128xf32>
      %69 = vector.shape_cast %68 : vector<1x1x16x128xf32> to vector<16x128xf32>
      %70 = vector.shape_cast %67 : vector<16x128xf32> to vector<1x1x16x128xf32>
      tpu.vector_store %arg6[%c0_91, %c0_92, %c0_93, %c0_94], %70 {strides = array<i32>} : memref<1x1x16x128xf32, #tpu.memory_space<vmem>>, vector<1x1x16x128xf32>,
    } else {
    }
    return
  }
  func.func @transform_0(%arg0: i32, %arg1: i32, %arg2: i32) -> (i32, i32, i32, i32) {
    %0 = arith.addi %arg1, %arg2 : i32
    %c0_i32 = arith.constant 0 : i32
    %c0_i32_0 = arith.constant 0 : i32
    %c0_i32_1 = arith.constant 0 : i32
    return %arg0, %0, %c0_i32, %c0_i32_0 : i32, i32, i32, i32
  }
  func.func @transform_1(%arg0: i32, %arg1: i32, %arg2: i32) -> (i32, i32, i32, i32, i32) {
    %c0_i32 = arith.constant 0 : i32
    %c0_i32_0 = arith.constant 0 : i32
    %c0_i32_1 = arith.constant 0 : i32
    %c0_i32_2 = arith.constant 0 : i32
    %c0_i32_3 = arith.constant 0 : i32
    return %arg2, %c0_i32, %c0_i32_0, %c0_i32_1, %c0_i32_2 : i32, i32, i32, i32, i32
  }
  func.func @transform_2(%arg0: i32, %arg1: i32, %arg2: i32) -> (i32, i32) {
    %c0_i32 = arith.constant 0 : i32
    %c0_i32_0 = arith.constant 0 : i32
    %c0_i32_1 = arith.constant 0 : i32
    return %c0_i32, %c0_i32_0 : i32, i32
  }
  func.func @transform_3(%arg0: i32, %arg1: i32, %arg2: i32) -> (i32, i32, i32, i32) {
    %c0_i32 = arith.constant 0 : i32
    %c0_i32_0 = arith.constant 0 : i32
    %c0_i32_1 = arith.constant 0 : i32
    return %arg0, %arg1, %c0_i32, %c0_i32_0 : i32, i32, i32, i32
  }
}

module attributes {stable_mosaic.version = 11 : i64} {
  func.func @_conv3d_k3p1_kernel(%arg0: i32, %arg1: i32, %arg2: i32, %arg3: memref<1x1x16x256xbf16, #tpu.memory_space<vmem>>, %arg4: memref<1x3x3x16x16xbf16, #tpu.memory_space<vmem>>, %arg5: memref<16x1xf32, #tpu.memory_space<vmem>>, %arg6: memref<1x1x16x128xf32, #tpu.memory_space<vmem>>, %arg7: memref<16x128xf32, #tpu.memory_space<vmem>>) attributes {dimension_semantics = [#tpu.dimension_semantics<parallel>, #tpu.dimension_semantics<parallel>, #tpu.dimension_semantics<arbitrary>], iteration_bounds = array<i64: 2, 2, 3>, scalar_prefetch = 0 : i64, scratch_operands = 1 : i64, tpu.core_type = #tpu.core_type<tc>, window_params = [{transform_indices = @transform_0, window_bounds = array<i64: 1, 1, 16, 256>}, {transform_indices = @transform_1, window_bounds = array<i64: 1, 3, 3, 16, 16>}, {pipeline_mode = #tpu.pipeline_mode<synchronous>, transform_indices = @transform_2, window_bounds = array<i64: 16, 1>}, {transform_indices = @transform_3, window_bounds = array<i64: 1, 1, 16, 128>}]} {
    %c0_i32 = arith.constant 0 : i32
    %0 = arith.cmpi eq, %arg2, %c0_i32 : i32
    %1 = arith.extui %0 : i1 to i32
    %c0_i32_0 = arith.constant 0 : i32
    %2 = arith.cmpi ne, %1, %c0_i32_0 : i32
    scf.if %2 {
      %cst_86 = arith.constant 0.000000e+00 : f32
      %62 = vector.broadcast %cst_86 : f32 to vector<16x128xf32>
      %c0_87 = arith.constant 0 : index
      %c0_88 = arith.constant 0 : index
      %63 = vector.load %arg7[%c0_87, %c0_88] : memref<16x128xf32, #tpu.memory_space<vmem>>, vector<16x128xf32>
      tpu.vector_store %arg7[%c0_87, %c0_88], %62 {strides = array<i32>} : memref<16x128xf32, #tpu.memory_space<vmem>>, vector<16x128xf32>,
    } else {
    }
    %c0 = arith.constant 0 : index
    %c0_1 = arith.constant 0 : index
    %3 = vector.load %arg7[%c0, %c0_1] : memref<16x128xf32, #tpu.memory_space<vmem>>, vector<16x128xf32>
    %c0_2 = arith.constant 0 : index
    %c0_3 = arith.constant 0 : index
    %c0_4 = arith.constant 0 : index
    %c0_5 = arith.constant 0 : index
    %4 = vector.load %arg3[%c0_2, %c0_3, %c0_4, %c0_5] : memref<1x1x16x256xbf16, #tpu.memory_space<vmem>>, vector<1x1x16x128xbf16>
    %5 = vector.shape_cast %4 : vector<1x1x16x128xbf16> to vector<16x128xbf16>
    %c0_6 = arith.constant 0 : index
    %c0_7 = arith.constant 0 : index
    %c0_8 = arith.constant 0 : index
    %c0_9 = arith.constant 0 : index
    %c0_10 = arith.constant 0 : index
    %6 = vector.load %arg4[%c0_6, %c0_7, %c0_8, %c0_9, %c0_10] : memref<1x3x3x16x16xbf16, #tpu.memory_space<vmem>>, vector<1x1x1x16x16xbf16>
    %7 = vector.shape_cast %6 : vector<1x1x1x16x16xbf16> to vector<16x16xbf16>
    %cst = arith.constant dense<0.000000e+00> : vector<16x128xf32>
    %8 = tpu.matmul %7, %5, %cst {dimension_numbers = #tpu.dot_dimension_numbers<[1], [0], [0], [1], [0, 0, 1, 1], [], []>} : vector<16x16xbf16>, vector<16x128xbf16>, vector<16x128xf32> -> vector<16x128xf32>
    %9 = arith.addf %3, %8 : vector<16x128xf32>
    %c0_11 = arith.constant 0 : index
    %c0_12 = arith.constant 0 : index
    %c0_13 = arith.constant 0 : index
    %c1 = arith.constant 1 : index
    %10 = vector.load %arg3[%c0_11, %c0_12, %c0_13, %c1] : memref<1x1x16x256xbf16, #tpu.memory_space<vmem>>, vector<1x1x16x128xbf16>
    %11 = vector.shape_cast %10 : vector<1x1x16x128xbf16> to vector<16x128xbf16>
    %c0_14 = arith.constant 0 : index
    %c0_15 = arith.constant 0 : index
    %c1_16 = arith.constant 1 : index
    %c0_17 = arith.constant 0 : index
    %c0_18 = arith.constant 0 : index
    %12 = vector.load %arg4[%c0_14, %c0_15, %c1_16, %c0_17, %c0_18] : memref<1x3x3x16x16xbf16, #tpu.memory_space<vmem>>, vector<1x1x1x16x16xbf16>
    %13 = vector.shape_cast %12 : vector<1x1x1x16x16xbf16> to vector<16x16xbf16>
    %cst_19 = arith.constant dense<0.000000e+00> : vector<16x128xf32>
    %14 = tpu.matmul %13, %11, %cst_19 {dimension_numbers = #tpu.dot_dimension_numbers<[1], [0], [0], [1], [0, 0, 1, 1], [], []>} : vector<16x16xbf16>, vector<16x128xbf16>, vector<16x128xf32> -> vector<16x128xf32>
    %15 = arith.addf %9, %14 : vector<16x128xf32>
    %c0_20 = arith.constant 0 : index
    %c0_21 = arith.constant 0 : index
    %c0_22 = arith.constant 0 : index
    %c2 = arith.constant 2 : index
    %16 = vector.load %arg3[%c0_20, %c0_21, %c0_22, %c2] : memref<1x1x16x256xbf16, #tpu.memory_space<vmem>>, vector<1x1x16x128xbf16>
    %17 = vector.shape_cast %16 : vector<1x1x16x128xbf16> to vector<16x128xbf16>
    %c0_23 = arith.constant 0 : index
    %c0_24 = arith.constant 0 : index
    %c2_25 = arith.constant 2 : index
    %c0_26 = arith.constant 0 : index
    %c0_27 = arith.constant 0 : index
    %18 = vector.load %arg4[%c0_23, %c0_24, %c2_25, %c0_26, %c0_27] : memref<1x3x3x16x16xbf16, #tpu.memory_space<vmem>>, vector<1x1x1x16x16xbf16>
    %19 = vector.shape_cast %18 : vector<1x1x1x16x16xbf16> to vector<16x16xbf16>
    %cst_28 = arith.constant dense<0.000000e+00> : vector<16x128xf32>
    %20 = tpu.matmul %19, %17, %cst_28 {dimension_numbers = #tpu.dot_dimension_numbers<[1], [0], [0], [1], [0, 0, 1, 1], [], []>} : vector<16x16xbf16>, vector<16x128xbf16>, vector<16x128xf32> -> vector<16x128xf32>
    %21 = arith.addf %15, %20 : vector<16x128xf32>
    %c0_29 = arith.constant 0 : index
    %c0_30 = arith.constant 0 : index
    %c0_31 = arith.constant 0 : index
    %c4 = arith.constant 4 : index
    %22 = vector.load %arg3[%c0_29, %c0_30, %c0_31, %c4] : memref<1x1x16x256xbf16, #tpu.memory_space<vmem>>, vector<1x1x16x128xbf16>
    %23 = vector.shape_cast %22 : vector<1x1x16x128xbf16> to vector<16x128xbf16>
    %c0_32 = arith.constant 0 : index
    %c1_33 = arith.constant 1 : index
    %c0_34 = arith.constant 0 : index
    %c0_35 = arith.constant 0 : index
    %c0_36 = arith.constant 0 : index
    %24 = vector.load %arg4[%c0_32, %c1_33, %c0_34, %c0_35, %c0_36] : memref<1x3x3x16x16xbf16, #tpu.memory_space<vmem>>, vector<1x1x1x16x16xbf16>
    %25 = vector.shape_cast %24 : vector<1x1x1x16x16xbf16> to vector<16x16xbf16>
    %cst_37 = arith.constant dense<0.000000e+00> : vector<16x128xf32>
    %26 = tpu.matmul %25, %23, %cst_37 {dimension_numbers = #tpu.dot_dimension_numbers<[1], [0], [0], [1], [0, 0, 1, 1], [], []>} : vector<16x16xbf16>, vector<16x128xbf16>, vector<16x128xf32> -> vector<16x128xf32>
    %27 = arith.addf %21, %26 : vector<16x128xf32>
    %c0_38 = arith.constant 0 : index
    %c0_39 = arith.constant 0 : index
    %c0_40 = arith.constant 0 : index
    %c5 = arith.constant 5 : index
    %28 = vector.load %arg3[%c0_38, %c0_39, %c0_40, %c5] : memref<1x1x16x256xbf16, #tpu.memory_space<vmem>>, vector<1x1x16x128xbf16>
    %29 = vector.shape_cast %28 : vector<1x1x16x128xbf16> to vector<16x128xbf16>
    %c0_41 = arith.constant 0 : index
    %c1_42 = arith.constant 1 : index
    %c1_43 = arith.constant 1 : index
    %c0_44 = arith.constant 0 : index
    %c0_45 = arith.constant 0 : index
    %30 = vector.load %arg4[%c0_41, %c1_42, %c1_43, %c0_44, %c0_45] : memref<1x3x3x16x16xbf16, #tpu.memory_space<vmem>>, vector<1x1x1x16x16xbf16>
    %31 = vector.shape_cast %30 : vector<1x1x1x16x16xbf16> to vector<16x16xbf16>
    %cst_46 = arith.constant dense<0.000000e+00> : vector<16x128xf32>
    %32 = tpu.matmul %31, %29, %cst_46 {dimension_numbers = #tpu.dot_dimension_numbers<[1], [0], [0], [1], [0, 0, 1, 1], [], []>} : vector<16x16xbf16>, vector<16x128xbf16>, vector<16x128xf32> -> vector<16x128xf32>
    %33 = arith.addf %27, %32 : vector<16x128xf32>
    %c0_47 = arith.constant 0 : index
    %c0_48 = arith.constant 0 : index
    %c0_49 = arith.constant 0 : index
    %c6 = arith.constant 6 : index
    %34 = vector.load %arg3[%c0_47, %c0_48, %c0_49, %c6] : memref<1x1x16x256xbf16, #tpu.memory_space<vmem>>, vector<1x1x16x128xbf16>
    %35 = vector.shape_cast %34 : vector<1x1x16x128xbf16> to vector<16x128xbf16>
    %c0_50 = arith.constant 0 : index
    %c1_51 = arith.constant 1 : index
    %c2_52 = arith.constant 2 : index
    %c0_53 = arith.constant 0 : index
    %c0_54 = arith.constant 0 : index
    %36 = vector.load %arg4[%c0_50, %c1_51, %c2_52, %c0_53, %c0_54] : memref<1x3x3x16x16xbf16, #tpu.memory_space<vmem>>, vector<1x1x1x16x16xbf16>
    %37 = vector.shape_cast %36 : vector<1x1x1x16x16xbf16> to vector<16x16xbf16>
    %cst_55 = arith.constant dense<0.000000e+00> : vector<16x128xf32>
    %38 = tpu.matmul %37, %35, %cst_55 {dimension_numbers = #tpu.dot_dimension_numbers<[1], [0], [0], [1], [0, 0, 1, 1], [], []>} : vector<16x16xbf16>, vector<16x128xbf16>, vector<16x128xf32> -> vector<16x128xf32>
    %39 = arith.addf %33, %38 : vector<16x128xf32>
    %c0_56 = arith.constant 0 : index
    %c0_57 = arith.constant 0 : index
    %c0_58 = arith.constant 0 : index
    %c8 = arith.constant 8 : index
    %40 = vector.load %arg3[%c0_56, %c0_57, %c0_58, %c8] : memref<1x1x16x256xbf16, #tpu.memory_space<vmem>>, vector<1x1x16x128xbf16>
    %41 = vector.shape_cast %40 : vector<1x1x16x128xbf16> to vector<16x128xbf16>
    %c0_59 = arith.constant 0 : index
    %c2_60 = arith.constant 2 : index
    %c0_61 = arith.constant 0 : index
    %c0_62 = arith.constant 0 : index
    %c0_63 = arith.constant 0 : index
    %42 = vector.load %arg4[%c0_59, %c2_60, %c0_61, %c0_62, %c0_63] : memref<1x3x3x16x16xbf16, #tpu.memory_space<vmem>>, vector<1x1x1x16x16xbf16>
    %43 = vector.shape_cast %42 : vector<1x1x1x16x16xbf16> to vector<16x16xbf16>
    %cst_64 = arith.constant dense<0.000000e+00> : vector<16x128xf32>
    %44 = tpu.matmul %43, %41, %cst_64 {dimension_numbers = #tpu.dot_dimension_numbers<[1], [0], [0], [1], [0, 0, 1, 1], [], []>} : vector<16x16xbf16>, vector<16x128xbf16>, vector<16x128xf32> -> vector<16x128xf32>
    %45 = arith.addf %39, %44 : vector<16x128xf32>
    %c0_65 = arith.constant 0 : index
    %c0_66 = arith.constant 0 : index
    %c0_67 = arith.constant 0 : index
    %c9 = arith.constant 9 : index
    %46 = vector.load %arg3[%c0_65, %c0_66, %c0_67, %c9] : memref<1x1x16x256xbf16, #tpu.memory_space<vmem>>, vector<1x1x16x128xbf16>
    %47 = vector.shape_cast %46 : vector<1x1x16x128xbf16> to vector<16x128xbf16>
    %c0_68 = arith.constant 0 : index
    %c2_69 = arith.constant 2 : index
    %c1_70 = arith.constant 1 : index
    %c0_71 = arith.constant 0 : index
    %c0_72 = arith.constant 0 : index
    %48 = vector.load %arg4[%c0_68, %c2_69, %c1_70, %c0_71, %c0_72] : memref<1x3x3x16x16xbf16, #tpu.memory_space<vmem>>, vector<1x1x1x16x16xbf16>
    %49 = vector.shape_cast %48 : vector<1x1x1x16x16xbf16> to vector<16x16xbf16>
    %cst_73 = arith.constant dense<0.000000e+00> : vector<16x128xf32>
    %50 = tpu.matmul %49, %47, %cst_73 {dimension_numbers = #tpu.dot_dimension_numbers<[1], [0], [0], [1], [0, 0, 1, 1], [], []>} : vector<16x16xbf16>, vector<16x128xbf16>, vector<16x128xf32> -> vector<16x128xf32>
    %51 = arith.addf %45, %50 : vector<16x128xf32>
    %c0_74 = arith.constant 0 : index
    %c0_75 = arith.constant 0 : index
    %c0_76 = arith.constant 0 : index
    %c10 = arith.constant 10 : index
    %52 = vector.load %arg3[%c0_74, %c0_75, %c0_76, %c10] : memref<1x1x16x256xbf16, #tpu.memory_space<vmem>>, vector<1x1x16x128xbf16>
    %53 = vector.shape_cast %52 : vector<1x1x16x128xbf16> to vector<16x128xbf16>
    %c0_77 = arith.constant 0 : index
    %c2_78 = arith.constant 2 : index
    %c2_79 = arith.constant 2 : index
    %c0_80 = arith.constant 0 : index
    %c0_81 = arith.constant 0 : index
    %54 = vector.load %arg4[%c0_77, %c2_78, %c2_79, %c0_80, %c0_81] : memref<1x3x3x16x16xbf16, #tpu.memory_space<vmem>>, vector<1x1x1x16x16xbf16>
    %55 = vector.shape_cast %54 : vector<1x1x1x16x16xbf16> to vector<16x16xbf16>
    %cst_82 = arith.constant dense<0.000000e+00> : vector<16x128xf32>
    %56 = tpu.matmul %55, %53, %cst_82 {dimension_numbers = #tpu.dot_dimension_numbers<[1], [0], [0], [1], [0, 0, 1, 1], [], []>} : vector<16x16xbf16>, vector<16x128xbf16>, vector<16x128xf32> -> vector<16x128xf32>
    %57 = arith.addf %51, %56 : vector<16x128xf32>
    %c0_83 = arith.constant 0 : index
    %c0_84 = arith.constant 0 : index
    %58 = vector.load %arg7[%c0_83, %c0_84] : memref<16x128xf32, #tpu.memory_space<vmem>>, vector<16x128xf32>
    tpu.vector_store %arg7[%c0_83, %c0_84], %57 {strides = array<i32>} : memref<16x128xf32, #tpu.memory_space<vmem>>, vector<16x128xf32>,
    %c2_i32 = arith.constant 2 : i32
    %59 = arith.cmpi eq, %arg2, %c2_i32 : i32
    %60 = arith.extui %59 : i1 to i32
    %c0_i32_85 = arith.constant 0 : i32
    %61 = arith.cmpi ne, %60, %c0_i32_85 : i32
    scf.if %61 {
      %c0_86 = arith.constant 0 : index
      %c0_87 = arith.constant 0 : index
      %62 = vector.load %arg7[%c0_86, %c0_87] : memref<16x128xf32, #tpu.memory_space<vmem>>, vector<16x128xf32>
      %c0_88 = arith.constant 0 : index
      %c0_89 = arith.constant 0 : index
      %63 = vector.load %arg5[%c0_88, %c0_89] : memref<16x1xf32, #tpu.memory_space<vmem>>, vector<16x1xf32>
      %64 = vector.broadcast %63 : vector<16x1xf32> to vector<16x128xf32>
      %65 = arith.addf %62, %64 : vector<16x128xf32>
      %cst_90 = arith.constant 0.000000e+00 : f32
      %66 = vector.broadcast %cst_90 : f32 to vector<16x128xf32>
      %67 = arith.maximumf %65, %66 : vector<16x128xf32>
      %c0_91 = arith.constant 0 : index
      %c0_92 = arith.constant 0 : index
      %c0_93 = arith.constant 0 : index
      %c0_94 = arith.constant 0 : index
      %68 = vector.load %arg6[%c0_91, %c0_92, %c0_93, %c0_94] : memref<1x1x16x128xf32, #tpu.memory_space<vmem>>, vector<1x1x16x128xf32>
      %69 = vector.shape_cast %68 : vector<1x1x16x128xf32> to vector<16x128xf32>
      %70 = vector.shape_cast %67 : vector<16x128xf32> to vector<1x1x16x128xf32>
      tpu.vector_store %arg6[%c0_91, %c0_92, %c0_93, %c0_94], %70 {strides = array<i32>} : memref<1x1x16x128xf32, #tpu.memory_space<vmem>>, vector<1x1x16x128xf32>,
    } else {
    }
    return
  }
  func.func @transform_0(%arg0: i32, %arg1: i32, %arg2: i32) -> (i32, i32, i32, i32) {
    %0 = arith.addi %arg1, %arg2 : i32
    %c0_i32 = arith.constant 0 : i32
    %c0_i32_0 = arith.constant 0 : i32
    %c0_i32_1 = arith.constant 0 : i32
    return %arg0, %0, %c0_i32, %c0_i32_0 : i32, i32, i32, i32
  }
  func.func @transform_1(%arg0: i32, %arg1: i32, %arg2: i32) -> (i32, i32, i32, i32, i32) {
    %c0_i32 = arith.constant 0 : i32
    %c0_i32_0 = arith.constant 0 : i32
    %c0_i32_1 = arith.constant 0 : i32
    %c0_i32_2 = arith.constant 0 : i32
    %c0_i32_3 = arith.constant 0 : i32
    return %arg2, %c0_i32, %c0_i32_0, %c0_i32_1, %c0_i32_2 : i32, i32, i32, i32, i32
  }
  func.func @transform_2(%arg0: i32, %arg1: i32, %arg2: i32) -> (i32, i32) {
    %c0_i32 = arith.constant 0 : i32
    %c0_i32_0 = arith.constant 0 : i32
    %c0_i32_1 = arith.constant 0 : i32
    return %c0_i32, %c0_i32_0 : i32, i32
  }
  func.func @transform_3(%arg0: i32, %arg1: i32, %arg2: i32) -> (i32, i32, i32, i32) {
    %c0_i32 = arith.constant 0 : i32
    %c0_i32_0 = arith.constant 0 : i32
    %c0_i32_1 = arith.constant 0 : i32
    return %arg0, %arg1, %c0_i32, %c0_i32_0 : i32, i32, i32, i32
  }
}

</mosaic_0001>

<llo_original>
// kernel: _lambda_.8
$region0: #{_lambda_.8}
  #allocation0 [shape = 'u32[]', space=smem, size = 0x4, offset = 0x4, fixed_abs, tag = 'smem constant byte address 0x4 - core index']
  #allocation1 [shape = 'u32[144,128]{1,0:T(1,128)}', space=vmem, size = 0x12000, scoped, tag = 'internal scratch']
  #allocation2 [shape = 'f32[4,1152]{1,0:T(4,128)}', space=vmem, size = 0x4800, scoped, tag = 'scratch operand']
  %s0 = inlined_call_operand.vmem [shape: bf16[2,34,1,1280], index: 0, kind: input, shape index: {}]
  %s1 = inlined_call_operand.vmem [shape: bf16[3,3,3,4,1], index: 1, kind: input, shape index: {}]
  %s2 = inlined_call_operand.vmem [shape: f32[4,1], index: 2, kind: input, shape index: {}]
  %s3 = inlined_call_operand.vmem [shape: f32[2,32,4,1152], index: 3, kind: output, shape index: {}]
  %s4 = sld [smem:[#allocation0]]
  $region53: #{_lambda_.8} parent=0
    _
  %s6 = ssub.s32 1, %s4
  %s7 = scalar_select 0, %s6, %s4
  loop: start=0, step=1, limit=194
  $region2: #{_lambda_.8} parent=0 // loop_pre_header
    _
  $region3: #{_lambda_.8} parent=0 // loop_header
    %s9 = sphi 0, %s13
    %p10 = scmp.ge.s32.totalorder %s9, 194
    %s16 = sphi 0, %s35
    %s17 = sphi 0, %s31
    %s18 = sphi 0, %s27
    %s19 = sphi 0, %s16
    %s20 = sphi 0, %s17
    %s21 = sphi 0, %s18
    %s22 = sphi 0, %s19
    %s23 = sphi 0, %s20
    %s24 = sphi 0, %s21
    %s42 = sphi 0, %s44
    %s45 = sphi 0, %s42
    %s46 = sphi 0, %s45
    %s62 = sphi 0, %s46
    %s68 = sphi 0, %s70
    %s71 = sphi 0, %s68
    %s72 = sphi 0, %s71
    %s88 = sphi 0, %s72
    %s92 = sphi 0, %s92
    %s94 = sphi 0, %s92
    %s95 = sphi 0, %s94
    %s109 = sphi 0, %s95
    %s117 = sphi 0, %s119
    %s120 = sphi 0, %s117
    %s121 = sphi 0, %s120
    %s137 = sphi 0, %s121
  $region4: #{_lambda_.8} parent=0 // loop_header_branch
    %12 = sbr.rel (%p10) target = $region8
  $region5: #{_lambda_.8} parent=0 // loop_body
    %s14 = ssub.s32 %s9, 1
    %s15 = ssub.s32 %s9, 2
    %s25 = sadd.s32 1, %s18
    %p26 = scmp.ge.s32.totalorder %s25, 3
    %s27 = scalar_select %p26, 0, %s25
    %s28 = sadd.s32 1, %s17
    %s29 = scalar_select %p26, %s28, %s17
    %p30 = scmp.ge.s32.totalorder %s29, 32
    %s31 = scalar_select %p30, 0, %s29
    %s32 = sadd.s32 1, %s16
    %s33 = scalar_select %p30, %s32, %s16
    %p34 = scmp.ge.s32.totalorder %s33, 2
    %s35 = scalar_select %p34, 0, %s33
    %s36 = sadd.s32 %s17, %s18
    %s37 = sadd.s32 %s31, %s27
    %s38 = ssub.s32 %s16, %s35
    %s39 = ssub.s32 %s36, %s37
    %s40 = sor.u32 %s38, %s39
    %p41 = scmp.eq.s32.totalorder %s40, 0
    %s43 = sadd.s32 %s42, 1
    %s44 = scalar_select %p41, %s42, %s43
    %p47 = pneg %p41
    %p48 = scmp.eq.s32.totalorder %s9, 191
    %p49 = por %p47, %p48
    %p50 = scmp.ne.s32.totalorder %s42, %s45
    %p51 = scmp.eq.s32.totalorder %s9, 0
    %p52 = por %p50, %p51
    %p53 = scmp.ne.s32.totalorder %s42, %s45
    %p54 = scmp.eq.s32.totalorder %s14, 191
    %p55 = por %p53, %p54
    %p56 = scmp.ne.s32.totalorder %s45, %s46
    %p57 = scmp.eq.s32.totalorder %s14, 0
    %p58 = por %p56, %p57
    %p59 = scmp.ne.s32.totalorder %s45, %s46
    %p60 = scmp.eq.s32.totalorder %s15, 191
    %p61 = por %p59, %p60
    %p63 = scmp.ne.s32.totalorder %s46, %s62
    %p64 = scmp.eq.s32.totalorder %s15, 0
    %p65 = por %p63, %p64
    %s66 = ssub.s32 %s18, %s27
    %p67 = scmp.eq.s32.totalorder %s66, 0
    %s69 = sadd.s32 %s68, 1
    %s70 = scalar_select %p67, %s68, %s69
    %p73 = pneg %p67
    %p74 = scmp.eq.s32.totalorder %s9, 191
    %p75 = por %p73, %p74
    %p76 = scmp.ne.s32.totalorder %s68, %s71
    %p77 = scmp.eq.s32.totalorder %s9, 0
    %p78 = por %p76, %p77
    %p79 = scmp.ne.s32.totalorder %s68, %s71
    %p80 = scmp.eq.s32.totalorder %s14, 191
    %p81 = por %p79, %p80
    %p82 = scmp.ne.s32.totalorder %s71, %s72
    %p83 = scmp.eq.s32.totalorder %s14, 0
    %p84 = por %p82, %p83
    %p85 = scmp.ne.s32.totalorder %s71, %s72
    %p86 = scmp.eq.s32.totalorder %s15, 191
    %p87 = por %p85, %p86
    %p89 = scmp.ne.s32.totalorder %s72, %s88
    %p90 = scmp.eq.s32.totalorder %s15, 0
    %p91 = por %p89, %p90
    %s93 = sadd.s32 %s92, 1
    %p96 = scmp.eq.s32.totalorder %s9, 191
    %p97 = scmp.ne.s32.totalorder %s92, %s94
    %p98 = scmp.eq.s32.totalorder %s9, 0
    %p99 = por %p97, %p98
    %p100 = scmp.ne.s32.totalorder %s92, %s94
    %p101 = scmp.eq.s32.totalorder %s14, 191
    %p102 = por %p100, %p101
    %p103 = scmp.ne.s32.totalorder %s94, %s95
    %p104 = scmp.eq.s32.totalorder %s14, 0
    %p105 = por %p103, %p104
    %p106 = scmp.ne.s32.totalorder %s94, %s95
    %p107 = scmp.eq.s32.totalorder %s15, 191
    %p108 = por %p106, %p107
    %p110 = scmp.ne.s32.totalorder %s95, %s109
    %p111 = scmp.eq.s32.totalorder %s15, 0
    %p112 = por %p110, %p111
    %s113 = ssub.s32 %s16, %s35
    %s114 = ssub.s32 %s17, %s31
    %s115 = sor.u32 %s113, %s114
    %p116 = scmp.eq.s32.totalorder %s115, 0
    %s118 = sadd.s32 %s117, 1
    %s119 = scalar_select %p116, %s117, %s118
    %p122 = pneg %p116
    %p123 = scmp.eq.s32.totalorder %s9, 191
    %p124 = por %p122, %p123
    %p125 = scmp.ne.s32.totalorder %s117, %s120
    %p126 = scmp.eq.s32.totalorder %s9, 0
    %p127 = por %p125, %p126
    %p128 = scmp.ne.s32.totalorder %s117, %s120
    %p129 = scmp.eq.s32.totalorder %s14, 191
    %p130 = por %p128, %p129
    %p131 = scmp.ne.s32.totalorder %s120, %s121
    %p132 = scmp.eq.s32.totalorder %s14, 0
    %p133 = por %p131, %p132
    %p134 = scmp.ne.s32.totalorder %s120, %s121
    %p135 = scmp.eq.s32.totalorder %s15, 191
    %p136 = por %p134, %p135
    %p138 = scmp.ne.s32.totalorder %s121, %s137
    %p139 = scmp.eq.s32.totalorder %s15, 0
    %p140 = por %p138, %p139
    %p141 = scmp.le.s32.totalorder 1, %s9
    %p142 = scmp.lt.s32.totalorder %s9, 193
    %p143 = pnand %p141, %p142
    %p144 = pneg %p143
    // Predicated region
    $region9: #{_lambda_.8} parent=5 // pred_check
      _
    $region10: #{_lambda_.8} parent=5 // pred_check_branch
      %146 = sbr.rel (%p143) target = $region12
    $region11: #{_lambda_.8} parent=5 // pred_region
      %s147 = ssub.s32 %s9, 1
      // Predicated region
      $region13: #{_lambda_.8} parent=11 // pred_check
        %p148 = pneg %p105
      $region14: #{_lambda_.8} parent=11 // pred_check_branch
        %150 = sbr.rel (%p148) target = $region16
      $region15: #{_lambda_.8} parent=11 // pred_region
        _
      $region16: #{_lambda_.8} parent=11 // pred_fallthru
        _
    $region12: #{_lambda_.8} parent=5 // pred_fallthru
      _
    %p151 = scmp.lt.s32.totalorder %s9, 192
    // Predicated region
    $region17: #{_lambda_.8} parent=5 // pred_check
      %p152 = pneg %p151
    $region18: #{_lambda_.8} parent=5 // pred_check_branch
      %154 = sbr.rel (%p152) target = $region20
    $region19: #{_lambda_.8} parent=5 // pred_region
      // Predicated region
      $region21: #{_lambda_.8} parent=19 // pred_check
        %p155 = pneg %p52
      $region22: #{_lambda_.8} parent=19 // pred_check_branch
        %157 = sbr.rel (%p155) target = $region24
      $region23: #{_lambda_.8} parent=19 // pred_region
        %s158 = sadd.s32 %s17, %s18
        %p159 = scmp.lt.s32.totalorder %s16, 1
        %s160 = scalar_select %p159, %s16, 1
        %p161 = scmp.lt.s32.totalorder %s158, 33
        %s162 = scalar_select %p161, %s158, 33
        %s163 = smul.addr %s162, 10
        %s164 = smul.addr %s160, 340
        %s165 = sadd.s32 %s163, %s164
        %s166 = scalar_lea.vmem %s0, %s165
        %s167 = sadd.s32 %s17, %s18
      $region24: #{_lambda_.8} parent=19 // pred_fallthru
        _
      // Predicated region
      $region25: #{_lambda_.8} parent=19 // pred_check
        %p168 = pneg %p78
      $region26: #{_lambda_.8} parent=19 // pred_check_branch
        %170 = sbr.rel (%p168) target = $region28
      $region27: #{_lambda_.8} parent=19 // pred_region
        %p171 = scmp.lt.s32.totalorder %s18, 2
        %s172 = scalar_select %p171, %s18, 2
        %s173 = smul.addr %s172, 9
        %s174 = smul.addr %s173, 2
        %s175 = scalar_lea.vmem %s1, %s174
      $region28: #{_lambda_.8} parent=19 // pred_fallthru
        _
    $region20: #{_lambda_.8} parent=5 // pred_fallthru
      _
    %p176 = scmp.le.s32.totalorder 1, %s9
    %p177 = scmp.lt.s32.totalorder %s9, 193
    %p178 = pnand %p176, %p177
    %p179 = pneg %p178
    // Predicated region
    $region29: #{_lambda_.8} parent=5 // pred_check
      _
    $region30: #{_lambda_.8} parent=5 // pred_check_branch
      %181 = sbr.rel (%p178) target = $region32
    $region31: #{_lambda_.8} parent=5 // pred_region
      %s182 = ssub.s32 %s9, 1
      %s183 = sadd.s32 %s20, %s21
      %p184 = scmp.lt.s32.totalorder %s19, 1
      %s185 = scalar_select %p184, %s19, 1
      %p186 = scmp.lt.s32.totalorder %s183, 33
      %s187 = scalar_select %p186, %s183, 33
      %s188 = smul.addr %s187, 10
      %s189 = smul.addr %s185, 340
      %s190 = sadd.s32 %s188, %s189
      %s191 = scalar_lea.vmem %s0, %s190
      %p192 = pneg %p58
      %p193 = pneg %p55
      %p194 = scmp.lt.s32.totalorder %s21, 2
      %s195 = scalar_select %p194, %s21, 2
      %s196 = smul.addr %s195, 9
      %s197 = smul.addr %s196, 2
      %s198 = scalar_lea.vmem %s1, %s197
      %p199 = pneg %p84
      %p200 = pneg %p81
      %p201 = pneg %p105
      %p202 = pneg %p102
      %p203 = pneg %p133
      %p204 = pneg %p130
      %p205 = scmp.lt.s32.totalorder %s19, 1
      %s206 = scalar_select %p205, %s19, 1
      %p207 = scmp.lt.s32.totalorder %s20, 31
      %s208 = scalar_select %p207, %s20, 31
      %s209 = smul.addr %s208, 9
      %s210 = smul.addr %s206, 288
      %s211 = sadd.s32 %s209, %s210
      %s212 = smul.addr %s211, 4
      %s213 = scalar_lea.vmem %s3, %s212
      %s214 = sadd.s32 %s20, %s21
      %p215 = scmp.lt.s32.totalorder %s19, 1
      %s216 = scalar_select %p215, %s19, 1
      %p217 = scmp.lt.s32.totalorder %s214, 33
      %s218 = scalar_select %p217, %s214, 33
      %s219 = smul.addr %s218, 10
      %s220 = smul.addr %s216, 340
      %s221 = sadd.s32 %s219, %s220
      %s222 = scalar_lea.vmem %s0, %s221
      %s223 = sadd.s32 %s20, %s21
      %p224 = scmp.lt.s32.totalorder %s21, 2
      %s225 = scalar_select %p224, %s21, 2
      %s226 = smul.addr %s225, 9
      %s227 = smul.addr %s226, 2
      %s228 = scalar_lea.vmem %s1, %s227
      %p229 = scmp.lt.s32.totalorder %s19, 1
      %s230 = scalar_select %p229, %s19, 1
      %p231 = scmp.lt.s32.totalorder %s20, 31
      %s232 = scalar_select %p231, %s20, 31
      %s233 = smul.addr %s232, 9
      %s234 = smul.addr %s230, 288
      %s235 = sadd.s32 %s233, %s234
      %s236 = smul.addr %s235, 4
      %s237 = scalar_lea.vmem %s3, %s236
      %p238 = scmp.eq.s32.totalorder %s21, 0
      // Predicated region
      $region33: #{_lambda_.8} parent=31 // pred_check
        %p239 = pneg %p238
      $region34: #{_lambda_.8} parent=31 // pred_check_branch
        %241 = sbr.rel (%p239) target = $region36
      $region35: #{_lambda_.8} parent=31 // pred_region
        %242 = vst [vmem:[#allocation2] sm:$0xff] 0.0
        %243 = vst [vmem:[#allocation2 + $0x8] sm:$0xff] 0.0
        %244 = vst [vmem:[#allocation2 + $0x10] sm:$0xff] 0.0
        %245 = vst [vmem:[#allocation2 + $0x18] sm:$0xff] 0.0
        %246 = vst [vmem:[#allocation2 + $0x20] sm:$0xf] 0.0
      $region36: #{_lambda_.8} parent=31 // pred_fallthru
        _
      %v247 = vld [vmem:[#allocation2] sm:$0xff]
      %v248 = vld [vmem:[#allocation2 + $0x8] sm:$0xff]
      %v249 = vld [vmem:[#allocation2 + $0x10] sm:$0xff]
      %v250 = vld [vmem:[#allocation2 + $0x18] sm:$0xff]
      %v251 = vld [vmem:[#allocation2 + $0x20] sm:$0xf]
      %v252 = vld [vmem:[%s222] sm:$0xff]
      %v253 = vld [vmem:[%s222 + $0x8] sm:$0x1]
      %v254 = vld [vmem:[%s228] sm:$0x3]
      %v255 = vunpack.c.l.bf16 %v254
      %v256 = vunpack.c.l.bf16 %v252
      %v257 = vunpack.c.h.bf16 %v252
      %v258 = vunpack.c.l.bf16 %v253
      %260 = vset.pattern.permute.xlu0 0
      %261 = vperm.xlu0 %260, %v255
      %v262 = vpop.permute.xlu0 %261
      %v265 = vunpack.c.l.s4 839922192
      %v266 = vunpack.c.0.s8 %v265
      %v267 = vlaneseq
      %v268 = vshrl.u32 %v267, 7
      %v269 = vsub.s32 %v266, %v268
      %v270 = vrot.slane %v262, %v269
      %v274 = vlaneseq
      %v275 = vshrl.u32 %v274, 7
      %v276 = vsub.s32 0, %v275
      %v277 = vrot.slane %v256, %v276
      %v278 = vlaneseq
      %v279 = vshrl.u32 %v278, 7
      %v280 = vsub.s32 2, %v279
      %v281 = vrot.slane %v256, %v280
      %v282 = vlaneseq
      %v283 = vshrl.u32 %v282, 7
      %v284 = vsub.s32 4, %v283
      %v285 = vrot.slane %v256, %v284
      %v286 = vlaneseq
      %v287 = vshrl.u32 %v286, 7
      %v288 = vsub.s32 6, %v287
      %v289 = vrot.slane %v256, %v288
      %v290 = vlaneseq
      %v291 = vshrl.u32 %v290, 7
      %v292 = vsub.s32 0, %v291
      %v293 = vrot.slane %v257, %v292
      %v294 = vlaneseq
      %v295 = vshrl.u32 %v294, 7
      %v296 = vsub.s32 2, %v295
      %v297 = vrot.slane %v257, %v296
      %v298 = vlaneseq
      %v299 = vshrl.u32 %v298, 7
      %v300 = vsub.s32 4, %v299
      %v301 = vrot.slane %v257, %v300
      %v302 = vlaneseq
      %v303 = vshrl.u32 %v302, 7
      %v304 = vsub.s32 6, %v303
      %v305 = vrot.slane %v257, %v304
      %v306 = vlaneseq
      %v307 = vshrl.u32 %v306, 7
      %v308 = vsub.s32 0, %v307
      %v309 = vrot.slane %v258, %v308
      %v319 = vlaneseq
      %v320 = vshrl.u32 %v319, 7
      %v321 = vsub.s32 0, %v320
      %v322 = vrot.slane %v277, %v321
      %v323 = vlaneseq
      %v324 = vshrl.u32 %v323, 7
      %v325 = vsub.s32 0, %v324
      %v326 = vrot.slane %v281, %v325
      %v327 = vlaneseq
      %v328 = vshrl.u32 %v327, 7
      %v329 = vsub.s32 0, %v328
      %v330 = vrot.slane %v285, %v329
      %v331 = vlaneseq
      %v332 = vshrl.u32 %v331, 7
      %v333 = vsub.s32 0, %v332
      %v334 = vrot.slane %v289, %v333
      %v335 = vlaneseq
      %v336 = vshrl.u32 %v335, 7
      %v337 = vsub.s32 0, %v336
      %v338 = vrot.slane %v293, %v337
      %v339 = vlaneseq
      %v340 = vshrl.u32 %v339, 7
      %v341 = vsub.s32 0, %v340
      %v342 = vrot.slane %v297, %v341
      %v343 = vlaneseq
      %v344 = vshrl.u32 %v343, 7
      %v345 = vsub.s32 0, %v344
      %v346 = vrot.slane %v301, %v345
      %v347 = vlaneseq
      %v348 = vshrl.u32 %v347, 7
      %v349 = vsub.s32 0, %v348
      %v350 = vrot.slane %v305, %v349
      %v351 = vlaneseq
      %v352 = vshrl.u32 %v351, 7
      %v353 = vsub.s32 0, %v352
      %v354 = vrot.slane %v309, %v353
      %v363 = vcombine.low %v322, %v326
      %v364 = vcombine.low %v330, %v334
      %v365 = vcombine.low %v338, %v342
      %v366 = vcombine.low %v346, %v350
      %v371 = vmul.f32 %v270, %v363
      %v372 = vmul.f32 %v270, %v364
      %v373 = vmul.f32 %v270, %v365
      %v374 = vmul.f32 %v270, %v366
      %v375 = vmul.f32 %v270, %v354
      %v376 = vadd.f32 %v247, %v371
      %v377 = vadd.f32 %v248, %v372
      %v378 = vadd.f32 %v249, %v373
      %v379 = vadd.f32 %v250, %v374
      %v380 = vadd.f32 %v251, %v375
      %v381 = vld [vmem:[%s222] sm:$0xff]
      %v382 = vld [vmem:[%s222 + $0x8] sm:$0x3]
      %s383 = scalar_lea.vmem %s228, 2
      %v384 = vld [vmem:[%s383] sm:$0x3]
      %v385 = vunpack.c.l.bf16 %v384
      %v386 = vunpack.c.l.bf16 %v381
      %v387 = vunpack.c.h.bf16 %v381
      %v388 = vunpack.c.l.bf16 %v382
      %390 = vset.pattern.permute.xlu0 0
      %391 = vperm.xlu0 %390, %v385
      %v392 = vpop.permute.xlu0 %391
      %v395 = vunpack.c.l.s4 839922192
      %v396 = vunpack.c.0.s8 %v395
      %v397 = vlaneseq
      %v398 = vshrl.u32 %v397, 7
      %v399 = vsub.s32 %v396, %v398
      %v400 = vrot.slane %v392, %v399
      %v404 = vlaneseq
      %v405 = vshrl.u32 %v404, 7
      %v406 = vsub.s32 0, %v405
      %v407 = vrot.slane %v386, %v406
      %v408 = vlaneseq
      %v409 = vshrl.u32 %v408, 7
      %v410 = vsub.s32 2, %v409
      %v411 = vrot.slane %v386, %v410
      %v412 = vlaneseq
      %v413 = vshrl.u32 %v412, 7
      %v414 = vsub.s32 4, %v413
      %v415 = vrot.slane %v386, %v414
      %v416 = vlaneseq
      %v417 = vshrl.u32 %v416, 7
      %v418 = vsub.s32 6, %v417
      %v419 = vrot.slane %v386, %v418
      %v420 = vlaneseq
      %v421 = vshrl.u32 %v420, 7
      %v422 = vsub.s32 0, %v421
      %v423 = vrot.slane %v387, %v422
      %v424 = vlaneseq
      %v425 = vshrl.u32 %v424, 7
      %v426 = vsub.s32 2, %v425
      %v427 = vrot.slane %v387, %v426
      %v428 = vlaneseq
      %v429 = vshrl.u32 %v428, 7
      %v430 = vsub.s32 4, %v429
      %v431 = vrot.slane %v387, %v430
      %v432 = vlaneseq
      %v433 = vshrl.u32 %v432, 7
      %v434 = vsub.s32 6, %v433
      %v435 = vrot.slane %v387, %v434
      %v436 = vlaneseq
      %v437 = vshrl.u32 %v436, 7
      %v438 = vsub.s32 0, %v437
      %v439 = vrot.slane %v388, %v438
      %v440 = vlaneseq
      %v441 = vshrl.u32 %v440, 7
      %v442 = vsub.s32 2, %v441
      %v443 = vrot.slane %v388, %v442
      %v454 = vlaneseq
      %v455 = vshrl.u32 %v454, 7
      %v456 = vsub.s32 0, %v455
      %v457 = vrot.slane %v407, %v456
      %v458 = vlaneseq
      %v459 = vshrl.u32 %v458, 7
      %v460 = vsub.s32 0, %v459
      %v461 = vrot.slane %v411, %v460
      %v462 = vlaneseq
      %v463 = vshrl.u32 %v462, 7
      %v464 = vsub.s32 0, %v463
      %v465 = vrot.slane %v415, %v464
      %v466 = vlaneseq
      %v467 = vshrl.u32 %v466, 7
      %v468 = vsub.s32 0, %v467
      %v469 = vrot.slane %v419, %v468
      %v470 = vlaneseq
      %v471 = vshrl.u32 %v470, 7
      %v472 = vsub.s32 0, %v471
      %v473 = vrot.slane %v423, %v472
      %v474 = vlaneseq
      %v475 = vshrl.u32 %v474, 7
      %v476 = vsub.s32 0, %v475
      %v477 = vrot.slane %v427, %v476
      %v478 = vlaneseq
      %v479 = vshrl.u32 %v478, 7
      %v480 = vsub.s32 0, %v479
      %v481 = vrot.slane %v431, %v480
      %v482 = vlaneseq
      %v483 = vshrl.u32 %v482, 7
      %v484 = vsub.s32 0, %v483
      %v485 = vrot.slane %v435, %v484
      %v486 = vlaneseq
      %v487 = vshrl.u32 %v486, 7
      %v488 = vsub.s32 0, %v487
      %v489 = vrot.slane %v439, %v488
      %v490 = vlaneseq
      %v491 = vshrl.u32 %v490, 7
      %v492 = vsub.s32 0, %v491
      %v493 = vrot.slane %v443, %v492
      %v504 = vcombine.low %v457, %v461
      %v505 = vcombine.low %v465, %v469
      %v506 = vcombine.low %v473, %v477
      %v507 = vcombine.low %v481, %v485
      %v508 = vcombine.low %v489, %v493
      %509 = vrot.lane.b32.xlu0 %v504, 127
      %v510 = vpop.permute.xlu0 %509
      %511 = vrot.lane.b32.xlu0 %v505, 127
      %v512 = vpop.permute.xlu0 %511
      %513 = vrot.lane.b32.xlu0 %v506, 127
      %v514 = vpop.permute.xlu0 %513
      %515 = vrot.lane.b32.xlu0 %v507, 127
      %v516 = vpop.permute.xlu0 %515
      %517 = vrot.lane.b32.xlu0 %v508, 127
      %v518 = vpop.permute.xlu0 %517
      %v519 = vrot.slane %v510, 4
      %v520 = vrot.slane %v512, 4
      %v521 = vrot.slane %v514, 4
      %v522 = vrot.slane %v516, 4
      %v523 = vrot.slane %v518, 4
      %vm524 = vcmask 1043456
      %v525 = vsel %vm524, %v519, %v520
      %vm526 = vcmask 1039360
      %v527 = vsel %vm526, %v510, %v525
      %v528 = vsel %vm524, %v520, %v521
      %v529 = vsel %vm526, %v512, %v528
      %v530 = vsel %vm524, %v521, %v522
      %v531 = vsel %vm526, %v514, %v530
      %v532 = vsel %vm524, %v522, %v523
      %v533 = vsel %vm526, %v516, %v532
      %v534 = vsel %vm526, %v518, %v523
      %v540 = vmul.f32 %v400, %v527
      %v541 = vmul.f32 %v400, %v529
      %v542 = vmul.f32 %v400, %v531
      %v543 = vmul.f32 %v400, %v533
      %v544 = vmul.f32 %v400, %v534
      %v545 = vadd.f32 %v376, %v540
      %v546 = vadd.f32 %v377, %v541
      %v547 = vadd.f32 %v378, %v542
      %v548 = vadd.f32 %v379, %v543
      %v549 = vadd.f32 %v380, %v544
      %v550 = vld [vmem:[%s222] sm:$0xff]
      %v551 = vld [vmem:[%s222 + $0x8] sm:$0x3]
      %s552 = scalar_lea.vmem %s228, 4
      %v553 = vld [vmem:[%s552] sm:$0x3]
      %v554 = vunpack.c.l.bf16 %v553
      %v555 = vunpack.c.l.bf16 %v550
      %v556 = vunpack.c.h.bf16 %v550
      %v557 = vunpack.c.l.bf16 %v551
      %559 = vset.pattern.permute.xlu0 0
      %560 = vperm.xlu0 %559, %v554
      %v561 = vpop.permute.xlu0 %560
      %v564 = vunpack.c.l.s4 839922192
      %v565 = vunpack.c.0.s8 %v564
      %v566 = vlaneseq
      %v567 = vshrl.u32 %v566, 7
      %v568 = vsub.s32 %v565, %v567
      %v569 = vrot.slane %v561, %v568
      %v573 = vlaneseq
      %v574 = vshrl.u32 %v573, 7
      %v575 = vsub.s32 0, %v574
      %v576 = vrot.slane %v555, %v575
      %v577 = vlaneseq
      %v578 = vshrl.u32 %v577, 7
      %v579 = vsub.s32 2, %v578
      %v580 = vrot.slane %v555, %v579
      %v581 = vlaneseq
      %v582 = vshrl.u32 %v581, 7
      %v583 = vsub.s32 4, %v582
      %v584 = vrot.slane %v555, %v583
      %v585 = vlaneseq
      %v586 = vshrl.u32 %v585, 7
      %v587 = vsub.s32 6, %v586
      %v588 = vrot.slane %v555, %v587
      %v589 = vlaneseq
      %v590 = vshrl.u32 %v589, 7
      %v591 = vsub.s32 0, %v590
      %v592 = vrot.slane %v556, %v591
      %v593 = vlaneseq
      %v594 = vshrl.u32 %v593, 7
      %v595 = vsub.s32 2, %v594
      %v596 = vrot.slane %v556, %v595
      %v597 = vlaneseq
      %v598 = vshrl.u32 %v597, 7
      %v599 = vsub.s32 4, %v598
      %v600 = vrot.slane %v556, %v599
      %v601 = vlaneseq
      %v602 = vshrl.u32 %v601, 7
      %v603 = vsub.s32 6, %v602
      %v604 = vrot.slane %v556, %v603
      %v605 = vlaneseq
      %v606 = vshrl.u32 %v605, 7
      %v607 = vsub.s32 0, %v606
      %v608 = vrot.slane %v557, %v607
      %v609 = vlaneseq
      %v610 = vshrl.u32 %v609, 7
      %v611 = vsub.s32 2, %v610
      %v612 = vrot.slane %v557, %v611
      %v623 = vlaneseq
      %v624 = vshrl.u32 %v623, 7
      %v625 = vsub.s32 0, %v624
      %v626 = vrot.slane %v576, %v625
      %v627 = vlaneseq
      %v628 = vshrl.u32 %v627, 7
      %v629 = vsub.s32 0, %v628
      %v630 = vrot.slane %v580, %v629
      %v631 = vlaneseq
      %v632 = vshrl.u32 %v631, 7
      %v633 = vsub.s32 0, %v632
      %v634 = vrot.slane %v584, %v633
      %v635 = vlaneseq
      %v636 = vshrl.u32 %v635, 7
      %v637 = vsub.s32 0, %v636
      %v638 = vrot.slane %v588, %v637
      %v639 = vlaneseq
      %v640 = vshrl.u32 %v639, 7
      %v641 = vsub.s32 0, %v640
      %v642 = vrot.slane %v592, %v641
      %v643 = vlaneseq
      %v644 = vshrl.u32 %v643, 7
      %v645 = vsub.s32 0, %v644
      %v646 = vrot.slane %v596, %v645
      %v647 = vlaneseq
      %v648 = vshrl.u32 %v647, 7
      %v649 = vsub.s32 0, %v648
      %v650 = vrot.slane %v600, %v649
      %v651 = vlaneseq
      %v652 = vshrl.u32 %v651, 7
      %v653 = vsub.s32 0, %v652
      %v654 = vrot.slane %v604, %v653
      %v655 = vlaneseq
      %v656 = vshrl.u32 %v655, 7
      %v657 = vsub.s32 0, %v656
      %v658 = vrot.slane %v608, %v657
      %v659 = vlaneseq
      %v660 = vshrl.u32 %v659, 7
      %v661 = vsub.s32 0, %v660
      %v662 = vrot.slane %v612, %v661
      %v673 = vcombine.low %v626, %v630
      %v674 = vcombine.low %v634, %v638
      %v675 = vcombine.low %v642, %v646
      %v676 = vcombine.low %v650, %v654
      %v677 = vcombine.low %v658, %v662
      %678 = vrot.lane.b32.xlu0 %v673, 126
      %v679 = vpop.permute.xlu0 %678
      %680 = vrot.lane.b32.xlu0 %v674, 126
      %v681 = vpop.permute.xlu0 %680
      %682 = vrot.lane.b32.xlu0 %v675, 126
      %v683 = vpop.permute.xlu0 %682
      %684 = vrot.lane.b32.xlu0 %v676, 126
      %v685 = vpop.permute.xlu0 %684
      %686 = vrot.lane.b32.xlu0 %v677, 126
      %v687 = vpop.permute.xlu0 %686
      %v688 = vrot.slane %v679, 4
      %v689 = vrot.slane %v681, 4
      %v690 = vrot.slane %v683, 4
      %v691 = vrot.slane %v685, 4
      %v692 = vrot.slane %v687, 4
      %v693 = vsel %vm524, %v688, %v689
      %vm694 = vcmask 1031168
      %v695 = vsel %vm694, %v679, %v693
      %v696 = vsel %vm524, %v689, %v690
      %v697 = vsel %vm694, %v681, %v696
      %v698 = vsel %vm524, %v690, %v691
      %v699 = vsel %vm694, %v683, %v698
      %v700 = vsel %vm524, %v691, %v692
      %v701 = vsel %vm694, %v685, %v700
      %v702 = vsel %vm694, %v687, %v692
      %v708 = vmul.f32 %v569, %v695
      %v709 = vmul.f32 %v569, %v697
      %v710 = vmul.f32 %v569, %v699
      %v711 = vmul.f32 %v569, %v701
      %v712 = vmul.f32 %v569, %v702
      %v713 = vadd.f32 %v545, %v708
      %v714 = vadd.f32 %v546, %v709
      %v715 = vadd.f32 %v547, %v710
      %v716 = vadd.f32 %v548, %v711
      %v717 = vadd.f32 %v549, %v712
      %v718 = vld [vmem:[%s222] sm:$0xff]
      %v719 = vld [vmem:[%s222 + $0x8] sm:$0x3]
      %s720 = scalar_lea.vmem %s228, 6
      %v721 = vld [vmem:[%s720] sm:$0x3]
      %v722 = vunpack.c.l.bf16 %v721
      %v723 = vunpack.c.l.bf16 %v718
      %v724 = vunpack.c.h.bf16 %v718
      %v725 = vunpack.c.l.bf16 %v719
      %727 = vset.pattern.permute.xlu0 0
      %728 = vperm.xlu0 %727, %v722
      %v729 = vpop.permute.xlu0 %728
      %v732 = vunpack.c.l.s4 839922192
      %v733 = vunpack.c.0.s8 %v732
      %v734 = vlaneseq
      %v735 = vshrl.u32 %v734, 7
      %v736 = vsub.s32 %v733, %v735
      %v737 = vrot.slane %v729, %v736
      %v741 = vlaneseq
      %v742 = vshrl.u32 %v741, 7
      %v743 = vsub.s32 0, %v742
      %v744 = vrot.slane %v723, %v743
      %v745 = vlaneseq
      %v746 = vshrl.u32 %v745, 7
      %v747 = vsub.s32 2, %v746
      %v748 = vrot.slane %v723, %v747
      %v749 = vlaneseq
      %v750 = vshrl.u32 %v749, 7
      %v751 = vsub.s32 4, %v750
      %v752 = vrot.slane %v723, %v751
      %v753 = vlaneseq
      %v754 = vshrl.u32 %v753, 7
      %v755 = vsub.s32 6, %v754
      %v756 = vrot.slane %v723, %v755
      %v757 = vlaneseq
      %v758 = vshrl.u32 %v757, 7
      %v759 = vsub.s32 0, %v758
      %v760 = vrot.slane %v724, %v759
      %v761 = vlaneseq
      %v762 = vshrl.u32 %v761, 7
      %v763 = vsub.s32 2, %v762
      %v764 = vrot.slane %v724, %v763
      %v765 = vlaneseq
      %v766 = vshrl.u32 %v765, 7
      %v767 = vsub.s32 4, %v766
      %v768 = vrot.slane %v724, %v767
      %v769 = vlaneseq
      %v770 = vshrl.u32 %v769, 7
      %v771 = vsub.s32 6, %v770
      %v772 = vrot.slane %v724, %v771
      %v773 = vlaneseq
      %v774 = vshrl.u32 %v773, 7
      %v775 = vsub.s32 0, %v774
      %v776 = vrot.slane %v725, %v775
      %v777 = vlaneseq
      %v778 = vshrl.u32 %v777, 7
      %v779 = vsub.s32 2, %v778
      %v780 = vrot.slane %v725, %v779
      %v791 = vlaneseq
      %v792 = vshrl.u32 %v791, 7
      %v793 = vsub.s32 0, %v792
      %v794 = vrot.slane %v744, %v793
      %v795 = vlaneseq
      %v796 = vshrl.u32 %v795, 7
      %v797 = vsub.s32 0, %v796
      %v798 = vrot.slane %v748, %v797
      %v799 = vlaneseq
      %v800 = vshrl.u32 %v799, 7
      %v801 = vsub.s32 0, %v800
      %v802 = vrot.slane %v752, %v801
      %v803 = vlaneseq
      %v804 = vshrl.u32 %v803, 7
      %v805 = vsub.s32 0, %v804
      %v806 = vrot.slane %v756, %v805
      %v807 = vlaneseq
      %v808 = vshrl.u32 %v807, 7
      %v809 = vsub.s32 0, %v808
      %v810 = vrot.slane %v760, %v809
      %v811 = vlaneseq
      %v812 = vshrl.u32 %v811, 7
      %v813 = vsub.s32 0, %v812
      %v814 = vrot.slane %v764, %v813
      %v815 = vlaneseq
      %v816 = vshrl.u32 %v815, 7
      %v817 = vsub.s32 0, %v816
      %v818 = vrot.slane %v768, %v817
      %v819 = vlaneseq
      %v820 = vshrl.u32 %v819, 7
      %v821 = vsub.s32 0, %v820
      %v822 = vrot.slane %v772, %v821
      %v823 = vlaneseq
      %v824 = vshrl.u32 %v823, 7
      %v825 = vsub.s32 0, %v824
      %v826 = vrot.slane %v776, %v825
      %v827 = vlaneseq
      %v828 = vshrl.u32 %v827, 7
      %v829 = vsub.s32 0, %v828
      %v830 = vrot.slane %v780, %v829
      %v841 = vcombine.low %v794, %v798
      %v842 = vcombine.low %v802, %v806
      %v843 = vcombine.low %v810, %v814
      %v844 = vcombine.low %v818, %v822
      %v845 = vcombine.low %v826, %v830
      %846 = vrot.lane.b32.xlu0 %v841, 94
      %v847 = vpop.permute.xlu0 %846
      %848 = vrot.lane.b32.xlu0 %v842, 94
      %v849 = vpop.permute.xlu0 %848
      %850 = vrot.lane.b32.xlu0 %v843, 94
      %v851 = vpop.permute.xlu0 %850
      %852 = vrot.lane.b32.xlu0 %v844, 94
      %v853 = vpop.permute.xlu0 %852
      %854 = vrot.lane.b32.xlu0 %v845, 94
      %v855 = vpop.permute.xlu0 %854
      %v856 = vrot.slane %v847, 4
      %v857 = vrot.slane %v849, 4
      %v858 = vrot.slane %v851, 4
      %v859 = vrot.slane %v853, 4
      %v860 = vrot.slane %v855, 4
      %v861 = vsel %vm524, %v856, %v857
      %vm862 = vcmask 769024
      %v863 = vsel %vm862, %v847, %v861
      %v864 = vsel %vm524, %v857, %v858
      %v865 = vsel %vm862, %v849, %v864
      %v866 = vsel %vm524, %v858, %v859
      %v867 = vsel %vm862, %v851, %v866
      %v868 = vsel %vm524, %v859, %v860
      %v869 = vsel %vm862, %v853, %v868
      %v870 = vsel %vm862, %v855, %v860
      %v876 = vmul.f32 %v737, %v863
      %v877 = vmul.f32 %v737, %v865
      %v878 = vmul.f32 %v737, %v867
      %v879 = vmul.f32 %v737, %v869
      %v880 = vmul.f32 %v737, %v870
      %v881 = vadd.f32 %v713, %v876
      %v882 = vadd.f32 %v714, %v877
      %v883 = vadd.f32 %v715, %v878
      %v884 = vadd.f32 %v716, %v879
      %v885 = vadd.f32 %v717, %v880
      %v886 = vld [vmem:[%s222] sm:$0xff]
      %v887 = vld [vmem:[%s222 + $0x8] sm:$0x3]
      %s888 = scalar_lea.vmem %s228, 8
      %v889 = vld [vmem:[%s888] sm:$0x3]
      %v890 = vunpack.c.l.bf16 %v889
      %v891 = vunpack.c.l.bf16 %v886
      %v892 = vunpack.c.h.bf16 %v886
      %v893 = vunpack.c.l.bf16 %v887
      %895 = vset.pattern.permute.xlu0 0
      %896 = vperm.xlu0 %895, %v890
      %v897 = vpop.permute.xlu0 %896
      %v900 = vunpack.c.l.s4 839922192
      %v901 = vunpack.c.0.s8 %v900
      %v902 = vlaneseq
      %v903 = vshrl.u32 %v902, 7
      %v904 = vsub.s32 %v901, %v903
      %v905 = vrot.slane %v897, %v904
      %v909 = vlaneseq
      %v910 = vshrl.u32 %v909, 7
      %v911 = vsub.s32 0, %v910
      %v912 = vrot.slane %v891, %v911
      %v913 = vlaneseq
      %v914 = vshrl.u32 %v913, 7
      %v915 = vsub.s32 2, %v914
      %v916 = vrot.slane %v891, %v915
      %v917 = vlaneseq
      %v918 = vshrl.u32 %v917, 7
      %v919 = vsub.s32 4, %v918
      %v920 = vrot.slane %v891, %v919
      %v921 = vlaneseq
      %v922 = vshrl.u32 %v921, 7
      %v923 = vsub.s32 6, %v922
      %v924 = vrot.slane %v891, %v923
      %v925 = vlaneseq
      %v926 = vshrl.u32 %v925, 7
      %v927 = vsub.s32 0, %v926
      %v928 = vrot.slane %v892, %v927
      %v929 = vlaneseq
      %v930 = vshrl.u32 %v929, 7
      %v931 = vsub.s32 2, %v930
      %v932 = vrot.slane %v892, %v931
      %v933 = vlaneseq
      %v934 = vshrl.u32 %v933, 7
      %v935 = vsub.s32 4, %v934
      %v936 = vrot.slane %v892, %v935
      %v937 = vlaneseq
      %v938 = vshrl.u32 %v937, 7
      %v939 = vsub.s32 6, %v938
      %v940 = vrot.slane %v892, %v939
      %v941 = vlaneseq
      %v942 = vshrl.u32 %v941, 7
      %v943 = vsub.s32 0, %v942
      %v944 = vrot.slane %v893, %v943
      %v945 = vlaneseq
      %v946 = vshrl.u32 %v945, 7
      %v947 = vsub.s32 2, %v946
      %v948 = vrot.slane %v893, %v947
      %v959 = vlaneseq
      %v960 = vshrl.u32 %v959, 7
      %v961 = vsub.s32 0, %v960
      %v962 = vrot.slane %v912, %v961
      %v963 = vlaneseq
      %v964 = vshrl.u32 %v963, 7
      %v965 = vsub.s32 0, %v964
      %v966 = vrot.slane %v916, %v965
      %v967 = vlaneseq
      %v968 = vshrl.u32 %v967, 7
      %v969 = vsub.s32 0, %v968
      %v970 = vrot.slane %v920, %v969
      %v971 = vlaneseq
      %v972 = vshrl.u32 %v971, 7
      %v973 = vsub.s32 0, %v972
      %v974 = vrot.slane %v924, %v973
      %v975 = vlaneseq
      %v976 = vshrl.u32 %v975, 7
      %v977 = vsub.s32 0, %v976
      %v978 = vrot.slane %v928, %v977
      %v979 = vlaneseq
      %v980 = vshrl.u32 %v979, 7
      %v981 = vsub.s32 0, %v980
      %v982 = vrot.slane %v932, %v981
      %v983 = vlaneseq
      %v984 = vshrl.u32 %v983, 7
      %v985 = vsub.s32 0, %v984
      %v986 = vrot.slane %v936, %v985
      %v987 = vlaneseq
      %v988 = vshrl.u32 %v987, 7
      %v989 = vsub.s32 0, %v988
      %v990 = vrot.slane %v940, %v989
      %v991 = vlaneseq
      %v992 = vshrl.u32 %v991, 7
      %v993 = vsub.s32 0, %v992
      %v994 = vrot.slane %v944, %v993
      %v995 = vlaneseq
      %v996 = vshrl.u32 %v995, 7
      %v997 = vsub.s32 0, %v996
      %v998 = vrot.slane %v948, %v997
      %v1009 = vcombine.low %v962, %v966
      %v1010 = vcombine.low %v970, %v974
      %v1011 = vcombine.low %v978, %v982
      %v1012 = vcombine.low %v986, %v990
      %v1013 = vcombine.low %v994, %v998
      %1014 = vrot.lane.b32.xlu0 %v1009, 93
      %v1015 = vpop.permute.xlu0 %1014
      %1016 = vrot.lane.b32.xlu0 %v1010, 93
      %v1017 = vpop.permute.xlu0 %1016
      %1018 = vrot.lane.b32.xlu0 %v1011, 93
      %v1019 = vpop.permute.xlu0 %1018
      %1020 = vrot.lane.b32.xlu0 %v1012, 93
      %v1021 = vpop.permute.xlu0 %1020
      %1022 = vrot.lane.b32.xlu0 %v1013, 93
      %v1023 = vpop.permute.xlu0 %1022
      %v1024 = vrot.slane %v1015, 4
      %v1025 = vrot.slane %v1017, 4
      %v1026 = vrot.slane %v1019, 4
      %v1027 = vrot.slane %v1021, 4
      %v1028 = vrot.slane %v1023, 4
      %v1029 = vsel %vm524, %v1024, %v1025
      %vm1030 = vcmask 760832
      %v1031 = vsel %vm1030, %v1015, %v1029
      %v1032 = vsel %vm524, %v1025, %v1026
      %v1033 = vsel %vm1030, %v1017, %v1032
      %v1034 = vsel %vm524, %v1026, %v1027
      %v1035 = vsel %vm1030, %v1019, %v1034
      %v1036 = vsel %vm524, %v1027, %v1028
      %v1037 = vsel %vm1030, %v1021, %v1036
      %v1038 = vsel %vm1030, %v1023, %v1028
      %v1044 = vmul.f32 %v905, %v1031
      %v1045 = vmul.f32 %v905, %v1033
      %v1046 = vmul.f32 %v905, %v1035
      %v1047 = vmul.f32 %v905, %v1037
      %v1048 = vmul.f32 %v905, %v1038
      %v1049 = vadd.f32 %v881, %v1044
      %v1050 = vadd.f32 %v882, %v1045
      %v1051 = vadd.f32 %v883, %v1046
      %v1052 = vadd.f32 %v884, %v1047
      %v1053 = vadd.f32 %v885, %v1048
      %v1054 = vld [vmem:[%s222] sm:$0xff]
      %v1055 = vld [vmem:[%s222 + $0x8] sm:$0x3]
      %s1056 = scalar_lea.vmem %s228, 10
      %v1057 = vld [vmem:[%s1056] sm:$0x3]
      %v1058 = vunpack.c.l.bf16 %v1057
      %v1059 = vunpack.c.l.bf16 %v1054
      %v1060 = vunpack.c.h.bf16 %v1054
      %v1061 = vunpack.c.l.bf16 %v1055
      %1063 = vset.pattern.permute.xlu0 0
      %1064 = vperm.xlu0 %1063, %v1058
      %v1065 = vpop.permute.xlu0 %1064
      %v1068 = vunpack.c.l.s4 839922192
      %v1069 = vunpack.c.0.s8 %v1068
      %v1070 = vlaneseq
      %v1071 = vshrl.u32 %v1070, 7
      %v1072 = vsub.s32 %v1069, %v1071
      %v1073 = vrot.slane %v1065, %v1072
      %v1077 = vlaneseq
      %v1078 = vshrl.u32 %v1077, 7
      %v1079 = vsub.s32 0, %v1078
      %v1080 = vrot.slane %v1059, %v1079
      %v1081 = vlaneseq
      %v1082 = vshrl.u32 %v1081, 7
      %v1083 = vsub.s32 2, %v1082
      %v1084 = vrot.slane %v1059, %v1083
      %v1085 = vlaneseq
      %v1086 = vshrl.u32 %v1085, 7
      %v1087 = vsub.s32 4, %v1086
      %v1088 = vrot.slane %v1059, %v1087
      %v1089 = vlaneseq
      %v1090 = vshrl.u32 %v1089, 7
      %v1091 = vsub.s32 6, %v1090
      %v1092 = vrot.slane %v1059, %v1091
      %v1093 = vlaneseq
      %v1094 = vshrl.u32 %v1093, 7
      %v1095 = vsub.s32 0, %v1094
      %v1096 = vrot.slane %v1060, %v1095
      %v1097 = vlaneseq
      %v1098 = vshrl.u32 %v1097, 7
      %v1099 = vsub.s32 2, %v1098
      %v1100 = vrot.slane %v1060, %v1099
      %v1101 = vlaneseq
      %v1102 = vshrl.u32 %v1101, 7
      %v1103 = vsub.s32 4, %v1102
      %v1104 = vrot.slane %v1060, %v1103
      %v1105 = vlaneseq
      %v1106 = vshrl.u32 %v1105, 7
      %v1107 = vsub.s32 6, %v1106
      %v1108 = vrot.slane %v1060, %v1107
      %v1109 = vlaneseq
      %v1110 = vshrl.u32 %v1109, 7
      %v1111 = vsub.s32 0, %v1110
      %v1112 = vrot.slane %v1061, %v1111
      %v1113 = vlaneseq
      %v1114 = vshrl.u32 %v1113, 7
      %v1115 = vsub.s32 2, %v1114
      %v1116 = vrot.slane %v1061, %v1115
      %v1127 = vlaneseq
      %v1128 = vshrl.u32 %v1127, 7
      %v1129 = vsub.s32 0, %v1128
      %v1130 = vrot.slane %v1080, %v1129
      %v1131 = vlaneseq
      %v1132 = vshrl.u32 %v1131, 7
      %v1133 = vsub.s32 0, %v1132
      %v1134 = vrot.slane %v1084, %v1133
      %v1135 = vlaneseq
      %v1136 = vshrl.u32 %v1135, 7
      %v1137 = vsub.s32 0, %v1136
      %v1138 = vrot.slane %v1088, %v1137
      %v1139 = vlaneseq
      %v1140 = vshrl.u32 %v1139, 7
      %v1141 = vsub.s32 0, %v1140
      %v1142 = vrot.slane %v1092, %v1141
      %v1143 = vlaneseq
      %v1144 = vshrl.u32 %v1143, 7
      %v1145 = vsub.s32 0, %v1144
      %v1146 = vrot.slane %v1096, %v1145
      %v1147 = vlaneseq
      %v1148 = vshrl.u32 %v1147, 7
      %v1149 = vsub.s32 0, %v1148
      %v1150 = vrot.slane %v1100, %v1149
      %v1151 = vlaneseq
      %v1152 = vshrl.u32 %v1151, 7
      %v1153 = vsub.s32 0, %v1152
      %v1154 = vrot.slane %v1104, %v1153
      %v1155 = vlaneseq
      %v1156 = vshrl.u32 %v1155, 7
      %v1157 = vsub.s32 0, %v1156
      %v1158 = vrot.slane %v1108, %v1157
      %v1159 = vlaneseq
      %v1160 = vshrl.u32 %v1159, 7
      %v1161 = vsub.s32 0, %v1160
      %v1162 = vrot.slane %v1112, %v1161
      %v1163 = vlaneseq
      %v1164 = vshrl.u32 %v1163, 7
      %v1165 = vsub.s32 0, %v1164
      %v1166 = vrot.slane %v1116, %v1165
      %v1177 = vcombine.low %v1130, %v1134
      %v1178 = vcombine.low %v1138, %v1142
      %v1179 = vcombine.low %v1146, %v1150
      %v1180 = vcombine.low %v1154, %v1158
      %v1181 = vcombine.low %v1162, %v1166
      %1182 = vrot.lane.b32.xlu0 %v1177, 92
      %v1183 = vpop.permute.xlu0 %1182
      %1184 = vrot.lane.b32.xlu0 %v1178, 92
      %v1185 = vpop.permute.xlu0 %1184
      %1186 = vrot.lane.b32.xlu0 %v1179, 92
      %v1187 = vpop.permute.xlu0 %1186
      %1188 = vrot.lane.b32.xlu0 %v1180, 92
      %v1189 = vpop.permute.xlu0 %1188
      %1190 = vrot.lane.b32.xlu0 %v1181, 92
      %v1191 = vpop.permute.xlu0 %1190
      %v1192 = vrot.slane %v1183, 4
      %v1193 = vrot.slane %v1185, 4
      %v1194 = vrot.slane %v1187, 4
      %v1195 = vrot.slane %v1189, 4
      %v1196 = vrot.slane %v1191, 4
      %v1197 = vsel %vm524, %v1192, %v1193
      %vm1198 = vcmask 752640
      %v1199 = vsel %vm1198, %v1183, %v1197
      %v1200 = vsel %vm524, %v1193, %v1194
      %v1201 = vsel %vm1198, %v1185, %v1200
      %v1202 = vsel %vm524, %v1194, %v1195
      %v1203 = vsel %vm1198, %v1187, %v1202
      %v1204 = vsel %vm524, %v1195, %v1196
      %v1205 = vsel %vm1198, %v1189, %v1204
      %v1206 = vsel %vm1198, %v1191, %v1196
      %v1212 = vmul.f32 %v1073, %v1199
      %v1213 = vmul.f32 %v1073, %v1201
      %v1214 = vmul.f32 %v1073, %v1203
      %v1215 = vmul.f32 %v1073, %v1205
      %v1216 = vmul.f32 %v1073, %v1206
      %v1217 = vadd.f32 %v1049, %v1212
      %v1218 = vadd.f32 %v1050, %v1213
      %v1219 = vadd.f32 %v1051, %v1214
      %v1220 = vadd.f32 %v1052, %v1215
      %v1221 = vadd.f32 %v1053, %v1216
      %v1222 = vld [vmem:[%s222] sm:$0xff]
      %v1223 = vld [vmem:[%s222 + $0x8] sm:$0x3]
      %s1224 = scalar_lea.vmem %s228, 12
      %v1225 = vld [vmem:[%s1224] sm:$0x3]
      %v1226 = vunpack.c.l.bf16 %v1225
      %v1227 = vunpack.c.l.bf16 %v1222
      %v1228 = vunpack.c.h.bf16 %v1222
      %v1229 = vunpack.c.l.bf16 %v1223
      %1231 = vset.pattern.permute.xlu0 0
      %1232 = vperm.xlu0 %1231, %v1226
      %v1233 = vpop.permute.xlu0 %1232
      %v1236 = vunpack.c.l.s4 839922192
      %v1237 = vunpack.c.0.s8 %v1236
      %v1238 = vlaneseq
      %v1239 = vshrl.u32 %v1238, 7
      %v1240 = vsub.s32 %v1237, %v1239
      %v1241 = vrot.slane %v1233, %v1240
      %v1245 = vlaneseq
      %v1246 = vshrl.u32 %v1245, 7
      %v1247 = vsub.s32 0, %v1246
      %v1248 = vrot.slane %v1227, %v1247
      %v1249 = vlaneseq
      %v1250 = vshrl.u32 %v1249, 7
      %v1251 = vsub.s32 2, %v1250
      %v1252 = vrot.slane %v1227, %v1251
      %v1253 = vlaneseq
      %v1254 = vshrl.u32 %v1253, 7
      %v1255 = vsub.s32 4, %v1254
      %v1256 = vrot.slane %v1227, %v1255
      %v1257 = vlaneseq
      %v1258 = vshrl.u32 %v1257, 7
      %v1259 = vsub.s32 6, %v1258
      %v1260 = vrot.slane %v1227, %v1259
      %v1261 = vlaneseq
      %v1262 = vshrl.u32 %v1261, 7
      %v1263 = vsub.s32 0, %v1262
      %v1264 = vrot.slane %v1228, %v1263
      %v1265 = vlaneseq
      %v1266 = vshrl.u32 %v1265, 7
      %v1267 = vsub.s32 2, %v1266
      %v1268 = vrot.slane %v1228, %v1267
      %v1269 = vlaneseq
      %v1270 = vshrl.u32 %v1269, 7
      %v1271 = vsub.s32 4, %v1270
      %v1272 = vrot.slane %v1228, %v1271
      %v1273 = vlaneseq
      %v1274 = vshrl.u32 %v1273, 7
      %v1275 = vsub.s32 6, %v1274
      %v1276 = vrot.slane %v1228, %v1275
      %v1277 = vlaneseq
      %v1278 = vshrl.u32 %v1277, 7
      %v1279 = vsub.s32 0, %v1278
      %v1280 = vrot.slane %v1229, %v1279
      %v1281 = vlaneseq
      %v1282 = vshrl.u32 %v1281, 7
      %v1283 = vsub.s32 2, %v1282
      %v1284 = vrot.slane %v1229, %v1283
      %v1295 = vlaneseq
      %v1296 = vshrl.u32 %v1295, 7
      %v1297 = vsub.s32 0, %v1296
      %v1298 = vrot.slane %v1248, %v1297
      %v1299 = vlaneseq
      %v1300 = vshrl.u32 %v1299, 7
      %v1301 = vsub.s32 0, %v1300
      %v1302 = vrot.slane %v1252, %v1301
      %v1303 = vlaneseq
      %v1304 = vshrl.u32 %v1303, 7
      %v1305 = vsub.s32 0, %v1304
      %v1306 = vrot.slane %v1256, %v1305
      %v1307 = vlaneseq
      %v1308 = vshrl.u32 %v1307, 7
      %v1309 = vsub.s32 0, %v1308
      %v1310 = vrot.slane %v1260, %v1309
      %v1311 = vlaneseq
      %v1312 = vshrl.u32 %v1311, 7
      %v1313 = vsub.s32 0, %v1312
      %v1314 = vrot.slane %v1264, %v1313
      %v1315 = vlaneseq
      %v1316 = vshrl.u32 %v1315, 7
      %v1317 = vsub.s32 0, %v1316
      %v1318 = vrot.slane %v1268, %v1317
      %v1319 = vlaneseq
      %v1320 = vshrl.u32 %v1319, 7
      %v1321 = vsub.s32 0, %v1320
      %v1322 = vrot.slane %v1272, %v1321
      %v1323 = vlaneseq
      %v1324 = vshrl.u32 %v1323, 7
      %v1325 = vsub.s32 0, %v1324
      %v1326 = vrot.slane %v1276, %v1325
      %v1327 = vlaneseq
      %v1328 = vshrl.u32 %v1327, 7
      %v1329 = vsub.s32 0, %v1328
      %v1330 = vrot.slane %v1280, %v1329
      %v1331 = vlaneseq
      %v1332 = vshrl.u32 %v1331, 7
      %v1333 = vsub.s32 0, %v1332
      %v1334 = vrot.slane %v1284, %v1333
      %v1345 = vcombine.low %v1298, %v1302
      %v1346 = vcombine.low %v1306, %v1310
      %v1347 = vcombine.low %v1314, %v1318
      %v1348 = vcombine.low %v1322, %v1326
      %v1349 = vcombine.low %v1330, %v1334
      %1350 = vrot.lane.b32.xlu0 %v1345, 60
      %v1351 = vpop.permute.xlu0 %1350
      %1352 = vrot.lane.b32.xlu0 %v1346, 60
      %v1353 = vpop.permute.xlu0 %1352
      %1354 = vrot.lane.b32.xlu0 %v1347, 60
      %v1355 = vpop.permute.xlu0 %1354
      %1356 = vrot.lane.b32.xlu0 %v1348, 60
      %v1357 = vpop.permute.xlu0 %1356
      %1358 = vrot.lane.b32.xlu0 %v1349, 60
      %v1359 = vpop.permute.xlu0 %1358
      %v1360 = vrot.slane %v1351, 4
      %v1361 = vrot.slane %v1353, 4
      %v1362 = vrot.slane %v1355, 4
      %v1363 = vrot.slane %v1357, 4
      %v1364 = vrot.slane %v1359, 4
      %v1365 = vsel %vm524, %v1360, %v1361
      %vm1366 = vcmask 490496
      %v1367 = vsel %vm1366, %v1351, %v1365
      %v1368 = vsel %vm524, %v1361, %v1362
      %v1369 = vsel %vm1366, %v1353, %v1368
      %v1370 = vsel %vm524, %v1362, %v1363
      %v1371 = vsel %vm1366, %v1355, %v1370
      %v1372 = vsel %vm524, %v1363, %v1364
      %v1373 = vsel %vm1366, %v1357, %v1372
      %v1374 = vsel %vm1366, %v1359, %v1364
      %v1380 = vmul.f32 %v1241, %v1367
      %v1381 = vmul.f32 %v1241, %v1369
      %v1382 = vmul.f32 %v1241, %v1371
      %v1383 = vmul.f32 %v1241, %v1373
      %v1384 = vmul.f32 %v1241, %v1374
      %v1385 = vadd.f32 %v1217, %v1380
      %v1386 = vadd.f32 %v1218, %v1381
      %v1387 = vadd.f32 %v1219, %v1382
      %v1388 = vadd.f32 %v1220, %v1383
      %v1389 = vadd.f32 %v1221, %v1384
      %v1390 = vld [vmem:[%s222] sm:$0xff]
      %v1391 = vld [vmem:[%s222 + $0x8] sm:$0x3]
      %s1392 = scalar_lea.vmem %s228, 14
      %v1393 = vld [vmem:[%s1392] sm:$0x3]
      %v1394 = vunpack.c.l.bf16 %v1393
      %v1395 = vunpack.c.l.bf16 %v1390
      %v1396 = vunpack.c.h.bf16 %v1390
      %v1397 = vunpack.c.l.bf16 %v1391
      %1399 = vset.pattern.permute.xlu0 0
      %1400 = vperm.xlu0 %1399, %v1394
      %v1401 = vpop.permute.xlu0 %1400
      %v1404 = vunpack.c.l.s4 839922192
      %v1405 = vunpack.c.0.s8 %v1404
      %v1406 = vlaneseq
      %v1407 = vshrl.u32 %v1406, 7
      %v1408 = vsub.s32 %v1405, %v1407
      %v1409 = vrot.slane %v1401, %v1408
      %v1413 = vlaneseq
      %v1414 = vshrl.u32 %v1413, 7
      %v1415 = vsub.s32 0, %v1414
      %v1416 = vrot.slane %v1395, %v1415
      %v1417 = vlaneseq
      %v1418 = vshrl.u32 %v1417, 7
      %v1419 = vsub.s32 2, %v1418
      %v1420 = vrot.slane %v1395, %v1419
      %v1421 = vlaneseq
      %v1422 = vshrl.u32 %v1421, 7
      %v1423 = vsub.s32 4, %v1422
      %v1424 = vrot.slane %v1395, %v1423
      %v1425 = vlaneseq
      %v1426 = vshrl.u32 %v1425, 7
      %v1427 = vsub.s32 6, %v1426
      %v1428 = vrot.slane %v1395, %v1427
      %v1429 = vlaneseq
      %v1430 = vshrl.u32 %v1429, 7
      %v1431 = vsub.s32 0, %v1430
      %v1432 = vrot.slane %v1396, %v1431
      %v1433 = vlaneseq
      %v1434 = vshrl.u32 %v1433, 7
      %v1435 = vsub.s32 2, %v1434
      %v1436 = vrot.slane %v1396, %v1435
      %v1437 = vlaneseq
      %v1438 = vshrl.u32 %v1437, 7
      %v1439 = vsub.s32 4, %v1438
      %v1440 = vrot.slane %v1396, %v1439
      %v1441 = vlaneseq
      %v1442 = vshrl.u32 %v1441, 7
      %v1443 = vsub.s32 6, %v1442
      %v1444 = vrot.slane %v1396, %v1443
      %v1445 = vlaneseq
      %v1446 = vshrl.u32 %v1445, 7
      %v1447 = vsub.s32 0, %v1446
      %v1448 = vrot.slane %v1397, %v1447
      %v1449 = vlaneseq
      %v1450 = vshrl.u32 %v1449, 7
      %v1451 = vsub.s32 2, %v1450
      %v1452 = vrot.slane %v1397, %v1451
      %v1463 = vlaneseq
      %v1464 = vshrl.u32 %v1463, 7
      %v1465 = vsub.s32 0, %v1464
      %v1466 = vrot.slane %v1416, %v1465
      %v1467 = vlaneseq
      %v1468 = vshrl.u32 %v1467, 7
      %v1469 = vsub.s32 0, %v1468
      %v1470 = vrot.slane %v1420, %v1469
      %v1471 = vlaneseq
      %v1472 = vshrl.u32 %v1471, 7
      %v1473 = vsub.s32 0, %v1472
      %v1474 = vrot.slane %v1424, %v1473
      %v1475 = vlaneseq
      %v1476 = vshrl.u32 %v1475, 7
      %v1477 = vsub.s32 0, %v1476
      %v1478 = vrot.slane %v1428, %v1477
      %v1479 = vlaneseq
      %v1480 = vshrl.u32 %v1479, 7
      %v1481 = vsub.s32 0, %v1480
      %v1482 = vrot.slane %v1432, %v1481
      %v1483 = vlaneseq
      %v1484 = vshrl.u32 %v1483, 7
      %v1485 = vsub.s32 0, %v1484
      %v1486 = vrot.slane %v1436, %v1485
      %v1487 = vlaneseq
      %v1488 = vshrl.u32 %v1487, 7
      %v1489 = vsub.s32 0, %v1488
      %v1490 = vrot.slane %v1440, %v1489
      %v1491 = vlaneseq
      %v1492 = vshrl.u32 %v1491, 7
      %v1493 = vsub.s32 0, %v1492
      %v1494 = vrot.slane %v1444, %v1493
      %v1495 = vlaneseq
      %v1496 = vshrl.u32 %v1495, 7
      %v1497 = vsub.s32 0, %v1496
      %v1498 = vrot.slane %v1448, %v1497
      %v1499 = vlaneseq
      %v1500 = vshrl.u32 %v1499, 7
      %v1501 = vsub.s32 0, %v1500
      %v1502 = vrot.slane %v1452, %v1501
      %v1513 = vcombine.low %v1466, %v1470
      %v1514 = vcombine.low %v1474, %v1478
      %v1515 = vcombine.low %v1482, %v1486
      %v1516 = vcombine.low %v1490, %v1494
      %v1517 = vcombine.low %v1498, %v1502
      %1518 = vrot.lane.b32.xlu0 %v1513, 59
      %v1519 = vpop.permute.xlu0 %1518
      %1520 = vrot.lane.b32.xlu0 %v1514, 59
      %v1521 = vpop.permute.xlu0 %1520
      %1522 = vrot.lane.b32.xlu0 %v1515, 59
      %v1523 = vpop.permute.xlu0 %1522
      %1524 = vrot.lane.b32.xlu0 %v1516, 59
      %v1525 = vpop.permute.xlu0 %1524
      %1526 = vrot.lane.b32.xlu0 %v1517, 59
      %v1527 = vpop.permute.xlu0 %1526
      %v1528 = vrot.slane %v1519, 4
      %v1529 = vrot.slane %v1521, 4
      %v1530 = vrot.slane %v1523, 4
      %v1531 = vrot.slane %v1525, 4
      %v1532 = vrot.slane %v1527, 4
      %v1533 = vsel %vm524, %v1528, %v1529
      %vm1534 = vcmask 482304
      %v1535 = vsel %vm1534, %v1519, %v1533
      %v1536 = vsel %vm524, %v1529, %v1530
      %v1537 = vsel %vm1534, %v1521, %v1536
      %v1538 = vsel %vm524, %v1530, %v1531
      %v1539 = vsel %vm1534, %v1523, %v1538
      %v1540 = vsel %vm524, %v1531, %v1532
      %v1541 = vsel %vm1534, %v1525, %v1540
      %v1542 = vsel %vm1534, %v1527, %v1532
      %v1548 = vmul.f32 %v1409, %v1535
      %v1549 = vmul.f32 %v1409, %v1537
      %v1550 = vmul.f32 %v1409, %v1539
      %v1551 = vmul.f32 %v1409, %v1541
      %v1552 = vmul.f32 %v1409, %v1542
      %v1553 = vadd.f32 %v1385, %v1548
      %v1554 = vadd.f32 %v1386, %v1549
      %v1555 = vadd.f32 %v1387, %v1550
      %v1556 = vadd.f32 %v1388, %v1551
      %v1557 = vadd.f32 %v1389, %v1552
      %v1558 = vld [vmem:[%s222] sm:$0xff]
      %v1559 = vld [vmem:[%s222 + $0x8] sm:$0x3]
      %s1560 = scalar_lea.vmem %s228, 16
      %v1561 = vld [vmem:[%s1560] sm:$0x3]
      %v1562 = vunpack.c.l.bf16 %v1561
      %v1563 = vunpack.c.l.bf16 %v1558
      %v1564 = vunpack.c.h.bf16 %v1558
      %v1565 = vunpack.c.l.bf16 %v1559
      %1567 = vset.pattern.permute.xlu0 0
      %1568 = vperm.xlu0 %1567, %v1562
      %v1569 = vpop.permute.xlu0 %1568
      %v1572 = vunpack.c.l.s4 839922192
      %v1573 = vunpack.c.0.s8 %v1572
      %v1574 = vlaneseq
      %v1575 = vshrl.u32 %v1574, 7
      %v1576 = vsub.s32 %v1573, %v1575
      %v1577 = vrot.slane %v1569, %v1576
      %v1581 = vlaneseq
      %v1582 = vshrl.u32 %v1581, 7
      %v1583 = vsub.s32 0, %v1582
      %v1584 = vrot.slane %v1563, %v1583
      %v1585 = vlaneseq
      %v1586 = vshrl.u32 %v1585, 7
      %v1587 = vsub.s32 2, %v1586
      %v1588 = vrot.slane %v1563, %v1587
      %v1589 = vlaneseq
      %v1590 = vshrl.u32 %v1589, 7
      %v1591 = vsub.s32 4, %v1590
      %v1592 = vrot.slane %v1563, %v1591
      %v1593 = vlaneseq
      %v1594 = vshrl.u32 %v1593, 7
      %v1595 = vsub.s32 6, %v1594
      %v1596 = vrot.slane %v1563, %v1595
      %v1597 = vlaneseq
      %v1598 = vshrl.u32 %v1597, 7
      %v1599 = vsub.s32 0, %v1598
      %v1600 = vrot.slane %v1564, %v1599
      %v1601 = vlaneseq
      %v1602 = vshrl.u32 %v1601, 7
      %v1603 = vsub.s32 2, %v1602
      %v1604 = vrot.slane %v1564, %v1603
      %v1605 = vlaneseq
      %v1606 = vshrl.u32 %v1605, 7
      %v1607 = vsub.s32 4, %v1606
      %v1608 = vrot.slane %v1564, %v1607
      %v1609 = vlaneseq
      %v1610 = vshrl.u32 %v1609, 7
      %v1611 = vsub.s32 6, %v1610
      %v1612 = vrot.slane %v1564, %v1611
      %v1613 = vlaneseq
      %v1614 = vshrl.u32 %v1613, 7
      %v1615 = vsub.s32 0, %v1614
      %v1616 = vrot.slane %v1565, %v1615
      %v1617 = vlaneseq
      %v1618 = vshrl.u32 %v1617, 7
      %v1619 = vsub.s32 2, %v1618
      %v1620 = vrot.slane %v1565, %v1619
      %v1631 = vlaneseq
      %v1632 = vshrl.u32 %v1631, 7
      %v1633 = vsub.s32 0, %v1632
      %v1634 = vrot.slane %v1584, %v1633
      %v1635 = vlaneseq
      %v1636 = vshrl.u32 %v1635, 7
      %v1637 = vsub.s32 0, %v1636
      %v1638 = vrot.slane %v1588, %v1637
      %v1639 = vlaneseq
      %v1640 = vshrl.u32 %v1639, 7
      %v1641 = vsub.s32 0, %v1640
      %v1642 = vrot.slane %v1592, %v1641
      %v1643 = vlaneseq
      %v1644 = vshrl.u32 %v1643, 7
      %v1645 = vsub.s32 0, %v1644
      %v1646 = vrot.slane %v1596, %v1645
      %v1647 = vlaneseq
      %v1648 = vshrl.u32 %v1647, 7
      %v1649 = vsub.s32 0, %v1648
      %v1650 = vrot.slane %v1600, %v1649
      %v1651 = vlaneseq
      %v1652 = vshrl.u32 %v1651, 7
      %v1653 = vsub.s32 0, %v1652
      %v1654 = vrot.slane %v1604, %v1653
      %v1655 = vlaneseq
      %v1656 = vshrl.u32 %v1655, 7
      %v1657 = vsub.s32 0, %v1656
      %v1658 = vrot.slane %v1608, %v1657
      %v1659 = vlaneseq
      %v1660 = vshrl.u32 %v1659, 7
      %v1661 = vsub.s32 0, %v1660
      %v1662 = vrot.slane %v1612, %v1661
      %v1663 = vlaneseq
      %v1664 = vshrl.u32 %v1663, 7
      %v1665 = vsub.s32 0, %v1664
      %v1666 = vrot.slane %v1616, %v1665
      %v1667 = vlaneseq
      %v1668 = vshrl.u32 %v1667, 7
      %v1669 = vsub.s32 0, %v1668
      %v1670 = vrot.slane %v1620, %v1669
      %v1681 = vcombine.low %v1634, %v1638
      %v1682 = vcombine.low %v1642, %v1646
      %v1683 = vcombine.low %v1650, %v1654
      %v1684 = vcombine.low %v1658, %v1662
      %v1685 = vcombine.low %v1666, %v1670
      %1686 = vrot.lane.b32.xlu0 %v1681, 58
      %v1687 = vpop.permute.xlu0 %1686
      %1688 = vrot.lane.b32.xlu0 %v1682, 58
      %v1689 = vpop.permute.xlu0 %1688
      %1690 = vrot.lane.b32.xlu0 %v1683, 58
      %v1691 = vpop.permute.xlu0 %1690
      %1692 = vrot.lane.b32.xlu0 %v1684, 58
      %v1693 = vpop.permute.xlu0 %1692
      %1694 = vrot.lane.b32.xlu0 %v1685, 58
      %v1695 = vpop.permute.xlu0 %1694
      %v1696 = vrot.slane %v1687, 4
      %v1697 = vrot.slane %v1689, 4
      %v1698 = vrot.slane %v1691, 4
      %v1699 = vrot.slane %v1693, 4
      %v1700 = vrot.slane %v1695, 4
      %v1701 = vsel %vm524, %v1696, %v1697
      %vm1702 = vcmask 474112
      %v1703 = vsel %vm1702, %v1687, %v1701
      %v1704 = vsel %vm524, %v1697, %v1698
      %v1705 = vsel %vm1702, %v1689, %v1704
      %v1706 = vsel %vm524, %v1698, %v1699
      %v1707 = vsel %vm1702, %v1691, %v1706
      %v1708 = vsel %vm524, %v1699, %v1700
      %v1709 = vsel %vm1702, %v1693, %v1708
      %v1710 = vsel %vm1702, %v1695, %v1700
      %v1716 = vmul.f32 %v1577, %v1703
      %v1717 = vmul.f32 %v1577, %v1705
      %v1718 = vmul.f32 %v1577, %v1707
      %v1719 = vmul.f32 %v1577, %v1709
      %v1720 = vmul.f32 %v1577, %v1710
      %v1721 = vadd.f32 %v1553, %v1716
      %v1722 = vadd.f32 %v1554, %v1717
      %v1723 = vadd.f32 %v1555, %v1718
      %v1724 = vadd.f32 %v1556, %v1719
      %v1725 = vadd.f32 %v1557, %v1720
      %1726 = vst [vmem:[#allocation2] sm:$0xff] %v1721
      %1727 = vst [vmem:[#allocation2 + $0x8] sm:$0xff] %v1722
      %1728 = vst [vmem:[#allocation2 + $0x10] sm:$0xff] %v1723
      %1729 = vst [vmem:[#allocation2 + $0x18] sm:$0xff] %v1724
      %1730 = vst [vmem:[#allocation2 + $0x20] sm:$0xf] %v1725
      %p1731 = scmp.eq.s32.totalorder %s21, 2
      // Predicated region
      $region37: #{_lambda_.8} parent=31 // pred_check
        %p1732 = pneg %p1731
      $region38: #{_lambda_.8} parent=31 // pred_check_branch
        %1734 = sbr.rel (%p1732) target = $region40
      $region39: #{_lambda_.8} parent=31 // pred_region
        %v1735 = vld [vmem:[#allocation2] sm:$0xff]
        %v1736 = vld [vmem:[#allocation2 + $0x8] sm:$0xff]
        %v1737 = vld [vmem:[#allocation2 + $0x10] sm:$0xff]
        %v1738 = vld [vmem:[#allocation2 + $0x18] sm:$0xff]
        %v1739 = vld [vmem:[#allocation2 + $0x20] sm:$0xf]
        %v1740 = vld [vmem:[%s2] sm:$0xf]
        %1742 = vset.pattern.permute.xlu0 0
        %1743 = vperm.xlu0 %1742, %v1740
        %v1744 = vpop.permute.xlu0 %1743
        %v1746 = vunpack.c.l.s4 839922192
        %v1747 = vunpack.c.0.s8 %v1746
        %v1748 = vlaneseq
        %v1749 = vshrl.u32 %v1748, 7
        %v1750 = vsub.s32 %v1747, %v1749
        %v1751 = vrot.slane %v1744, %v1750
        %v1753 = vadd.f32 %v1735, %v1751
        %v1754 = vadd.f32 %v1736, %v1751
        %v1755 = vadd.f32 %v1737, %v1751
        %v1756 = vadd.f32 %v1738, %v1751
        %v1757 = vadd.f32 %v1739, %v1751
        %v1758 = vmax.f32 %v1753, 0.0
        %v1759 = vmax.f32 %v1754, 0.0
        %v1760 = vmax.f32 %v1755, 0.0
        %v1761 = vmax.f32 %v1756, 0.0
        %v1762 = vmax.f32 %v1757, 0.0
        %1763 = vst [vmem:[%s237] sm:$0xff] %v1758
        %1764 = vst [vmem:[%s237 + $0x8] sm:$0xff] %v1759
        %1765 = vst [vmem:[%s237 + $0x10] sm:$0xff] %v1760
        %1766 = vst [vmem:[%s237 + $0x18] sm:$0xff] %v1761
        %1767 = vst [vmem:[%s237 + $0x20] sm:$0xf] %v1762
      $region40: #{_lambda_.8} parent=31 // pred_fallthru
        _
      %p1768 = scmp.lt.s32.totalorder %s19, 1
      %s1769 = scalar_select %p1768, %s19, 1
      %p1770 = scmp.lt.s32.totalorder %s20, 31
      %s1771 = scalar_select %p1770, %s20, 31
      %s1772 = smul.addr %s1771, 9
      %s1773 = smul.addr %s1769, 288
      %s1774 = sadd.s32 %s1772, %s1773
      %s1775 = smul.addr %s1774, 4
      %s1776 = scalar_lea.vmem %s3, %s1775
      // Predicated region
      $region41: #{_lambda_.8} parent=31 // pred_check
        %p1777 = pneg %p130
      $region42: #{_lambda_.8} parent=31 // pred_check_branch
        %1779 = sbr.rel (%p1777) target = $region44
      $region43: #{_lambda_.8} parent=31 // pred_region
        _
      $region44: #{_lambda_.8} parent=31 // pred_fallthru
        _
    $region32: #{_lambda_.8} parent=5 // pred_fallthru
      _
    %p1780 = scmp.le.s32.totalorder 2, %s9
    // Predicated region
    $region45: #{_lambda_.8} parent=5 // pred_check
      %p1781 = pneg %p1780
    $region46: #{_lambda_.8} parent=5 // pred_check_branch
      %1783 = sbr.rel (%p1781) target = $region48
    $region47: #{_lambda_.8} parent=5 // pred_region
      %s1784 = ssub.s32 %s9, 2
      // Predicated region
      $region49: #{_lambda_.8} parent=47 // pred_check
        %p1785 = pneg %p136
      $region50: #{_lambda_.8} parent=47 // pred_check_branch
        %1787 = sbr.rel (%p1785) target = $region52
      $region51: #{_lambda_.8} parent=47 // pred_region
        %p1788 = scmp.lt.s32.totalorder %s22, 1
        %s1789 = scalar_select %p1788, %s22, 1
        %p1790 = scmp.lt.s32.totalorder %s23, 31
        %s1791 = scalar_select %p1790, %s23, 31
        %s1792 = smul.addr %s1791, 9
        %s1793 = smul.addr %s1789, 288
        %s1794 = sadd.s32 %s1792, %s1793
        %s1795 = smul.addr %s1794, 4
        %s1796 = scalar_lea.vmem %s3, %s1795
      $region52: #{_lambda_.8} parent=47 // pred_fallthru
        _
    $region48: #{_lambda_.8} parent=5 // pred_fallthru
      _
  $region6: #{_lambda_.8} parent=0 // loop_footer
    %s13 = sadd.s32 1, %s9
  $region7: #{_lambda_.8} parent=0 // loop_footer_branch
    %8 = sbr.rel target = $region3
  $region8: #{_lambda_.8} parent=0 // loop_exit
    _

// kernel: _lambda_.9
$region0: #{_lambda_.9}
  #allocation0 [shape = 'u32[]', space=smem, size = 0x4, offset = 0x4, fixed_abs, tag = 'smem constant byte address 0x4 - core index']
  #allocation1 [shape = 'u32[144,128]{1,0:T(1,128)}', space=vmem, size = 0x12000, scoped, tag = 'internal scratch']
  #allocation2 [shape = 'f32[8,384]{1,0:T(8,128)}', space=vmem, size = 0x3000, scoped, tag = 'scratch operand']
  %s0 = inlined_call_operand.vmem [shape: bf16[2,18,4,512], index: 0, kind: input, shape index: {}]
  %s1 = inlined_call_operand.vmem [shape: bf16[3,3,3,8,4], index: 1, kind: input, shape index: {}]
  %s2 = inlined_call_operand.vmem [shape: f32[8,1], index: 2, kind: input, shape index: {}]
  %s3 = inlined_call_operand.vmem [shape: f32[2,16,8,384], index: 3, kind: output, shape index: {}]
  %s4 = sld [smem:[#allocation0]]
  $region53: #{_lambda_.9} parent=0
    _
  %s6 = ssub.s32 1, %s4
  %s7 = scalar_select 0, %s6, %s4
  loop: start=0, step=1, limit=98
  $region2: #{_lambda_.9} parent=0 // loop_pre_header
    _
  $region3: #{_lambda_.9} parent=0 // loop_header
    %s9 = sphi 0, %s13
    %p10 = scmp.ge.s32.totalorder %s9, 98
    %s16 = sphi 0, %s35
    %s17 = sphi 0, %s31
    %s18 = sphi 0, %s27
    %s19 = sphi 0, %s16
    %s20 = sphi 0, %s17
    %s21 = sphi 0, %s18
    %s22 = sphi 0, %s19
    %s23 = sphi 0, %s20
    %s24 = sphi 0, %s21
    %s42 = sphi 0, %s44
    %s45 = sphi 0, %s42
    %s46 = sphi 0, %s45
    %s62 = sphi 0, %s46
    %s68 = sphi 0, %s70
    %s71 = sphi 0, %s68
    %s72 = sphi 0, %s71
    %s88 = sphi 0, %s72
    %s92 = sphi 0, %s92
    %s94 = sphi 0, %s92
    %s95 = sphi 0, %s94
    %s109 = sphi 0, %s95
    %s117 = sphi 0, %s119
    %s120 = sphi 0, %s117
    %s121 = sphi 0, %s120
    %s137 = sphi 0, %s121
  $region4: #{_lambda_.9} parent=0 // loop_header_branch
    %12 = sbr.rel (%p10) target = $region8
  $region5: #{_lambda_.9} parent=0 // loop_body
    %s14 = ssub.s32 %s9, 1
    %s15 = ssub.s32 %s9, 2
    %s25 = sadd.s32 1, %s18
    %p26 = scmp.ge.s32.totalorder %s25, 3
    %s27 = scalar_select %p26, 0, %s25
    %s28 = sadd.s32 1, %s17
    %s29 = scalar_select %p26, %s28, %s17
    %p30 = scmp.ge.s32.totalorder %s29, 16
    %s31 = scalar_select %p30, 0, %s29
    %s32 = sadd.s32 1, %s16
    %s33 = scalar_select %p30, %s32, %s16
    %p34 = scmp.ge.s32.totalorder %s33, 2
    %s35 = scalar_select %p34, 0, %s33
    %s36 = sadd.s32 %s17, %s18
    %s37 = sadd.s32 %s31, %s27
    %s38 = ssub.s32 %s16, %s35
    %s39 = ssub.s32 %s36, %s37
    %s40 = sor.u32 %s38, %s39
    %p41 = scmp.eq.s32.totalorder %s40, 0
    %s43 = sadd.s32 %s42, 1
    %s44 = scalar_select %p41, %s42, %s43
    %p47 = pneg %p41
    %p48 = scmp.eq.s32.totalorder %s9, 95
    %p49 = por %p47, %p48
    %p50 = scmp.ne.s32.totalorder %s42, %s45
    %p51 = scmp.eq.s32.totalorder %s9, 0
    %p52 = por %p50, %p51
    %p53 = scmp.ne.s32.totalorder %s42, %s45
    %p54 = scmp.eq.s32.totalorder %s14, 95
    %p55 = por %p53, %p54
    %p56 = scmp.ne.s32.totalorder %s45, %s46
    %p57 = scmp.eq.s32.totalorder %s14, 0
    %p58 = por %p56, %p57
    %p59 = scmp.ne.s32.totalorder %s45, %s46
    %p60 = scmp.eq.s32.totalorder %s15, 95
    %p61 = por %p59, %p60
    %p63 = scmp.ne.s32.totalorder %s46, %s62
    %p64 = scmp.eq.s32.totalorder %s15, 0
    %p65 = por %p63, %p64
    %s66 = ssub.s32 %s18, %s27
    %p67 = scmp.eq.s32.totalorder %s66, 0
    %s69 = sadd.s32 %s68, 1
    %s70 = scalar_select %p67, %s68, %s69
    %p73 = pneg %p67
    %p74 = scmp.eq.s32.totalorder %s9, 95
    %p75 = por %p73, %p74
    %p76 = scmp.ne.s32.totalorder %s68, %s71
    %p77 = scmp.eq.s32.totalorder %s9, 0
    %p78 = por %p76, %p77
    %p79 = scmp.ne.s32.totalorder %s68, %s71
    %p80 = scmp.eq.s32.totalorder %s14, 95
    %p81 = por %p79, %p80
    %p82 = scmp.ne.s32.totalorder %s71, %s72
    %p83 = scmp.eq.s32.totalorder %s14, 0
    %p84 = por %p82, %p83
    %p85 = scmp.ne.s32.totalorder %s71, %s72
    %p86 = scmp.eq.s32.totalorder %s15, 95
    %p87 = por %p85, %p86
    %p89 = scmp.ne.s32.totalorder %s72, %s88
    %p90 = scmp.eq.s32.totalorder %s15, 0
    %p91 = por %p89, %p90
    %s93 = sadd.s32 %s92, 1
    %p96 = scmp.eq.s32.totalorder %s9, 95
    %p97 = scmp.ne.s32.totalorder %s92, %s94
    %p98 = scmp.eq.s32.totalorder %s9, 0
    %p99 = por %p97, %p98
    %p100 = scmp.ne.s32.totalorder %s92, %s94
    %p101 = scmp.eq.s32.totalorder %s14, 95
    %p102 = por %p100, %p101
    %p103 = scmp.ne.s32.totalorder %s94, %s95
    %p104 = scmp.eq.s32.totalorder %s14, 0
    %p105 = por %p103, %p104
    %p106 = scmp.ne.s32.totalorder %s94, %s95
    %p107 = scmp.eq.s32.totalorder %s15, 95
    %p108 = por %p106, %p107
    %p110 = scmp.ne.s32.totalorder %s95, %s109
    %p111 = scmp.eq.s32.totalorder %s15, 0
    %p112 = por %p110, %p111
    %s113 = ssub.s32 %s16, %s35
    %s114 = ssub.s32 %s17, %s31
    %s115 = sor.u32 %s113, %s114
    %p116 = scmp.eq.s32.totalorder %s115, 0
    %s118 = sadd.s32 %s117, 1
    %s119 = scalar_select %p116, %s117, %s118
    %p122 = pneg %p116
    %p123 = scmp.eq.s32.totalorder %s9, 95
    %p124 = por %p122, %p123
    %p125 = scmp.ne.s32.totalorder %s117, %s120
    %p126 = scmp.eq.s32.totalorder %s9, 0
    %p127 = por %p125, %p126
    %p128 = scmp.ne.s32.totalorder %s117, %s120
    %p129 = scmp.eq.s32.totalorder %s14, 95
    %p130 = por %p128, %p129
    %p131 = scmp.ne.s32.totalorder %s120, %s121
    %p132 = scmp.eq.s32.totalorder %s14, 0
    %p133 = por %p131, %p132
    %p134 = scmp.ne.s32.totalorder %s120, %s121
    %p135 = scmp.eq.s32.totalorder %s15, 95
    %p136 = por %p134, %p135
    %p138 = scmp.ne.s32.totalorder %s121, %s137
    %p139 = scmp.eq.s32.totalorder %s15, 0
    %p140 = por %p138, %p139
    %p141 = scmp.le.s32.totalorder 1, %s9
    %p142 = scmp.lt.s32.totalorder %s9, 97
    %p143 = pnand %p141, %p142
    %p144 = pneg %p143
    // Predicated region
    $region9: #{_lambda_.9} parent=5 // pred_check
      _
    $region10: #{_lambda_.9} parent=5 // pred_check_branch
      %146 = sbr.rel (%p143) target = $region12
    $region11: #{_lambda_.9} parent=5 // pred_region
      %s147 = ssub.s32 %s9, 1
      // Predicated region
      $region13: #{_lambda_.9} parent=11 // pred_check
        %p148 = pneg %p105
      $region14: #{_lambda_.9} parent=11 // pred_check_branch
        %150 = sbr.rel (%p148) target = $region16
      $region15: #{_lambda_.9} parent=11 // pred_region
        _
      $region16: #{_lambda_.9} parent=11 // pred_fallthru
        _
    $region12: #{_lambda_.9} parent=5 // pred_fallthru
      _
    %p151 = scmp.lt.s32.totalorder %s9, 96
    // Predicated region
    $region17: #{_lambda_.9} parent=5 // pred_check
      %p152 = pneg %p151
    $region18: #{_lambda_.9} parent=5 // pred_check_branch
      %154 = sbr.rel (%p152) target = $region20
    $region19: #{_lambda_.9} parent=5 // pred_region
      // Predicated region
      $region21: #{_lambda_.9} parent=19 // pred_check
        %p155 = pneg %p52
      $region22: #{_lambda_.9} parent=19 // pred_check_branch
        %157 = sbr.rel (%p155) target = $region24
      $region23: #{_lambda_.9} parent=19 // pred_region
        %s158 = sadd.s32 %s17, %s18
        %p159 = scmp.lt.s32.totalorder %s16, 1
        %s160 = scalar_select %p159, %s16, 1
        %p161 = scmp.lt.s32.totalorder %s158, 17
        %s162 = scalar_select %p161, %s158, 17
        %s163 = smul.addr %s162, 4
        %s164 = smul.addr %s160, 72
        %s165 = sadd.s32 %s163, %s164
        %s166 = smul.addr %s165, 2
        %s167 = scalar_lea.vmem %s0, %s166
        %s168 = sadd.s32 %s17, %s18
      $region24: #{_lambda_.9} parent=19 // pred_fallthru
        _
      // Predicated region
      $region25: #{_lambda_.9} parent=19 // pred_check
        %p169 = pneg %p78
      $region26: #{_lambda_.9} parent=19 // pred_check_branch
        %171 = sbr.rel (%p169) target = $region28
      $region27: #{_lambda_.9} parent=19 // pred_region
        %p172 = scmp.lt.s32.totalorder %s18, 2
        %s173 = scalar_select %p172, %s18, 2
        %s174 = smul.addr %s173, 9
        %s175 = smul.addr %s174, 4
        %s176 = scalar_lea.vmem %s1, %s175
      $region28: #{_lambda_.9} parent=19 // pred_fallthru
        _
    $region20: #{_lambda_.9} parent=5 // pred_fallthru
      _
    %p177 = scmp.le.s32.totalorder 1, %s9
    %p178 = scmp.lt.s32.totalorder %s9, 97
    %p179 = pnand %p177, %p178
    %p180 = pneg %p179
    // Predicated region
    $region29: #{_lambda_.9} parent=5 // pred_check
      _
    $region30: #{_lambda_.9} parent=5 // pred_check_branch
      %182 = sbr.rel (%p179) target = $region32
    $region31: #{_lambda_.9} parent=5 // pred_region
      %s183 = ssub.s32 %s9, 1
      %s184 = sadd.s32 %s20, %s21
      %p185 = scmp.lt.s32.totalorder %s19, 1
      %s186 = scalar_select %p185, %s19, 1
      %p187 = scmp.lt.s32.totalorder %s184, 17
      %s188 = scalar_select %p187, %s184, 17
      %s189 = smul.addr %s188, 4
      %s190 = smul.addr %s186, 72
      %s191 = sadd.s32 %s189, %s190
      %s192 = smul.addr %s191, 2
      %s193 = scalar_lea.vmem %s0, %s192
      %p194 = pneg %p58
      %p195 = pneg %p55
      %p196 = scmp.lt.s32.totalorder %s21, 2
      %s197 = scalar_select %p196, %s21, 2
      %s198 = smul.addr %s197, 9
      %s199 = smul.addr %s198, 4
      %s200 = scalar_lea.vmem %s1, %s199
      %p201 = pneg %p84
      %p202 = pneg %p81
      %p203 = pneg %p105
      %p204 = pneg %p102
      %p205 = pneg %p133
      %p206 = pneg %p130
      %p207 = scmp.lt.s32.totalorder %s19, 1
      %s208 = scalar_select %p207, %s19, 1
      %p209 = scmp.lt.s32.totalorder %s20, 15
      %s210 = scalar_select %p209, %s20, 15
      %s211 = smul.addr %s210, 3
      %s212 = smul.addr %s208, 48
      %s213 = sadd.s32 %s211, %s212
      %s214 = smul.addr %s213, 8
      %s215 = scalar_lea.vmem %s3, %s214
      %s216 = sadd.s32 %s20, %s21
      %p217 = scmp.lt.s32.totalorder %s19, 1
      %s218 = scalar_select %p217, %s19, 1
      %p219 = scmp.lt.s32.totalorder %s216, 17
      %s220 = scalar_select %p219, %s216, 17
      %s221 = smul.addr %s220, 4
      %s222 = smul.addr %s218, 72
      %s223 = sadd.s32 %s221, %s222
      %s224 = smul.addr %s223, 2
      %s225 = scalar_lea.vmem %s0, %s224
      %s226 = sadd.s32 %s20, %s21
      %p227 = scmp.lt.s32.totalorder %s21, 2
      %s228 = scalar_select %p227, %s21, 2
      %s229 = smul.addr %s228, 9
      %s230 = smul.addr %s229, 4
      %s231 = scalar_lea.vmem %s1, %s230
      %p232 = scmp.lt.s32.totalorder %s19, 1
      %s233 = scalar_select %p232, %s19, 1
      %p234 = scmp.lt.s32.totalorder %s20, 15
      %s235 = scalar_select %p234, %s20, 15
      %s236 = smul.addr %s235, 3
      %s237 = smul.addr %s233, 48
      %s238 = sadd.s32 %s236, %s237
      %s239 = smul.addr %s238, 8
      %s240 = scalar_lea.vmem %s3, %s239
      %p242 = scmp.eq.s32.totalorder %s21, 0
      // Predicated region
      $region33: #{_lambda_.9} parent=31 // pred_check
        %p243 = pneg %p242
      $region34: #{_lambda_.9} parent=31 // pred_check_branch
        %245 = sbr.rel (%p243) target = $region36
      $region35: #{_lambda_.9} parent=31 // pred_region
        %246 = vst [vmem:[#allocation2] sm:$0xff] 0.0
        %247 = vst [vmem:[#allocation2 + $0x8] sm:$0xff] 0.0
        %248 = vst [vmem:[#allocation2 + $0x10] sm:$0xff] 0.0
      $region36: #{_lambda_.9} parent=31 // pred_fallthru
        _
      %v249 = vld [vmem:[#allocation2] sm:$0xff]
      %v250 = vld [vmem:[#allocation2 + $0x8] sm:$0xff]
      %v251 = vld [vmem:[#allocation2 + $0x10] sm:$0xff]
      %v252 = vld [vmem:[%s225] sm:$0x3f]
      %v253 = vld [vmem:[%s231] sm:$0xf]
      %v255 = vcombine.high %v252, %v252
      %v257 = vunpack.c.l.s4 1983009808
      %v258 = vunpack.c.0.s8 %v257
      %v259 = vlaneseq
      %v260 = vshrl.u32 %v259, 7
      %v261 = vsub.s32 %v258, %v260
      %v262 = vrot.slane %v252, %v261
      %v264 = vunpack.c.l.s4 1983009808
      %v265 = vunpack.c.0.s8 %v264
      %v266 = vlaneseq
      %v267 = vshrl.u32 %v266, 7
      %v268 = vsub.s32 %v265, %v267
      %v269 = vrot.slane %v255, %v268
      %v270 = vcombine.high %v262, %v262
      %vm271 = vcmask 31744
      %v273 = vsel %vm271, %v253, 0
      %vm275 = vcmask 1041408
      %v277 = vsel %vm275, %v262, 0
      %v280 = vsel %vm275, %v270, 0
      %v283 = vsel %vm275, %v269, 0
      %285 = vmatprep.subr.bf16.mxu0 %v280
      %286 = vmatpush1.bf16.msra.mxu0 %v277
      %287 = vmatprep.subr.bf16.mxu0 0
      %288 = vmatpush1.bf16.msra.mxu0 0
      %289 = vmatprep.subr.bf16.mxu0 0
      %290 = vmatpush1.bf16.msra.mxu0 0
      %291 = vmatprep.subr.bf16.mxu0 0
      %292 = vmatpush1.bf16.msra.mxu0 0
      %293 = vmatprep.subr.bf16.mxu0 0
      %294 = vmatpush1.bf16.msra.mxu0 0
      %295 = vmatprep.subr.bf16.mxu0 0
      %296 = vmatpush1.bf16.msra.mxu0 0
      %297 = vmatprep.subr.bf16.mxu0 0
      %298 = vmatpush1.bf16.msra.mxu0 0
      %299 = vmatprep.subr.bf16.mxu0 0
      %300 = vmatpush1.bf16.msra.mxu0 0
      %301 = vmatprep.subr.bf16.mxu0 0
      %302 = vmatpush1.bf16.msra.mxu0 0
      %303 = vmatprep.subr.bf16.mxu0 0
      %304 = vmatpush1.bf16.msra.mxu0 0
      %305 = vmatprep.subr.bf16.mxu0 0
      %306 = vmatpush1.bf16.msra.mxu0 0
      %307 = vmatprep.subr.bf16.mxu0 0
      %308 = vmatpush1.bf16.msra.mxu0 0
      %309 = vmatprep.subr.bf16.mxu0 0
      %310 = vmatpush1.bf16.msra.mxu0 0
      %311 = vmatprep.subr.bf16.mxu0 0
      %312 = vmatpush1.bf16.msra.mxu0 0
      %313 = vmatprep.subr.bf16.mxu0 0
      %314 = vmatpush1.bf16.msra.mxu0 0
      %315 = vmatprep.subr.bf16.mxu0 0
      %316 = vmatpush1.bf16.msra.mxu0 0
      %317 = vmatprep.mubr.bf16.mxu0 0
      %318 = vmatmul.mubr.bf16.gmra.mrb[0].mxu0 %v273
      %v319 = vpop.f32.mrb[0].mxu0
      %v320 = vadd.f32 0.0, %v319
      %v321 = vpop.f32.mrb[0].mxu0
      %v322 = vadd.f32 0.0, %v321
      %v323 = vpop.f32.mrb[0].mxu0
      %v324 = vpop.f32.mrb[0].mxu0
      %325 = vdwg.mxu0
      %326 = vmatprep.subr.bf16.mxu0 0
      %327 = vmatpush1.bf16.msra.mxu0 %v283
      %328 = vmatprep.subr.bf16.mxu0 0
      %329 = vmatpush1.bf16.msra.mxu0 0
      %330 = vmatprep.subr.bf16.mxu0 0
      %331 = vmatpush1.bf16.msra.mxu0 0
      %332 = vmatprep.subr.bf16.mxu0 0
      %333 = vmatpush1.bf16.msra.mxu0 0
      %334 = vmatprep.subr.bf16.mxu0 0
      %335 = vmatpush1.bf16.msra.mxu0 0
      %336 = vmatprep.subr.bf16.mxu0 0
      %337 = vmatpush1.bf16.msra.mxu0 0
      %338 = vmatprep.subr.bf16.mxu0 0
      %339 = vmatpush1.bf16.msra.mxu0 0
      %340 = vmatprep.subr.bf16.mxu0 0
      %341 = vmatpush1.bf16.msra.mxu0 0
      %342 = vmatprep.subr.bf16.mxu0 0
      %343 = vmatpush1.bf16.msra.mxu0 0
      %344 = vmatprep.subr.bf16.mxu0 0
      %345 = vmatpush1.bf16.msra.mxu0 0
      %346 = vmatprep.subr.bf16.mxu0 0
      %347 = vmatpush1.bf16.msra.mxu0 0
      %348 = vmatprep.subr.bf16.mxu0 0
      %349 = vmatpush1.bf16.msra.mxu0 0
      %350 = vmatprep.subr.bf16.mxu0 0
      %351 = vmatpush1.bf16.msra.mxu0 0
      %352 = vmatprep.subr.bf16.mxu0 0
      %353 = vmatpush1.bf16.msra.mxu0 0
      %354 = vmatprep.subr.bf16.mxu0 0
      %355 = vmatpush1.bf16.msra.mxu0 0
      %356 = vmatprep.subr.bf16.mxu0 0
      %357 = vmatpush1.bf16.msra.mxu0 0
      %358 = vmatprep.mubr.bf16.mxu0 0
      %359 = vmatmul.mubr.bf16.gmra.mrb[0].mxu0 %v273
      %v360 = vpop.f32.mrb[0].mxu0
      %v361 = vadd.f32 0.0, %v360
      %v362 = vpop.f32.mrb[0].mxu0
      %v363 = vpop.f32.mrb[0].mxu0
      %v364 = vpop.f32.mrb[0].mxu0
      %365 = vdwg.mxu0
      %v366 = vadd.f32 %v249, %v320
      %v367 = vadd.f32 %v250, %v322
      %v368 = vadd.f32 %v251, %v361
      %v369 = vld [vmem:[%s225] sm:$0xff]
      %s370 = scalar_lea.vmem %s231, 4
      %v371 = vld [vmem:[%s370] sm:$0xf]
      %v373 = vcombine.high %v369, %v369
      %v375 = vunpack.c.l.s4 1983009808
      %v376 = vunpack.c.0.s8 %v375
      %v377 = vlaneseq
      %v378 = vshrl.u32 %v377, 7
      %v379 = vsub.s32 %v376, %v378
      %v380 = vrot.slane %v369, %v379
      %v382 = vunpack.c.l.s4 1983009808
      %v383 = vunpack.c.0.s8 %v382
      %v384 = vlaneseq
      %v385 = vshrl.u32 %v384, 7
      %v386 = vsub.s32 %v383, %v385
      %v387 = vrot.slane %v373, %v386
      %v388 = vcombine.high %v380, %v380
      %v389 = vcombine.high %v387, %v387
      %390 = vrot.lane.b32.xlu0 %v380, 127
      %v391 = vpop.permute.xlu0 %390
      %392 = vrot.lane.b32.xlu0 %v388, 127
      %v393 = vpop.permute.xlu0 %392
      %394 = vrot.lane.b32.xlu0 %v387, 127
      %v395 = vpop.permute.xlu0 %394
      %396 = vrot.lane.b32.xlu0 %v389, 127
      %v397 = vpop.permute.xlu0 %396
      %vm398 = vcmask 1039360
      %v399 = vsel %vm398, %v391, %v393
      %v400 = vsel %vm398, %v393, %v395
      %v401 = vsel %vm398, %v395, %v397
      %v403 = vsel %vm271, %v371, 0
      %v406 = vsel %vm275, %v399, 0
      %v409 = vsel %vm275, %v400, 0
      %v412 = vsel %vm275, %v401, 0
      %414 = vmatprep.subr.bf16.mxu0 %v409
      %415 = vmatpush1.bf16.msra.mxu0 %v406
      %416 = vmatprep.subr.bf16.mxu0 0
      %417 = vmatpush1.bf16.msra.mxu0 0
      %418 = vmatprep.subr.bf16.mxu0 0
      %419 = vmatpush1.bf16.msra.mxu0 0
      %420 = vmatprep.subr.bf16.mxu0 0
      %421 = vmatpush1.bf16.msra.mxu0 0
      %422 = vmatprep.subr.bf16.mxu0 0
      %423 = vmatpush1.bf16.msra.mxu0 0
      %424 = vmatprep.subr.bf16.mxu0 0
      %425 = vmatpush1.bf16.msra.mxu0 0
      %426 = vmatprep.subr.bf16.mxu0 0
      %427 = vmatpush1.bf16.msra.mxu0 0
      %428 = vmatprep.subr.bf16.mxu0 0
      %429 = vmatpush1.bf16.msra.mxu0 0
      %430 = vmatprep.subr.bf16.mxu0 0
      %431 = vmatpush1.bf16.msra.mxu0 0
      %432 = vmatprep.subr.bf16.mxu0 0
      %433 = vmatpush1.bf16.msra.mxu0 0
      %434 = vmatprep.subr.bf16.mxu0 0
      %435 = vmatpush1.bf16.msra.mxu0 0
      %436 = vmatprep.subr.bf16.mxu0 0
      %437 = vmatpush1.bf16.msra.mxu0 0
      %438 = vmatprep.subr.bf16.mxu0 0
      %439 = vmatpush1.bf16.msra.mxu0 0
      %440 = vmatprep.subr.bf16.mxu0 0
      %441 = vmatpush1.bf16.msra.mxu0 0
      %442 = vmatprep.subr.bf16.mxu0 0
      %443 = vmatpush1.bf16.msra.mxu0 0
      %444 = vmatprep.subr.bf16.mxu0 0
      %445 = vmatpush1.bf16.msra.mxu0 0
      %446 = vmatprep.mubr.bf16.mxu0 0
      %447 = vmatmul.mubr.bf16.gmra.mrb[0].mxu0 %v403
      %v448 = vpop.f32.mrb[0].mxu0
      %v449 = vadd.f32 0.0, %v448
      %v450 = vpop.f32.mrb[0].mxu0
      %v451 = vadd.f32 0.0, %v450
      %v452 = vpop.f32.mrb[0].mxu0
      %v453 = vpop.f32.mrb[0].mxu0
      %454 = vdwg.mxu0
      %455 = vmatprep.subr.bf16.mxu0 0
      %456 = vmatpush1.bf16.msra.mxu0 %v412
      %457 = vmatprep.subr.bf16.mxu0 0
      %458 = vmatpush1.bf16.msra.mxu0 0
      %459 = vmatprep.subr.bf16.mxu0 0
      %460 = vmatpush1.bf16.msra.mxu0 0
      %461 = vmatprep.subr.bf16.mxu0 0
      %462 = vmatpush1.bf16.msra.mxu0 0
      %463 = vmatprep.subr.bf16.mxu0 0
      %464 = vmatpush1.bf16.msra.mxu0 0
      %465 = vmatprep.subr.bf16.mxu0 0
      %466 = vmatpush1.bf16.msra.mxu0 0
      %467 = vmatprep.subr.bf16.mxu0 0
      %468 = vmatpush1.bf16.msra.mxu0 0
      %469 = vmatprep.subr.bf16.mxu0 0
      %470 = vmatpush1.bf16.msra.mxu0 0
      %471 = vmatprep.subr.bf16.mxu0 0
      %472 = vmatpush1.bf16.msra.mxu0 0
      %473 = vmatprep.subr.bf16.mxu0 0
      %474 = vmatpush1.bf16.msra.mxu0 0
      %475 = vmatprep.subr.bf16.mxu0 0
      %476 = vmatpush1.bf16.msra.mxu0 0
      %477 = vmatprep.subr.bf16.mxu0 0
      %478 = vmatpush1.bf16.msra.mxu0 0
      %479 = vmatprep.subr.bf16.mxu0 0
      %480 = vmatpush1.bf16.msra.mxu0 0
      %481 = vmatprep.subr.bf16.mxu0 0
      %482 = vmatpush1.bf16.msra.mxu0 0
      %483 = vmatprep.subr.bf16.mxu0 0
      %484 = vmatpush1.bf16.msra.mxu0 0
      %485 = vmatprep.subr.bf16.mxu0 0
      %486 = vmatpush1.bf16.msra.mxu0 0
      %487 = vmatprep.mubr.bf16.mxu0 0
      %488 = vmatmul.mubr.bf16.gmra.mrb[0].mxu0 %v403
      %v489 = vpop.f32.mrb[0].mxu0
      %v490 = vadd.f32 0.0, %v489
      %v491 = vpop.f32.mrb[0].mxu0
      %v492 = vpop.f32.mrb[0].mxu0
      %v493 = vpop.f32.mrb[0].mxu0
      %494 = vdwg.mxu0
      %v495 = vadd.f32 %v366, %v449
      %v496 = vadd.f32 %v367, %v451
      %v497 = vadd.f32 %v368, %v490
      %v498 = vld [vmem:[%s225] sm:$0xff]
      %s499 = scalar_lea.vmem %s231, 8
      %v500 = vld [vmem:[%s499] sm:$0xf]
      %v502 = vcombine.high %v498, %v498
      %v504 = vunpack.c.l.s4 1983009808
      %v505 = vunpack.c.0.s8 %v504
      %v506 = vlaneseq
      %v507 = vshrl.u32 %v506, 7
      %v508 = vsub.s32 %v505, %v507
      %v509 = vrot.slane %v498, %v508
      %v511 = vunpack.c.l.s4 1983009808
      %v512 = vunpack.c.0.s8 %v511
      %v513 = vlaneseq
      %v514 = vshrl.u32 %v513, 7
      %v515 = vsub.s32 %v512, %v514
      %v516 = vrot.slane %v502, %v515
      %v517 = vcombine.high %v509, %v509
      %v518 = vcombine.high %v516, %v516
      %519 = vrot.lane.b32.xlu0 %v509, 126
      %v520 = vpop.permute.xlu0 %519
      %521 = vrot.lane.b32.xlu0 %v517, 126
      %v522 = vpop.permute.xlu0 %521
      %523 = vrot.lane.b32.xlu0 %v516, 126
      %v524 = vpop.permute.xlu0 %523
      %525 = vrot.lane.b32.xlu0 %v518, 126
      %v526 = vpop.permute.xlu0 %525
      %vm527 = vcmask 1031168
      %v528 = vsel %vm527, %v520, %v522
      %v529 = vsel %vm527, %v522, %v524
      %v530 = vsel %vm527, %v524, %v526
      %v532 = vsel %vm271, %v500, 0
      %v535 = vsel %vm275, %v528, 0
      %v538 = vsel %vm275, %v529, 0
      %v541 = vsel %vm275, %v530, 0
      %543 = vmatprep.subr.bf16.mxu0 %v538
      %544 = vmatpush1.bf16.msra.mxu0 %v535
      %545 = vmatprep.subr.bf16.mxu0 0
      %546 = vmatpush1.bf16.msra.mxu0 0
      %547 = vmatprep.subr.bf16.mxu0 0
      %548 = vmatpush1.bf16.msra.mxu0 0
      %549 = vmatprep.subr.bf16.mxu0 0
      %550 = vmatpush1.bf16.msra.mxu0 0
      %551 = vmatprep.subr.bf16.mxu0 0
      %552 = vmatpush1.bf16.msra.mxu0 0
      %553 = vmatprep.subr.bf16.mxu0 0
      %554 = vmatpush1.bf16.msra.mxu0 0
      %555 = vmatprep.subr.bf16.mxu0 0
      %556 = vmatpush1.bf16.msra.mxu0 0
      %557 = vmatprep.subr.bf16.mxu0 0
      %558 = vmatpush1.bf16.msra.mxu0 0
      %559 = vmatprep.subr.bf16.mxu0 0
      %560 = vmatpush1.bf16.msra.mxu0 0
      %561 = vmatprep.subr.bf16.mxu0 0
      %562 = vmatpush1.bf16.msra.mxu0 0
      %563 = vmatprep.subr.bf16.mxu0 0
      %564 = vmatpush1.bf16.msra.mxu0 0
      %565 = vmatprep.subr.bf16.mxu0 0
      %566 = vmatpush1.bf16.msra.mxu0 0
      %567 = vmatprep.subr.bf16.mxu0 0
      %568 = vmatpush1.bf16.msra.mxu0 0
      %569 = vmatprep.subr.bf16.mxu0 0
      %570 = vmatpush1.bf16.msra.mxu0 0
      %571 = vmatprep.subr.bf16.mxu0 0
      %572 = vmatpush1.bf16.msra.mxu0 0
      %573 = vmatprep.subr.bf16.mxu0 0
      %574 = vmatpush1.bf16.msra.mxu0 0
      %575 = vmatprep.mubr.bf16.mxu0 0
      %576 = vmatmul.mubr.bf16.gmra.mrb[0].mxu0 %v532
      %v577 = vpop.f32.mrb[0].mxu0
      %v578 = vadd.f32 0.0, %v577
      %v579 = vpop.f32.mrb[0].mxu0
      %v580 = vadd.f32 0.0, %v579
      %v581 = vpop.f32.mrb[0].mxu0
      %v582 = vpop.f32.mrb[0].mxu0
      %583 = vdwg.mxu0
      %584 = vmatprep.subr.bf16.mxu0 0
      %585 = vmatpush1.bf16.msra.mxu0 %v541
      %586 = vmatprep.subr.bf16.mxu0 0
      %587 = vmatpush1.bf16.msra.mxu0 0
      %588 = vmatprep.subr.bf16.mxu0 0
      %589 = vmatpush1.bf16.msra.mxu0 0
      %590 = vmatprep.subr.bf16.mxu0 0
      %591 = vmatpush1.bf16.msra.mxu0 0
      %592 = vmatprep.subr.bf16.mxu0 0
      %593 = vmatpush1.bf16.msra.mxu0 0
      %594 = vmatprep.subr.bf16.mxu0 0
      %595 = vmatpush1.bf16.msra.mxu0 0
      %596 = vmatprep.subr.bf16.mxu0 0
      %597 = vmatpush1.bf16.msra.mxu0 0
      %598 = vmatprep.subr.bf16.mxu0 0
      %599 = vmatpush1.bf16.msra.mxu0 0
      %600 = vmatprep.subr.bf16.mxu0 0
      %601 = vmatpush1.bf16.msra.mxu0 0
      %602 = vmatprep.subr.bf16.mxu0 0
      %603 = vmatpush1.bf16.msra.mxu0 0
      %604 = vmatprep.subr.bf16.mxu0 0
      %605 = vmatpush1.bf16.msra.mxu0 0
      %606 = vmatprep.subr.bf16.mxu0 0
      %607 = vmatpush1.bf16.msra.mxu0 0
      %608 = vmatprep.subr.bf16.mxu0 0
      %609 = vmatpush1.bf16.msra.mxu0 0
      %610 = vmatprep.subr.bf16.mxu0 0
      %611 = vmatpush1.bf16.msra.mxu0 0
      %612 = vmatprep.subr.bf16.mxu0 0
      %613 = vmatpush1.bf16.msra.mxu0 0
      %614 = vmatprep.subr.bf16.mxu0 0
      %615 = vmatpush1.bf16.msra.mxu0 0
      %616 = vmatprep.mubr.bf16.mxu0 0
      %617 = vmatmul.mubr.bf16.gmra.mrb[0].mxu0 %v532
      %v618 = vpop.f32.mrb[0].mxu0
      %v619 = vadd.f32 0.0, %v618
      %v620 = vpop.f32.mrb[0].mxu0
      %v621 = vpop.f32.mrb[0].mxu0
      %v622 = vpop.f32.mrb[0].mxu0
      %623 = vdwg.mxu0
      %v624 = vadd.f32 %v495, %v578
      %v625 = vadd.f32 %v496, %v580
      %v626 = vadd.f32 %v497, %v619
      %v627 = vld [vmem:[%s225] sm:$0xff]
      %s628 = scalar_lea.vmem %s231, 12
      %v629 = vld [vmem:[%s628] sm:$0xf]
      %v631 = vcombine.high %v627, %v627
      %v633 = vunpack.c.l.s4 1983009808
      %v634 = vunpack.c.0.s8 %v633
      %v635 = vlaneseq
      %v636 = vshrl.u32 %v635, 7
      %v637 = vsub.s32 %v634, %v636
      %v638 = vrot.slane %v627, %v637
      %v640 = vunpack.c.l.s4 1983009808
      %v641 = vunpack.c.0.s8 %v640
      %v642 = vlaneseq
      %v643 = vshrl.u32 %v642, 7
      %v644 = vsub.s32 %v641, %v643
      %v645 = vrot.slane %v631, %v644
      %v646 = vcombine.high %v638, %v638
      %v647 = vcombine.high %v645, %v645
      %648 = vrot.lane.b32.xlu0 %v638, 110
      %v649 = vpop.permute.xlu0 %648
      %650 = vrot.lane.b32.xlu0 %v646, 110
      %v651 = vpop.permute.xlu0 %650
      %652 = vrot.lane.b32.xlu0 %v645, 110
      %v653 = vpop.permute.xlu0 %652
      %654 = vrot.lane.b32.xlu0 %v647, 110
      %v655 = vpop.permute.xlu0 %654
      %vm656 = vcmask 900096
      %v657 = vsel %vm656, %v649, %v651
      %v658 = vsel %vm656, %v651, %v653
      %v659 = vsel %vm656, %v653, %v655
      %v661 = vsel %vm271, %v629, 0
      %v664 = vsel %vm275, %v657, 0
      %v667 = vsel %vm275, %v658, 0
      %v670 = vsel %vm275, %v659, 0
      %672 = vmatprep.subr.bf16.mxu0 %v667
      %673 = vmatpush1.bf16.msra.mxu0 %v664
      %674 = vmatprep.subr.bf16.mxu0 0
      %675 = vmatpush1.bf16.msra.mxu0 0
      %676 = vmatprep.subr.bf16.mxu0 0
      %677 = vmatpush1.bf16.msra.mxu0 0
      %678 = vmatprep.subr.bf16.mxu0 0
      %679 = vmatpush1.bf16.msra.mxu0 0
      %680 = vmatprep.subr.bf16.mxu0 0
      %681 = vmatpush1.bf16.msra.mxu0 0
      %682 = vmatprep.subr.bf16.mxu0 0
      %683 = vmatpush1.bf16.msra.mxu0 0
      %684 = vmatprep.subr.bf16.mxu0 0
      %685 = vmatpush1.bf16.msra.mxu0 0
      %686 = vmatprep.subr.bf16.mxu0 0
      %687 = vmatpush1.bf16.msra.mxu0 0
      %688 = vmatprep.subr.bf16.mxu0 0
      %689 = vmatpush1.bf16.msra.mxu0 0
      %690 = vmatprep.subr.bf16.mxu0 0
      %691 = vmatpush1.bf16.msra.mxu0 0
      %692 = vmatprep.subr.bf16.mxu0 0
      %693 = vmatpush1.bf16.msra.mxu0 0
      %694 = vmatprep.subr.bf16.mxu0 0
      %695 = vmatpush1.bf16.msra.mxu0 0
      %696 = vmatprep.subr.bf16.mxu0 0
      %697 = vmatpush1.bf16.msra.mxu0 0
      %698 = vmatprep.subr.bf16.mxu0 0
      %699 = vmatpush1.bf16.msra.mxu0 0
      %700 = vmatprep.subr.bf16.mxu0 0
      %701 = vmatpush1.bf16.msra.mxu0 0
      %702 = vmatprep.subr.bf16.mxu0 0
      %703 = vmatpush1.bf16.msra.mxu0 0
      %704 = vmatprep.mubr.bf16.mxu0 0
      %705 = vmatmul.mubr.bf16.gmra.mrb[0].mxu0 %v661
      %v706 = vpop.f32.mrb[0].mxu0
      %v707 = vadd.f32 0.0, %v706
      %v708 = vpop.f32.mrb[0].mxu0
      %v709 = vadd.f32 0.0, %v708
      %v710 = vpop.f32.mrb[0].mxu0
      %v711 = vpop.f32.mrb[0].mxu0
      %712 = vdwg.mxu0
      %713 = vmatprep.subr.bf16.mxu0 0
      %714 = vmatpush1.bf16.msra.mxu0 %v670
      %715 = vmatprep.subr.bf16.mxu0 0
      %716 = vmatpush1.bf16.msra.mxu0 0
      %717 = vmatprep.subr.bf16.mxu0 0
      %718 = vmatpush1.bf16.msra.mxu0 0
      %719 = vmatprep.subr.bf16.mxu0 0
      %720 = vmatpush1.bf16.msra.mxu0 0
      %721 = vmatprep.subr.bf16.mxu0 0
      %722 = vmatpush1.bf16.msra.mxu0 0
      %723 = vmatprep.subr.bf16.mxu0 0
      %724 = vmatpush1.bf16.msra.mxu0 0
      %725 = vmatprep.subr.bf16.mxu0 0
      %726 = vmatpush1.bf16.msra.mxu0 0
      %727 = vmatprep.subr.bf16.mxu0 0
      %728 = vmatpush1.bf16.msra.mxu0 0
      %729 = vmatprep.subr.bf16.mxu0 0
      %730 = vmatpush1.bf16.msra.mxu0 0
      %731 = vmatprep.subr.bf16.mxu0 0
      %732 = vmatpush1.bf16.msra.mxu0 0
      %733 = vmatprep.subr.bf16.mxu0 0
      %734 = vmatpush1.bf16.msra.mxu0 0
      %735 = vmatprep.subr.bf16.mxu0 0
      %736 = vmatpush1.bf16.msra.mxu0 0
      %737 = vmatprep.subr.bf16.mxu0 0
      %738 = vmatpush1.bf16.msra.mxu0 0
      %739 = vmatprep.subr.bf16.mxu0 0
      %740 = vmatpush1.bf16.msra.mxu0 0
      %741 = vmatprep.subr.bf16.mxu0 0
      %742 = vmatpush1.bf16.msra.mxu0 0
      %743 = vmatprep.subr.bf16.mxu0 0
      %744 = vmatpush1.bf16.msra.mxu0 0
      %745 = vmatprep.mubr.bf16.mxu0 0
      %746 = vmatmul.mubr.bf16.gmra.mrb[0].mxu0 %v661
      %v747 = vpop.f32.mrb[0].mxu0
      %v748 = vadd.f32 0.0, %v747
      %v749 = vpop.f32.mrb[0].mxu0
      %v750 = vpop.f32.mrb[0].mxu0
      %v751 = vpop.f32.mrb[0].mxu0
      %752 = vdwg.mxu0
      %v753 = vadd.f32 %v624, %v707
      %v754 = vadd.f32 %v625, %v709
      %v755 = vadd.f32 %v626, %v748
      %v756 = vld [vmem:[%s225] sm:$0xff]
      %s757 = scalar_lea.vmem %s231, 16
      %v758 = vld [vmem:[%s757] sm:$0xf]
      %v760 = vcombine.high %v756, %v756
      %v762 = vunpack.c.l.s4 1983009808
      %v763 = vunpack.c.0.s8 %v762
      %v764 = vlaneseq
      %v765 = vshrl.u32 %v764, 7
      %v766 = vsub.s32 %v763, %v765
      %v767 = vrot.slane %v756, %v766
      %v769 = vunpack.c.l.s4 1983009808
      %v770 = vunpack.c.0.s8 %v769
      %v771 = vlaneseq
      %v772 = vshrl.u32 %v771, 7
      %v773 = vsub.s32 %v770, %v772
      %v774 = vrot.slane %v760, %v773
      %v775 = vcombine.high %v767, %v767
      %v776 = vcombine.high %v774, %v774
      %777 = vrot.lane.b32.xlu0 %v767, 109
      %v778 = vpop.permute.xlu0 %777
      %779 = vrot.lane.b32.xlu0 %v775, 109
      %v780 = vpop.permute.xlu0 %779
      %781 = vrot.lane.b32.xlu0 %v774, 109
      %v782 = vpop.permute.xlu0 %781
      %783 = vrot.lane.b32.xlu0 %v776, 109
      %v784 = vpop.permute.xlu0 %783
      %vm785 = vcmask 891904
      %v786 = vsel %vm785, %v778, %v780
      %v787 = vsel %vm785, %v780, %v782
      %v788 = vsel %vm785, %v782, %v784
      %v790 = vsel %vm271, %v758, 0
      %v793 = vsel %vm275, %v786, 0
      %v796 = vsel %vm275, %v787, 0
      %v799 = vsel %vm275, %v788, 0
      %801 = vmatprep.subr.bf16.mxu0 %v796
      %802 = vmatpush1.bf16.msra.mxu0 %v793
      %803 = vmatprep.subr.bf16.mxu0 0
      %804 = vmatpush1.bf16.msra.mxu0 0
      %805 = vmatprep.subr.bf16.mxu0 0
      %806 = vmatpush1.bf16.msra.mxu0 0
      %807 = vmatprep.subr.bf16.mxu0 0
      %808 = vmatpush1.bf16.msra.mxu0 0
      %809 = vmatprep.subr.bf16.mxu0 0
      %810 = vmatpush1.bf16.msra.mxu0 0
      %811 = vmatprep.subr.bf16.mxu0 0
      %812 = vmatpush1.bf16.msra.mxu0 0
      %813 = vmatprep.subr.bf16.mxu0 0
      %814 = vmatpush1.bf16.msra.mxu0 0
      %815 = vmatprep.subr.bf16.mxu0 0
      %816 = vmatpush1.bf16.msra.mxu0 0
      %817 = vmatprep.subr.bf16.mxu0 0
      %818 = vmatpush1.bf16.msra.mxu0 0
      %819 = vmatprep.subr.bf16.mxu0 0
      %820 = vmatpush1.bf16.msra.mxu0 0
      %821 = vmatprep.subr.bf16.mxu0 0
      %822 = vmatpush1.bf16.msra.mxu0 0
      %823 = vmatprep.subr.bf16.mxu0 0
      %824 = vmatpush1.bf16.msra.mxu0 0
      %825 = vmatprep.subr.bf16.mxu0 0
      %826 = vmatpush1.bf16.msra.mxu0 0
      %827 = vmatprep.subr.bf16.mxu0 0
      %828 = vmatpush1.bf16.msra.mxu0 0
      %829 = vmatprep.subr.bf16.mxu0 0
      %830 = vmatpush1.bf16.msra.mxu0 0
      %831 = vmatprep.subr.bf16.mxu0 0
      %832 = vmatpush1.bf16.msra.mxu0 0
      %833 = vmatprep.mubr.bf16.mxu0 0
      %834 = vmatmul.mubr.bf16.gmra.mrb[0].mxu0 %v790
      %v835 = vpop.f32.mrb[0].mxu0
      %v836 = vadd.f32 0.0, %v835
      %v837 = vpop.f32.mrb[0].mxu0
      %v838 = vadd.f32 0.0, %v837
      %v839 = vpop.f32.mrb[0].mxu0
      %v840 = vpop.f32.mrb[0].mxu0
      %841 = vdwg.mxu0
      %842 = vmatprep.subr.bf16.mxu0 0
      %843 = vmatpush1.bf16.msra.mxu0 %v799
      %844 = vmatprep.subr.bf16.mxu0 0
      %845 = vmatpush1.bf16.msra.mxu0 0
      %846 = vmatprep.subr.bf16.mxu0 0
      %847 = vmatpush1.bf16.msra.mxu0 0
      %848 = vmatprep.subr.bf16.mxu0 0
      %849 = vmatpush1.bf16.msra.mxu0 0
      %850 = vmatprep.subr.bf16.mxu0 0
      %851 = vmatpush1.bf16.msra.mxu0 0
      %852 = vmatprep.subr.bf16.mxu0 0
      %853 = vmatpush1.bf16.msra.mxu0 0
      %854 = vmatprep.subr.bf16.mxu0 0
      %855 = vmatpush1.bf16.msra.mxu0 0
      %856 = vmatprep.subr.bf16.mxu0 0
      %857 = vmatpush1.bf16.msra.mxu0 0
      %858 = vmatprep.subr.bf16.mxu0 0
      %859 = vmatpush1.bf16.msra.mxu0 0
      %860 = vmatprep.subr.bf16.mxu0 0
      %861 = vmatpush1.bf16.msra.mxu0 0
      %862 = vmatprep.subr.bf16.mxu0 0
      %863 = vmatpush1.bf16.msra.mxu0 0
      %864 = vmatprep.subr.bf16.mxu0 0
      %865 = vmatpush1.bf16.msra.mxu0 0
      %866 = vmatprep.subr.bf16.mxu0 0
      %867 = vmatpush1.bf16.msra.mxu0 0
      %868 = vmatprep.subr.bf16.mxu0 0
      %869 = vmatpush1.bf16.msra.mxu0 0
      %870 = vmatprep.subr.bf16.mxu0 0
      %871 = vmatpush1.bf16.msra.mxu0 0
      %872 = vmatprep.subr.bf16.mxu0 0
      %873 = vmatpush1.bf16.msra.mxu0 0
      %874 = vmatprep.mubr.bf16.mxu0 0
      %875 = vmatmul.mubr.bf16.gmra.mrb[0].mxu0 %v790
      %v876 = vpop.f32.mrb[0].mxu0
      %v877 = vadd.f32 0.0, %v876
      %v878 = vpop.f32.mrb[0].mxu0
      %v879 = vpop.f32.mrb[0].mxu0
      %v880 = vpop.f32.mrb[0].mxu0
      %881 = vdwg.mxu0
      %v882 = vadd.f32 %v753, %v836
      %v883 = vadd.f32 %v754, %v838
      %v884 = vadd.f32 %v755, %v877
      %v885 = vld [vmem:[%s225] sm:$0xff]
      %s886 = scalar_lea.vmem %s231, 20
      %v887 = vld [vmem:[%s886] sm:$0xf]
      %v889 = vcombine.high %v885, %v885
      %v891 = vunpack.c.l.s4 1983009808
      %v892 = vunpack.c.0.s8 %v891
      %v893 = vlaneseq
      %v894 = vshrl.u32 %v893, 7
      %v895 = vsub.s32 %v892, %v894
      %v896 = vrot.slane %v885, %v895
      %v898 = vunpack.c.l.s4 1983009808
      %v899 = vunpack.c.0.s8 %v898
      %v900 = vlaneseq
      %v901 = vshrl.u32 %v900, 7
      %v902 = vsub.s32 %v899, %v901
      %v903 = vrot.slane %v889, %v902
      %v904 = vcombine.high %v896, %v896
      %v905 = vcombine.high %v903, %v903
      %906 = vrot.lane.b32.xlu0 %v896, 108
      %v907 = vpop.permute.xlu0 %906
      %908 = vrot.lane.b32.xlu0 %v904, 108
      %v909 = vpop.permute.xlu0 %908
      %910 = vrot.lane.b32.xlu0 %v903, 108
      %v911 = vpop.permute.xlu0 %910
      %912 = vrot.lane.b32.xlu0 %v905, 108
      %v913 = vpop.permute.xlu0 %912
      %vm914 = vcmask 883712
      %v915 = vsel %vm914, %v907, %v909
      %v916 = vsel %vm914, %v909, %v911
      %v917 = vsel %vm914, %v911, %v913
      %v919 = vsel %vm271, %v887, 0
      %v922 = vsel %vm275, %v915, 0
      %v925 = vsel %vm275, %v916, 0
      %v928 = vsel %vm275, %v917, 0
      %930 = vmatprep.subr.bf16.mxu0 %v925
      %931 = vmatpush1.bf16.msra.mxu0 %v922
      %932 = vmatprep.subr.bf16.mxu0 0
      %933 = vmatpush1.bf16.msra.mxu0 0
      %934 = vmatprep.subr.bf16.mxu0 0
      %935 = vmatpush1.bf16.msra.mxu0 0
      %936 = vmatprep.subr.bf16.mxu0 0
      %937 = vmatpush1.bf16.msra.mxu0 0
      %938 = vmatprep.subr.bf16.mxu0 0
      %939 = vmatpush1.bf16.msra.mxu0 0
      %940 = vmatprep.subr.bf16.mxu0 0
      %941 = vmatpush1.bf16.msra.mxu0 0
      %942 = vmatprep.subr.bf16.mxu0 0
      %943 = vmatpush1.bf16.msra.mxu0 0
      %944 = vmatprep.subr.bf16.mxu0 0
      %945 = vmatpush1.bf16.msra.mxu0 0
      %946 = vmatprep.subr.bf16.mxu0 0
      %947 = vmatpush1.bf16.msra.mxu0 0
      %948 = vmatprep.subr.bf16.mxu0 0
      %949 = vmatpush1.bf16.msra.mxu0 0
      %950 = vmatprep.subr.bf16.mxu0 0
      %951 = vmatpush1.bf16.msra.mxu0 0
      %952 = vmatprep.subr.bf16.mxu0 0
      %953 = vmatpush1.bf16.msra.mxu0 0
      %954 = vmatprep.subr.bf16.mxu0 0
      %955 = vmatpush1.bf16.msra.mxu0 0
      %956 = vmatprep.subr.bf16.mxu0 0
      %957 = vmatpush1.bf16.msra.mxu0 0
      %958 = vmatprep.subr.bf16.mxu0 0
      %959 = vmatpush1.bf16.msra.mxu0 0
      %960 = vmatprep.subr.bf16.mxu0 0
      %961 = vmatpush1.bf16.msra.mxu0 0
      %962 = vmatprep.mubr.bf16.mxu0 0
      %963 = vmatmul.mubr.bf16.gmra.mrb[0].mxu0 %v919
      %v964 = vpop.f32.mrb[0].mxu0
      %v965 = vadd.f32 0.0, %v964
      %v966 = vpop.f32.mrb[0].mxu0
      %v967 = vadd.f32 0.0, %v966
      %v968 = vpop.f32.mrb[0].mxu0
      %v969 = vpop.f32.mrb[0].mxu0
      %970 = vdwg.mxu0
      %971 = vmatprep.subr.bf16.mxu0 0
      %972 = vmatpush1.bf16.msra.mxu0 %v928
      %973 = vmatprep.subr.bf16.mxu0 0
      %974 = vmatpush1.bf16.msra.mxu0 0
      %975 = vmatprep.subr.bf16.mxu0 0
      %976 = vmatpush1.bf16.msra.mxu0 0
      %977 = vmatprep.subr.bf16.mxu0 0
      %978 = vmatpush1.bf16.msra.mxu0 0
      %979 = vmatprep.subr.bf16.mxu0 0
      %980 = vmatpush1.bf16.msra.mxu0 0
      %981 = vmatprep.subr.bf16.mxu0 0
      %982 = vmatpush1.bf16.msra.mxu0 0
      %983 = vmatprep.subr.bf16.mxu0 0
      %984 = vmatpush1.bf16.msra.mxu0 0
      %985 = vmatprep.subr.bf16.mxu0 0
      %986 = vmatpush1.bf16.msra.mxu0 0
      %987 = vmatprep.subr.bf16.mxu0 0
      %988 = vmatpush1.bf16.msra.mxu0 0
      %989 = vmatprep.subr.bf16.mxu0 0
      %990 = vmatpush1.bf16.msra.mxu0 0
      %991 = vmatprep.subr.bf16.mxu0 0
      %992 = vmatpush1.bf16.msra.mxu0 0
      %993 = vmatprep.subr.bf16.mxu0 0
      %994 = vmatpush1.bf16.msra.mxu0 0
      %995 = vmatprep.subr.bf16.mxu0 0
      %996 = vmatpush1.bf16.msra.mxu0 0
      %997 = vmatprep.subr.bf16.mxu0 0
      %998 = vmatpush1.bf16.msra.mxu0 0
      %999 = vmatprep.subr.bf16.mxu0 0
      %1000 = vmatpush1.bf16.msra.mxu0 0
      %1001 = vmatprep.subr.bf16.mxu0 0
      %1002 = vmatpush1.bf16.msra.mxu0 0
      %1003 = vmatprep.mubr.bf16.mxu0 0
      %1004 = vmatmul.mubr.bf16.gmra.mrb[0].mxu0 %v919
      %v1005 = vpop.f32.mrb[0].mxu0
      %v1006 = vadd.f32 0.0, %v1005
      %v1007 = vpop.f32.mrb[0].mxu0
      %v1008 = vpop.f32.mrb[0].mxu0
      %v1009 = vpop.f32.mrb[0].mxu0
      %1010 = vdwg.mxu0
      %v1011 = vadd.f32 %v882, %v965
      %v1012 = vadd.f32 %v883, %v967
      %v1013 = vadd.f32 %v884, %v1006
      %v1014 = vld [vmem:[%s225] sm:$0xff]
      %s1015 = scalar_lea.vmem %s231, 24
      %v1016 = vld [vmem:[%s1015] sm:$0xf]
      %v1018 = vcombine.high %v1014, %v1014
      %v1020 = vunpack.c.l.s4 1983009808
      %v1021 = vunpack.c.0.s8 %v1020
      %v1022 = vlaneseq
      %v1023 = vshrl.u32 %v1022, 7
      %v1024 = vsub.s32 %v1021, %v1023
      %v1025 = vrot.slane %v1014, %v1024
      %v1027 = vunpack.c.l.s4 1983009808
      %v1028 = vunpack.c.0.s8 %v1027
      %v1029 = vlaneseq
      %v1030 = vshrl.u32 %v1029, 7
      %v1031 = vsub.s32 %v1028, %v1030
      %v1032 = vrot.slane %v1018, %v1031
      %v1033 = vcombine.high %v1025, %v1025
      %v1034 = vcombine.high %v1032, %v1032
      %1035 = vrot.lane.b32.xlu0 %v1025, 92
      %v1036 = vpop.permute.xlu0 %1035
      %1037 = vrot.lane.b32.xlu0 %v1033, 92
      %v1038 = vpop.permute.xlu0 %1037
      %1039 = vrot.lane.b32.xlu0 %v1032, 92
      %v1040 = vpop.permute.xlu0 %1039
      %1041 = vrot.lane.b32.xlu0 %v1034, 92
      %v1042 = vpop.permute.xlu0 %1041
      %vm1043 = vcmask 752640
      %v1044 = vsel %vm1043, %v1036, %v1038
      %v1045 = vsel %vm1043, %v1038, %v1040
      %v1046 = vsel %vm1043, %v1040, %v1042
      %v1048 = vsel %vm271, %v1016, 0
      %v1051 = vsel %vm275, %v1044, 0
      %v1054 = vsel %vm275, %v1045, 0
      %v1057 = vsel %vm275, %v1046, 0
      %1059 = vmatprep.subr.bf16.mxu0 %v1054
      %1060 = vmatpush1.bf16.msra.mxu0 %v1051
      %1061 = vmatprep.subr.bf16.mxu0 0
      %1062 = vmatpush1.bf16.msra.mxu0 0
      %1063 = vmatprep.subr.bf16.mxu0 0
      %1064 = vmatpush1.bf16.msra.mxu0 0
      %1065 = vmatprep.subr.bf16.mxu0 0
      %1066 = vmatpush1.bf16.msra.mxu0 0
      %1067 = vmatprep.subr.bf16.mxu0 0
      %1068 = vmatpush1.bf16.msra.mxu0 0
      %1069 = vmatprep.subr.bf16.mxu0 0
      %1070 = vmatpush1.bf16.msra.mxu0 0
      %1071 = vmatprep.subr.bf16.mxu0 0
      %1072 = vmatpush1.bf16.msra.mxu0 0
      %1073 = vmatprep.subr.bf16.mxu0 0
      %1074 = vmatpush1.bf16.msra.mxu0 0
      %1075 = vmatprep.subr.bf16.mxu0 0
      %1076 = vmatpush1.bf16.msra.mxu0 0
      %1077 = vmatprep.subr.bf16.mxu0 0
      %1078 = vmatpush1.bf16.msra.mxu0 0
      %1079 = vmatprep.subr.bf16.mxu0 0
      %1080 = vmatpush1.bf16.msra.mxu0 0
      %1081 = vmatprep.subr.bf16.mxu0 0
      %1082 = vmatpush1.bf16.msra.mxu0 0
      %1083 = vmatprep.subr.bf16.mxu0 0
      %1084 = vmatpush1.bf16.msra.mxu0 0
      %1085 = vmatprep.subr.bf16.mxu0 0
      %1086 = vmatpush1.bf16.msra.mxu0 0
      %1087 = vmatprep.subr.bf16.mxu0 0
      %1088 = vmatpush1.bf16.msra.mxu0 0
      %1089 = vmatprep.subr.bf16.mxu0 0
      %1090 = vmatpush1.bf16.msra.mxu0 0
      %1091 = vmatprep.mubr.bf16.mxu0 0
      %1092 = vmatmul.mubr.bf16.gmra.mrb[0].mxu0 %v1048
      %v1093 = vpop.f32.mrb[0].mxu0
      %v1094 = vadd.f32 0.0, %v1093
      %v1095 = vpop.f32.mrb[0].mxu0
      %v1096 = vadd.f32 0.0, %v1095
      %v1097 = vpop.f32.mrb[0].mxu0
      %v1098 = vpop.f32.mrb[0].mxu0
      %1099 = vdwg.mxu0
      %1100 = vmatprep.subr.bf16.mxu0 0
      %1101 = vmatpush1.bf16.msra.mxu0 %v1057
      %1102 = vmatprep.subr.bf16.mxu0 0
      %1103 = vmatpush1.bf16.msra.mxu0 0
      %1104 = vmatprep.subr.bf16.mxu0 0
      %1105 = vmatpush1.bf16.msra.mxu0 0
      %1106 = vmatprep.subr.bf16.mxu0 0
      %1107 = vmatpush1.bf16.msra.mxu0 0
      %1108 = vmatprep.subr.bf16.mxu0 0
      %1109 = vmatpush1.bf16.msra.mxu0 0
      %1110 = vmatprep.subr.bf16.mxu0 0
      %1111 = vmatpush1.bf16.msra.mxu0 0
      %1112 = vmatprep.subr.bf16.mxu0 0
      %1113 = vmatpush1.bf16.msra.mxu0 0
      %1114 = vmatprep.subr.bf16.mxu0 0
      %1115 = vmatpush1.bf16.msra.mxu0 0
      %1116 = vmatprep.subr.bf16.mxu0 0
      %1117 = vmatpush1.bf16.msra.mxu0 0
      %1118 = vmatprep.subr.bf16.mxu0 0
      %1119 = vmatpush1.bf16.msra.mxu0 0
      %1120 = vmatprep.subr.bf16.mxu0 0
      %1121 = vmatpush1.bf16.msra.mxu0 0
      %1122 = vmatprep.subr.bf16.mxu0 0
      %1123 = vmatpush1.bf16.msra.mxu0 0
      %1124 = vmatprep.subr.bf16.mxu0 0
      %1125 = vmatpush1.bf16.msra.mxu0 0
      %1126 = vmatprep.subr.bf16.mxu0 0
      %1127 = vmatpush1.bf16.msra.mxu0 0
      %1128 = vmatprep.subr.bf16.mxu0 0
      %1129 = vmatpush1.bf16.msra.mxu0 0
      %1130 = vmatprep.subr.bf16.mxu0 0
      %1131 = vmatpush1.bf16.msra.mxu0 0
      %1132 = vmatprep.mubr.bf16.mxu0 0
      %1133 = vmatmul.mubr.bf16.gmra.mrb[0].mxu0 %v1048
      %v1134 = vpop.f32.mrb[0].mxu0
      %v1135 = vadd.f32 0.0, %v1134
      %v1136 = vpop.f32.mrb[0].mxu0
      %v1137 = vpop.f32.mrb[0].mxu0
      %v1138 = vpop.f32.mrb[0].mxu0
      %1139 = vdwg.mxu0
      %v1140 = vadd.f32 %v1011, %v1094
      %v1141 = vadd.f32 %v1012, %v1096
      %v1142 = vadd.f32 %v1013, %v1135
      %v1143 = vld [vmem:[%s225] sm:$0xff]
      %s1144 = scalar_lea.vmem %s231, 28
      %v1145 = vld [vmem:[%s1144] sm:$0xf]
      %v1147 = vcombine.high %v1143, %v1143
      %v1149 = vunpack.c.l.s4 1983009808
      %v1150 = vunpack.c.0.s8 %v1149
      %v1151 = vlaneseq
      %v1152 = vshrl.u32 %v1151, 7
      %v1153 = vsub.s32 %v1150, %v1152
      %v1154 = vrot.slane %v1143, %v1153
      %v1156 = vunpack.c.l.s4 1983009808
      %v1157 = vunpack.c.0.s8 %v1156
      %v1158 = vlaneseq
      %v1159 = vshrl.u32 %v1158, 7
      %v1160 = vsub.s32 %v1157, %v1159
      %v1161 = vrot.slane %v1147, %v1160
      %v1162 = vcombine.high %v1154, %v1154
      %v1163 = vcombine.high %v1161, %v1161
      %1164 = vrot.lane.b32.xlu0 %v1154, 91
      %v1165 = vpop.permute.xlu0 %1164
      %1166 = vrot.lane.b32.xlu0 %v1162, 91
      %v1167 = vpop.permute.xlu0 %1166
      %1168 = vrot.lane.b32.xlu0 %v1161, 91
      %v1169 = vpop.permute.xlu0 %1168
      %1170 = vrot.lane.b32.xlu0 %v1163, 91
      %v1171 = vpop.permute.xlu0 %1170
      %vm1172 = vcmask 744448
      %v1173 = vsel %vm1172, %v1165, %v1167
      %v1174 = vsel %vm1172, %v1167, %v1169
      %v1175 = vsel %vm1172, %v1169, %v1171
      %v1177 = vsel %vm271, %v1145, 0
      %v1180 = vsel %vm275, %v1173, 0
      %v1183 = vsel %vm275, %v1174, 0
      %v1186 = vsel %vm275, %v1175, 0
      %1188 = vmatprep.subr.bf16.mxu0 %v1183
      %1189 = vmatpush1.bf16.msra.mxu0 %v1180
      %1190 = vmatprep.subr.bf16.mxu0 0
      %1191 = vmatpush1.bf16.msra.mxu0 0
      %1192 = vmatprep.subr.bf16.mxu0 0
      %1193 = vmatpush1.bf16.msra.mxu0 0
      %1194 = vmatprep.subr.bf16.mxu0 0
      %1195 = vmatpush1.bf16.msra.mxu0 0
      %1196 = vmatprep.subr.bf16.mxu0 0
      %1197 = vmatpush1.bf16.msra.mxu0 0
      %1198 = vmatprep.subr.bf16.mxu0 0
      %1199 = vmatpush1.bf16.msra.mxu0 0
      %1200 = vmatprep.subr.bf16.mxu0 0
      %1201 = vmatpush1.bf16.msra.mxu0 0
      %1202 = vmatprep.subr.bf16.mxu0 0
      %1203 = vmatpush1.bf16.msra.mxu0 0
      %1204 = vmatprep.subr.bf16.mxu0 0
      %1205 = vmatpush1.bf16.msra.mxu0 0
      %1206 = vmatprep.subr.bf16.mxu0 0
      %1207 = vmatpush1.bf16.msra.mxu0 0
      %1208 = vmatprep.subr.bf16.mxu0 0
      %1209 = vmatpush1.bf16.msra.mxu0 0
      %1210 = vmatprep.subr.bf16.mxu0 0
      %1211 = vmatpush1.bf16.msra.mxu0 0
      %1212 = vmatprep.subr.bf16.mxu0 0
      %1213 = vmatpush1.bf16.msra.mxu0 0
      %1214 = vmatprep.subr.bf16.mxu0 0
      %1215 = vmatpush1.bf16.msra.mxu0 0
      %1216 = vmatprep.subr.bf16.mxu0 0
      %1217 = vmatpush1.bf16.msra.mxu0 0
      %1218 = vmatprep.subr.bf16.mxu0 0
      %1219 = vmatpush1.bf16.msra.mxu0 0
      %1220 = vmatprep.mubr.bf16.mxu0 0
      %1221 = vmatmul.mubr.bf16.gmra.mrb[0].mxu0 %v1177
      %v1222 = vpop.f32.mrb[0].mxu0
      %v1223 = vadd.f32 0.0, %v1222
      %v1224 = vpop.f32.mrb[0].mxu0
      %v1225 = vadd.f32 0.0, %v1224
      %v1226 = vpop.f32.mrb[0].mxu0
      %v1227 = vpop.f32.mrb[0].mxu0
      %1228 = vdwg.mxu0
      %1229 = vmatprep.subr.bf16.mxu0 0
      %1230 = vmatpush1.bf16.msra.mxu0 %v1186
      %1231 = vmatprep.subr.bf16.mxu0 0
      %1232 = vmatpush1.bf16.msra.mxu0 0
      %1233 = vmatprep.subr.bf16.mxu0 0
      %1234 = vmatpush1.bf16.msra.mxu0 0
      %1235 = vmatprep.subr.bf16.mxu0 0
      %1236 = vmatpush1.bf16.msra.mxu0 0
      %1237 = vmatprep.subr.bf16.mxu0 0
      %1238 = vmatpush1.bf16.msra.mxu0 0
      %1239 = vmatprep.subr.bf16.mxu0 0
      %1240 = vmatpush1.bf16.msra.mxu0 0
      %1241 = vmatprep.subr.bf16.mxu0 0
      %1242 = vmatpush1.bf16.msra.mxu0 0
      %1243 = vmatprep.subr.bf16.mxu0 0
      %1244 = vmatpush1.bf16.msra.mxu0 0
      %1245 = vmatprep.subr.bf16.mxu0 0
      %1246 = vmatpush1.bf16.msra.mxu0 0
      %1247 = vmatprep.subr.bf16.mxu0 0
      %1248 = vmatpush1.bf16.msra.mxu0 0
      %1249 = vmatprep.subr.bf16.mxu0 0
      %1250 = vmatpush1.bf16.msra.mxu0 0
      %1251 = vmatprep.subr.bf16.mxu0 0
      %1252 = vmatpush1.bf16.msra.mxu0 0
      %1253 = vmatprep.subr.bf16.mxu0 0
      %1254 = vmatpush1.bf16.msra.mxu0 0
      %1255 = vmatprep.subr.bf16.mxu0 0
      %1256 = vmatpush1.bf16.msra.mxu0 0
      %1257 = vmatprep.subr.bf16.mxu0 0
      %1258 = vmatpush1.bf16.msra.mxu0 0
      %1259 = vmatprep.subr.bf16.mxu0 0
      %1260 = vmatpush1.bf16.msra.mxu0 0
      %1261 = vmatprep.mubr.bf16.mxu0 0
      %1262 = vmatmul.mubr.bf16.gmra.mrb[0].mxu0 %v1177
      %v1263 = vpop.f32.mrb[0].mxu0
      %v1264 = vadd.f32 0.0, %v1263
      %v1265 = vpop.f32.mrb[0].mxu0
      %v1266 = vpop.f32.mrb[0].mxu0
      %v1267 = vpop.f32.mrb[0].mxu0
      %1268 = vdwg.mxu0
      %v1269 = vadd.f32 %v1140, %v1223
      %v1270 = vadd.f32 %v1141, %v1225
      %v1271 = vadd.f32 %v1142, %v1264
      %v1272 = vld [vmem:[%s225] sm:$0xff]
      %s1273 = scalar_lea.vmem %s231, 32
      %v1274 = vld [vmem:[%s1273] sm:$0xf]
      %v1276 = vcombine.high %v1272, %v1272
      %v1278 = vunpack.c.l.s4 1983009808
      %v1279 = vunpack.c.0.s8 %v1278
      %v1280 = vlaneseq
      %v1281 = vshrl.u32 %v1280, 7
      %v1282 = vsub.s32 %v1279, %v1281
      %v1283 = vrot.slane %v1272, %v1282
      %v1285 = vunpack.c.l.s4 1983009808
      %v1286 = vunpack.c.0.s8 %v1285
      %v1287 = vlaneseq
      %v1288 = vshrl.u32 %v1287, 7
      %v1289 = vsub.s32 %v1286, %v1288
      %v1290 = vrot.slane %v1276, %v1289
      %v1291 = vcombine.high %v1283, %v1283
      %v1292 = vcombine.high %v1290, %v1290
      %1293 = vrot.lane.b32.xlu0 %v1283, 90
      %v1294 = vpop.permute.xlu0 %1293
      %1295 = vrot.lane.b32.xlu0 %v1291, 90
      %v1296 = vpop.permute.xlu0 %1295
      %1297 = vrot.lane.b32.xlu0 %v1290, 90
      %v1298 = vpop.permute.xlu0 %1297
      %1299 = vrot.lane.b32.xlu0 %v1292, 90
      %v1300 = vpop.permute.xlu0 %1299
      %vm1301 = vcmask 736256
      %v1302 = vsel %vm1301, %v1294, %v1296
      %v1303 = vsel %vm1301, %v1296, %v1298
      %v1304 = vsel %vm1301, %v1298, %v1300
      %v1306 = vsel %vm271, %v1274, 0
      %v1309 = vsel %vm275, %v1302, 0
      %v1312 = vsel %vm275, %v1303, 0
      %v1315 = vsel %vm275, %v1304, 0
      %1317 = vmatprep.subr.bf16.mxu0 %v1312
      %1318 = vmatpush1.bf16.msra.mxu0 %v1309
      %1319 = vmatprep.subr.bf16.mxu0 0
      %1320 = vmatpush1.bf16.msra.mxu0 0
      %1321 = vmatprep.subr.bf16.mxu0 0
      %1322 = vmatpush1.bf16.msra.mxu0 0
      %1323 = vmatprep.subr.bf16.mxu0 0
      %1324 = vmatpush1.bf16.msra.mxu0 0
      %1325 = vmatprep.subr.bf16.mxu0 0
      %1326 = vmatpush1.bf16.msra.mxu0 0
      %1327 = vmatprep.subr.bf16.mxu0 0
      %1328 = vmatpush1.bf16.msra.mxu0 0
      %1329 = vmatprep.subr.bf16.mxu0 0
      %1330 = vmatpush1.bf16.msra.mxu0 0
      %1331 = vmatprep.subr.bf16.mxu0 0
      %1332 = vmatpush1.bf16.msra.mxu0 0
      %1333 = vmatprep.subr.bf16.mxu0 0
      %1334 = vmatpush1.bf16.msra.mxu0 0
      %1335 = vmatprep.subr.bf16.mxu0 0
      %1336 = vmatpush1.bf16.msra.mxu0 0
      %1337 = vmatprep.subr.bf16.mxu0 0
      %1338 = vmatpush1.bf16.msra.mxu0 0
      %1339 = vmatprep.subr.bf16.mxu0 0
      %1340 = vmatpush1.bf16.msra.mxu0 0
      %1341 = vmatprep.subr.bf16.mxu0 0
      %1342 = vmatpush1.bf16.msra.mxu0 0
      %1343 = vmatprep.subr.bf16.mxu0 0
      %1344 = vmatpush1.bf16.msra.mxu0 0
      %1345 = vmatprep.subr.bf16.mxu0 0
      %1346 = vmatpush1.bf16.msra.mxu0 0
      %1347 = vmatprep.subr.bf16.mxu0 0
      %1348 = vmatpush1.bf16.msra.mxu0 0
      %1349 = vmatprep.mubr.bf16.mxu0 0
      %1350 = vmatmul.mubr.bf16.gmra.mrb[0].mxu0 %v1306
      %v1351 = vpop.f32.mrb[0].mxu0
      %v1352 = vadd.f32 0.0, %v1351
      %v1353 = vpop.f32.mrb[0].mxu0
      %v1354 = vadd.f32 0.0, %v1353
      %v1355 = vpop.f32.mrb[0].mxu0
      %v1356 = vpop.f32.mrb[0].mxu0
      %1357 = vdwg.mxu0
      %1358 = vmatprep.subr.bf16.mxu0 0
      %1359 = vmatpush1.bf16.msra.mxu0 %v1315
      %1360 = vmatprep.subr.bf16.mxu0 0
      %1361 = vmatpush1.bf16.msra.mxu0 0
      %1362 = vmatprep.subr.bf16.mxu0 0
      %1363 = vmatpush1.bf16.msra.mxu0 0
      %1364 = vmatprep.subr.bf16.mxu0 0
      %1365 = vmatpush1.bf16.msra.mxu0 0
      %1366 = vmatprep.subr.bf16.mxu0 0
      %1367 = vmatpush1.bf16.msra.mxu0 0
      %1368 = vmatprep.subr.bf16.mxu0 0
      %1369 = vmatpush1.bf16.msra.mxu0 0
      %1370 = vmatprep.subr.bf16.mxu0 0
      %1371 = vmatpush1.bf16.msra.mxu0 0
      %1372 = vmatprep.subr.bf16.mxu0 0
      %1373 = vmatpush1.bf16.msra.mxu0 0
      %1374 = vmatprep.subr.bf16.mxu0 0
      %1375 = vmatpush1.bf16.msra.mxu0 0
      %1376 = vmatprep.subr.bf16.mxu0 0
      %1377 = vmatpush1.bf16.msra.mxu0 0
      %1378 = vmatprep.subr.bf16.mxu0 0
      %1379 = vmatpush1.bf16.msra.mxu0 0
      %1380 = vmatprep.subr.bf16.mxu0 0
      %1381 = vmatpush1.bf16.msra.mxu0 0
      %1382 = vmatprep.subr.bf16.mxu0 0
      %1383 = vmatpush1.bf16.msra.mxu0 0
      %1384 = vmatprep.subr.bf16.mxu0 0
      %1385 = vmatpush1.bf16.msra.mxu0 0
      %1386 = vmatprep.subr.bf16.mxu0 0
      %1387 = vmatpush1.bf16.msra.mxu0 0
      %1388 = vmatprep.subr.bf16.mxu0 0
      %1389 = vmatpush1.bf16.msra.mxu0 0
      %1390 = vmatprep.mubr.bf16.mxu0 0
      %1391 = vmatmul.mubr.bf16.gmra.mrb[0].mxu0 %v1306
      %v1392 = vpop.f32.mrb[0].mxu0
      %v1393 = vadd.f32 0.0, %v1392
      %v1394 = vpop.f32.mrb[0].mxu0
      %v1395 = vpop.f32.mrb[0].mxu0
      %v1396 = vpop.f32.mrb[0].mxu0
      %1397 = vdwg.mxu0
      %v1398 = vadd.f32 %v1269, %v1352
      %v1399 = vadd.f32 %v1270, %v1354
      %v1400 = vadd.f32 %v1271, %v1393
      %1401 = vst [vmem:[#allocation2] sm:$0xff] %v1398
      %1402 = vst [vmem:[#allocation2 + $0x8] sm:$0xff] %v1399
      %1403 = vst [vmem:[#allocation2 + $0x10] sm:$0xff] %v1400
      %p1404 = scmp.eq.s32.totalorder %s21, 2
      // Predicated region
      $region37: #{_lambda_.9} parent=31 // pred_check
        %p1405 = pneg %p1404
      $region38: #{_lambda_.9} parent=31 // pred_check_branch
        %1407 = sbr.rel (%p1405) target = $region40
      $region39: #{_lambda_.9} parent=31 // pred_region
        %v1408 = vld [vmem:[#allocation2] sm:$0xff]
        %v1409 = vld [vmem:[#allocation2 + $0x8] sm:$0xff]
        %v1410 = vld [vmem:[#allocation2 + $0x10] sm:$0xff]
        %v1411 = vld [vmem:[%s2] sm:$0xff]
        %1413 = vset.pattern.permute.xlu0 0
        %1414 = vperm.xlu0 %1413, %v1411
        %v1415 = vpop.permute.xlu0 %1414
        %v1417 = vadd.f32 %v1408, %v1415
        %v1418 = vadd.f32 %v1409, %v1415
        %v1419 = vadd.f32 %v1410, %v1415
        %v1420 = vmax.f32 %v1417, 0.0
        %v1421 = vmax.f32 %v1418, 0.0
        %v1422 = vmax.f32 %v1419, 0.0
        %1423 = vst [vmem:[%s240] sm:$0xff] %v1420
        %1424 = vst [vmem:[%s240 + $0x8] sm:$0xff] %v1421
        %1425 = vst [vmem:[%s240 + $0x10] sm:$0xff] %v1422
      $region40: #{_lambda_.9} parent=31 // pred_fallthru
        _
      %p1426 = scmp.lt.s32.totalorder %s19, 1
      %s1427 = scalar_select %p1426, %s19, 1
      %p1428 = scmp.lt.s32.totalorder %s20, 15
      %s1429 = scalar_select %p1428, %s20, 15
      %s1430 = smul.addr %s1429, 3
      %s1431 = smul.addr %s1427, 48
      %s1432 = sadd.s32 %s1430, %s1431
      %s1433 = smul.addr %s1432, 8
      %s1434 = scalar_lea.vmem %s3, %s1433
      // Predicated region
      $region41: #{_lambda_.9} parent=31 // pred_check
        %p1435 = pneg %p130
      $region42: #{_lambda_.9} parent=31 // pred_check_branch
        %1437 = sbr.rel (%p1435) target = $region44
      $region43: #{_lambda_.9} parent=31 // pred_region
        _
      $region44: #{_lambda_.9} parent=31 // pred_fallthru
        _
    $region32: #{_lambda_.9} parent=5 // pred_fallthru
      _
    %p1438 = scmp.le.s32.totalorder 2, %s9
    // Predicated region
    $region45: #{_lambda_.9} parent=5 // pred_check
      %p1439 = pneg %p1438
    $region46: #{_lambda_.9} parent=5 // pred_check_branch
      %1441 = sbr.rel (%p1439) target = $region48
    $region47: #{_lambda_.9} parent=5 // pred_region
      %s1442 = ssub.s32 %s9, 2
      // Predicated region
      $region49: #{_lambda_.9} parent=47 // pred_check
        %p1443 = pneg %p136
      $region50: #{_lambda_.9} parent=47 // pred_check_branch
        %1445 = sbr.rel (%p1443) target = $region52
      $region51: #{_lambda_.9} parent=47 // pred_region
        %p1446 = scmp.lt.s32.totalorder %s22, 1
        %s1447 = scalar_select %p1446, %s22, 1
        %p1448 = scmp.lt.s32.totalorder %s23, 15
        %s1449 = scalar_select %p1448, %s23, 15
        %s1450 = smul.addr %s1449, 3
        %s1451 = smul.addr %s1447, 48
        %s1452 = sadd.s32 %s1450, %s1451
        %s1453 = smul.addr %s1452, 8
        %s1454 = scalar_lea.vmem %s3, %s1453
      $region52: #{_lambda_.9} parent=47 // pred_fallthru
        _
    $region48: #{_lambda_.9} parent=5 // pred_fallthru
      _
  $region6: #{_lambda_.9} parent=0 // loop_footer
    %s13 = sadd.s32 1, %s9
  $region7: #{_lambda_.9} parent=0 // loop_footer_branch
    %8 = sbr.rel target = $region3
  $region8: #{_lambda_.9} parent=0 // loop_exit
    _

// kernel: _lambda_.10
$region0: #{_lambda_.10}
  #allocation0 [shape = 'u32[]', space=smem, size = 0x4, offset = 0x4, fixed_abs, tag = 'smem constant byte address 0x4 - core index']
  #allocation1 [shape = 'u32[144,128]{1,0:T(1,128)}', space=vmem, size = 0x12000, scoped, tag = 'internal scratch']
  #allocation2 [shape = 'f32[8,128]{1,0:T(8,128)}', space=vmem, size = 0x1000, scoped, tag = 'scratch operand']
  %s0 = inlined_call_operand.vmem [shape: bf16[2,10,8,256], index: 0, kind: input, shape index: {}]
  %s1 = inlined_call_operand.vmem [shape: bf16[3,3,3,8,8], index: 1, kind: input, shape index: {}]
  %s2 = inlined_call_operand.vmem [shape: f32[8,1], index: 2, kind: input, shape index: {}]
  %s3 = inlined_call_operand.vmem [shape: f32[2,8,8,128], index: 3, kind: output, shape index: {}]
  %s4 = sld [smem:[#allocation0]]
  $region53: #{_lambda_.10} parent=0
    _
  %s6 = ssub.s32 1, %s4
  %s7 = scalar_select 0, %s6, %s4
  loop: start=0, step=1, limit=50
  $region2: #{_lambda_.10} parent=0 // loop_pre_header
    _
  $region3: #{_lambda_.10} parent=0 // loop_header
    %s9 = sphi 0, %s13
    %p10 = scmp.ge.s32.totalorder %s9, 50
    %s16 = sphi 0, %s35
    %s17 = sphi 0, %s31
    %s18 = sphi 0, %s27
    %s19 = sphi 0, %s16
    %s20 = sphi 0, %s17
    %s21 = sphi 0, %s18
    %s22 = sphi 0, %s19
    %s23 = sphi 0, %s20
    %s24 = sphi 0, %s21
    %s42 = sphi 0, %s44
    %s45 = sphi 0, %s42
    %s46 = sphi 0, %s45
    %s62 = sphi 0, %s46
    %s68 = sphi 0, %s70
    %s71 = sphi 0, %s68
    %s72 = sphi 0, %s71
    %s88 = sphi 0, %s72
    %s92 = sphi 0, %s92
    %s94 = sphi 0, %s92
    %s95 = sphi 0, %s94
    %s109 = sphi 0, %s95
    %s117 = sphi 0, %s119
    %s120 = sphi 0, %s117
    %s121 = sphi 0, %s120
    %s137 = sphi 0, %s121
  $region4: #{_lambda_.10} parent=0 // loop_header_branch
    %12 = sbr.rel (%p10) target = $region8
  $region5: #{_lambda_.10} parent=0 // loop_body
    %s14 = ssub.s32 %s9, 1
    %s15 = ssub.s32 %s9, 2
    %s25 = sadd.s32 1, %s18
    %p26 = scmp.ge.s32.totalorder %s25, 3
    %s27 = scalar_select %p26, 0, %s25
    %s28 = sadd.s32 1, %s17
    %s29 = scalar_select %p26, %s28, %s17
    %p30 = scmp.ge.s32.totalorder %s29, 8
    %s31 = scalar_select %p30, 0, %s29
    %s32 = sadd.s32 1, %s16
    %s33 = scalar_select %p30, %s32, %s16
    %p34 = scmp.ge.s32.totalorder %s33, 2
    %s35 = scalar_select %p34, 0, %s33
    %s36 = sadd.s32 %s17, %s18
    %s37 = sadd.s32 %s31, %s27
    %s38 = ssub.s32 %s16, %s35
    %s39 = ssub.s32 %s36, %s37
    %s40 = sor.u32 %s38, %s39
    %p41 = scmp.eq.s32.totalorder %s40, 0
    %s43 = sadd.s32 %s42, 1
    %s44 = scalar_select %p41, %s42, %s43
    %p47 = pneg %p41
    %p48 = scmp.eq.s32.totalorder %s9, 47
    %p49 = por %p47, %p48
    %p50 = scmp.ne.s32.totalorder %s42, %s45
    %p51 = scmp.eq.s32.totalorder %s9, 0
    %p52 = por %p50, %p51
    %p53 = scmp.ne.s32.totalorder %s42, %s45
    %p54 = scmp.eq.s32.totalorder %s14, 47
    %p55 = por %p53, %p54
    %p56 = scmp.ne.s32.totalorder %s45, %s46
    %p57 = scmp.eq.s32.totalorder %s14, 0
    %p58 = por %p56, %p57
    %p59 = scmp.ne.s32.totalorder %s45, %s46
    %p60 = scmp.eq.s32.totalorder %s15, 47
    %p61 = por %p59, %p60
    %p63 = scmp.ne.s32.totalorder %s46, %s62
    %p64 = scmp.eq.s32.totalorder %s15, 0
    %p65 = por %p63, %p64
    %s66 = ssub.s32 %s18, %s27
    %p67 = scmp.eq.s32.totalorder %s66, 0
    %s69 = sadd.s32 %s68, 1
    %s70 = scalar_select %p67, %s68, %s69
    %p73 = pneg %p67
    %p74 = scmp.eq.s32.totalorder %s9, 47
    %p75 = por %p73, %p74
    %p76 = scmp.ne.s32.totalorder %s68, %s71
    %p77 = scmp.eq.s32.totalorder %s9, 0
    %p78 = por %p76, %p77
    %p79 = scmp.ne.s32.totalorder %s68, %s71
    %p80 = scmp.eq.s32.totalorder %s14, 47
    %p81 = por %p79, %p80
    %p82 = scmp.ne.s32.totalorder %s71, %s72
    %p83 = scmp.eq.s32.totalorder %s14, 0
    %p84 = por %p82, %p83
    %p85 = scmp.ne.s32.totalorder %s71, %s72
    %p86 = scmp.eq.s32.totalorder %s15, 47
    %p87 = por %p85, %p86
    %p89 = scmp.ne.s32.totalorder %s72, %s88
    %p90 = scmp.eq.s32.totalorder %s15, 0
    %p91 = por %p89, %p90
    %s93 = sadd.s32 %s92, 1
    %p96 = scmp.eq.s32.totalorder %s9, 47
    %p97 = scmp.ne.s32.totalorder %s92, %s94
    %p98 = scmp.eq.s32.totalorder %s9, 0
    %p99 = por %p97, %p98
    %p100 = scmp.ne.s32.totalorder %s92, %s94
    %p101 = scmp.eq.s32.totalorder %s14, 47
    %p102 = por %p100, %p101
    %p103 = scmp.ne.s32.totalorder %s94, %s95
    %p104 = scmp.eq.s32.totalorder %s14, 0
    %p105 = por %p103, %p104
    %p106 = scmp.ne.s32.totalorder %s94, %s95
    %p107 = scmp.eq.s32.totalorder %s15, 47
    %p108 = por %p106, %p107
    %p110 = scmp.ne.s32.totalorder %s95, %s109
    %p111 = scmp.eq.s32.totalorder %s15, 0
    %p112 = por %p110, %p111
    %s113 = ssub.s32 %s16, %s35
    %s114 = ssub.s32 %s17, %s31
    %s115 = sor.u32 %s113, %s114
    %p116 = scmp.eq.s32.totalorder %s115, 0
    %s118 = sadd.s32 %s117, 1
    %s119 = scalar_select %p116, %s117, %s118
    %p122 = pneg %p116
    %p123 = scmp.eq.s32.totalorder %s9, 47
    %p124 = por %p122, %p123
    %p125 = scmp.ne.s32.totalorder %s117, %s120
    %p126 = scmp.eq.s32.totalorder %s9, 0
    %p127 = por %p125, %p126
    %p128 = scmp.ne.s32.totalorder %s117, %s120
    %p129 = scmp.eq.s32.totalorder %s14, 47
    %p130 = por %p128, %p129
    %p131 = scmp.ne.s32.totalorder %s120, %s121
    %p132 = scmp.eq.s32.totalorder %s14, 0
    %p133 = por %p131, %p132
    %p134 = scmp.ne.s32.totalorder %s120, %s121
    %p135 = scmp.eq.s32.totalorder %s15, 47
    %p136 = por %p134, %p135
    %p138 = scmp.ne.s32.totalorder %s121, %s137
    %p139 = scmp.eq.s32.totalorder %s15, 0
    %p140 = por %p138, %p139
    %p141 = scmp.le.s32.totalorder 1, %s9
    %p142 = scmp.lt.s32.totalorder %s9, 49
    %p143 = pnand %p141, %p142
    %p144 = pneg %p143
    // Predicated region
    $region9: #{_lambda_.10} parent=5 // pred_check
      _
    $region10: #{_lambda_.10} parent=5 // pred_check_branch
      %146 = sbr.rel (%p143) target = $region12
    $region11: #{_lambda_.10} parent=5 // pred_region
      %s147 = ssub.s32 %s9, 1
      // Predicated region
      $region13: #{_lambda_.10} parent=11 // pred_check
        %p148 = pneg %p105
      $region14: #{_lambda_.10} parent=11 // pred_check_branch
        %150 = sbr.rel (%p148) target = $region16
      $region15: #{_lambda_.10} parent=11 // pred_region
        _
      $region16: #{_lambda_.10} parent=11 // pred_fallthru
        _
    $region12: #{_lambda_.10} parent=5 // pred_fallthru
      _
    %p151 = scmp.lt.s32.totalorder %s9, 48
    // Predicated region
    $region17: #{_lambda_.10} parent=5 // pred_check
      %p152 = pneg %p151
    $region18: #{_lambda_.10} parent=5 // pred_check_branch
      %154 = sbr.rel (%p152) target = $region20
    $region19: #{_lambda_.10} parent=5 // pred_region
      // Predicated region
      $region21: #{_lambda_.10} parent=19 // pred_check
        %p155 = pneg %p52
      $region22: #{_lambda_.10} parent=19 // pred_check_branch
        %157 = sbr.rel (%p155) target = $region24
      $region23: #{_lambda_.10} parent=19 // pred_region
        %s158 = sadd.s32 %s17, %s18
        %p159 = scmp.lt.s32.totalorder %s16, 1
        %s160 = scalar_select %p159, %s16, 1
        %p161 = scmp.lt.s32.totalorder %s158, 9
        %s162 = scalar_select %p161, %s158, 9
        %s163 = smul.addr %s162, 2
        %s164 = smul.addr %s160, 20
        %s165 = sadd.s32 %s163, %s164
        %s166 = smul.addr %s165, 4
        %s167 = scalar_lea.vmem %s0, %s166
        %s168 = sadd.s32 %s17, %s18
      $region24: #{_lambda_.10} parent=19 // pred_fallthru
        _
      // Predicated region
      $region25: #{_lambda_.10} parent=19 // pred_check
        %p169 = pneg %p78
      $region26: #{_lambda_.10} parent=19 // pred_check_branch
        %171 = sbr.rel (%p169) target = $region28
      $region27: #{_lambda_.10} parent=19 // pred_region
        %p172 = scmp.lt.s32.totalorder %s18, 2
        %s173 = scalar_select %p172, %s18, 2
        %s174 = smul.addr %s173, 9
        %s175 = smul.addr %s174, 4
        %s176 = scalar_lea.vmem %s1, %s175
      $region28: #{_lambda_.10} parent=19 // pred_fallthru
        _
    $region20: #{_lambda_.10} parent=5 // pred_fallthru
      _
    %p177 = scmp.le.s32.totalorder 1, %s9
    %p178 = scmp.lt.s32.totalorder %s9, 49
    %p179 = pnand %p177, %p178
    %p180 = pneg %p179
    // Predicated region
    $region29: #{_lambda_.10} parent=5 // pred_check
      _
    $region30: #{_lambda_.10} parent=5 // pred_check_branch
      %182 = sbr.rel (%p179) target = $region32
    $region31: #{_lambda_.10} parent=5 // pred_region
      %s183 = ssub.s32 %s9, 1
      %s184 = sadd.s32 %s20, %s21
      %p185 = scmp.lt.s32.totalorder %s19, 1
      %s186 = scalar_select %p185, %s19, 1
      %p187 = scmp.lt.s32.totalorder %s184, 9
      %s188 = scalar_select %p187, %s184, 9
      %s189 = smul.addr %s188, 2
      %s190 = smul.addr %s186, 20
      %s191 = sadd.s32 %s189, %s190
      %s192 = smul.addr %s191, 4
      %s193 = scalar_lea.vmem %s0, %s192
      %p194 = pneg %p58
      %p195 = pneg %p55
      %p196 = scmp.lt.s32.totalorder %s21, 2
      %s197 = scalar_select %p196, %s21, 2
      %s198 = smul.addr %s197, 9
      %s199 = smul.addr %s198, 4
      %s200 = scalar_lea.vmem %s1, %s199
      %p201 = pneg %p84
      %p202 = pneg %p81
      %p203 = pneg %p105
      %p204 = pneg %p102
      %p205 = pneg %p133
      %p206 = pneg %p130
      %p207 = scmp.lt.s32.totalorder %s19, 1
      %s208 = scalar_select %p207, %s19, 1
      %p209 = scmp.lt.s32.totalorder %s20, 7
      %s210 = scalar_select %p209, %s20, 7
      %s211 = smul.addr %s208, 8
      %s212 = sadd.s32 %s210, %s211
      %s213 = smul.addr %s212, 8
      %s214 = scalar_lea.vmem %s3, %s213
      %s215 = sadd.s32 %s20, %s21
      %p216 = scmp.lt.s32.totalorder %s19, 1
      %s217 = scalar_select %p216, %s19, 1
      %p218 = scmp.lt.s32.totalorder %s215, 9
      %s219 = scalar_select %p218, %s215, 9
      %s220 = smul.addr %s219, 2
      %s221 = smul.addr %s217, 20
      %s222 = sadd.s32 %s220, %s221
      %s223 = smul.addr %s222, 4
      %s224 = scalar_lea.vmem %s0, %s223
      %s225 = sadd.s32 %s20, %s21
      %p226 = scmp.lt.s32.totalorder %s21, 2
      %s227 = scalar_select %p226, %s21, 2
      %s228 = smul.addr %s227, 9
      %s229 = smul.addr %s228, 4
      %s230 = scalar_lea.vmem %s1, %s229
      %p231 = scmp.lt.s32.totalorder %s19, 1
      %s232 = scalar_select %p231, %s19, 1
      %p233 = scmp.lt.s32.totalorder %s20, 7
      %s234 = scalar_select %p233, %s20, 7
      %s235 = smul.addr %s232, 8
      %s236 = sadd.s32 %s234, %s235
      %s237 = smul.addr %s236, 8
      %s238 = scalar_lea.vmem %s3, %s237
      %p240 = scmp.eq.s32.totalorder %s21, 0
      // Predicated region
      $region33: #{_lambda_.10} parent=31 // pred_check
        %p241 = pneg %p240
      $region34: #{_lambda_.10} parent=31 // pred_check_branch
        %243 = sbr.rel (%p241) target = $region36
      $region35: #{_lambda_.10} parent=31 // pred_region
        %244 = vst [vmem:[#allocation2] sm:$0xff] 0.0
      $region36: #{_lambda_.10} parent=31 // pred_fallthru
        _
      %v245 = vld [vmem:[#allocation2] sm:$0xff]
      %v246 = vld [vmem:[%s224] sm:$0xf]
      %v247 = vld [vmem:[%s230] sm:$0xf]
      %vm248 = vcmask 64512
      %v250 = vsel %vm248, %v247, 0
      %vm252 = vcmask 1043456
      %v254 = vsel %vm252, %v246, 0
      %256 = vmatprep.subr.bf16.mxu0 0
      %257 = vmatpush1.bf16.msra.mxu0 %v254
      %258 = vmatprep.subr.bf16.mxu0 0
      %259 = vmatpush1.bf16.msra.mxu0 0
      %260 = vmatprep.subr.bf16.mxu0 0
      %261 = vmatpush1.bf16.msra.mxu0 0
      %262 = vmatprep.subr.bf16.mxu0 0
      %263 = vmatpush1.bf16.msra.mxu0 0
      %264 = vmatprep.subr.bf16.mxu0 0
      %265 = vmatpush1.bf16.msra.mxu0 0
      %266 = vmatprep.subr.bf16.mxu0 0
      %267 = vmatpush1.bf16.msra.mxu0 0
      %268 = vmatprep.subr.bf16.mxu0 0
      %269 = vmatpush1.bf16.msra.mxu0 0
      %270 = vmatprep.subr.bf16.mxu0 0
      %271 = vmatpush1.bf16.msra.mxu0 0
      %272 = vmatprep.subr.bf16.mxu0 0
      %273 = vmatpush1.bf16.msra.mxu0 0
      %274 = vmatprep.subr.bf16.mxu0 0
      %275 = vmatpush1.bf16.msra.mxu0 0
      %276 = vmatprep.subr.bf16.mxu0 0
      %277 = vmatpush1.bf16.msra.mxu0 0
      %278 = vmatprep.subr.bf16.mxu0 0
      %279 = vmatpush1.bf16.msra.mxu0 0
      %280 = vmatprep.subr.bf16.mxu0 0
      %281 = vmatpush1.bf16.msra.mxu0 0
      %282 = vmatprep.subr.bf16.mxu0 0
      %283 = vmatpush1.bf16.msra.mxu0 0
      %284 = vmatprep.subr.bf16.mxu0 0
      %285 = vmatpush1.bf16.msra.mxu0 0
      %286 = vmatprep.subr.bf16.mxu0 0
      %287 = vmatpush1.bf16.msra.mxu0 0
      %288 = vmatprep.mubr.bf16.mxu0 0
      %289 = vmatmul.mubr.bf16.gmra.mrb[0].mxu0 %v250
      %v290 = vpop.f32.mrb[0].mxu0
      %v291 = vadd.f32 0.0, %v290
      %v292 = vpop.f32.mrb[0].mxu0
      %v293 = vpop.f32.mrb[0].mxu0
      %v294 = vpop.f32.mrb[0].mxu0
      %295 = vdwg.mxu0
      %v296 = vadd.f32 %v245, %v291
      %v297 = vld [vmem:[%s224] sm:$0xff]
      %s298 = scalar_lea.vmem %s230, 4
      %v299 = vld [vmem:[%s298] sm:$0xf]
      %v301 = vunpack.c.l.b16 %v297
      %v302 = vunpack.c.h.b16 %v297
      %v303 = vpack.c.b16 %v301, %v301
      %v304 = vpack.c.b16 %v302, %v302
      %305 = vrot.lane.b32.xlu0 %v303, 127
      %v306 = vpop.permute.xlu0 %305
      %307 = vrot.lane.b32.xlu0 %v304, 127
      %v308 = vpop.permute.xlu0 %307
      %vm309 = vcmask 1039360
      %v310 = vsel %vm309, %v306, %v308
      %v312 = vsel %vm248, %v299, 0
      %v315 = vsel %vm252, %v310, 0
      %317 = vmatprep.subr.bf16.mxu0 0
      %318 = vmatpush1.bf16.msra.mxu0 %v315
      %319 = vmatprep.subr.bf16.mxu0 0
      %320 = vmatpush1.bf16.msra.mxu0 0
      %321 = vmatprep.subr.bf16.mxu0 0
      %322 = vmatpush1.bf16.msra.mxu0 0
      %323 = vmatprep.subr.bf16.mxu0 0
      %324 = vmatpush1.bf16.msra.mxu0 0
      %325 = vmatprep.subr.bf16.mxu0 0
      %326 = vmatpush1.bf16.msra.mxu0 0
      %327 = vmatprep.subr.bf16.mxu0 0
      %328 = vmatpush1.bf16.msra.mxu0 0
      %329 = vmatprep.subr.bf16.mxu0 0
      %330 = vmatpush1.bf16.msra.mxu0 0
      %331 = vmatprep.subr.bf16.mxu0 0
      %332 = vmatpush1.bf16.msra.mxu0 0
      %333 = vmatprep.subr.bf16.mxu0 0
      %334 = vmatpush1.bf16.msra.mxu0 0
      %335 = vmatprep.subr.bf16.mxu0 0
      %336 = vmatpush1.bf16.msra.mxu0 0
      %337 = vmatprep.subr.bf16.mxu0 0
      %338 = vmatpush1.bf16.msra.mxu0 0
      %339 = vmatprep.subr.bf16.mxu0 0
      %340 = vmatpush1.bf16.msra.mxu0 0
      %341 = vmatprep.subr.bf16.mxu0 0
      %342 = vmatpush1.bf16.msra.mxu0 0
      %343 = vmatprep.subr.bf16.mxu0 0
      %344 = vmatpush1.bf16.msra.mxu0 0
      %345 = vmatprep.subr.bf16.mxu0 0
      %346 = vmatpush1.bf16.msra.mxu0 0
      %347 = vmatprep.subr.bf16.mxu0 0
      %348 = vmatpush1.bf16.msra.mxu0 0
      %349 = vmatprep.mubr.bf16.mxu0 0
      %350 = vmatmul.mubr.bf16.gmra.mrb[0].mxu0 %v312
      %v351 = vpop.f32.mrb[0].mxu0
      %v352 = vadd.f32 0.0, %v351
      %v353 = vpop.f32.mrb[0].mxu0
      %v354 = vpop.f32.mrb[0].mxu0
      %v355 = vpop.f32.mrb[0].mxu0
      %356 = vdwg.mxu0
      %v357 = vadd.f32 %v296, %v352
      %s358 = scalar_lea.vmem %s230, 8
      %v359 = vld [vmem:[%s358] sm:$0xf]
      %360 = vrot.lane.b32.xlu0 %v303, 126
      %v361 = vpop.permute.xlu0 %360
      %362 = vrot.lane.b32.xlu0 %v304, 126
      %v363 = vpop.permute.xlu0 %362
      %vm364 = vcmask 1031168
      %v365 = vsel %vm364, %v361, %v363
      %v367 = vsel %vm248, %v359, 0
      %v370 = vsel %vm252, %v365, 0
      %372 = vmatprep.subr.bf16.mxu0 0
      %373 = vmatpush1.bf16.msra.mxu0 %v370
      %374 = vmatprep.subr.bf16.mxu0 0
      %375 = vmatpush1.bf16.msra.mxu0 0
      %376 = vmatprep.subr.bf16.mxu0 0
      %377 = vmatpush1.bf16.msra.mxu0 0
      %378 = vmatprep.subr.bf16.mxu0 0
      %379 = vmatpush1.bf16.msra.mxu0 0
      %380 = vmatprep.subr.bf16.mxu0 0
      %381 = vmatpush1.bf16.msra.mxu0 0
      %382 = vmatprep.subr.bf16.mxu0 0
      %383 = vmatpush1.bf16.msra.mxu0 0
      %384 = vmatprep.subr.bf16.mxu0 0
      %385 = vmatpush1.bf16.msra.mxu0 0
      %386 = vmatprep.subr.bf16.mxu0 0
      %387 = vmatpush1.bf16.msra.mxu0 0
      %388 = vmatprep.subr.bf16.mxu0 0
      %389 = vmatpush1.bf16.msra.mxu0 0
      %390 = vmatprep.subr.bf16.mxu0 0
      %391 = vmatpush1.bf16.msra.mxu0 0
      %392 = vmatprep.subr.bf16.mxu0 0
      %393 = vmatpush1.bf16.msra.mxu0 0
      %394 = vmatprep.subr.bf16.mxu0 0
      %395 = vmatpush1.bf16.msra.mxu0 0
      %396 = vmatprep.subr.bf16.mxu0 0
      %397 = vmatpush1.bf16.msra.mxu0 0
      %398 = vmatprep.subr.bf16.mxu0 0
      %399 = vmatpush1.bf16.msra.mxu0 0
      %400 = vmatprep.subr.bf16.mxu0 0
      %401 = vmatpush1.bf16.msra.mxu0 0
      %402 = vmatprep.subr.bf16.mxu0 0
      %403 = vmatpush1.bf16.msra.mxu0 0
      %404 = vmatprep.mubr.bf16.mxu0 0
      %405 = vmatmul.mubr.bf16.gmra.mrb[0].mxu0 %v367
      %v406 = vpop.f32.mrb[0].mxu0
      %v407 = vadd.f32 0.0, %v406
      %v408 = vpop.f32.mrb[0].mxu0
      %v409 = vpop.f32.mrb[0].mxu0
      %v410 = vpop.f32.mrb[0].mxu0
      %411 = vdwg.mxu0
      %v412 = vadd.f32 %v357, %v407
      %s413 = scalar_lea.vmem %s230, 12
      %v414 = vld [vmem:[%s413] sm:$0xf]
      %415 = vrot.lane.b32.xlu0 %v303, 118
      %v416 = vpop.permute.xlu0 %415
      %417 = vrot.lane.b32.xlu0 %v304, 118
      %v418 = vpop.permute.xlu0 %417
      %vm419 = vcmask 965632
      %v420 = vsel %vm419, %v416, %v418
      %v422 = vsel %vm248, %v414, 0
      %v425 = vsel %vm252, %v420, 0
      %427 = vmatprep.subr.bf16.mxu0 0
      %428 = vmatpush1.bf16.msra.mxu0 %v425
      %429 = vmatprep.subr.bf16.mxu0 0
      %430 = vmatpush1.bf16.msra.mxu0 0
      %431 = vmatprep.subr.bf16.mxu0 0
      %432 = vmatpush1.bf16.msra.mxu0 0
      %433 = vmatprep.subr.bf16.mxu0 0
      %434 = vmatpush1.bf16.msra.mxu0 0
      %435 = vmatprep.subr.bf16.mxu0 0
      %436 = vmatpush1.bf16.msra.mxu0 0
      %437 = vmatprep.subr.bf16.mxu0 0
      %438 = vmatpush1.bf16.msra.mxu0 0
      %439 = vmatprep.subr.bf16.mxu0 0
      %440 = vmatpush1.bf16.msra.mxu0 0
      %441 = vmatprep.subr.bf16.mxu0 0
      %442 = vmatpush1.bf16.msra.mxu0 0
      %443 = vmatprep.subr.bf16.mxu0 0
      %444 = vmatpush1.bf16.msra.mxu0 0
      %445 = vmatprep.subr.bf16.mxu0 0
      %446 = vmatpush1.bf16.msra.mxu0 0
      %447 = vmatprep.subr.bf16.mxu0 0
      %448 = vmatpush1.bf16.msra.mxu0 0
      %449 = vmatprep.subr.bf16.mxu0 0
      %450 = vmatpush1.bf16.msra.mxu0 0
      %451 = vmatprep.subr.bf16.mxu0 0
      %452 = vmatpush1.bf16.msra.mxu0 0
      %453 = vmatprep.subr.bf16.mxu0 0
      %454 = vmatpush1.bf16.msra.mxu0 0
      %455 = vmatprep.subr.bf16.mxu0 0
      %456 = vmatpush1.bf16.msra.mxu0 0
      %457 = vmatprep.subr.bf16.mxu0 0
      %458 = vmatpush1.bf16.msra.mxu0 0
      %459 = vmatprep.mubr.bf16.mxu0 0
      %460 = vmatmul.mubr.bf16.gmra.mrb[0].mxu0 %v422
      %v461 = vpop.f32.mrb[0].mxu0
      %v462 = vadd.f32 0.0, %v461
      %v463 = vpop.f32.mrb[0].mxu0
      %v464 = vpop.f32.mrb[0].mxu0
      %v465 = vpop.f32.mrb[0].mxu0
      %466 = vdwg.mxu0
      %v467 = vadd.f32 %v412, %v462
      %s468 = scalar_lea.vmem %s230, 16
      %v469 = vld [vmem:[%s468] sm:$0xf]
      %470 = vrot.lane.b32.xlu0 %v303, 117
      %v471 = vpop.permute.xlu0 %470
      %472 = vrot.lane.b32.xlu0 %v304, 117
      %v473 = vpop.permute.xlu0 %472
      %vm474 = vcmask 957440
      %v475 = vsel %vm474, %v471, %v473
      %v477 = vsel %vm248, %v469, 0
      %v480 = vsel %vm252, %v475, 0
      %482 = vmatprep.subr.bf16.mxu0 0
      %483 = vmatpush1.bf16.msra.mxu0 %v480
      %484 = vmatprep.subr.bf16.mxu0 0
      %485 = vmatpush1.bf16.msra.mxu0 0
      %486 = vmatprep.subr.bf16.mxu0 0
      %487 = vmatpush1.bf16.msra.mxu0 0
      %488 = vmatprep.subr.bf16.mxu0 0
      %489 = vmatpush1.bf16.msra.mxu0 0
      %490 = vmatprep.subr.bf16.mxu0 0
      %491 = vmatpush1.bf16.msra.mxu0 0
      %492 = vmatprep.subr.bf16.mxu0 0
      %493 = vmatpush1.bf16.msra.mxu0 0
      %494 = vmatprep.subr.bf16.mxu0 0
      %495 = vmatpush1.bf16.msra.mxu0 0
      %496 = vmatprep.subr.bf16.mxu0 0
      %497 = vmatpush1.bf16.msra.mxu0 0
      %498 = vmatprep.subr.bf16.mxu0 0
      %499 = vmatpush1.bf16.msra.mxu0 0
      %500 = vmatprep.subr.bf16.mxu0 0
      %501 = vmatpush1.bf16.msra.mxu0 0
      %502 = vmatprep.subr.bf16.mxu0 0
      %503 = vmatpush1.bf16.msra.mxu0 0
      %504 = vmatprep.subr.bf16.mxu0 0
      %505 = vmatpush1.bf16.msra.mxu0 0
      %506 = vmatprep.subr.bf16.mxu0 0
      %507 = vmatpush1.bf16.msra.mxu0 0
      %508 = vmatprep.subr.bf16.mxu0 0
      %509 = vmatpush1.bf16.msra.mxu0 0
      %510 = vmatprep.subr.bf16.mxu0 0
      %511 = vmatpush1.bf16.msra.mxu0 0
      %512 = vmatprep.subr.bf16.mxu0 0
      %513 = vmatpush1.bf16.msra.mxu0 0
      %514 = vmatprep.mubr.bf16.mxu0 0
      %515 = vmatmul.mubr.bf16.gmra.mrb[0].mxu0 %v477
      %v516 = vpop.f32.mrb[0].mxu0
      %v517 = vadd.f32 0.0, %v516
      %v518 = vpop.f32.mrb[0].mxu0
      %v519 = vpop.f32.mrb[0].mxu0
      %v520 = vpop.f32.mrb[0].mxu0
      %521 = vdwg.mxu0
      %v522 = vadd.f32 %v467, %v517
      %s523 = scalar_lea.vmem %s230, 20
      %v524 = vld [vmem:[%s523] sm:$0xf]
      %525 = vrot.lane.b32.xlu0 %v303, 116
      %v526 = vpop.permute.xlu0 %525
      %527 = vrot.lane.b32.xlu0 %v304, 116
      %v528 = vpop.permute.xlu0 %527
      %vm529 = vcmask 949248
      %v530 = vsel %vm529, %v526, %v528
      %v532 = vsel %vm248, %v524, 0
      %v535 = vsel %vm252, %v530, 0
      %537 = vmatprep.subr.bf16.mxu0 0
      %538 = vmatpush1.bf16.msra.mxu0 %v535
      %539 = vmatprep.subr.bf16.mxu0 0
      %540 = vmatpush1.bf16.msra.mxu0 0
      %541 = vmatprep.subr.bf16.mxu0 0
      %542 = vmatpush1.bf16.msra.mxu0 0
      %543 = vmatprep.subr.bf16.mxu0 0
      %544 = vmatpush1.bf16.msra.mxu0 0
      %545 = vmatprep.subr.bf16.mxu0 0
      %546 = vmatpush1.bf16.msra.mxu0 0
      %547 = vmatprep.subr.bf16.mxu0 0
      %548 = vmatpush1.bf16.msra.mxu0 0
      %549 = vmatprep.subr.bf16.mxu0 0
      %550 = vmatpush1.bf16.msra.mxu0 0
      %551 = vmatprep.subr.bf16.mxu0 0
      %552 = vmatpush1.bf16.msra.mxu0 0
      %553 = vmatprep.subr.bf16.mxu0 0
      %554 = vmatpush1.bf16.msra.mxu0 0
      %555 = vmatprep.subr.bf16.mxu0 0
      %556 = vmatpush1.bf16.msra.mxu0 0
      %557 = vmatprep.subr.bf16.mxu0 0
      %558 = vmatpush1.bf16.msra.mxu0 0
      %559 = vmatprep.subr.bf16.mxu0 0
      %560 = vmatpush1.bf16.msra.mxu0 0
      %561 = vmatprep.subr.bf16.mxu0 0
      %562 = vmatpush1.bf16.msra.mxu0 0
      %563 = vmatprep.subr.bf16.mxu0 0
      %564 = vmatpush1.bf16.msra.mxu0 0
      %565 = vmatprep.subr.bf16.mxu0 0
      %566 = vmatpush1.bf16.msra.mxu0 0
      %567 = vmatprep.subr.bf16.mxu0 0
      %568 = vmatpush1.bf16.msra.mxu0 0
      %569 = vmatprep.mubr.bf16.mxu0 0
      %570 = vmatmul.mubr.bf16.gmra.mrb[0].mxu0 %v532
      %v571 = vpop.f32.mrb[0].mxu0
      %v572 = vadd.f32 0.0, %v571
      %v573 = vpop.f32.mrb[0].mxu0
      %v574 = vpop.f32.mrb[0].mxu0
      %v575 = vpop.f32.mrb[0].mxu0
      %576 = vdwg.mxu0
      %v577 = vadd.f32 %v522, %v572
      %s578 = scalar_lea.vmem %s230, 24
      %v579 = vld [vmem:[%s578] sm:$0xf]
      %580 = vrot.lane.b32.xlu0 %v303, 108
      %v581 = vpop.permute.xlu0 %580
      %582 = vrot.lane.b32.xlu0 %v304, 108
      %v583 = vpop.permute.xlu0 %582
      %vm584 = vcmask 883712
      %v585 = vsel %vm584, %v581, %v583
      %v587 = vsel %vm248, %v579, 0
      %v590 = vsel %vm252, %v585, 0
      %592 = vmatprep.subr.bf16.mxu0 0
      %593 = vmatpush1.bf16.msra.mxu0 %v590
      %594 = vmatprep.subr.bf16.mxu0 0
      %595 = vmatpush1.bf16.msra.mxu0 0
      %596 = vmatprep.subr.bf16.mxu0 0
      %597 = vmatpush1.bf16.msra.mxu0 0
      %598 = vmatprep.subr.bf16.mxu0 0
      %599 = vmatpush1.bf16.msra.mxu0 0
      %600 = vmatprep.subr.bf16.mxu0 0
      %601 = vmatpush1.bf16.msra.mxu0 0
      %602 = vmatprep.subr.bf16.mxu0 0
      %603 = vmatpush1.bf16.msra.mxu0 0
      %604 = vmatprep.subr.bf16.mxu0 0
      %605 = vmatpush1.bf16.msra.mxu0 0
      %606 = vmatprep.subr.bf16.mxu0 0
      %607 = vmatpush1.bf16.msra.mxu0 0
      %608 = vmatprep.subr.bf16.mxu0 0
      %609 = vmatpush1.bf16.msra.mxu0 0
      %610 = vmatprep.subr.bf16.mxu0 0
      %611 = vmatpush1.bf16.msra.mxu0 0
      %612 = vmatprep.subr.bf16.mxu0 0
      %613 = vmatpush1.bf16.msra.mxu0 0
      %614 = vmatprep.subr.bf16.mxu0 0
      %615 = vmatpush1.bf16.msra.mxu0 0
      %616 = vmatprep.subr.bf16.mxu0 0
      %617 = vmatpush1.bf16.msra.mxu0 0
      %618 = vmatprep.subr.bf16.mxu0 0
      %619 = vmatpush1.bf16.msra.mxu0 0
      %620 = vmatprep.subr.bf16.mxu0 0
      %621 = vmatpush1.bf16.msra.mxu0 0
      %622 = vmatprep.subr.bf16.mxu0 0
      %623 = vmatpush1.bf16.msra.mxu0 0
      %624 = vmatprep.mubr.bf16.mxu0 0
      %625 = vmatmul.mubr.bf16.gmra.mrb[0].mxu0 %v587
      %v626 = vpop.f32.mrb[0].mxu0
      %v627 = vadd.f32 0.0, %v626
      %v628 = vpop.f32.mrb[0].mxu0
      %v629 = vpop.f32.mrb[0].mxu0
      %v630 = vpop.f32.mrb[0].mxu0
      %631 = vdwg.mxu0
      %v632 = vadd.f32 %v577, %v627
      %s633 = scalar_lea.vmem %s230, 28
      %v634 = vld [vmem:[%s633] sm:$0xf]
      %635 = vrot.lane.b32.xlu0 %v303, 107
      %v636 = vpop.permute.xlu0 %635
      %637 = vrot.lane.b32.xlu0 %v304, 107
      %v638 = vpop.permute.xlu0 %637
      %vm639 = vcmask 875520
      %v640 = vsel %vm639, %v636, %v638
      %v642 = vsel %vm248, %v634, 0
      %v645 = vsel %vm252, %v640, 0
      %647 = vmatprep.subr.bf16.mxu0 0
      %648 = vmatpush1.bf16.msra.mxu0 %v645
      %649 = vmatprep.subr.bf16.mxu0 0
      %650 = vmatpush1.bf16.msra.mxu0 0
      %651 = vmatprep.subr.bf16.mxu0 0
      %652 = vmatpush1.bf16.msra.mxu0 0
      %653 = vmatprep.subr.bf16.mxu0 0
      %654 = vmatpush1.bf16.msra.mxu0 0
      %655 = vmatprep.subr.bf16.mxu0 0
      %656 = vmatpush1.bf16.msra.mxu0 0
      %657 = vmatprep.subr.bf16.mxu0 0
      %658 = vmatpush1.bf16.msra.mxu0 0
      %659 = vmatprep.subr.bf16.mxu0 0
      %660 = vmatpush1.bf16.msra.mxu0 0
      %661 = vmatprep.subr.bf16.mxu0 0
      %662 = vmatpush1.bf16.msra.mxu0 0
      %663 = vmatprep.subr.bf16.mxu0 0
      %664 = vmatpush1.bf16.msra.mxu0 0
      %665 = vmatprep.subr.bf16.mxu0 0
      %666 = vmatpush1.bf16.msra.mxu0 0
      %667 = vmatprep.subr.bf16.mxu0 0
      %668 = vmatpush1.bf16.msra.mxu0 0
      %669 = vmatprep.subr.bf16.mxu0 0
      %670 = vmatpush1.bf16.msra.mxu0 0
      %671 = vmatprep.subr.bf16.mxu0 0
      %672 = vmatpush1.bf16.msra.mxu0 0
      %673 = vmatprep.subr.bf16.mxu0 0
      %674 = vmatpush1.bf16.msra.mxu0 0
      %675 = vmatprep.subr.bf16.mxu0 0
      %676 = vmatpush1.bf16.msra.mxu0 0
      %677 = vmatprep.subr.bf16.mxu0 0
      %678 = vmatpush1.bf16.msra.mxu0 0
      %679 = vmatprep.mubr.bf16.mxu0 0
      %680 = vmatmul.mubr.bf16.gmra.mrb[0].mxu0 %v642
      %v681 = vpop.f32.mrb[0].mxu0
      %v682 = vadd.f32 0.0, %v681
      %v683 = vpop.f32.mrb[0].mxu0
      %v684 = vpop.f32.mrb[0].mxu0
      %v685 = vpop.f32.mrb[0].mxu0
      %686 = vdwg.mxu0
      %v687 = vadd.f32 %v632, %v682
      %s688 = scalar_lea.vmem %s230, 32
      %v689 = vld [vmem:[%s688] sm:$0xf]
      %690 = vrot.lane.b32.xlu0 %v303, 106
      %v691 = vpop.permute.xlu0 %690
      %692 = vrot.lane.b32.xlu0 %v304, 106
      %v693 = vpop.permute.xlu0 %692
      %vm694 = vcmask 867328
      %v695 = vsel %vm694, %v691, %v693
      %v697 = vsel %vm248, %v689, 0
      %v700 = vsel %vm252, %v695, 0
      %702 = vmatprep.subr.bf16.mxu0 0
      %703 = vmatpush1.bf16.msra.mxu0 %v700
      %704 = vmatprep.subr.bf16.mxu0 0
      %705 = vmatpush1.bf16.msra.mxu0 0
      %706 = vmatprep.subr.bf16.mxu0 0
      %707 = vmatpush1.bf16.msra.mxu0 0
      %708 = vmatprep.subr.bf16.mxu0 0
      %709 = vmatpush1.bf16.msra.mxu0 0
      %710 = vmatprep.subr.bf16.mxu0 0
      %711 = vmatpush1.bf16.msra.mxu0 0
      %712 = vmatprep.subr.bf16.mxu0 0
      %713 = vmatpush1.bf16.msra.mxu0 0
      %714 = vmatprep.subr.bf16.mxu0 0
      %715 = vmatpush1.bf16.msra.mxu0 0
      %716 = vmatprep.subr.bf16.mxu0 0
      %717 = vmatpush1.bf16.msra.mxu0 0
      %718 = vmatprep.subr.bf16.mxu0 0
      %719 = vmatpush1.bf16.msra.mxu0 0
      %720 = vmatprep.subr.bf16.mxu0 0
      %721 = vmatpush1.bf16.msra.mxu0 0
      %722 = vmatprep.subr.bf16.mxu0 0
      %723 = vmatpush1.bf16.msra.mxu0 0
      %724 = vmatprep.subr.bf16.mxu0 0
      %725 = vmatpush1.bf16.msra.mxu0 0
      %726 = vmatprep.subr.bf16.mxu0 0
      %727 = vmatpush1.bf16.msra.mxu0 0
      %728 = vmatprep.subr.bf16.mxu0 0
      %729 = vmatpush1.bf16.msra.mxu0 0
      %730 = vmatprep.subr.bf16.mxu0 0
      %731 = vmatpush1.bf16.msra.mxu0 0
      %732 = vmatprep.subr.bf16.mxu0 0
      %733 = vmatpush1.bf16.msra.mxu0 0
      %734 = vmatprep.mubr.bf16.mxu0 0
      %735 = vmatmul.mubr.bf16.gmra.mrb[0].mxu0 %v697
      %v736 = vpop.f32.mrb[0].mxu0
      %v737 = vadd.f32 0.0, %v736
      %v738 = vpop.f32.mrb[0].mxu0
      %v739 = vpop.f32.mrb[0].mxu0
      %v740 = vpop.f32.mrb[0].mxu0
      %741 = vdwg.mxu0
      %v742 = vadd.f32 %v687, %v737
      %743 = vst [vmem:[#allocation2] sm:$0xff] %v742
      %p744 = scmp.eq.s32.totalorder %s21, 2
      // Predicated region
      $region37: #{_lambda_.10} parent=31 // pred_check
        %p745 = pneg %p744
      $region38: #{_lambda_.10} parent=31 // pred_check_branch
        %747 = sbr.rel (%p745) target = $region40
      $region39: #{_lambda_.10} parent=31 // pred_region
        %v748 = vld [vmem:[#allocation2] sm:$0xff]
        %v749 = vld [vmem:[%s2] sm:$0xff]
        %751 = vset.pattern.permute.xlu0 0
        %752 = vperm.xlu0 %751, %v749
        %v753 = vpop.permute.xlu0 %752
        %v755 = vadd.f32 %v748, %v753
        %v756 = vmax.f32 %v755, 0.0
        %757 = vst [vmem:[%s238] sm:$0xff] %v756
      $region40: #{_lambda_.10} parent=31 // pred_fallthru
        _
      %p758 = scmp.lt.s32.totalorder %s19, 1
      %s759 = scalar_select %p758, %s19, 1
      %p760 = scmp.lt.s32.totalorder %s20, 7
      %s761 = scalar_select %p760, %s20, 7
      %s762 = smul.addr %s759, 8
      %s763 = sadd.s32 %s761, %s762
      %s764 = smul.addr %s763, 8
      %s765 = scalar_lea.vmem %s3, %s764
      // Predicated region
      $region41: #{_lambda_.10} parent=31 // pred_check
        %p766 = pneg %p130
      $region42: #{_lambda_.10} parent=31 // pred_check_branch
        %768 = sbr.rel (%p766) target = $region44
      $region43: #{_lambda_.10} parent=31 // pred_region
        _
      $region44: #{_lambda_.10} parent=31 // pred_fallthru
        _
    $region32: #{_lambda_.10} parent=5 // pred_fallthru
      _
    %p769 = scmp.le.s32.totalorder 2, %s9
    // Predicated region
    $region45: #{_lambda_.10} parent=5 // pred_check
      %p770 = pneg %p769
    $region46: #{_lambda_.10} parent=5 // pred_check_branch
      %772 = sbr.rel (%p770) target = $region48
    $region47: #{_lambda_.10} parent=5 // pred_region
      %s773 = ssub.s32 %s9, 2
      // Predicated region
      $region49: #{_lambda_.10} parent=47 // pred_check
        %p774 = pneg %p136
      $region50: #{_lambda_.10} parent=47 // pred_check_branch
        %776 = sbr.rel (%p774) target = $region52
      $region51: #{_lambda_.10} parent=47 // pred_region
        %p777 = scmp.lt.s32.totalorder %s22, 1
        %s778 = scalar_select %p777, %s22, 1
        %p779 = scmp.lt.s32.totalorder %s23, 7
        %s780 = scalar_select %p779, %s23, 7
        %s781 = smul.addr %s778, 8
        %s782 = sadd.s32 %s780, %s781
        %s783 = smul.addr %s782, 8
        %s784 = scalar_lea.vmem %s3, %s783
      $region52: #{_lambda_.10} parent=47 // pred_fallthru
        _
    $region48: #{_lambda_.10} parent=5 // pred_fallthru
      _
  $region6: #{_lambda_.10} parent=0 // loop_footer
    %s13 = sadd.s32 1, %s9
  $region7: #{_lambda_.10} parent=0 // loop_footer_branch
    %8 = sbr.rel target = $region3
  $region8: #{_lambda_.10} parent=0 // loop_exit
    _

// kernel: _lambda_.12
$region0: #{_lambda_.12}
  #allocation0 [shape = 'u32[]', space=smem, size = 0x4, offset = 0x4, fixed_abs, tag = 'smem constant byte address 0x4 - core index']
  #allocation1 [shape = 'u32[144,128]{1,0:T(1,128)}', space=vmem, size = 0x12000, scoped, tag = 'internal scratch']
  #allocation2 [shape = 'f32[16,128]{1,0:T(8,128)}', space=vmem, size = 0x2000, scoped, tag = 'scratch operand']
  %s0 = inlined_call_operand.vmem [shape: bf16[2,6,8,256], index: 0, kind: input, shape index: {}]
  %s1 = inlined_call_operand.vmem [shape: bf16[3,3,3,16,8], index: 1, kind: input, shape index: {}]
  %s2 = inlined_call_operand.vmem [shape: f32[16,1], index: 2, kind: input, shape index: {}]
  %s3 = inlined_call_operand.vmem [shape: f32[2,4,16,128], index: 3, kind: output, shape index: {}]
  %s4 = sld [smem:[#allocation0]]
  $region53: #{_lambda_.12} parent=0
    _
  %s6 = ssub.s32 1, %s4
  %s7 = scalar_select 0, %s6, %s4
  loop: start=0, step=1, limit=26
  $region2: #{_lambda_.12} parent=0 // loop_pre_header
    _
  $region3: #{_lambda_.12} parent=0 // loop_header
    %s9 = sphi 0, %s13
    %p10 = scmp.ge.s32.totalorder %s9, 26
    %s16 = sphi 0, %s35
    %s17 = sphi 0, %s31
    %s18 = sphi 0, %s27
    %s19 = sphi 0, %s16
    %s20 = sphi 0, %s17
    %s21 = sphi 0, %s18
    %s22 = sphi 0, %s19
    %s23 = sphi 0, %s20
    %s24 = sphi 0, %s21
    %s42 = sphi 0, %s44
    %s45 = sphi 0, %s42
    %s46 = sphi 0, %s45
    %s62 = sphi 0, %s46
    %s68 = sphi 0, %s70
    %s71 = sphi 0, %s68
    %s72 = sphi 0, %s71
    %s88 = sphi 0, %s72
    %s92 = sphi 0, %s92
    %s94 = sphi 0, %s92
    %s95 = sphi 0, %s94
    %s109 = sphi 0, %s95
    %s117 = sphi 0, %s119
    %s120 = sphi 0, %s117
    %s121 = sphi 0, %s120
    %s137 = sphi 0, %s121
  $region4: #{_lambda_.12} parent=0 // loop_header_branch
    %12 = sbr.rel (%p10) target = $region8
  $region5: #{_lambda_.12} parent=0 // loop_body
    %s14 = ssub.s32 %s9, 1
    %s15 = ssub.s32 %s9, 2
    %s25 = sadd.s32 1, %s18
    %p26 = scmp.ge.s32.totalorder %s25, 3
    %s27 = scalar_select %p26, 0, %s25
    %s28 = sadd.s32 1, %s17
    %s29 = scalar_select %p26, %s28, %s17
    %p30 = scmp.ge.s32.totalorder %s29, 4
    %s31 = scalar_select %p30, 0, %s29
    %s32 = sadd.s32 1, %s16
    %s33 = scalar_select %p30, %s32, %s16
    %p34 = scmp.ge.s32.totalorder %s33, 2
    %s35 = scalar_select %p34, 0, %s33
    %s36 = sadd.s32 %s17, %s18
    %s37 = sadd.s32 %s31, %s27
    %s38 = ssub.s32 %s16, %s35
    %s39 = ssub.s32 %s36, %s37
    %s40 = sor.u32 %s38, %s39
    %p41 = scmp.eq.s32.totalorder %s40, 0
    %s43 = sadd.s32 %s42, 1
    %s44 = scalar_select %p41, %s42, %s43
    %p47 = pneg %p41
    %p48 = scmp.eq.s32.totalorder %s9, 23
    %p49 = por %p47, %p48
    %p50 = scmp.ne.s32.totalorder %s42, %s45
    %p51 = scmp.eq.s32.totalorder %s9, 0
    %p52 = por %p50, %p51
    %p53 = scmp.ne.s32.totalorder %s42, %s45
    %p54 = scmp.eq.s32.totalorder %s14, 23
    %p55 = por %p53, %p54
    %p56 = scmp.ne.s32.totalorder %s45, %s46
    %p57 = scmp.eq.s32.totalorder %s14, 0
    %p58 = por %p56, %p57
    %p59 = scmp.ne.s32.totalorder %s45, %s46
    %p60 = scmp.eq.s32.totalorder %s15, 23
    %p61 = por %p59, %p60
    %p63 = scmp.ne.s32.totalorder %s46, %s62
    %p64 = scmp.eq.s32.totalorder %s15, 0
    %p65 = por %p63, %p64
    %s66 = ssub.s32 %s18, %s27
    %p67 = scmp.eq.s32.totalorder %s66, 0
    %s69 = sadd.s32 %s68, 1
    %s70 = scalar_select %p67, %s68, %s69
    %p73 = pneg %p67
    %p74 = scmp.eq.s32.totalorder %s9, 23
    %p75 = por %p73, %p74
    %p76 = scmp.ne.s32.totalorder %s68, %s71
    %p77 = scmp.eq.s32.totalorder %s9, 0
    %p78 = por %p76, %p77
    %p79 = scmp.ne.s32.totalorder %s68, %s71
    %p80 = scmp.eq.s32.totalorder %s14, 23
    %p81 = por %p79, %p80
    %p82 = scmp.ne.s32.totalorder %s71, %s72
    %p83 = scmp.eq.s32.totalorder %s14, 0
    %p84 = por %p82, %p83
    %p85 = scmp.ne.s32.totalorder %s71, %s72
    %p86 = scmp.eq.s32.totalorder %s15, 23
    %p87 = por %p85, %p86
    %p89 = scmp.ne.s32.totalorder %s72, %s88
    %p90 = scmp.eq.s32.totalorder %s15, 0
    %p91 = por %p89, %p90
    %s93 = sadd.s32 %s92, 1
    %p96 = scmp.eq.s32.totalorder %s9, 23
    %p97 = scmp.ne.s32.totalorder %s92, %s94
    %p98 = scmp.eq.s32.totalorder %s9, 0
    %p99 = por %p97, %p98
    %p100 = scmp.ne.s32.totalorder %s92, %s94
    %p101 = scmp.eq.s32.totalorder %s14, 23
    %p102 = por %p100, %p101
    %p103 = scmp.ne.s32.totalorder %s94, %s95
    %p104 = scmp.eq.s32.totalorder %s14, 0
    %p105 = por %p103, %p104
    %p106 = scmp.ne.s32.totalorder %s94, %s95
    %p107 = scmp.eq.s32.totalorder %s15, 23
    %p108 = por %p106, %p107
    %p110 = scmp.ne.s32.totalorder %s95, %s109
    %p111 = scmp.eq.s32.totalorder %s15, 0
    %p112 = por %p110, %p111
    %s113 = ssub.s32 %s16, %s35
    %s114 = ssub.s32 %s17, %s31
    %s115 = sor.u32 %s113, %s114
    %p116 = scmp.eq.s32.totalorder %s115, 0
    %s118 = sadd.s32 %s117, 1
    %s119 = scalar_select %p116, %s117, %s118
    %p122 = pneg %p116
    %p123 = scmp.eq.s32.totalorder %s9, 23
    %p124 = por %p122, %p123
    %p125 = scmp.ne.s32.totalorder %s117, %s120
    %p126 = scmp.eq.s32.totalorder %s9, 0
    %p127 = por %p125, %p126
    %p128 = scmp.ne.s32.totalorder %s117, %s120
    %p129 = scmp.eq.s32.totalorder %s14, 23
    %p130 = por %p128, %p129
    %p131 = scmp.ne.s32.totalorder %s120, %s121
    %p132 = scmp.eq.s32.totalorder %s14, 0
    %p133 = por %p131, %p132
    %p134 = scmp.ne.s32.totalorder %s120, %s121
    %p135 = scmp.eq.s32.totalorder %s15, 23
    %p136 = por %p134, %p135
    %p138 = scmp.ne.s32.totalorder %s121, %s137
    %p139 = scmp.eq.s32.totalorder %s15, 0
    %p140 = por %p138, %p139
    %p141 = scmp.le.s32.totalorder 1, %s9
    %p142 = scmp.lt.s32.totalorder %s9, 25
    %p143 = pnand %p141, %p142
    %p144 = pneg %p143
    // Predicated region
    $region9: #{_lambda_.12} parent=5 // pred_check
      _
    $region10: #{_lambda_.12} parent=5 // pred_check_branch
      %146 = sbr.rel (%p143) target = $region12
    $region11: #{_lambda_.12} parent=5 // pred_region
      %s147 = ssub.s32 %s9, 1
      // Predicated region
      $region13: #{_lambda_.12} parent=11 // pred_check
        %p148 = pneg %p105
      $region14: #{_lambda_.12} parent=11 // pred_check_branch
        %150 = sbr.rel (%p148) target = $region16
      $region15: #{_lambda_.12} parent=11 // pred_region
        _
      $region16: #{_lambda_.12} parent=11 // pred_fallthru
        _
    $region12: #{_lambda_.12} parent=5 // pred_fallthru
      _
    %p151 = scmp.lt.s32.totalorder %s9, 24
    // Predicated region
    $region17: #{_lambda_.12} parent=5 // pred_check
      %p152 = pneg %p151
    $region18: #{_lambda_.12} parent=5 // pred_check_branch
      %154 = sbr.rel (%p152) target = $region20
    $region19: #{_lambda_.12} parent=5 // pred_region
      // Predicated region
      $region21: #{_lambda_.12} parent=19 // pred_check
        %p155 = pneg %p52
      $region22: #{_lambda_.12} parent=19 // pred_check_branch
        %157 = sbr.rel (%p155) target = $region24
      $region23: #{_lambda_.12} parent=19 // pred_region
        %s158 = sadd.s32 %s17, %s18
        %p159 = scmp.lt.s32.totalorder %s16, 1
        %s160 = scalar_select %p159, %s16, 1
        %p161 = scmp.lt.s32.totalorder %s158, 5
        %s162 = scalar_select %p161, %s158, 5
        %s163 = smul.addr %s162, 2
        %s164 = smul.addr %s160, 12
        %s165 = sadd.s32 %s163, %s164
        %s166 = smul.addr %s165, 4
        %s167 = scalar_lea.vmem %s0, %s166
        %s168 = sadd.s32 %s17, %s18
      $region24: #{_lambda_.12} parent=19 // pred_fallthru
        _
      // Predicated region
      $region25: #{_lambda_.12} parent=19 // pred_check
        %p169 = pneg %p78
      $region26: #{_lambda_.12} parent=19 // pred_check_branch
        %171 = sbr.rel (%p169) target = $region28
      $region27: #{_lambda_.12} parent=19 // pred_region
        %p172 = scmp.lt.s32.totalorder %s18, 2
        %s173 = scalar_select %p172, %s18, 2
        %s174 = smul.addr %s173, 18
        %s175 = smul.addr %s174, 4
        %s176 = scalar_lea.vmem %s1, %s175
      $region28: #{_lambda_.12} parent=19 // pred_fallthru
        _
    $region20: #{_lambda_.12} parent=5 // pred_fallthru
      _
    %p177 = scmp.le.s32.totalorder 1, %s9
    %p178 = scmp.lt.s32.totalorder %s9, 25
    %p179 = pnand %p177, %p178
    %p180 = pneg %p179
    // Predicated region
    $region29: #{_lambda_.12} parent=5 // pred_check
      _
    $region30: #{_lambda_.12} parent=5 // pred_check_branch
      %182 = sbr.rel (%p179) target = $region32
    $region31: #{_lambda_.12} parent=5 // pred_region
      %s183 = ssub.s32 %s9, 1
      %s184 = sadd.s32 %s20, %s21
      %p185 = scmp.lt.s32.totalorder %s19, 1
      %s186 = scalar_select %p185, %s19, 1
      %p187 = scmp.lt.s32.totalorder %s184, 5
      %s188 = scalar_select %p187, %s184, 5
      %s189 = smul.addr %s188, 2
      %s190 = smul.addr %s186, 12
      %s191 = sadd.s32 %s189, %s190
      %s192 = smul.addr %s191, 4
      %s193 = scalar_lea.vmem %s0, %s192
      %p194 = pneg %p58
      %p195 = pneg %p55
      %p196 = scmp.lt.s32.totalorder %s21, 2
      %s197 = scalar_select %p196, %s21, 2
      %s198 = smul.addr %s197, 18
      %s199 = smul.addr %s198, 4
      %s200 = scalar_lea.vmem %s1, %s199
      %p201 = pneg %p84
      %p202 = pneg %p81
      %p203 = pneg %p105
      %p204 = pneg %p102
      %p205 = pneg %p133
      %p206 = pneg %p130
      %p207 = scmp.lt.s32.totalorder %s19, 1
      %s208 = scalar_select %p207, %s19, 1
      %p209 = scmp.lt.s32.totalorder %s20, 3
      %s210 = scalar_select %p209, %s20, 3
      %s211 = smul.addr %s210, 2
      %s212 = smul.addr %s208, 8
      %s213 = sadd.s32 %s211, %s212
      %s214 = smul.addr %s213, 8
      %s215 = scalar_lea.vmem %s3, %s214
      %s216 = sadd.s32 %s20, %s21
      %p217 = scmp.lt.s32.totalorder %s19, 1
      %s218 = scalar_select %p217, %s19, 1
      %p219 = scmp.lt.s32.totalorder %s216, 5
      %s220 = scalar_select %p219, %s216, 5
      %s221 = smul.addr %s220, 2
      %s222 = smul.addr %s218, 12
      %s223 = sadd.s32 %s221, %s222
      %s224 = smul.addr %s223, 4
      %s225 = scalar_lea.vmem %s0, %s224
      %s226 = sadd.s32 %s20, %s21
      %p227 = scmp.lt.s32.totalorder %s21, 2
      %s228 = scalar_select %p227, %s21, 2
      %s229 = smul.addr %s228, 18
      %s230 = smul.addr %s229, 4
      %s231 = scalar_lea.vmem %s1, %s230
      %p232 = scmp.lt.s32.totalorder %s19, 1
      %s233 = scalar_select %p232, %s19, 1
      %p234 = scmp.lt.s32.totalorder %s20, 3
      %s235 = scalar_select %p234, %s20, 3
      %s236 = smul.addr %s235, 2
      %s237 = smul.addr %s233, 8
      %s238 = sadd.s32 %s236, %s237
      %s239 = smul.addr %s238, 8
      %s240 = scalar_lea.vmem %s3, %s239
      %p242 = scmp.eq.s32.totalorder %s21, 0
      // Predicated region
      $region33: #{_lambda_.12} parent=31 // pred_check
        %p243 = pneg %p242
      $region34: #{_lambda_.12} parent=31 // pred_check_branch
        %245 = sbr.rel (%p243) target = $region36
      $region35: #{_lambda_.12} parent=31 // pred_region
        %246 = vst [vmem:[#allocation2] sm:$0xff] 0.0
        %247 = vst [vmem:[#allocation2 + $0x8] sm:$0xff] 0.0
      $region36: #{_lambda_.12} parent=31 // pred_fallthru
        _
      %v248 = vld [vmem:[#allocation2] sm:$0xff]
      %v249 = vld [vmem:[#allocation2 + $0x8] sm:$0xff]
      %v250 = vld [vmem:[%s225] sm:$0xf]
      %v251 = vld [vmem:[%s231] sm:$0xf]
      %v252 = vld [vmem:[%s231 + $0x4] sm:$0xf]
      %v255 = vunpack.c.l.b16 %v251
      %v256 = vunpack.c.l.b16 %v252
      %v257 = vpack.c.b16 %v256, %v255
      %vm258 = vcmask 64512
      %v260 = vsel %vm258, %v257, 0
      %vm262 = vcmask 1043456
      %v264 = vsel %vm262, %v250, 0
      %266 = vmatprep.subr.bf16.mxu0 0
      %267 = vmatpush1.bf16.msra.mxu0 %v264
      %268 = vmatprep.subr.bf16.mxu0 0
      %269 = vmatpush1.bf16.msra.mxu0 0
      %270 = vmatprep.subr.bf16.mxu0 0
      %271 = vmatpush1.bf16.msra.mxu0 0
      %272 = vmatprep.subr.bf16.mxu0 0
      %273 = vmatpush1.bf16.msra.mxu0 0
      %274 = vmatprep.subr.bf16.mxu0 0
      %275 = vmatpush1.bf16.msra.mxu0 0
      %276 = vmatprep.subr.bf16.mxu0 0
      %277 = vmatpush1.bf16.msra.mxu0 0
      %278 = vmatprep.subr.bf16.mxu0 0
      %279 = vmatpush1.bf16.msra.mxu0 0
      %280 = vmatprep.subr.bf16.mxu0 0
      %281 = vmatpush1.bf16.msra.mxu0 0
      %282 = vmatprep.subr.bf16.mxu0 0
      %283 = vmatpush1.bf16.msra.mxu0 0
      %284 = vmatprep.subr.bf16.mxu0 0
      %285 = vmatpush1.bf16.msra.mxu0 0
      %286 = vmatprep.subr.bf16.mxu0 0
      %287 = vmatpush1.bf16.msra.mxu0 0
      %288 = vmatprep.subr.bf16.mxu0 0
      %289 = vmatpush1.bf16.msra.mxu0 0
      %290 = vmatprep.subr.bf16.mxu0 0
      %291 = vmatpush1.bf16.msra.mxu0 0
      %292 = vmatprep.subr.bf16.mxu0 0
      %293 = vmatpush1.bf16.msra.mxu0 0
      %294 = vmatprep.subr.bf16.mxu0 0
      %295 = vmatpush1.bf16.msra.mxu0 0
      %296 = vmatprep.subr.bf16.mxu0 0
      %297 = vmatpush1.bf16.msra.mxu0 0
      %298 = vmatprep.mubr.bf16.mxu0 0
      %299 = vmatmul.mubr.bf16.gmra.mrb[0].mxu0 %v260
      %v300 = vpop.f32.mrb[0].mxu0
      %v301 = vadd.f32 0.0, %v300
      %v302 = vpop.f32.mrb[0].mxu0
      %v303 = vpop.f32.mrb[0].mxu0
      %v304 = vadd.f32 0.0, %v303
      %v305 = vpop.f32.mrb[0].mxu0
      %306 = vdwg.mxu0
      %v307 = vadd.f32 %v248, %v301
      %v308 = vadd.f32 %v249, %v304
      %v309 = vld [vmem:[%s225] sm:$0xff]
      %s310 = scalar_lea.vmem %s231, 8
      %v311 = vld [vmem:[%s310] sm:$0xf]
      %v312 = vld [vmem:[%s310 + $0x4] sm:$0xf]
      %v315 = vunpack.c.l.b16 %v311
      %v316 = vunpack.c.l.b16 %v312
      %v317 = vpack.c.b16 %v316, %v315
      %v319 = vunpack.c.l.b16 %v309
      %v320 = vunpack.c.h.b16 %v309
      %v321 = vpack.c.b16 %v319, %v319
      %v322 = vpack.c.b16 %v320, %v320
      %323 = vrot.lane.b32.xlu0 %v321, 127
      %v324 = vpop.permute.xlu0 %323
      %325 = vrot.lane.b32.xlu0 %v322, 127
      %v326 = vpop.permute.xlu0 %325
      %vm327 = vcmask 1039360
      %v328 = vsel %vm327, %v324, %v326
      %v330 = vsel %vm258, %v317, 0
      %v333 = vsel %vm262, %v328, 0
      %335 = vmatprep.subr.bf16.mxu0 0
      %336 = vmatpush1.bf16.msra.mxu0 %v333
      %337 = vmatprep.subr.bf16.mxu0 0
      %338 = vmatpush1.bf16.msra.mxu0 0
      %339 = vmatprep.subr.bf16.mxu0 0
      %340 = vmatpush1.bf16.msra.mxu0 0
      %341 = vmatprep.subr.bf16.mxu0 0
      %342 = vmatpush1.bf16.msra.mxu0 0
      %343 = vmatprep.subr.bf16.mxu0 0
      %344 = vmatpush1.bf16.msra.mxu0 0
      %345 = vmatprep.subr.bf16.mxu0 0
      %346 = vmatpush1.bf16.msra.mxu0 0
      %347 = vmatprep.subr.bf16.mxu0 0
      %348 = vmatpush1.bf16.msra.mxu0 0
      %349 = vmatprep.subr.bf16.mxu0 0
      %350 = vmatpush1.bf16.msra.mxu0 0
      %351 = vmatprep.subr.bf16.mxu0 0
      %352 = vmatpush1.bf16.msra.mxu0 0
      %353 = vmatprep.subr.bf16.mxu0 0
      %354 = vmatpush1.bf16.msra.mxu0 0
      %355 = vmatprep.subr.bf16.mxu0 0
      %356 = vmatpush1.bf16.msra.mxu0 0
      %357 = vmatprep.subr.bf16.mxu0 0
      %358 = vmatpush1.bf16.msra.mxu0 0
      %359 = vmatprep.subr.bf16.mxu0 0
      %360 = vmatpush1.bf16.msra.mxu0 0
      %361 = vmatprep.subr.bf16.mxu0 0
      %362 = vmatpush1.bf16.msra.mxu0 0
      %363 = vmatprep.subr.bf16.mxu0 0
      %364 = vmatpush1.bf16.msra.mxu0 0
      %365 = vmatprep.subr.bf16.mxu0 0
      %366 = vmatpush1.bf16.msra.mxu0 0
      %367 = vmatprep.mubr.bf16.mxu0 0
      %368 = vmatmul.mubr.bf16.gmra.mrb[0].mxu0 %v330
      %v369 = vpop.f32.mrb[0].mxu0
      %v370 = vadd.f32 0.0, %v369
      %v371 = vpop.f32.mrb[0].mxu0
      %v372 = vpop.f32.mrb[0].mxu0
      %v373 = vadd.f32 0.0, %v372
      %v374 = vpop.f32.mrb[0].mxu0
      %375 = vdwg.mxu0
      %v376 = vadd.f32 %v307, %v370
      %v377 = vadd.f32 %v308, %v373
      %s378 = scalar_lea.vmem %s231, 16
      %v379 = vld [vmem:[%s378] sm:$0xf]
      %v380 = vld [vmem:[%s378 + $0x4] sm:$0xf]
      %v383 = vunpack.c.l.b16 %v379
      %v384 = vunpack.c.l.b16 %v380
      %v385 = vpack.c.b16 %v384, %v383
      %386 = vrot.lane.b32.xlu0 %v321, 126
      %v387 = vpop.permute.xlu0 %386
      %388 = vrot.lane.b32.xlu0 %v322, 126
      %v389 = vpop.permute.xlu0 %388
      %vm390 = vcmask 1031168
      %v391 = vsel %vm390, %v387, %v389
      %v393 = vsel %vm258, %v385, 0
      %v396 = vsel %vm262, %v391, 0
      %398 = vmatprep.subr.bf16.mxu0 0
      %399 = vmatpush1.bf16.msra.mxu0 %v396
      %400 = vmatprep.subr.bf16.mxu0 0
      %401 = vmatpush1.bf16.msra.mxu0 0
      %402 = vmatprep.subr.bf16.mxu0 0
      %403 = vmatpush1.bf16.msra.mxu0 0
      %404 = vmatprep.subr.bf16.mxu0 0
      %405 = vmatpush1.bf16.msra.mxu0 0
      %406 = vmatprep.subr.bf16.mxu0 0
      %407 = vmatpush1.bf16.msra.mxu0 0
      %408 = vmatprep.subr.bf16.mxu0 0
      %409 = vmatpush1.bf16.msra.mxu0 0
      %410 = vmatprep.subr.bf16.mxu0 0
      %411 = vmatpush1.bf16.msra.mxu0 0
      %412 = vmatprep.subr.bf16.mxu0 0
      %413 = vmatpush1.bf16.msra.mxu0 0
      %414 = vmatprep.subr.bf16.mxu0 0
      %415 = vmatpush1.bf16.msra.mxu0 0
      %416 = vmatprep.subr.bf16.mxu0 0
      %417 = vmatpush1.bf16.msra.mxu0 0
      %418 = vmatprep.subr.bf16.mxu0 0
      %419 = vmatpush1.bf16.msra.mxu0 0
      %420 = vmatprep.subr.bf16.mxu0 0
      %421 = vmatpush1.bf16.msra.mxu0 0
      %422 = vmatprep.subr.bf16.mxu0 0
      %423 = vmatpush1.bf16.msra.mxu0 0
      %424 = vmatprep.subr.bf16.mxu0 0
      %425 = vmatpush1.bf16.msra.mxu0 0
      %426 = vmatprep.subr.bf16.mxu0 0
      %427 = vmatpush1.bf16.msra.mxu0 0
      %428 = vmatprep.subr.bf16.mxu0 0
      %429 = vmatpush1.bf16.msra.mxu0 0
      %430 = vmatprep.mubr.bf16.mxu0 0
      %431 = vmatmul.mubr.bf16.gmra.mrb[0].mxu0 %v393
      %v432 = vpop.f32.mrb[0].mxu0
      %v433 = vadd.f32 0.0, %v432
      %v434 = vpop.f32.mrb[0].mxu0
      %v435 = vpop.f32.mrb[0].mxu0
      %v436 = vadd.f32 0.0, %v435
      %v437 = vpop.f32.mrb[0].mxu0
      %438 = vdwg.mxu0
      %v439 = vadd.f32 %v376, %v433
      %v440 = vadd.f32 %v377, %v436
      %s441 = scalar_lea.vmem %s231, 24
      %v442 = vld [vmem:[%s441] sm:$0xf]
      %v443 = vld [vmem:[%s441 + $0x4] sm:$0xf]
      %v446 = vunpack.c.l.b16 %v442
      %v447 = vunpack.c.l.b16 %v443
      %v448 = vpack.c.b16 %v447, %v446
      %449 = vrot.lane.b32.xlu0 %v321, 122
      %v450 = vpop.permute.xlu0 %449
      %451 = vrot.lane.b32.xlu0 %v322, 122
      %v452 = vpop.permute.xlu0 %451
      %vm453 = vcmask 998400
      %v454 = vsel %vm453, %v450, %v452
      %v456 = vsel %vm258, %v448, 0
      %v459 = vsel %vm262, %v454, 0
      %461 = vmatprep.subr.bf16.mxu0 0
      %462 = vmatpush1.bf16.msra.mxu0 %v459
      %463 = vmatprep.subr.bf16.mxu0 0
      %464 = vmatpush1.bf16.msra.mxu0 0
      %465 = vmatprep.subr.bf16.mxu0 0
      %466 = vmatpush1.bf16.msra.mxu0 0
      %467 = vmatprep.subr.bf16.mxu0 0
      %468 = vmatpush1.bf16.msra.mxu0 0
      %469 = vmatprep.subr.bf16.mxu0 0
      %470 = vmatpush1.bf16.msra.mxu0 0
      %471 = vmatprep.subr.bf16.mxu0 0
      %472 = vmatpush1.bf16.msra.mxu0 0
      %473 = vmatprep.subr.bf16.mxu0 0
      %474 = vmatpush1.bf16.msra.mxu0 0
      %475 = vmatprep.subr.bf16.mxu0 0
      %476 = vmatpush1.bf16.msra.mxu0 0
      %477 = vmatprep.subr.bf16.mxu0 0
      %478 = vmatpush1.bf16.msra.mxu0 0
      %479 = vmatprep.subr.bf16.mxu0 0
      %480 = vmatpush1.bf16.msra.mxu0 0
      %481 = vmatprep.subr.bf16.mxu0 0
      %482 = vmatpush1.bf16.msra.mxu0 0
      %483 = vmatprep.subr.bf16.mxu0 0
      %484 = vmatpush1.bf16.msra.mxu0 0
      %485 = vmatprep.subr.bf16.mxu0 0
      %486 = vmatpush1.bf16.msra.mxu0 0
      %487 = vmatprep.subr.bf16.mxu0 0
      %488 = vmatpush1.bf16.msra.mxu0 0
      %489 = vmatprep.subr.bf16.mxu0 0
      %490 = vmatpush1.bf16.msra.mxu0 0
      %491 = vmatprep.subr.bf16.mxu0 0
      %492 = vmatpush1.bf16.msra.mxu0 0
      %493 = vmatprep.mubr.bf16.mxu0 0
      %494 = vmatmul.mubr.bf16.gmra.mrb[0].mxu0 %v456
      %v495 = vpop.f32.mrb[0].mxu0
      %v496 = vadd.f32 0.0, %v495
      %v497 = vpop.f32.mrb[0].mxu0
      %v498 = vpop.f32.mrb[0].mxu0
      %v499 = vadd.f32 0.0, %v498
      %v500 = vpop.f32.mrb[0].mxu0
      %501 = vdwg.mxu0
      %v502 = vadd.f32 %v439, %v496
      %v503 = vadd.f32 %v440, %v499
      %s504 = scalar_lea.vmem %s231, 32
      %v505 = vld [vmem:[%s504] sm:$0xf]
      %v506 = vld [vmem:[%s504 + $0x4] sm:$0xf]
      %v509 = vunpack.c.l.b16 %v505
      %v510 = vunpack.c.l.b16 %v506
      %v511 = vpack.c.b16 %v510, %v509
      %512 = vrot.lane.b32.xlu0 %v321, 121
      %v513 = vpop.permute.xlu0 %512
      %514 = vrot.lane.b32.xlu0 %v322, 121
      %v515 = vpop.permute.xlu0 %514
      %vm516 = vcmask 990208
      %v517 = vsel %vm516, %v513, %v515
      %v519 = vsel %vm258, %v511, 0
      %v522 = vsel %vm262, %v517, 0
      %524 = vmatprep.subr.bf16.mxu0 0
      %525 = vmatpush1.bf16.msra.mxu0 %v522
      %526 = vmatprep.subr.bf16.mxu0 0
      %527 = vmatpush1.bf16.msra.mxu0 0
      %528 = vmatprep.subr.bf16.mxu0 0
      %529 = vmatpush1.bf16.msra.mxu0 0
      %530 = vmatprep.subr.bf16.mxu0 0
      %531 = vmatpush1.bf16.msra.mxu0 0
      %532 = vmatprep.subr.bf16.mxu0 0
      %533 = vmatpush1.bf16.msra.mxu0 0
      %534 = vmatprep.subr.bf16.mxu0 0
      %535 = vmatpush1.bf16.msra.mxu0 0
      %536 = vmatprep.subr.bf16.mxu0 0
      %537 = vmatpush1.bf16.msra.mxu0 0
      %538 = vmatprep.subr.bf16.mxu0 0
      %539 = vmatpush1.bf16.msra.mxu0 0
      %540 = vmatprep.subr.bf16.mxu0 0
      %541 = vmatpush1.bf16.msra.mxu0 0
      %542 = vmatprep.subr.bf16.mxu0 0
      %543 = vmatpush1.bf16.msra.mxu0 0
      %544 = vmatprep.subr.bf16.mxu0 0
      %545 = vmatpush1.bf16.msra.mxu0 0
      %546 = vmatprep.subr.bf16.mxu0 0
      %547 = vmatpush1.bf16.msra.mxu0 0
      %548 = vmatprep.subr.bf16.mxu0 0
      %549 = vmatpush1.bf16.msra.mxu0 0
      %550 = vmatprep.subr.bf16.mxu0 0
      %551 = vmatpush1.bf16.msra.mxu0 0
      %552 = vmatprep.subr.bf16.mxu0 0
      %553 = vmatpush1.bf16.msra.mxu0 0
      %554 = vmatprep.subr.bf16.mxu0 0
      %555 = vmatpush1.bf16.msra.mxu0 0
      %556 = vmatprep.mubr.bf16.mxu0 0
      %557 = vmatmul.mubr.bf16.gmra.mrb[0].mxu0 %v519
      %v558 = vpop.f32.mrb[0].mxu0
      %v559 = vadd.f32 0.0, %v558
      %v560 = vpop.f32.mrb[0].mxu0
      %v561 = vpop.f32.mrb[0].mxu0
      %v562 = vadd.f32 0.0, %v561
      %v563 = vpop.f32.mrb[0].mxu0
      %564 = vdwg.mxu0
      %v565 = vadd.f32 %v502, %v559
      %v566 = vadd.f32 %v503, %v562
      %s567 = scalar_lea.vmem %s231, 40
      %v568 = vld [vmem:[%s567] sm:$0xf]
      %v569 = vld [vmem:[%s567 + $0x4] sm:$0xf]
      %v572 = vunpack.c.l.b16 %v568
      %v573 = vunpack.c.l.b16 %v569
      %v574 = vpack.c.b16 %v573, %v572
      %575 = vrot.lane.b32.xlu0 %v321, 120
      %v576 = vpop.permute.xlu0 %575
      %577 = vrot.lane.b32.xlu0 %v322, 120
      %v578 = vpop.permute.xlu0 %577
      %vm579 = vcmask 982016
      %v580 = vsel %vm579, %v576, %v578
      %v582 = vsel %vm258, %v574, 0
      %v585 = vsel %vm262, %v580, 0
      %587 = vmatprep.subr.bf16.mxu0 0
      %588 = vmatpush1.bf16.msra.mxu0 %v585
      %589 = vmatprep.subr.bf16.mxu0 0
      %590 = vmatpush1.bf16.msra.mxu0 0
      %591 = vmatprep.subr.bf16.mxu0 0
      %592 = vmatpush1.bf16.msra.mxu0 0
      %593 = vmatprep.subr.bf16.mxu0 0
      %594 = vmatpush1.bf16.msra.mxu0 0
      %595 = vmatprep.subr.bf16.mxu0 0
      %596 = vmatpush1.bf16.msra.mxu0 0
      %597 = vmatprep.subr.bf16.mxu0 0
      %598 = vmatpush1.bf16.msra.mxu0 0
      %599 = vmatprep.subr.bf16.mxu0 0
      %600 = vmatpush1.bf16.msra.mxu0 0
      %601 = vmatprep.subr.bf16.mxu0 0
      %602 = vmatpush1.bf16.msra.mxu0 0
      %603 = vmatprep.subr.bf16.mxu0 0
      %604 = vmatpush1.bf16.msra.mxu0 0
      %605 = vmatprep.subr.bf16.mxu0 0
      %606 = vmatpush1.bf16.msra.mxu0 0
      %607 = vmatprep.subr.bf16.mxu0 0
      %608 = vmatpush1.bf16.msra.mxu0 0
      %609 = vmatprep.subr.bf16.mxu0 0
      %610 = vmatpush1.bf16.msra.mxu0 0
      %611 = vmatprep.subr.bf16.mxu0 0
      %612 = vmatpush1.bf16.msra.mxu0 0
      %613 = vmatprep.subr.bf16.mxu0 0
      %614 = vmatpush1.bf16.msra.mxu0 0
      %615 = vmatprep.subr.bf16.mxu0 0
      %616 = vmatpush1.bf16.msra.mxu0 0
      %617 = vmatprep.subr.bf16.mxu0 0
      %618 = vmatpush1.bf16.msra.mxu0 0
      %619 = vmatprep.mubr.bf16.mxu0 0
      %620 = vmatmul.mubr.bf16.gmra.mrb[0].mxu0 %v582
      %v621 = vpop.f32.mrb[0].mxu0
      %v622 = vadd.f32 0.0, %v621
      %v623 = vpop.f32.mrb[0].mxu0
      %v624 = vpop.f32.mrb[0].mxu0
      %v625 = vadd.f32 0.0, %v624
      %v626 = vpop.f32.mrb[0].mxu0
      %627 = vdwg.mxu0
      %v628 = vadd.f32 %v565, %v622
      %v629 = vadd.f32 %v566, %v625
      %s630 = scalar_lea.vmem %s231, 48
      %v631 = vld [vmem:[%s630] sm:$0xf]
      %v632 = vld [vmem:[%s630 + $0x4] sm:$0xf]
      %v635 = vunpack.c.l.b16 %v631
      %v636 = vunpack.c.l.b16 %v632
      %v637 = vpack.c.b16 %v636, %v635
      %638 = vrot.lane.b32.xlu0 %v321, 116
      %v639 = vpop.permute.xlu0 %638
      %640 = vrot.lane.b32.xlu0 %v322, 116
      %v641 = vpop.permute.xlu0 %640
      %vm642 = vcmask 949248
      %v643 = vsel %vm642, %v639, %v641
      %v645 = vsel %vm258, %v637, 0
      %v648 = vsel %vm262, %v643, 0
      %650 = vmatprep.subr.bf16.mxu0 0
      %651 = vmatpush1.bf16.msra.mxu0 %v648
      %652 = vmatprep.subr.bf16.mxu0 0
      %653 = vmatpush1.bf16.msra.mxu0 0
      %654 = vmatprep.subr.bf16.mxu0 0
      %655 = vmatpush1.bf16.msra.mxu0 0
      %656 = vmatprep.subr.bf16.mxu0 0
      %657 = vmatpush1.bf16.msra.mxu0 0
      %658 = vmatprep.subr.bf16.mxu0 0
      %659 = vmatpush1.bf16.msra.mxu0 0
      %660 = vmatprep.subr.bf16.mxu0 0
      %661 = vmatpush1.bf16.msra.mxu0 0
      %662 = vmatprep.subr.bf16.mxu0 0
      %663 = vmatpush1.bf16.msra.mxu0 0
      %664 = vmatprep.subr.bf16.mxu0 0
      %665 = vmatpush1.bf16.msra.mxu0 0
      %666 = vmatprep.subr.bf16.mxu0 0
      %667 = vmatpush1.bf16.msra.mxu0 0
      %668 = vmatprep.subr.bf16.mxu0 0
      %669 = vmatpush1.bf16.msra.mxu0 0
      %670 = vmatprep.subr.bf16.mxu0 0
      %671 = vmatpush1.bf16.msra.mxu0 0
      %672 = vmatprep.subr.bf16.mxu0 0
      %673 = vmatpush1.bf16.msra.mxu0 0
      %674 = vmatprep.subr.bf16.mxu0 0
      %675 = vmatpush1.bf16.msra.mxu0 0
      %676 = vmatprep.subr.bf16.mxu0 0
      %677 = vmatpush1.bf16.msra.mxu0 0
      %678 = vmatprep.subr.bf16.mxu0 0
      %679 = vmatpush1.bf16.msra.mxu0 0
      %680 = vmatprep.subr.bf16.mxu0 0
      %681 = vmatpush1.bf16.msra.mxu0 0
      %682 = vmatprep.mubr.bf16.mxu0 0
      %683 = vmatmul.mubr.bf16.gmra.mrb[0].mxu0 %v645
      %v684 = vpop.f32.mrb[0].mxu0
      %v685 = vadd.f32 0.0, %v684
      %v686 = vpop.f32.mrb[0].mxu0
      %v687 = vpop.f32.mrb[0].mxu0
      %v688 = vadd.f32 0.0, %v687
      %v689 = vpop.f32.mrb[0].mxu0
      %690 = vdwg.mxu0
      %v691 = vadd.f32 %v628, %v685
      %v692 = vadd.f32 %v629, %v688
      %s693 = scalar_lea.vmem %s231, 56
      %v694 = vld [vmem:[%s693] sm:$0xf]
      %v695 = vld [vmem:[%s693 + $0x4] sm:$0xf]
      %v698 = vunpack.c.l.b16 %v694
      %v699 = vunpack.c.l.b16 %v695
      %v700 = vpack.c.b16 %v699, %v698
      %701 = vrot.lane.b32.xlu0 %v321, 115
      %v702 = vpop.permute.xlu0 %701
      %703 = vrot.lane.b32.xlu0 %v322, 115
      %v704 = vpop.permute.xlu0 %703
      %vm705 = vcmask 941056
      %v706 = vsel %vm705, %v702, %v704
      %v708 = vsel %vm258, %v700, 0
      %v711 = vsel %vm262, %v706, 0
      %713 = vmatprep.subr.bf16.mxu0 0
      %714 = vmatpush1.bf16.msra.mxu0 %v711
      %715 = vmatprep.subr.bf16.mxu0 0
      %716 = vmatpush1.bf16.msra.mxu0 0
      %717 = vmatprep.subr.bf16.mxu0 0
      %718 = vmatpush1.bf16.msra.mxu0 0
      %719 = vmatprep.subr.bf16.mxu0 0
      %720 = vmatpush1.bf16.msra.mxu0 0
      %721 = vmatprep.subr.bf16.mxu0 0
      %722 = vmatpush1.bf16.msra.mxu0 0
      %723 = vmatprep.subr.bf16.mxu0 0
      %724 = vmatpush1.bf16.msra.mxu0 0
      %725 = vmatprep.subr.bf16.mxu0 0
      %726 = vmatpush1.bf16.msra.mxu0 0
      %727 = vmatprep.subr.bf16.mxu0 0
      %728 = vmatpush1.bf16.msra.mxu0 0
      %729 = vmatprep.subr.bf16.mxu0 0
      %730 = vmatpush1.bf16.msra.mxu0 0
      %731 = vmatprep.subr.bf16.mxu0 0
      %732 = vmatpush1.bf16.msra.mxu0 0
      %733 = vmatprep.subr.bf16.mxu0 0
      %734 = vmatpush1.bf16.msra.mxu0 0
      %735 = vmatprep.subr.bf16.mxu0 0
      %736 = vmatpush1.bf16.msra.mxu0 0
      %737 = vmatprep.subr.bf16.mxu0 0
      %738 = vmatpush1.bf16.msra.mxu0 0
      %739 = vmatprep.subr.bf16.mxu0 0
      %740 = vmatpush1.bf16.msra.mxu0 0
      %741 = vmatprep.subr.bf16.mxu0 0
      %742 = vmatpush1.bf16.msra.mxu0 0
      %743 = vmatprep.subr.bf16.mxu0 0
      %744 = vmatpush1.bf16.msra.mxu0 0
      %745 = vmatprep.mubr.bf16.mxu0 0
      %746 = vmatmul.mubr.bf16.gmra.mrb[0].mxu0 %v708
      %v747 = vpop.f32.mrb[0].mxu0
      %v748 = vadd.f32 0.0, %v747
      %v749 = vpop.f32.mrb[0].mxu0
      %v750 = vpop.f32.mrb[0].mxu0
      %v751 = vadd.f32 0.0, %v750
      %v752 = vpop.f32.mrb[0].mxu0
      %753 = vdwg.mxu0
      %v754 = vadd.f32 %v691, %v748
      %v755 = vadd.f32 %v692, %v751
      %s756 = scalar_lea.vmem %s231, 64
      %v757 = vld [vmem:[%s756] sm:$0xf]
      %v758 = vld [vmem:[%s756 + $0x4] sm:$0xf]
      %v761 = vunpack.c.l.b16 %v757
      %v762 = vunpack.c.l.b16 %v758
      %v763 = vpack.c.b16 %v762, %v761
      %764 = vrot.lane.b32.xlu0 %v321, 114
      %v765 = vpop.permute.xlu0 %764
      %766 = vrot.lane.b32.xlu0 %v322, 114
      %v767 = vpop.permute.xlu0 %766
      %vm768 = vcmask 932864
      %v769 = vsel %vm768, %v765, %v767
      %v771 = vsel %vm258, %v763, 0
      %v774 = vsel %vm262, %v769, 0
      %776 = vmatprep.subr.bf16.mxu0 0
      %777 = vmatpush1.bf16.msra.mxu0 %v774
      %778 = vmatprep.subr.bf16.mxu0 0
      %779 = vmatpush1.bf16.msra.mxu0 0
      %780 = vmatprep.subr.bf16.mxu0 0
      %781 = vmatpush1.bf16.msra.mxu0 0
      %782 = vmatprep.subr.bf16.mxu0 0
      %783 = vmatpush1.bf16.msra.mxu0 0
      %784 = vmatprep.subr.bf16.mxu0 0
      %785 = vmatpush1.bf16.msra.mxu0 0
      %786 = vmatprep.subr.bf16.mxu0 0
      %787 = vmatpush1.bf16.msra.mxu0 0
      %788 = vmatprep.subr.bf16.mxu0 0
      %789 = vmatpush1.bf16.msra.mxu0 0
      %790 = vmatprep.subr.bf16.mxu0 0
      %791 = vmatpush1.bf16.msra.mxu0 0
      %792 = vmatprep.subr.bf16.mxu0 0
      %793 = vmatpush1.bf16.msra.mxu0 0
      %794 = vmatprep.subr.bf16.mxu0 0
      %795 = vmatpush1.bf16.msra.mxu0 0
      %796 = vmatprep.subr.bf16.mxu0 0
      %797 = vmatpush1.bf16.msra.mxu0 0
      %798 = vmatprep.subr.bf16.mxu0 0
      %799 = vmatpush1.bf16.msra.mxu0 0
      %800 = vmatprep.subr.bf16.mxu0 0
      %801 = vmatpush1.bf16.msra.mxu0 0
      %802 = vmatprep.subr.bf16.mxu0 0
      %803 = vmatpush1.bf16.msra.mxu0 0
      %804 = vmatprep.subr.bf16.mxu0 0
      %805 = vmatpush1.bf16.msra.mxu0 0
      %806 = vmatprep.subr.bf16.mxu0 0
      %807 = vmatpush1.bf16.msra.mxu0 0
      %808 = vmatprep.mubr.bf16.mxu0 0
      %809 = vmatmul.mubr.bf16.gmra.mrb[0].mxu0 %v771
      %v810 = vpop.f32.mrb[0].mxu0
      %v811 = vadd.f32 0.0, %v810
      %v812 = vpop.f32.mrb[0].mxu0
      %v813 = vpop.f32.mrb[0].mxu0
      %v814 = vadd.f32 0.0, %v813
      %v815 = vpop.f32.mrb[0].mxu0
      %816 = vdwg.mxu0
      %v817 = vadd.f32 %v754, %v811
      %v818 = vadd.f32 %v755, %v814
      %819 = vst [vmem:[#allocation2] sm:$0xff] %v817
      %820 = vst [vmem:[#allocation2 + $0x8] sm:$0xff] %v818
      %p821 = scmp.eq.s32.totalorder %s21, 2
      // Predicated region
      $region37: #{_lambda_.12} parent=31 // pred_check
        %p822 = pneg %p821
      $region38: #{_lambda_.12} parent=31 // pred_check_branch
        %824 = sbr.rel (%p822) target = $region40
      $region39: #{_lambda_.12} parent=31 // pred_region
        %v825 = vld [vmem:[#allocation2] sm:$0xff]
        %v826 = vld [vmem:[#allocation2 + $0x8] sm:$0xff]
        %v827 = vld [vmem:[%s2] sm:$0xff]
        %v828 = vld [vmem:[%s2 + $0x8] sm:$0xff]
        %830 = vset.pattern.permute.xlu0 0
        %831 = vperm.xlu0 %830, %v827
        %v832 = vpop.permute.xlu0 %831
        %835 = vset.pattern.permute.xlu0 0
        %836 = vperm.xlu0 %835, %v828
        %v837 = vpop.permute.xlu0 %836
        %v839 = vadd.f32 %v825, %v832
        %v840 = vadd.f32 %v826, %v837
        %v841 = vmax.f32 %v839, 0.0
        %v842 = vmax.f32 %v840, 0.0
        %843 = vst [vmem:[%s240] sm:$0xff] %v841
        %844 = vst [vmem:[%s240 + $0x8] sm:$0xff] %v842
      $region40: #{_lambda_.12} parent=31 // pred_fallthru
        _
      %p845 = scmp.lt.s32.totalorder %s19, 1
      %s846 = scalar_select %p845, %s19, 1
      %p847 = scmp.lt.s32.totalorder %s20, 3
      %s848 = scalar_select %p847, %s20, 3
      %s849 = smul.addr %s848, 2
      %s850 = smul.addr %s846, 8
      %s851 = sadd.s32 %s849, %s850
      %s852 = smul.addr %s851, 8
      %s853 = scalar_lea.vmem %s3, %s852
      // Predicated region
      $region41: #{_lambda_.12} parent=31 // pred_check
        %p854 = pneg %p130
      $region42: #{_lambda_.12} parent=31 // pred_check_branch
        %856 = sbr.rel (%p854) target = $region44
      $region43: #{_lambda_.12} parent=31 // pred_region
        _
      $region44: #{_lambda_.12} parent=31 // pred_fallthru
        _
    $region32: #{_lambda_.12} parent=5 // pred_fallthru
      _
    %p857 = scmp.le.s32.totalorder 2, %s9
    // Predicated region
    $region45: #{_lambda_.12} parent=5 // pred_check
      %p858 = pneg %p857
    $region46: #{_lambda_.12} parent=5 // pred_check_branch
      %860 = sbr.rel (%p858) target = $region48
    $region47: #{_lambda_.12} parent=5 // pred_region
      %s861 = ssub.s32 %s9, 2
      // Predicated region
      $region49: #{_lambda_.12} parent=47 // pred_check
        %p862 = pneg %p136
      $region50: #{_lambda_.12} parent=47 // pred_check_branch
        %864 = sbr.rel (%p862) target = $region52
      $region51: #{_lambda_.12} parent=47 // pred_region
        %p865 = scmp.lt.s32.totalorder %s22, 1
        %s866 = scalar_select %p865, %s22, 1
        %p867 = scmp.lt.s32.totalorder %s23, 3
        %s868 = scalar_select %p867, %s23, 3
        %s869 = smul.addr %s868, 2
        %s870 = smul.addr %s866, 8
        %s871 = sadd.s32 %s869, %s870
        %s872 = smul.addr %s871, 8
        %s873 = scalar_lea.vmem %s3, %s872
      $region52: #{_lambda_.12} parent=47 // pred_fallthru
        _
    $region48: #{_lambda_.12} parent=5 // pred_fallthru
      _
  $region6: #{_lambda_.12} parent=0 // loop_footer
    %s13 = sadd.s32 1, %s9
  $region7: #{_lambda_.12} parent=0 // loop_footer_branch
    %8 = sbr.rel target = $region3
  $region8: #{_lambda_.12} parent=0 // loop_exit
    _

// kernel: _lambda_.13
$region0: #{_lambda_.13}
  #allocation0 [shape = 'u32[]', space=smem, size = 0x4, offset = 0x4, fixed_abs, tag = 'smem constant byte address 0x4 - core index']
  #allocation1 [shape = 'u32[144,128]{1,0:T(1,128)}', space=vmem, size = 0x12000, scoped, tag = 'internal scratch']
  #allocation2 [shape = 'f32[16,128]{1,0:T(8,128)}', space=vmem, size = 0x2000, scoped, tag = 'scratch operand']
  %s0 = inlined_call_operand.vmem [shape: bf16[2,6,16,256], index: 0, kind: input, shape index: {}]
  %s1 = inlined_call_operand.vmem [shape: bf16[3,3,3,16,16], index: 1, kind: input, shape index: {}]
  %s2 = inlined_call_operand.vmem [shape: f32[16,1], index: 2, kind: input, shape index: {}]
  %s3 = inlined_call_operand.vmem [shape: f32[2,4,16,128], index: 3, kind: output, shape index: {}]
  %s4 = sld [smem:[#allocation0]]
  $region53: #{_lambda_.13} parent=0
    _
  %s6 = ssub.s32 1, %s4
  %s7 = scalar_select 0, %s6, %s4
  loop: start=0, step=1, limit=26
  $region2: #{_lambda_.13} parent=0 // loop_pre_header
    _
  $region3: #{_lambda_.13} parent=0 // loop_header
    %s9 = sphi 0, %s13
    %p10 = scmp.ge.s32.totalorder %s9, 26
    %s16 = sphi 0, %s35
    %s17 = sphi 0, %s31
    %s18 = sphi 0, %s27
    %s19 = sphi 0, %s16
    %s20 = sphi 0, %s17
    %s21 = sphi 0, %s18
    %s22 = sphi 0, %s19
    %s23 = sphi 0, %s20
    %s24 = sphi 0, %s21
    %s42 = sphi 0, %s44
    %s45 = sphi 0, %s42
    %s46 = sphi 0, %s45
    %s62 = sphi 0, %s46
    %s68 = sphi 0, %s70
    %s71 = sphi 0, %s68
    %s72 = sphi 0, %s71
    %s88 = sphi 0, %s72
    %s92 = sphi 0, %s92
    %s94 = sphi 0, %s92
    %s95 = sphi 0, %s94
    %s109 = sphi 0, %s95
    %s117 = sphi 0, %s119
    %s120 = sphi 0, %s117
    %s121 = sphi 0, %s120
    %s137 = sphi 0, %s121
  $region4: #{_lambda_.13} parent=0 // loop_header_branch
    %12 = sbr.rel (%p10) target = $region8
  $region5: #{_lambda_.13} parent=0 // loop_body
    %s14 = ssub.s32 %s9, 1
    %s15 = ssub.s32 %s9, 2
    %s25 = sadd.s32 1, %s18
    %p26 = scmp.ge.s32.totalorder %s25, 3
    %s27 = scalar_select %p26, 0, %s25
    %s28 = sadd.s32 1, %s17
    %s29 = scalar_select %p26, %s28, %s17
    %p30 = scmp.ge.s32.totalorder %s29, 4
    %s31 = scalar_select %p30, 0, %s29
    %s32 = sadd.s32 1, %s16
    %s33 = scalar_select %p30, %s32, %s16
    %p34 = scmp.ge.s32.totalorder %s33, 2
    %s35 = scalar_select %p34, 0, %s33
    %s36 = sadd.s32 %s17, %s18
    %s37 = sadd.s32 %s31, %s27
    %s38 = ssub.s32 %s16, %s35
    %s39 = ssub.s32 %s36, %s37
    %s40 = sor.u32 %s38, %s39
    %p41 = scmp.eq.s32.totalorder %s40, 0
    %s43 = sadd.s32 %s42, 1
    %s44 = scalar_select %p41, %s42, %s43
    %p47 = pneg %p41
    %p48 = scmp.eq.s32.totalorder %s9, 23
    %p49 = por %p47, %p48
    %p50 = scmp.ne.s32.totalorder %s42, %s45
    %p51 = scmp.eq.s32.totalorder %s9, 0
    %p52 = por %p50, %p51
    %p53 = scmp.ne.s32.totalorder %s42, %s45
    %p54 = scmp.eq.s32.totalorder %s14, 23
    %p55 = por %p53, %p54
    %p56 = scmp.ne.s32.totalorder %s45, %s46
    %p57 = scmp.eq.s32.totalorder %s14, 0
    %p58 = por %p56, %p57
    %p59 = scmp.ne.s32.totalorder %s45, %s46
    %p60 = scmp.eq.s32.totalorder %s15, 23
    %p61 = por %p59, %p60
    %p63 = scmp.ne.s32.totalorder %s46, %s62
    %p64 = scmp.eq.s32.totalorder %s15, 0
    %p65 = por %p63, %p64
    %s66 = ssub.s32 %s18, %s27
    %p67 = scmp.eq.s32.totalorder %s66, 0
    %s69 = sadd.s32 %s68, 1
    %s70 = scalar_select %p67, %s68, %s69
    %p73 = pneg %p67
    %p74 = scmp.eq.s32.totalorder %s9, 23
    %p75 = por %p73, %p74
    %p76 = scmp.ne.s32.totalorder %s68, %s71
    %p77 = scmp.eq.s32.totalorder %s9, 0
    %p78 = por %p76, %p77
    %p79 = scmp.ne.s32.totalorder %s68, %s71
    %p80 = scmp.eq.s32.totalorder %s14, 23
    %p81 = por %p79, %p80
    %p82 = scmp.ne.s32.totalorder %s71, %s72
    %p83 = scmp.eq.s32.totalorder %s14, 0
    %p84 = por %p82, %p83
    %p85 = scmp.ne.s32.totalorder %s71, %s72
    %p86 = scmp.eq.s32.totalorder %s15, 23
    %p87 = por %p85, %p86
    %p89 = scmp.ne.s32.totalorder %s72, %s88
    %p90 = scmp.eq.s32.totalorder %s15, 0
    %p91 = por %p89, %p90
    %s93 = sadd.s32 %s92, 1
    %p96 = scmp.eq.s32.totalorder %s9, 23
    %p97 = scmp.ne.s32.totalorder %s92, %s94
    %p98 = scmp.eq.s32.totalorder %s9, 0
    %p99 = por %p97, %p98
    %p100 = scmp.ne.s32.totalorder %s92, %s94
    %p101 = scmp.eq.s32.totalorder %s14, 23
    %p102 = por %p100, %p101
    %p103 = scmp.ne.s32.totalorder %s94, %s95
    %p104 = scmp.eq.s32.totalorder %s14, 0
    %p105 = por %p103, %p104
    %p106 = scmp.ne.s32.totalorder %s94, %s95
    %p107 = scmp.eq.s32.totalorder %s15, 23
    %p108 = por %p106, %p107
    %p110 = scmp.ne.s32.totalorder %s95, %s109
    %p111 = scmp.eq.s32.totalorder %s15, 0
    %p112 = por %p110, %p111
    %s113 = ssub.s32 %s16, %s35
    %s114 = ssub.s32 %s17, %s31
    %s115 = sor.u32 %s113, %s114
    %p116 = scmp.eq.s32.totalorder %s115, 0
    %s118 = sadd.s32 %s117, 1
    %s119 = scalar_select %p116, %s117, %s118
    %p122 = pneg %p116
    %p123 = scmp.eq.s32.totalorder %s9, 23
    %p124 = por %p122, %p123
    %p125 = scmp.ne.s32.totalorder %s117, %s120
    %p126 = scmp.eq.s32.totalorder %s9, 0
    %p127 = por %p125, %p126
    %p128 = scmp.ne.s32.totalorder %s117, %s120
    %p129 = scmp.eq.s32.totalorder %s14, 23
    %p130 = por %p128, %p129
    %p131 = scmp.ne.s32.totalorder %s120, %s121
    %p132 = scmp.eq.s32.totalorder %s14, 0
    %p133 = por %p131, %p132
    %p134 = scmp.ne.s32.totalorder %s120, %s121
    %p135 = scmp.eq.s32.totalorder %s15, 23
    %p136 = por %p134, %p135
    %p138 = scmp.ne.s32.totalorder %s121, %s137
    %p139 = scmp.eq.s32.totalorder %s15, 0
    %p140 = por %p138, %p139
    %p141 = scmp.le.s32.totalorder 1, %s9
    %p142 = scmp.lt.s32.totalorder %s9, 25
    %p143 = pnand %p141, %p142
    %p144 = pneg %p143
    // Predicated region
    $region9: #{_lambda_.13} parent=5 // pred_check
      _
    $region10: #{_lambda_.13} parent=5 // pred_check_branch
      %146 = sbr.rel (%p143) target = $region12
    $region11: #{_lambda_.13} parent=5 // pred_region
      %s147 = ssub.s32 %s9, 1
      // Predicated region
      $region13: #{_lambda_.13} parent=11 // pred_check
        %p148 = pneg %p105
      $region14: #{_lambda_.13} parent=11 // pred_check_branch
        %150 = sbr.rel (%p148) target = $region16
      $region15: #{_lambda_.13} parent=11 // pred_region
        _
      $region16: #{_lambda_.13} parent=11 // pred_fallthru
        _
    $region12: #{_lambda_.13} parent=5 // pred_fallthru
      _
    %p151 = scmp.lt.s32.totalorder %s9, 24
    // Predicated region
    $region17: #{_lambda_.13} parent=5 // pred_check
      %p152 = pneg %p151
    $region18: #{_lambda_.13} parent=5 // pred_check_branch
      %154 = sbr.rel (%p152) target = $region20
    $region19: #{_lambda_.13} parent=5 // pred_region
      // Predicated region
      $region21: #{_lambda_.13} parent=19 // pred_check
        %p155 = pneg %p52
      $region22: #{_lambda_.13} parent=19 // pred_check_branch
        %157 = sbr.rel (%p155) target = $region24
      $region23: #{_lambda_.13} parent=19 // pred_region
        %s158 = sadd.s32 %s17, %s18
        %p159 = scmp.lt.s32.totalorder %s16, 1
        %s160 = scalar_select %p159, %s16, 1
        %p161 = scmp.lt.s32.totalorder %s158, 5
        %s162 = scalar_select %p161, %s158, 5
        %s163 = smul.addr %s162, 4
        %s164 = smul.addr %s160, 24
        %s165 = sadd.s32 %s163, %s164
        %s166 = smul.addr %s165, 4
        %s167 = scalar_lea.vmem %s0, %s166
        %s168 = sadd.s32 %s17, %s18
      $region24: #{_lambda_.13} parent=19 // pred_fallthru
        _
      // Predicated region
      $region25: #{_lambda_.13} parent=19 // pred_check
        %p169 = pneg %p78
      $region26: #{_lambda_.13} parent=19 // pred_check_branch
        %171 = sbr.rel (%p169) target = $region28
      $region27: #{_lambda_.13} parent=19 // pred_region
        %p172 = scmp.lt.s32.totalorder %s18, 2
        %s173 = scalar_select %p172, %s18, 2
        %s174 = smul.addr %s173, 18
        %s175 = smul.addr %s174, 4
        %s176 = scalar_lea.vmem %s1, %s175
      $region28: #{_lambda_.13} parent=19 // pred_fallthru
        _
    $region20: #{_lambda_.13} parent=5 // pred_fallthru
      _
    %p177 = scmp.le.s32.totalorder 1, %s9
    %p178 = scmp.lt.s32.totalorder %s9, 25
    %p179 = pnand %p177, %p178
    %p180 = pneg %p179
    // Predicated region
    $region29: #{_lambda_.13} parent=5 // pred_check
      _
    $region30: #{_lambda_.13} parent=5 // pred_check_branch
      %182 = sbr.rel (%p179) target = $region32
    $region31: #{_lambda_.13} parent=5 // pred_region
      %s183 = ssub.s32 %s9, 1
      %s184 = sadd.s32 %s20, %s21
      %p185 = scmp.lt.s32.totalorder %s19, 1
      %s186 = scalar_select %p185, %s19, 1
      %p187 = scmp.lt.s32.totalorder %s184, 5
      %s188 = scalar_select %p187, %s184, 5
      %s189 = smul.addr %s188, 4
      %s190 = smul.addr %s186, 24
      %s191 = sadd.s32 %s189, %s190
      %s192 = smul.addr %s191, 4
      %s193 = scalar_lea.vmem %s0, %s192
      %p194 = pneg %p58
      %p195 = pneg %p55
      %p196 = scmp.lt.s32.totalorder %s21, 2
      %s197 = scalar_select %p196, %s21, 2
      %s198 = smul.addr %s197, 18
      %s199 = smul.addr %s198, 4
      %s200 = scalar_lea.vmem %s1, %s199
      %p201 = pneg %p84
      %p202 = pneg %p81
      %p203 = pneg %p105
      %p204 = pneg %p102
      %p205 = pneg %p133
      %p206 = pneg %p130
      %p207 = scmp.lt.s32.totalorder %s19, 1
      %s208 = scalar_select %p207, %s19, 1
      %p209 = scmp.lt.s32.totalorder %s20, 3
      %s210 = scalar_select %p209, %s20, 3
      %s211 = smul.addr %s210, 2
      %s212 = smul.addr %s208, 8
      %s213 = sadd.s32 %s211, %s212
      %s214 = smul.addr %s213, 8
      %s215 = scalar_lea.vmem %s3, %s214
      %s216 = sadd.s32 %s20, %s21
      %p217 = scmp.lt.s32.totalorder %s19, 1
      %s218 = scalar_select %p217, %s19, 1
      %p219 = scmp.lt.s32.totalorder %s216, 5
      %s220 = scalar_select %p219, %s216, 5
      %s221 = smul.addr %s220, 4
      %s222 = smul.addr %s218, 24
      %s223 = sadd.s32 %s221, %s222
      %s224 = smul.addr %s223, 4
      %s225 = scalar_lea.vmem %s0, %s224
      %s226 = sadd.s32 %s20, %s21
      %p227 = scmp.lt.s32.totalorder %s21, 2
      %s228 = scalar_select %p227, %s21, 2
      %s229 = smul.addr %s228, 18
      %s230 = smul.addr %s229, 4
      %s231 = scalar_lea.vmem %s1, %s230
      %p232 = scmp.lt.s32.totalorder %s19, 1
      %s233 = scalar_select %p232, %s19, 1
      %p234 = scmp.lt.s32.totalorder %s20, 3
      %s235 = scalar_select %p234, %s20, 3
      %s236 = smul.addr %s235, 2
      %s237 = smul.addr %s233, 8
      %s238 = sadd.s32 %s236, %s237
      %s239 = smul.addr %s238, 8
      %s240 = scalar_lea.vmem %s3, %s239
      %p242 = scmp.eq.s32.totalorder %s21, 0
      // Predicated region
      $region33: #{_lambda_.13} parent=31 // pred_check
        %p243 = pneg %p242
      $region34: #{_lambda_.13} parent=31 // pred_check_branch
        %245 = sbr.rel (%p243) target = $region36
      $region35: #{_lambda_.13} parent=31 // pred_region
        %246 = vst [vmem:[#allocation2] sm:$0xff] 0.0
        %247 = vst [vmem:[#allocation2 + $0x8] sm:$0xff] 0.0
      $region36: #{_lambda_.13} parent=31 // pred_fallthru
        _
      %v248 = vld [vmem:[#allocation2] sm:$0xff]
      %v249 = vld [vmem:[#allocation2 + $0x8] sm:$0xff]
      %v250 = vld [vmem:[%s225] sm:$0xf]
      %v251 = vld [vmem:[%s225 + $0x8] sm:$0xf]
      %v252 = vld [vmem:[%s231] sm:$0xf]
      %v253 = vld [vmem:[%s231 + $0x4] sm:$0xf]
      %v256 = vunpack.c.l.b16 %v252
      %v257 = vunpack.c.l.b16 %v253
      %v258 = vpack.c.b16 %v257, %v256
      %v261 = vunpack.c.l.b16 %v250
      %v262 = vunpack.c.l.b16 %v251
      %v263 = vpack.c.b16 %v262, %v261
      %vm265 = vcmask 130048
      %v267 = vsel %vm265, %v258, 0
      %269 = vmatprep.subr.bf16.mxu0 0
      %270 = vmatpush1.bf16.msra.mxu0 %v263
      %271 = vmatprep.subr.bf16.mxu0 0
      %272 = vmatpush1.bf16.msra.mxu0 0
      %273 = vmatprep.subr.bf16.mxu0 0
      %274 = vmatpush1.bf16.msra.mxu0 0
      %275 = vmatprep.subr.bf16.mxu0 0
      %276 = vmatpush1.bf16.msra.mxu0 0
      %277 = vmatprep.subr.bf16.mxu0 0
      %278 = vmatpush1.bf16.msra.mxu0 0
      %279 = vmatprep.subr.bf16.mxu0 0
      %280 = vmatpush1.bf16.msra.mxu0 0
      %281 = vmatprep.subr.bf16.mxu0 0
      %282 = vmatpush1.bf16.msra.mxu0 0
      %283 = vmatprep.subr.bf16.mxu0 0
      %284 = vmatpush1.bf16.msra.mxu0 0
      %285 = vmatprep.subr.bf16.mxu0 0
      %286 = vmatpush1.bf16.msra.mxu0 0
      %287 = vmatprep.subr.bf16.mxu0 0
      %288 = vmatpush1.bf16.msra.mxu0 0
      %289 = vmatprep.subr.bf16.mxu0 0
      %290 = vmatpush1.bf16.msra.mxu0 0
      %291 = vmatprep.subr.bf16.mxu0 0
      %292 = vmatpush1.bf16.msra.mxu0 0
      %293 = vmatprep.subr.bf16.mxu0 0
      %294 = vmatpush1.bf16.msra.mxu0 0
      %295 = vmatprep.subr.bf16.mxu0 0
      %296 = vmatpush1.bf16.msra.mxu0 0
      %297 = vmatprep.subr.bf16.mxu0 0
      %298 = vmatpush1.bf16.msra.mxu0 0
      %299 = vmatprep.subr.bf16.mxu0 0
      %300 = vmatpush1.bf16.msra.mxu0 0
      %301 = vmatprep.mubr.bf16.mxu0 0
      %302 = vmatmul.mubr.bf16.gmra.mrb[0].mxu0 %v267
      %v303 = vpop.f32.mrb[0].mxu0
      %v304 = vadd.f32 0.0, %v303
      %v305 = vpop.f32.mrb[0].mxu0
      %v306 = vpop.f32.mrb[0].mxu0
      %v307 = vadd.f32 0.0, %v306
      %v308 = vpop.f32.mrb[0].mxu0
      %309 = vdwg.mxu0
      %v310 = vadd.f32 %v248, %v304
      %v311 = vadd.f32 %v249, %v307
      %v312 = vld [vmem:[%s225] sm:$0xff]
      %v313 = vld [vmem:[%s225 + $0x8] sm:$0xff]
      %s314 = scalar_lea.vmem %s231, 8
      %v315 = vld [vmem:[%s314] sm:$0xf]
      %v316 = vld [vmem:[%s314 + $0x4] sm:$0xf]
      %v319 = vunpack.c.l.b16 %v315
      %v320 = vunpack.c.l.b16 %v316
      %v321 = vpack.c.b16 %v320, %v319
      %v324 = vunpack.c.l.b16 %v312
      %v325 = vunpack.c.h.b16 %v312
      %v326 = vunpack.c.l.b16 %v313
      %v327 = vunpack.c.h.b16 %v313
      %v328 = vpack.c.b16 %v326, %v324
      %v329 = vpack.c.b16 %v327, %v325
      %330 = vrot.lane.b32.xlu0 %v328, 127
      %v331 = vpop.permute.xlu0 %330
      %332 = vrot.lane.b32.xlu0 %v329, 127
      %v333 = vpop.permute.xlu0 %332
      %vm334 = vcmask 1039360
      %v335 = vsel %vm334, %v331, %v333
      %v338 = vsel %vm265, %v321, 0
      %340 = vmatprep.subr.bf16.mxu0 0
      %341 = vmatpush1.bf16.msra.mxu0 %v335
      %342 = vmatprep.subr.bf16.mxu0 0
      %343 = vmatpush1.bf16.msra.mxu0 0
      %344 = vmatprep.subr.bf16.mxu0 0
      %345 = vmatpush1.bf16.msra.mxu0 0
      %346 = vmatprep.subr.bf16.mxu0 0
      %347 = vmatpush1.bf16.msra.mxu0 0
      %348 = vmatprep.subr.bf16.mxu0 0
      %349 = vmatpush1.bf16.msra.mxu0 0
      %350 = vmatprep.subr.bf16.mxu0 0
      %351 = vmatpush1.bf16.msra.mxu0 0
      %352 = vmatprep.subr.bf16.mxu0 0
      %353 = vmatpush1.bf16.msra.mxu0 0
      %354 = vmatprep.subr.bf16.mxu0 0
      %355 = vmatpush1.bf16.msra.mxu0 0
      %356 = vmatprep.subr.bf16.mxu0 0
      %357 = vmatpush1.bf16.msra.mxu0 0
      %358 = vmatprep.subr.bf16.mxu0 0
      %359 = vmatpush1.bf16.msra.mxu0 0
      %360 = vmatprep.subr.bf16.mxu0 0
      %361 = vmatpush1.bf16.msra.mxu0 0
      %362 = vmatprep.subr.bf16.mxu0 0
      %363 = vmatpush1.bf16.msra.mxu0 0
      %364 = vmatprep.subr.bf16.mxu0 0
      %365 = vmatpush1.bf16.msra.mxu0 0
      %366 = vmatprep.subr.bf16.mxu0 0
      %367 = vmatpush1.bf16.msra.mxu0 0
      %368 = vmatprep.subr.bf16.mxu0 0
      %369 = vmatpush1.bf16.msra.mxu0 0
      %370 = vmatprep.subr.bf16.mxu0 0
      %371 = vmatpush1.bf16.msra.mxu0 0
      %372 = vmatprep.mubr.bf16.mxu0 0
      %373 = vmatmul.mubr.bf16.gmra.mrb[0].mxu0 %v338
      %v374 = vpop.f32.mrb[0].mxu0
      %v375 = vadd.f32 0.0, %v374
      %v376 = vpop.f32.mrb[0].mxu0
      %v377 = vpop.f32.mrb[0].mxu0
      %v378 = vadd.f32 0.0, %v377
      %v379 = vpop.f32.mrb[0].mxu0
      %380 = vdwg.mxu0
      %v381 = vadd.f32 %v310, %v375
      %v382 = vadd.f32 %v311, %v378
      %s383 = scalar_lea.vmem %s231, 16
      %v384 = vld [vmem:[%s383] sm:$0xf]
      %v385 = vld [vmem:[%s383 + $0x4] sm:$0xf]
      %v388 = vunpack.c.l.b16 %v384
      %v389 = vunpack.c.l.b16 %v385
      %v390 = vpack.c.b16 %v389, %v388
      %391 = vrot.lane.b32.xlu0 %v328, 126
      %v392 = vpop.permute.xlu0 %391
      %393 = vrot.lane.b32.xlu0 %v329, 126
      %v394 = vpop.permute.xlu0 %393
      %vm395 = vcmask 1031168
      %v396 = vsel %vm395, %v392, %v394
      %v399 = vsel %vm265, %v390, 0
      %401 = vmatprep.subr.bf16.mxu0 0
      %402 = vmatpush1.bf16.msra.mxu0 %v396
      %403 = vmatprep.subr.bf16.mxu0 0
      %404 = vmatpush1.bf16.msra.mxu0 0
      %405 = vmatprep.subr.bf16.mxu0 0
      %406 = vmatpush1.bf16.msra.mxu0 0
      %407 = vmatprep.subr.bf16.mxu0 0
      %408 = vmatpush1.bf16.msra.mxu0 0
      %409 = vmatprep.subr.bf16.mxu0 0
      %410 = vmatpush1.bf16.msra.mxu0 0
      %411 = vmatprep.subr.bf16.mxu0 0
      %412 = vmatpush1.bf16.msra.mxu0 0
      %413 = vmatprep.subr.bf16.mxu0 0
      %414 = vmatpush1.bf16.msra.mxu0 0
      %415 = vmatprep.subr.bf16.mxu0 0
      %416 = vmatpush1.bf16.msra.mxu0 0
      %417 = vmatprep.subr.bf16.mxu0 0
      %418 = vmatpush1.bf16.msra.mxu0 0
      %419 = vmatprep.subr.bf16.mxu0 0
      %420 = vmatpush1.bf16.msra.mxu0 0
      %421 = vmatprep.subr.bf16.mxu0 0
      %422 = vmatpush1.bf16.msra.mxu0 0
      %423 = vmatprep.subr.bf16.mxu0 0
      %424 = vmatpush1.bf16.msra.mxu0 0
      %425 = vmatprep.subr.bf16.mxu0 0
      %426 = vmatpush1.bf16.msra.mxu0 0
      %427 = vmatprep.subr.bf16.mxu0 0
      %428 = vmatpush1.bf16.msra.mxu0 0
      %429 = vmatprep.subr.bf16.mxu0 0
      %430 = vmatpush1.bf16.msra.mxu0 0
      %431 = vmatprep.subr.bf16.mxu0 0
      %432 = vmatpush1.bf16.msra.mxu0 0
      %433 = vmatprep.mubr.bf16.mxu0 0
      %434 = vmatmul.mubr.bf16.gmra.mrb[0].mxu0 %v399
      %v435 = vpop.f32.mrb[0].mxu0
      %v436 = vadd.f32 0.0, %v435
      %v437 = vpop.f32.mrb[0].mxu0
      %v438 = vpop.f32.mrb[0].mxu0
      %v439 = vadd.f32 0.0, %v438
      %v440 = vpop.f32.mrb[0].mxu0
      %441 = vdwg.mxu0
      %v442 = vadd.f32 %v381, %v436
      %v443 = vadd.f32 %v382, %v439
      %s444 = scalar_lea.vmem %s231, 24
      %v445 = vld [vmem:[%s444] sm:$0xf]
      %v446 = vld [vmem:[%s444 + $0x4] sm:$0xf]
      %v449 = vunpack.c.l.b16 %v445
      %v450 = vunpack.c.l.b16 %v446
      %v451 = vpack.c.b16 %v450, %v449
      %452 = vrot.lane.b32.xlu0 %v328, 122
      %v453 = vpop.permute.xlu0 %452
      %454 = vrot.lane.b32.xlu0 %v329, 122
      %v455 = vpop.permute.xlu0 %454
      %vm456 = vcmask 998400
      %v457 = vsel %vm456, %v453, %v455
      %v460 = vsel %vm265, %v451, 0
      %462 = vmatprep.subr.bf16.mxu0 0
      %463 = vmatpush1.bf16.msra.mxu0 %v457
      %464 = vmatprep.subr.bf16.mxu0 0
      %465 = vmatpush1.bf16.msra.mxu0 0
      %466 = vmatprep.subr.bf16.mxu0 0
      %467 = vmatpush1.bf16.msra.mxu0 0
      %468 = vmatprep.subr.bf16.mxu0 0
      %469 = vmatpush1.bf16.msra.mxu0 0
      %470 = vmatprep.subr.bf16.mxu0 0
      %471 = vmatpush1.bf16.msra.mxu0 0
      %472 = vmatprep.subr.bf16.mxu0 0
      %473 = vmatpush1.bf16.msra.mxu0 0
      %474 = vmatprep.subr.bf16.mxu0 0
      %475 = vmatpush1.bf16.msra.mxu0 0
      %476 = vmatprep.subr.bf16.mxu0 0
      %477 = vmatpush1.bf16.msra.mxu0 0
      %478 = vmatprep.subr.bf16.mxu0 0
      %479 = vmatpush1.bf16.msra.mxu0 0
      %480 = vmatprep.subr.bf16.mxu0 0
      %481 = vmatpush1.bf16.msra.mxu0 0
      %482 = vmatprep.subr.bf16.mxu0 0
      %483 = vmatpush1.bf16.msra.mxu0 0
      %484 = vmatprep.subr.bf16.mxu0 0
      %485 = vmatpush1.bf16.msra.mxu0 0
      %486 = vmatprep.subr.bf16.mxu0 0
      %487 = vmatpush1.bf16.msra.mxu0 0
      %488 = vmatprep.subr.bf16.mxu0 0
      %489 = vmatpush1.bf16.msra.mxu0 0
      %490 = vmatprep.subr.bf16.mxu0 0
      %491 = vmatpush1.bf16.msra.mxu0 0
      %492 = vmatprep.subr.bf16.mxu0 0
      %493 = vmatpush1.bf16.msra.mxu0 0
      %494 = vmatprep.mubr.bf16.mxu0 0
      %495 = vmatmul.mubr.bf16.gmra.mrb[0].mxu0 %v460
      %v496 = vpop.f32.mrb[0].mxu0
      %v497 = vadd.f32 0.0, %v496
      %v498 = vpop.f32.mrb[0].mxu0
      %v499 = vpop.f32.mrb[0].mxu0
      %v500 = vadd.f32 0.0, %v499
      %v501 = vpop.f32.mrb[0].mxu0
      %502 = vdwg.mxu0
      %v503 = vadd.f32 %v442, %v497
      %v504 = vadd.f32 %v443, %v500
      %s505 = scalar_lea.vmem %s231, 32
      %v506 = vld [vmem:[%s505] sm:$0xf]
      %v507 = vld [vmem:[%s505 + $0x4] sm:$0xf]
      %v510 = vunpack.c.l.b16 %v506
      %v511 = vunpack.c.l.b16 %v507
      %v512 = vpack.c.b16 %v511, %v510
      %513 = vrot.lane.b32.xlu0 %v328, 121
      %v514 = vpop.permute.xlu0 %513
      %515 = vrot.lane.b32.xlu0 %v329, 121
      %v516 = vpop.permute.xlu0 %515
      %vm517 = vcmask 990208
      %v518 = vsel %vm517, %v514, %v516
      %v521 = vsel %vm265, %v512, 0
      %523 = vmatprep.subr.bf16.mxu0 0
      %524 = vmatpush1.bf16.msra.mxu0 %v518
      %525 = vmatprep.subr.bf16.mxu0 0
      %526 = vmatpush1.bf16.msra.mxu0 0
      %527 = vmatprep.subr.bf16.mxu0 0
      %528 = vmatpush1.bf16.msra.mxu0 0
      %529 = vmatprep.subr.bf16.mxu0 0
      %530 = vmatpush1.bf16.msra.mxu0 0
      %531 = vmatprep.subr.bf16.mxu0 0
      %532 = vmatpush1.bf16.msra.mxu0 0
      %533 = vmatprep.subr.bf16.mxu0 0
      %534 = vmatpush1.bf16.msra.mxu0 0
      %535 = vmatprep.subr.bf16.mxu0 0
      %536 = vmatpush1.bf16.msra.mxu0 0
      %537 = vmatprep.subr.bf16.mxu0 0
      %538 = vmatpush1.bf16.msra.mxu0 0
      %539 = vmatprep.subr.bf16.mxu0 0
      %540 = vmatpush1.bf16.msra.mxu0 0
      %541 = vmatprep.subr.bf16.mxu0 0
      %542 = vmatpush1.bf16.msra.mxu0 0
      %543 = vmatprep.subr.bf16.mxu0 0
      %544 = vmatpush1.bf16.msra.mxu0 0
      %545 = vmatprep.subr.bf16.mxu0 0
      %546 = vmatpush1.bf16.msra.mxu0 0
      %547 = vmatprep.subr.bf16.mxu0 0
      %548 = vmatpush1.bf16.msra.mxu0 0
      %549 = vmatprep.subr.bf16.mxu0 0
      %550 = vmatpush1.bf16.msra.mxu0 0
      %551 = vmatprep.subr.bf16.mxu0 0
      %552 = vmatpush1.bf16.msra.mxu0 0
      %553 = vmatprep.subr.bf16.mxu0 0
      %554 = vmatpush1.bf16.msra.mxu0 0
      %555 = vmatprep.mubr.bf16.mxu0 0
      %556 = vmatmul.mubr.bf16.gmra.mrb[0].mxu0 %v521
      %v557 = vpop.f32.mrb[0].mxu0
      %v558 = vadd.f32 0.0, %v557
      %v559 = vpop.f32.mrb[0].mxu0
      %v560 = vpop.f32.mrb[0].mxu0
      %v561 = vadd.f32 0.0, %v560
      %v562 = vpop.f32.mrb[0].mxu0
      %563 = vdwg.mxu0
      %v564 = vadd.f32 %v503, %v558
      %v565 = vadd.f32 %v504, %v561
      %s566 = scalar_lea.vmem %s231, 40
      %v567 = vld [vmem:[%s566] sm:$0xf]
      %v568 = vld [vmem:[%s566 + $0x4] sm:$0xf]
      %v571 = vunpack.c.l.b16 %v567
      %v572 = vunpack.c.l.b16 %v568
      %v573 = vpack.c.b16 %v572, %v571
      %574 = vrot.lane.b32.xlu0 %v328, 120
      %v575 = vpop.permute.xlu0 %574
      %576 = vrot.lane.b32.xlu0 %v329, 120
      %v577 = vpop.permute.xlu0 %576
      %vm578 = vcmask 982016
      %v579 = vsel %vm578, %v575, %v577
      %v582 = vsel %vm265, %v573, 0
      %584 = vmatprep.subr.bf16.mxu0 0
      %585 = vmatpush1.bf16.msra.mxu0 %v579
      %586 = vmatprep.subr.bf16.mxu0 0
      %587 = vmatpush1.bf16.msra.mxu0 0
      %588 = vmatprep.subr.bf16.mxu0 0
      %589 = vmatpush1.bf16.msra.mxu0 0
      %590 = vmatprep.subr.bf16.mxu0 0
      %591 = vmatpush1.bf16.msra.mxu0 0
      %592 = vmatprep.subr.bf16.mxu0 0
      %593 = vmatpush1.bf16.msra.mxu0 0
      %594 = vmatprep.subr.bf16.mxu0 0
      %595 = vmatpush1.bf16.msra.mxu0 0
      %596 = vmatprep.subr.bf16.mxu0 0
      %597 = vmatpush1.bf16.msra.mxu0 0
      %598 = vmatprep.subr.bf16.mxu0 0
      %599 = vmatpush1.bf16.msra.mxu0 0
      %600 = vmatprep.subr.bf16.mxu0 0
      %601 = vmatpush1.bf16.msra.mxu0 0
      %602 = vmatprep.subr.bf16.mxu0 0
      %603 = vmatpush1.bf16.msra.mxu0 0
      %604 = vmatprep.subr.bf16.mxu0 0
      %605 = vmatpush1.bf16.msra.mxu0 0
      %606 = vmatprep.subr.bf16.mxu0 0
      %607 = vmatpush1.bf16.msra.mxu0 0
      %608 = vmatprep.subr.bf16.mxu0 0
      %609 = vmatpush1.bf16.msra.mxu0 0
      %610 = vmatprep.subr.bf16.mxu0 0
      %611 = vmatpush1.bf16.msra.mxu0 0
      %612 = vmatprep.subr.bf16.mxu0 0
      %613 = vmatpush1.bf16.msra.mxu0 0
      %614 = vmatprep.subr.bf16.mxu0 0
      %615 = vmatpush1.bf16.msra.mxu0 0
      %616 = vmatprep.mubr.bf16.mxu0 0
      %617 = vmatmul.mubr.bf16.gmra.mrb[0].mxu0 %v582
      %v618 = vpop.f32.mrb[0].mxu0
      %v619 = vadd.f32 0.0, %v618
      %v620 = vpop.f32.mrb[0].mxu0
      %v621 = vpop.f32.mrb[0].mxu0
      %v622 = vadd.f32 0.0, %v621
      %v623 = vpop.f32.mrb[0].mxu0
      %624 = vdwg.mxu0
      %v625 = vadd.f32 %v564, %v619
      %v626 = vadd.f32 %v565, %v622
      %s627 = scalar_lea.vmem %s231, 48
      %v628 = vld [vmem:[%s627] sm:$0xf]
      %v629 = vld [vmem:[%s627 + $0x4] sm:$0xf]
      %v632 = vunpack.c.l.b16 %v628
      %v633 = vunpack.c.l.b16 %v629
      %v634 = vpack.c.b16 %v633, %v632
      %635 = vrot.lane.b32.xlu0 %v328, 116
      %v636 = vpop.permute.xlu0 %635
      %637 = vrot.lane.b32.xlu0 %v329, 116
      %v638 = vpop.permute.xlu0 %637
      %vm639 = vcmask 949248
      %v640 = vsel %vm639, %v636, %v638
      %v643 = vsel %vm265, %v634, 0
      %645 = vmatprep.subr.bf16.mxu0 0
      %646 = vmatpush1.bf16.msra.mxu0 %v640
      %647 = vmatprep.subr.bf16.mxu0 0
      %648 = vmatpush1.bf16.msra.mxu0 0
      %649 = vmatprep.subr.bf16.mxu0 0
      %650 = vmatpush1.bf16.msra.mxu0 0
      %651 = vmatprep.subr.bf16.mxu0 0
      %652 = vmatpush1.bf16.msra.mxu0 0
      %653 = vmatprep.subr.bf16.mxu0 0
      %654 = vmatpush1.bf16.msra.mxu0 0
      %655 = vmatprep.subr.bf16.mxu0 0
      %656 = vmatpush1.bf16.msra.mxu0 0
      %657 = vmatprep.subr.bf16.mxu0 0
      %658 = vmatpush1.bf16.msra.mxu0 0
      %659 = vmatprep.subr.bf16.mxu0 0
      %660 = vmatpush1.bf16.msra.mxu0 0
      %661 = vmatprep.subr.bf16.mxu0 0
      %662 = vmatpush1.bf16.msra.mxu0 0
      %663 = vmatprep.subr.bf16.mxu0 0
      %664 = vmatpush1.bf16.msra.mxu0 0
      %665 = vmatprep.subr.bf16.mxu0 0
      %666 = vmatpush1.bf16.msra.mxu0 0
      %667 = vmatprep.subr.bf16.mxu0 0
      %668 = vmatpush1.bf16.msra.mxu0 0
      %669 = vmatprep.subr.bf16.mxu0 0
      %670 = vmatpush1.bf16.msra.mxu0 0
      %671 = vmatprep.subr.bf16.mxu0 0
      %672 = vmatpush1.bf16.msra.mxu0 0
      %673 = vmatprep.subr.bf16.mxu0 0
      %674 = vmatpush1.bf16.msra.mxu0 0
      %675 = vmatprep.subr.bf16.mxu0 0
      %676 = vmatpush1.bf16.msra.mxu0 0
      %677 = vmatprep.mubr.bf16.mxu0 0
      %678 = vmatmul.mubr.bf16.gmra.mrb[0].mxu0 %v643
      %v679 = vpop.f32.mrb[0].mxu0
      %v680 = vadd.f32 0.0, %v679
      %v681 = vpop.f32.mrb[0].mxu0
      %v682 = vpop.f32.mrb[0].mxu0
      %v683 = vadd.f32 0.0, %v682
      %v684 = vpop.f32.mrb[0].mxu0
      %685 = vdwg.mxu0
      %v686 = vadd.f32 %v625, %v680
      %v687 = vadd.f32 %v626, %v683
      %s688 = scalar_lea.vmem %s231, 56
      %v689 = vld [vmem:[%s688] sm:$0xf]
      %v690 = vld [vmem:[%s688 + $0x4] sm:$0xf]
      %v693 = vunpack.c.l.b16 %v689
      %v694 = vunpack.c.l.b16 %v690
      %v695 = vpack.c.b16 %v694, %v693
      %696 = vrot.lane.b32.xlu0 %v328, 115
      %v697 = vpop.permute.xlu0 %696
      %698 = vrot.lane.b32.xlu0 %v329, 115
      %v699 = vpop.permute.xlu0 %698
      %vm700 = vcmask 941056
      %v701 = vsel %vm700, %v697, %v699
      %v704 = vsel %vm265, %v695, 0
      %706 = vmatprep.subr.bf16.mxu0 0
      %707 = vmatpush1.bf16.msra.mxu0 %v701
      %708 = vmatprep.subr.bf16.mxu0 0
      %709 = vmatpush1.bf16.msra.mxu0 0
      %710 = vmatprep.subr.bf16.mxu0 0
      %711 = vmatpush1.bf16.msra.mxu0 0
      %712 = vmatprep.subr.bf16.mxu0 0
      %713 = vmatpush1.bf16.msra.mxu0 0
      %714 = vmatprep.subr.bf16.mxu0 0
      %715 = vmatpush1.bf16.msra.mxu0 0
      %716 = vmatprep.subr.bf16.mxu0 0
      %717 = vmatpush1.bf16.msra.mxu0 0
      %718 = vmatprep.subr.bf16.mxu0 0
      %719 = vmatpush1.bf16.msra.mxu0 0
      %720 = vmatprep.subr.bf16.mxu0 0
      %721 = vmatpush1.bf16.msra.mxu0 0
      %722 = vmatprep.subr.bf16.mxu0 0
      %723 = vmatpush1.bf16.msra.mxu0 0
      %724 = vmatprep.subr.bf16.mxu0 0
      %725 = vmatpush1.bf16.msra.mxu0 0
      %726 = vmatprep.subr.bf16.mxu0 0
      %727 = vmatpush1.bf16.msra.mxu0 0
      %728 = vmatprep.subr.bf16.mxu0 0
      %729 = vmatpush1.bf16.msra.mxu0 0
      %730 = vmatprep.subr.bf16.mxu0 0
      %731 = vmatpush1.bf16.msra.mxu0 0
      %732 = vmatprep.subr.bf16.mxu0 0
      %733 = vmatpush1.bf16.msra.mxu0 0
      %734 = vmatprep.subr.bf16.mxu0 0
      %735 = vmatpush1.bf16.msra.mxu0 0
      %736 = vmatprep.subr.bf16.mxu0 0
      %737 = vmatpush1.bf16.msra.mxu0 0
      %738 = vmatprep.mubr.bf16.mxu0 0
      %739 = vmatmul.mubr.bf16.gmra.mrb[0].mxu0 %v704
      %v740 = vpop.f32.mrb[0].mxu0
      %v741 = vadd.f32 0.0, %v740
      %v742 = vpop.f32.mrb[0].mxu0
      %v743 = vpop.f32.mrb[0].mxu0
      %v744 = vadd.f32 0.0, %v743
      %v745 = vpop.f32.mrb[0].mxu0
      %746 = vdwg.mxu0
      %v747 = vadd.f32 %v686, %v741
      %v748 = vadd.f32 %v687, %v744
      %s749 = scalar_lea.vmem %s231, 64
      %v750 = vld [vmem:[%s749] sm:$0xf]
      %v751 = vld [vmem:[%s749 + $0x4] sm:$0xf]
      %v754 = vunpack.c.l.b16 %v750
      %v755 = vunpack.c.l.b16 %v751
      %v756 = vpack.c.b16 %v755, %v754
      %757 = vrot.lane.b32.xlu0 %v328, 114
      %v758 = vpop.permute.xlu0 %757
      %759 = vrot.lane.b32.xlu0 %v329, 114
      %v760 = vpop.permute.xlu0 %759
      %vm761 = vcmask 932864
      %v762 = vsel %vm761, %v758, %v760
      %v765 = vsel %vm265, %v756, 0
      %767 = vmatprep.subr.bf16.mxu0 0
      %768 = vmatpush1.bf16.msra.mxu0 %v762
      %769 = vmatprep.subr.bf16.mxu0 0
      %770 = vmatpush1.bf16.msra.mxu0 0
      %771 = vmatprep.subr.bf16.mxu0 0
      %772 = vmatpush1.bf16.msra.mxu0 0
      %773 = vmatprep.subr.bf16.mxu0 0
      %774 = vmatpush1.bf16.msra.mxu0 0
      %775 = vmatprep.subr.bf16.mxu0 0
      %776 = vmatpush1.bf16.msra.mxu0 0
      %777 = vmatprep.subr.bf16.mxu0 0
      %778 = vmatpush1.bf16.msra.mxu0 0
      %779 = vmatprep.subr.bf16.mxu0 0
      %780 = vmatpush1.bf16.msra.mxu0 0
      %781 = vmatprep.subr.bf16.mxu0 0
      %782 = vmatpush1.bf16.msra.mxu0 0
      %783 = vmatprep.subr.bf16.mxu0 0
      %784 = vmatpush1.bf16.msra.mxu0 0
      %785 = vmatprep.subr.bf16.mxu0 0
      %786 = vmatpush1.bf16.msra.mxu0 0
      %787 = vmatprep.subr.bf16.mxu0 0
      %788 = vmatpush1.bf16.msra.mxu0 0
      %789 = vmatprep.subr.bf16.mxu0 0
      %790 = vmatpush1.bf16.msra.mxu0 0
      %791 = vmatprep.subr.bf16.mxu0 0
      %792 = vmatpush1.bf16.msra.mxu0 0
      %793 = vmatprep.subr.bf16.mxu0 0
      %794 = vmatpush1.bf16.msra.mxu0 0
      %795 = vmatprep.subr.bf16.mxu0 0
      %796 = vmatpush1.bf16.msra.mxu0 0
      %797 = vmatprep.subr.bf16.mxu0 0
      %798 = vmatpush1.bf16.msra.mxu0 0
      %799 = vmatprep.mubr.bf16.mxu0 0
      %800 = vmatmul.mubr.bf16.gmra.mrb[0].mxu0 %v765
      %v801 = vpop.f32.mrb[0].mxu0
      %v802 = vadd.f32 0.0, %v801
      %v803 = vpop.f32.mrb[0].mxu0
      %v804 = vpop.f32.mrb[0].mxu0
      %v805 = vadd.f32 0.0, %v804
      %v806 = vpop.f32.mrb[0].mxu0
      %807 = vdwg.mxu0
      %v808 = vadd.f32 %v747, %v802
      %v809 = vadd.f32 %v748, %v805
      %810 = vst [vmem:[#allocation2] sm:$0xff] %v808
      %811 = vst [vmem:[#allocation2 + $0x8] sm:$0xff] %v809
      %p812 = scmp.eq.s32.totalorder %s21, 2
      // Predicated region
      $region37: #{_lambda_.13} parent=31 // pred_check
        %p813 = pneg %p812
      $region38: #{_lambda_.13} parent=31 // pred_check_branch
        %815 = sbr.rel (%p813) target = $region40
      $region39: #{_lambda_.13} parent=31 // pred_region
        %v816 = vld [vmem:[#allocation2] sm:$0xff]
        %v817 = vld [vmem:[#allocation2 + $0x8] sm:$0xff]
        %v818 = vld [vmem:[%s2] sm:$0xff]
        %v819 = vld [vmem:[%s2 + $0x8] sm:$0xff]
        %821 = vset.pattern.permute.xlu0 0
        %822 = vperm.xlu0 %821, %v818
        %v823 = vpop.permute.xlu0 %822
        %826 = vset.pattern.permute.xlu0 0
        %827 = vperm.xlu0 %826, %v819
        %v828 = vpop.permute.xlu0 %827
        %v830 = vadd.f32 %v816, %v823
        %v831 = vadd.f32 %v817, %v828
        %v832 = vmax.f32 %v830, 0.0
        %v833 = vmax.f32 %v831, 0.0
        %834 = vst [vmem:[%s240] sm:$0xff] %v832
        %835 = vst [vmem:[%s240 + $0x8] sm:$0xff] %v833
      $region40: #{_lambda_.13} parent=31 // pred_fallthru
        _
      %p836 = scmp.lt.s32.totalorder %s19, 1
      %s837 = scalar_select %p836, %s19, 1
      %p838 = scmp.lt.s32.totalorder %s20, 3
      %s839 = scalar_select %p838, %s20, 3
      %s840 = smul.addr %s839, 2
      %s841 = smul.addr %s837, 8
      %s842 = sadd.s32 %s840, %s841
      %s843 = smul.addr %s842, 8
      %s844 = scalar_lea.vmem %s3, %s843
      // Predicated region
      $region41: #{_lambda_.13} parent=31 // pred_check
        %p845 = pneg %p130
      $region42: #{_lambda_.13} parent=31 // pred_check_branch
        %847 = sbr.rel (%p845) target = $region44
      $region43: #{_lambda_.13} parent=31 // pred_region
        _
      $region44: #{_lambda_.13} parent=31 // pred_fallthru
        _
    $region32: #{_lambda_.13} parent=5 // pred_fallthru
      _
    %p848 = scmp.le.s32.totalorder 2, %s9
    // Predicated region
    $region45: #{_lambda_.13} parent=5 // pred_check
      %p849 = pneg %p848
    $region46: #{_lambda_.13} parent=5 // pred_check_branch
      %851 = sbr.rel (%p849) target = $region48
    $region47: #{_lambda_.13} parent=5 // pred_region
      %s852 = ssub.s32 %s9, 2
      // Predicated region
      $region49: #{_lambda_.13} parent=47 // pred_check
        %p853 = pneg %p136
      $region50: #{_lambda_.13} parent=47 // pred_check_branch
        %855 = sbr.rel (%p853) target = $region52
      $region51: #{_lambda_.13} parent=47 // pred_region
        %p856 = scmp.lt.s32.totalorder %s22, 1
        %s857 = scalar_select %p856, %s22, 1
        %p858 = scmp.lt.s32.totalorder %s23, 3
        %s859 = scalar_select %p858, %s23, 3
        %s860 = smul.addr %s859, 2
        %s861 = smul.addr %s857, 8
        %s862 = sadd.s32 %s860, %s861
        %s863 = smul.addr %s862, 8
        %s864 = scalar_lea.vmem %s3, %s863
      $region52: #{_lambda_.13} parent=47 // pred_fallthru
        _
    $region48: #{_lambda_.13} parent=5 // pred_fallthru
      _
  $region6: #{_lambda_.13} parent=0 // loop_footer
    %s13 = sadd.s32 1, %s9
  $region7: #{_lambda_.13} parent=0 // loop_footer_branch
    %8 = sbr.rel target = $region3
  $region8: #{_lambda_.13} parent=0 // loop_exit
    _

// kernel: _lambda_.14
$region0: #{_lambda_.14}
  #allocation0 [shape = 'u32[]', space=smem, size = 0x4, offset = 0x4, fixed_abs, tag = 'smem constant byte address 0x4 - core index']
  #allocation1 [shape = 'u32[144,128]{1,0:T(1,128)}', space=vmem, size = 0x12000, scoped, tag = 'internal scratch']
  #allocation2 [shape = 'f32[16,128]{1,0:T(8,128)}', space=vmem, size = 0x2000, scoped, tag = 'scratch operand']
  %s0 = inlined_call_operand.vmem [shape: bf16[2,4,16,256], index: 0, kind: input, shape index: {}]
  %s1 = inlined_call_operand.vmem [shape: bf16[3,3,3,16,16], index: 1, kind: input, shape index: {}]
  %s2 = inlined_call_operand.vmem [shape: f32[16,1], index: 2, kind: input, shape index: {}]
  %s3 = inlined_call_operand.vmem [shape: f32[2,2,16,128], index: 3, kind: output, shape index: {}]
  %s4 = sld [smem:[#allocation0]]
  $region53: #{_lambda_.14} parent=0
    _
  %s6 = ssub.s32 1, %s4
  %s7 = scalar_select 0, %s6, %s4
  loop: start=0, step=1, limit=14
  $region2: #{_lambda_.14} parent=0 // loop_pre_header
    _
  $region3: #{_lambda_.14} parent=0 // loop_header
    %s9 = sphi 0, %s13
    %p10 = scmp.ge.s32.totalorder %s9, 14
    %s16 = sphi 0, %s35
    %s17 = sphi 0, %s31
    %s18 = sphi 0, %s27
    %s19 = sphi 0, %s16
    %s20 = sphi 0, %s17
    %s21 = sphi 0, %s18
    %s22 = sphi 0, %s19
    %s23 = sphi 0, %s20
    %s24 = sphi 0, %s21
    %s42 = sphi 0, %s44
    %s45 = sphi 0, %s42
    %s46 = sphi 0, %s45
    %s62 = sphi 0, %s46
    %s68 = sphi 0, %s70
    %s71 = sphi 0, %s68
    %s72 = sphi 0, %s71
    %s88 = sphi 0, %s72
    %s92 = sphi 0, %s92
    %s94 = sphi 0, %s92
    %s95 = sphi 0, %s94
    %s109 = sphi 0, %s95
    %s117 = sphi 0, %s119
    %s120 = sphi 0, %s117
    %s121 = sphi 0, %s120
    %s137 = sphi 0, %s121
  $region4: #{_lambda_.14} parent=0 // loop_header_branch
    %12 = sbr.rel (%p10) target = $region8
  $region5: #{_lambda_.14} parent=0 // loop_body
    %s14 = ssub.s32 %s9, 1
    %s15 = ssub.s32 %s9, 2
    %s25 = sadd.s32 1, %s18
    %p26 = scmp.ge.s32.totalorder %s25, 3
    %s27 = scalar_select %p26, 0, %s25
    %s28 = sadd.s32 1, %s17
    %s29 = scalar_select %p26, %s28, %s17
    %p30 = scmp.ge.s32.totalorder %s29, 2
    %s31 = scalar_select %p30, 0, %s29
    %s32 = sadd.s32 1, %s16
    %s33 = scalar_select %p30, %s32, %s16
    %p34 = scmp.ge.s32.totalorder %s33, 2
    %s35 = scalar_select %p34, 0, %s33
    %s36 = sadd.s32 %s17, %s18
    %s37 = sadd.s32 %s31, %s27
    %s38 = ssub.s32 %s16, %s35
    %s39 = ssub.s32 %s36, %s37
    %s40 = sor.u32 %s38, %s39
    %p41 = scmp.eq.s32.totalorder %s40, 0
    %s43 = sadd.s32 %s42, 1
    %s44 = scalar_select %p41, %s42, %s43
    %p47 = pneg %p41
    %p48 = scmp.eq.s32.totalorder %s9, 11
    %p49 = por %p47, %p48
    %p50 = scmp.ne.s32.totalorder %s42, %s45
    %p51 = scmp.eq.s32.totalorder %s9, 0
    %p52 = por %p50, %p51
    %p53 = scmp.ne.s32.totalorder %s42, %s45
    %p54 = scmp.eq.s32.totalorder %s14, 11
    %p55 = por %p53, %p54
    %p56 = scmp.ne.s32.totalorder %s45, %s46
    %p57 = scmp.eq.s32.totalorder %s14, 0
    %p58 = por %p56, %p57
    %p59 = scmp.ne.s32.totalorder %s45, %s46
    %p60 = scmp.eq.s32.totalorder %s15, 11
    %p61 = por %p59, %p60
    %p63 = scmp.ne.s32.totalorder %s46, %s62
    %p64 = scmp.eq.s32.totalorder %s15, 0
    %p65 = por %p63, %p64
    %s66 = ssub.s32 %s18, %s27
    %p67 = scmp.eq.s32.totalorder %s66, 0
    %s69 = sadd.s32 %s68, 1
    %s70 = scalar_select %p67, %s68, %s69
    %p73 = pneg %p67
    %p74 = scmp.eq.s32.totalorder %s9, 11
    %p75 = por %p73, %p74
    %p76 = scmp.ne.s32.totalorder %s68, %s71
    %p77 = scmp.eq.s32.totalorder %s9, 0
    %p78 = por %p76, %p77
    %p79 = scmp.ne.s32.totalorder %s68, %s71
    %p80 = scmp.eq.s32.totalorder %s14, 11
    %p81 = por %p79, %p80
    %p82 = scmp.ne.s32.totalorder %s71, %s72
    %p83 = scmp.eq.s32.totalorder %s14, 0
    %p84 = por %p82, %p83
    %p85 = scmp.ne.s32.totalorder %s71, %s72
    %p86 = scmp.eq.s32.totalorder %s15, 11
    %p87 = por %p85, %p86
    %p89 = scmp.ne.s32.totalorder %s72, %s88
    %p90 = scmp.eq.s32.totalorder %s15, 0
    %p91 = por %p89, %p90
    %s93 = sadd.s32 %s92, 1
    %p96 = scmp.eq.s32.totalorder %s9, 11
    %p97 = scmp.ne.s32.totalorder %s92, %s94
    %p98 = scmp.eq.s32.totalorder %s9, 0
    %p99 = por %p97, %p98
    %p100 = scmp.ne.s32.totalorder %s92, %s94
    %p101 = scmp.eq.s32.totalorder %s14, 11
    %p102 = por %p100, %p101
    %p103 = scmp.ne.s32.totalorder %s94, %s95
    %p104 = scmp.eq.s32.totalorder %s14, 0
    %p105 = por %p103, %p104
    %p106 = scmp.ne.s32.totalorder %s94, %s95
    %p107 = scmp.eq.s32.totalorder %s15, 11
    %p108 = por %p106, %p107
    %p110 = scmp.ne.s32.totalorder %s95, %s109
    %p111 = scmp.eq.s32.totalorder %s15, 0
    %p112 = por %p110, %p111
    %s113 = ssub.s32 %s16, %s35
    %s114 = ssub.s32 %s17, %s31
    %s115 = sor.u32 %s113, %s114
    %p116 = scmp.eq.s32.totalorder %s115, 0
    %s118 = sadd.s32 %s117, 1
    %s119 = scalar_select %p116, %s117, %s118
    %p122 = pneg %p116
    %p123 = scmp.eq.s32.totalorder %s9, 11
    %p124 = por %p122, %p123
    %p125 = scmp.ne.s32.totalorder %s117, %s120
    %p126 = scmp.eq.s32.totalorder %s9, 0
    %p127 = por %p125, %p126
    %p128 = scmp.ne.s32.totalorder %s117, %s120
    %p129 = scmp.eq.s32.totalorder %s14, 11
    %p130 = por %p128, %p129
    %p131 = scmp.ne.s32.totalorder %s120, %s121
    %p132 = scmp.eq.s32.totalorder %s14, 0
    %p133 = por %p131, %p132
    %p134 = scmp.ne.s32.totalorder %s120, %s121
    %p135 = scmp.eq.s32.totalorder %s15, 11
    %p136 = por %p134, %p135
    %p138 = scmp.ne.s32.totalorder %s121, %s137
    %p139 = scmp.eq.s32.totalorder %s15, 0
    %p140 = por %p138, %p139
    %p141 = scmp.le.s32.totalorder 1, %s9
    %p142 = scmp.lt.s32.totalorder %s9, 13
    %p143 = pnand %p141, %p142
    %p144 = pneg %p143
    // Predicated region
    $region9: #{_lambda_.14} parent=5 // pred_check
      _
    $region10: #{_lambda_.14} parent=5 // pred_check_branch
      %146 = sbr.rel (%p143) target = $region12
    $region11: #{_lambda_.14} parent=5 // pred_region
      %s147 = ssub.s32 %s9, 1
      // Predicated region
      $region13: #{_lambda_.14} parent=11 // pred_check
        %p148 = pneg %p105
      $region14: #{_lambda_.14} parent=11 // pred_check_branch
        %150 = sbr.rel (%p148) target = $region16
      $region15: #{_lambda_.14} parent=11 // pred_region
        _
      $region16: #{_lambda_.14} parent=11 // pred_fallthru
        _
    $region12: #{_lambda_.14} parent=5 // pred_fallthru
      _
    %p151 = scmp.lt.s32.totalorder %s9, 12
    // Predicated region
    $region17: #{_lambda_.14} parent=5 // pred_check
      %p152 = pneg %p151
    $region18: #{_lambda_.14} parent=5 // pred_check_branch
      %154 = sbr.rel (%p152) target = $region20
    $region19: #{_lambda_.14} parent=5 // pred_region
      // Predicated region
      $region21: #{_lambda_.14} parent=19 // pred_check
        %p155 = pneg %p52
      $region22: #{_lambda_.14} parent=19 // pred_check_branch
        %157 = sbr.rel (%p155) target = $region24
      $region23: #{_lambda_.14} parent=19 // pred_region
        %s158 = sadd.s32 %s17, %s18
        %p159 = scmp.lt.s32.totalorder %s16, 1
        %s160 = scalar_select %p159, %s16, 1
        %p161 = scmp.lt.s32.totalorder %s158, 3
        %s162 = scalar_select %p161, %s158, 3
        %s163 = smul.addr %s162, 4
        %s164 = smul.addr %s160, 16
        %s165 = sadd.s32 %s163, %s164
        %s166 = smul.addr %s165, 4
        %s167 = scalar_lea.vmem %s0, %s166
        %s168 = sadd.s32 %s17, %s18
      $region24: #{_lambda_.14} parent=19 // pred_fallthru
        _
      // Predicated region
      $region25: #{_lambda_.14} parent=19 // pred_check
        %p169 = pneg %p78
      $region26: #{_lambda_.14} parent=19 // pred_check_branch
        %171 = sbr.rel (%p169) target = $region28
      $region27: #{_lambda_.14} parent=19 // pred_region
        %p172 = scmp.lt.s32.totalorder %s18, 2
        %s173 = scalar_select %p172, %s18, 2
        %s174 = smul.addr %s173, 18
        %s175 = smul.addr %s174, 4
        %s176 = scalar_lea.vmem %s1, %s175
      $region28: #{_lambda_.14} parent=19 // pred_fallthru
        _
    $region20: #{_lambda_.14} parent=5 // pred_fallthru
      _
    %p177 = scmp.le.s32.totalorder 1, %s9
    %p178 = scmp.lt.s32.totalorder %s9, 13
    %p179 = pnand %p177, %p178
    %p180 = pneg %p179
    // Predicated region
    $region29: #{_lambda_.14} parent=5 // pred_check
      _
    $region30: #{_lambda_.14} parent=5 // pred_check_branch
      %182 = sbr.rel (%p179) target = $region32
    $region31: #{_lambda_.14} parent=5 // pred_region
      %s183 = ssub.s32 %s9, 1
      %s184 = sadd.s32 %s20, %s21
      %p185 = scmp.lt.s32.totalorder %s19, 1
      %s186 = scalar_select %p185, %s19, 1
      %p187 = scmp.lt.s32.totalorder %s184, 3
      %s188 = scalar_select %p187, %s184, 3
      %s189 = smul.addr %s188, 4
      %s190 = smul.addr %s186, 16
      %s191 = sadd.s32 %s189, %s190
      %s192 = smul.addr %s191, 4
      %s193 = scalar_lea.vmem %s0, %s192
      %p194 = pneg %p58
      %p195 = pneg %p55
      %p196 = scmp.lt.s32.totalorder %s21, 2
      %s197 = scalar_select %p196, %s21, 2
      %s198 = smul.addr %s197, 18
      %s199 = smul.addr %s198, 4
      %s200 = scalar_lea.vmem %s1, %s199
      %p201 = pneg %p84
      %p202 = pneg %p81
      %p203 = pneg %p105
      %p204 = pneg %p102
      %p205 = pneg %p133
      %p206 = pneg %p130
      %p207 = scmp.lt.s32.totalorder %s19, 1
      %s208 = scalar_select %p207, %s19, 1
      %p209 = scmp.lt.s32.totalorder %s20, 1
      %s210 = scalar_select %p209, %s20, 1
      %s211 = smul.addr %s210, 2
      %s212 = smul.addr %s208, 4
      %s213 = sadd.s32 %s211, %s212
      %s214 = smul.addr %s213, 8
      %s215 = scalar_lea.vmem %s3, %s214
      %s216 = sadd.s32 %s20, %s21
      %p217 = scmp.lt.s32.totalorder %s19, 1
      %s218 = scalar_select %p217, %s19, 1
      %p219 = scmp.lt.s32.totalorder %s216, 3
      %s220 = scalar_select %p219, %s216, 3
      %s221 = smul.addr %s220, 4
      %s222 = smul.addr %s218, 16
      %s223 = sadd.s32 %s221, %s222
      %s224 = smul.addr %s223, 4
      %s225 = scalar_lea.vmem %s0, %s224
      %s226 = sadd.s32 %s20, %s21
      %p227 = scmp.lt.s32.totalorder %s21, 2
      %s228 = scalar_select %p227, %s21, 2
      %s229 = smul.addr %s228, 18
      %s230 = smul.addr %s229, 4
      %s231 = scalar_lea.vmem %s1, %s230
      %p232 = scmp.lt.s32.totalorder %s19, 1
      %s233 = scalar_select %p232, %s19, 1
      %p234 = scmp.lt.s32.totalorder %s20, 1
      %s235 = scalar_select %p234, %s20, 1
      %s236 = smul.addr %s235, 2
      %s237 = smul.addr %s233, 4
      %s238 = sadd.s32 %s236, %s237
      %s239 = smul.addr %s238, 8
      %s240 = scalar_lea.vmem %s3, %s239
      %p242 = scmp.eq.s32.totalorder %s21, 0
      // Predicated region
      $region33: #{_lambda_.14} parent=31 // pred_check
        %p243 = pneg %p242
      $region34: #{_lambda_.14} parent=31 // pred_check_branch
        %245 = sbr.rel (%p243) target = $region36
      $region35: #{_lambda_.14} parent=31 // pred_region
        %246 = vst [vmem:[#allocation2] sm:$0xff] 0.0
        %247 = vst [vmem:[#allocation2 + $0x8] sm:$0xff] 0.0
      $region36: #{_lambda_.14} parent=31 // pred_fallthru
        _
      %v248 = vld [vmem:[#allocation2] sm:$0xff]
      %v249 = vld [vmem:[#allocation2 + $0x8] sm:$0xff]
      %v250 = vld [vmem:[%s225] sm:$0xf]
      %v251 = vld [vmem:[%s225 + $0x8] sm:$0xf]
      %v252 = vld [vmem:[%s231] sm:$0xf]
      %v253 = vld [vmem:[%s231 + $0x4] sm:$0xf]
      %v256 = vunpack.c.l.b16 %v252
      %v257 = vunpack.c.l.b16 %v253
      %v258 = vpack.c.b16 %v257, %v256
      %v261 = vunpack.c.l.b16 %v250
      %v262 = vunpack.c.l.b16 %v251
      %v263 = vpack.c.b16 %v262, %v261
      %vm265 = vcmask 130048
      %v267 = vsel %vm265, %v258, 0
      %269 = vmatprep.subr.bf16.mxu0 0
      %270 = vmatpush1.bf16.msra.mxu0 %v263
      %271 = vmatprep.subr.bf16.mxu0 0
      %272 = vmatpush1.bf16.msra.mxu0 0
      %273 = vmatprep.subr.bf16.mxu0 0
      %274 = vmatpush1.bf16.msra.mxu0 0
      %275 = vmatprep.subr.bf16.mxu0 0
      %276 = vmatpush1.bf16.msra.mxu0 0
      %277 = vmatprep.subr.bf16.mxu0 0
      %278 = vmatpush1.bf16.msra.mxu0 0
      %279 = vmatprep.subr.bf16.mxu0 0
      %280 = vmatpush1.bf16.msra.mxu0 0
      %281 = vmatprep.subr.bf16.mxu0 0
      %282 = vmatpush1.bf16.msra.mxu0 0
      %283 = vmatprep.subr.bf16.mxu0 0
      %284 = vmatpush1.bf16.msra.mxu0 0
      %285 = vmatprep.subr.bf16.mxu0 0
      %286 = vmatpush1.bf16.msra.mxu0 0
      %287 = vmatprep.subr.bf16.mxu0 0
      %288 = vmatpush1.bf16.msra.mxu0 0
      %289 = vmatprep.subr.bf16.mxu0 0
      %290 = vmatpush1.bf16.msra.mxu0 0
      %291 = vmatprep.subr.bf16.mxu0 0
      %292 = vmatpush1.bf16.msra.mxu0 0
      %293 = vmatprep.subr.bf16.mxu0 0
      %294 = vmatpush1.bf16.msra.mxu0 0
      %295 = vmatprep.subr.bf16.mxu0 0
      %296 = vmatpush1.bf16.msra.mxu0 0
      %297 = vmatprep.subr.bf16.mxu0 0
      %298 = vmatpush1.bf16.msra.mxu0 0
      %299 = vmatprep.subr.bf16.mxu0 0
      %300 = vmatpush1.bf16.msra.mxu0 0
      %301 = vmatprep.mubr.bf16.mxu0 0
      %302 = vmatmul.mubr.bf16.gmra.mrb[0].mxu0 %v267
      %v303 = vpop.f32.mrb[0].mxu0
      %v304 = vadd.f32 0.0, %v303
      %v305 = vpop.f32.mrb[0].mxu0
      %v306 = vpop.f32.mrb[0].mxu0
      %v307 = vadd.f32 0.0, %v306
      %v308 = vpop.f32.mrb[0].mxu0
      %309 = vdwg.mxu0
      %v310 = vadd.f32 %v248, %v304
      %v311 = vadd.f32 %v249, %v307
      %v312 = vld [vmem:[%s225] sm:$0xff]
      %v313 = vld [vmem:[%s225 + $0x8] sm:$0xff]
      %s314 = scalar_lea.vmem %s231, 8
      %v315 = vld [vmem:[%s314] sm:$0xf]
      %v316 = vld [vmem:[%s314 + $0x4] sm:$0xf]
      %v319 = vunpack.c.l.b16 %v315
      %v320 = vunpack.c.l.b16 %v316
      %v321 = vpack.c.b16 %v320, %v319
      %v324 = vunpack.c.l.b16 %v312
      %v325 = vunpack.c.h.b16 %v312
      %v326 = vunpack.c.l.b16 %v313
      %v327 = vunpack.c.h.b16 %v313
      %v328 = vpack.c.b16 %v326, %v324
      %v329 = vpack.c.b16 %v327, %v325
      %330 = vrot.lane.b32.xlu0 %v328, 127
      %v331 = vpop.permute.xlu0 %330
      %332 = vrot.lane.b32.xlu0 %v329, 127
      %v333 = vpop.permute.xlu0 %332
      %vm334 = vcmask 1039360
      %v335 = vsel %vm334, %v331, %v333
      %v338 = vsel %vm265, %v321, 0
      %340 = vmatprep.subr.bf16.mxu0 0
      %341 = vmatpush1.bf16.msra.mxu0 %v335
      %342 = vmatprep.subr.bf16.mxu0 0
      %343 = vmatpush1.bf16.msra.mxu0 0
      %344 = vmatprep.subr.bf16.mxu0 0
      %345 = vmatpush1.bf16.msra.mxu0 0
      %346 = vmatprep.subr.bf16.mxu0 0
      %347 = vmatpush1.bf16.msra.mxu0 0
      %348 = vmatprep.subr.bf16.mxu0 0
      %349 = vmatpush1.bf16.msra.mxu0 0
      %350 = vmatprep.subr.bf16.mxu0 0
      %351 = vmatpush1.bf16.msra.mxu0 0
      %352 = vmatprep.subr.bf16.mxu0 0
      %353 = vmatpush1.bf16.msra.mxu0 0
      %354 = vmatprep.subr.bf16.mxu0 0
      %355 = vmatpush1.bf16.msra.mxu0 0
      %356 = vmatprep.subr.bf16.mxu0 0
      %357 = vmatpush1.bf16.msra.mxu0 0
      %358 = vmatprep.subr.bf16.mxu0 0
      %359 = vmatpush1.bf16.msra.mxu0 0
      %360 = vmatprep.subr.bf16.mxu0 0
      %361 = vmatpush1.bf16.msra.mxu0 0
      %362 = vmatprep.subr.bf16.mxu0 0
      %363 = vmatpush1.bf16.msra.mxu0 0
      %364 = vmatprep.subr.bf16.mxu0 0
      %365 = vmatpush1.bf16.msra.mxu0 0
      %366 = vmatprep.subr.bf16.mxu0 0
      %367 = vmatpush1.bf16.msra.mxu0 0
      %368 = vmatprep.subr.bf16.mxu0 0
      %369 = vmatpush1.bf16.msra.mxu0 0
      %370 = vmatprep.subr.bf16.mxu0 0
      %371 = vmatpush1.bf16.msra.mxu0 0
      %372 = vmatprep.mubr.bf16.mxu0 0
      %373 = vmatmul.mubr.bf16.gmra.mrb[0].mxu0 %v338
      %v374 = vpop.f32.mrb[0].mxu0
      %v375 = vadd.f32 0.0, %v374
      %v376 = vpop.f32.mrb[0].mxu0
      %v377 = vpop.f32.mrb[0].mxu0
      %v378 = vadd.f32 0.0, %v377
      %v379 = vpop.f32.mrb[0].mxu0
      %380 = vdwg.mxu0
      %v381 = vadd.f32 %v310, %v375
      %v382 = vadd.f32 %v311, %v378
      %s383 = scalar_lea.vmem %s231, 16
      %v384 = vld [vmem:[%s383] sm:$0xf]
      %v385 = vld [vmem:[%s383 + $0x4] sm:$0xf]
      %v388 = vunpack.c.l.b16 %v384
      %v389 = vunpack.c.l.b16 %v385
      %v390 = vpack.c.b16 %v389, %v388
      %391 = vrot.lane.b32.xlu0 %v328, 126
      %v392 = vpop.permute.xlu0 %391
      %393 = vrot.lane.b32.xlu0 %v329, 126
      %v394 = vpop.permute.xlu0 %393
      %vm395 = vcmask 1031168
      %v396 = vsel %vm395, %v392, %v394
      %v399 = vsel %vm265, %v390, 0
      %401 = vmatprep.subr.bf16.mxu0 0
      %402 = vmatpush1.bf16.msra.mxu0 %v396
      %403 = vmatprep.subr.bf16.mxu0 0
      %404 = vmatpush1.bf16.msra.mxu0 0
      %405 = vmatprep.subr.bf16.mxu0 0
      %406 = vmatpush1.bf16.msra.mxu0 0
      %407 = vmatprep.subr.bf16.mxu0 0
      %408 = vmatpush1.bf16.msra.mxu0 0
      %409 = vmatprep.subr.bf16.mxu0 0
      %410 = vmatpush1.bf16.msra.mxu0 0
      %411 = vmatprep.subr.bf16.mxu0 0
      %412 = vmatpush1.bf16.msra.mxu0 0
      %413 = vmatprep.subr.bf16.mxu0 0
      %414 = vmatpush1.bf16.msra.mxu0 0
      %415 = vmatprep.subr.bf16.mxu0 0
      %416 = vmatpush1.bf16.msra.mxu0 0
      %417 = vmatprep.subr.bf16.mxu0 0
      %418 = vmatpush1.bf16.msra.mxu0 0
      %419 = vmatprep.subr.bf16.mxu0 0
      %420 = vmatpush1.bf16.msra.mxu0 0
      %421 = vmatprep.subr.bf16.mxu0 0
      %422 = vmatpush1.bf16.msra.mxu0 0
      %423 = vmatprep.subr.bf16.mxu0 0
      %424 = vmatpush1.bf16.msra.mxu0 0
      %425 = vmatprep.subr.bf16.mxu0 0
      %426 = vmatpush1.bf16.msra.mxu0 0
      %427 = vmatprep.subr.bf16.mxu0 0
      %428 = vmatpush1.bf16.msra.mxu0 0
      %429 = vmatprep.subr.bf16.mxu0 0
      %430 = vmatpush1.bf16.msra.mxu0 0
      %431 = vmatprep.subr.bf16.mxu0 0
      %432 = vmatpush1.bf16.msra.mxu0 0
      %433 = vmatprep.mubr.bf16.mxu0 0
      %434 = vmatmul.mubr.bf16.gmra.mrb[0].mxu0 %v399
      %v435 = vpop.f32.mrb[0].mxu0
      %v436 = vadd.f32 0.0, %v435
      %v437 = vpop.f32.mrb[0].mxu0
      %v438 = vpop.f32.mrb[0].mxu0
      %v439 = vadd.f32 0.0, %v438
      %v440 = vpop.f32.mrb[0].mxu0
      %441 = vdwg.mxu0
      %v442 = vadd.f32 %v381, %v436
      %v443 = vadd.f32 %v382, %v439
      %s444 = scalar_lea.vmem %s231, 24
      %v445 = vld [vmem:[%s444] sm:$0xf]
      %v446 = vld [vmem:[%s444 + $0x4] sm:$0xf]
      %v449 = vunpack.c.l.b16 %v445
      %v450 = vunpack.c.l.b16 %v446
      %v451 = vpack.c.b16 %v450, %v449
      %452 = vrot.lane.b32.xlu0 %v328, 124
      %v453 = vpop.permute.xlu0 %452
      %454 = vrot.lane.b32.xlu0 %v329, 124
      %v455 = vpop.permute.xlu0 %454
      %vm456 = vcmask 1014784
      %v457 = vsel %vm456, %v453, %v455
      %v460 = vsel %vm265, %v451, 0
      %462 = vmatprep.subr.bf16.mxu0 0
      %463 = vmatpush1.bf16.msra.mxu0 %v457
      %464 = vmatprep.subr.bf16.mxu0 0
      %465 = vmatpush1.bf16.msra.mxu0 0
      %466 = vmatprep.subr.bf16.mxu0 0
      %467 = vmatpush1.bf16.msra.mxu0 0
      %468 = vmatprep.subr.bf16.mxu0 0
      %469 = vmatpush1.bf16.msra.mxu0 0
      %470 = vmatprep.subr.bf16.mxu0 0
      %471 = vmatpush1.bf16.msra.mxu0 0
      %472 = vmatprep.subr.bf16.mxu0 0
      %473 = vmatpush1.bf16.msra.mxu0 0
      %474 = vmatprep.subr.bf16.mxu0 0
      %475 = vmatpush1.bf16.msra.mxu0 0
      %476 = vmatprep.subr.bf16.mxu0 0
      %477 = vmatpush1.bf16.msra.mxu0 0
      %478 = vmatprep.subr.bf16.mxu0 0
      %479 = vmatpush1.bf16.msra.mxu0 0
      %480 = vmatprep.subr.bf16.mxu0 0
      %481 = vmatpush1.bf16.msra.mxu0 0
      %482 = vmatprep.subr.bf16.mxu0 0
      %483 = vmatpush1.bf16.msra.mxu0 0
      %484 = vmatprep.subr.bf16.mxu0 0
      %485 = vmatpush1.bf16.msra.mxu0 0
      %486 = vmatprep.subr.bf16.mxu0 0
      %487 = vmatpush1.bf16.msra.mxu0 0
      %488 = vmatprep.subr.bf16.mxu0 0
      %489 = vmatpush1.bf16.msra.mxu0 0
      %490 = vmatprep.subr.bf16.mxu0 0
      %491 = vmatpush1.bf16.msra.mxu0 0
      %492 = vmatprep.subr.bf16.mxu0 0
      %493 = vmatpush1.bf16.msra.mxu0 0
      %494 = vmatprep.mubr.bf16.mxu0 0
      %495 = vmatmul.mubr.bf16.gmra.mrb[0].mxu0 %v460
      %v496 = vpop.f32.mrb[0].mxu0
      %v497 = vadd.f32 0.0, %v496
      %v498 = vpop.f32.mrb[0].mxu0
      %v499 = vpop.f32.mrb[0].mxu0
      %v500 = vadd.f32 0.0, %v499
      %v501 = vpop.f32.mrb[0].mxu0
      %502 = vdwg.mxu0
      %v503 = vadd.f32 %v442, %v497
      %v504 = vadd.f32 %v443, %v500
      %s505 = scalar_lea.vmem %s231, 32
      %v506 = vld [vmem:[%s505] sm:$0xf]
      %v507 = vld [vmem:[%s505 + $0x4] sm:$0xf]
      %v510 = vunpack.c.l.b16 %v506
      %v511 = vunpack.c.l.b16 %v507
      %v512 = vpack.c.b16 %v511, %v510
      %513 = vrot.lane.b32.xlu0 %v328, 123
      %v514 = vpop.permute.xlu0 %513
      %515 = vrot.lane.b32.xlu0 %v329, 123
      %v516 = vpop.permute.xlu0 %515
      %vm517 = vcmask 1006592
      %v518 = vsel %vm517, %v514, %v516
      %v521 = vsel %vm265, %v512, 0
      %523 = vmatprep.subr.bf16.mxu0 0
      %524 = vmatpush1.bf16.msra.mxu0 %v518
      %525 = vmatprep.subr.bf16.mxu0 0
      %526 = vmatpush1.bf16.msra.mxu0 0
      %527 = vmatprep.subr.bf16.mxu0 0
      %528 = vmatpush1.bf16.msra.mxu0 0
      %529 = vmatprep.subr.bf16.mxu0 0
      %530 = vmatpush1.bf16.msra.mxu0 0
      %531 = vmatprep.subr.bf16.mxu0 0
      %532 = vmatpush1.bf16.msra.mxu0 0
      %533 = vmatprep.subr.bf16.mxu0 0
      %534 = vmatpush1.bf16.msra.mxu0 0
      %535 = vmatprep.subr.bf16.mxu0 0
      %536 = vmatpush1.bf16.msra.mxu0 0
      %537 = vmatprep.subr.bf16.mxu0 0
      %538 = vmatpush1.bf16.msra.mxu0 0
      %539 = vmatprep.subr.bf16.mxu0 0
      %540 = vmatpush1.bf16.msra.mxu0 0
      %541 = vmatprep.subr.bf16.mxu0 0
      %542 = vmatpush1.bf16.msra.mxu0 0
      %543 = vmatprep.subr.bf16.mxu0 0
      %544 = vmatpush1.bf16.msra.mxu0 0
      %545 = vmatprep.subr.bf16.mxu0 0
      %546 = vmatpush1.bf16.msra.mxu0 0
      %547 = vmatprep.subr.bf16.mxu0 0
      %548 = vmatpush1.bf16.msra.mxu0 0
      %549 = vmatprep.subr.bf16.mxu0 0
      %550 = vmatpush1.bf16.msra.mxu0 0
      %551 = vmatprep.subr.bf16.mxu0 0
      %552 = vmatpush1.bf16.msra.mxu0 0
      %553 = vmatprep.subr.bf16.mxu0 0
      %554 = vmatpush1.bf16.msra.mxu0 0
      %555 = vmatprep.mubr.bf16.mxu0 0
      %556 = vmatmul.mubr.bf16.gmra.mrb[0].mxu0 %v521
      %v557 = vpop.f32.mrb[0].mxu0
      %v558 = vadd.f32 0.0, %v557
      %v559 = vpop.f32.mrb[0].mxu0
      %v560 = vpop.f32.mrb[0].mxu0
      %v561 = vadd.f32 0.0, %v560
      %v562 = vpop.f32.mrb[0].mxu0
      %563 = vdwg.mxu0
      %v564 = vadd.f32 %v503, %v558
      %v565 = vadd.f32 %v504, %v561
      %s566 = scalar_lea.vmem %s231, 40
      %v567 = vld [vmem:[%s566] sm:$0xf]
      %v568 = vld [vmem:[%s566 + $0x4] sm:$0xf]
      %v571 = vunpack.c.l.b16 %v567
      %v572 = vunpack.c.l.b16 %v568
      %v573 = vpack.c.b16 %v572, %v571
      %574 = vrot.lane.b32.xlu0 %v328, 122
      %v575 = vpop.permute.xlu0 %574
      %576 = vrot.lane.b32.xlu0 %v329, 122
      %v577 = vpop.permute.xlu0 %576
      %vm578 = vcmask 998400
      %v579 = vsel %vm578, %v575, %v577
      %v582 = vsel %vm265, %v573, 0
      %584 = vmatprep.subr.bf16.mxu0 0
      %585 = vmatpush1.bf16.msra.mxu0 %v579
      %586 = vmatprep.subr.bf16.mxu0 0
      %587 = vmatpush1.bf16.msra.mxu0 0
      %588 = vmatprep.subr.bf16.mxu0 0
      %589 = vmatpush1.bf16.msra.mxu0 0
      %590 = vmatprep.subr.bf16.mxu0 0
      %591 = vmatpush1.bf16.msra.mxu0 0
      %592 = vmatprep.subr.bf16.mxu0 0
      %593 = vmatpush1.bf16.msra.mxu0 0
      %594 = vmatprep.subr.bf16.mxu0 0
      %595 = vmatpush1.bf16.msra.mxu0 0
      %596 = vmatprep.subr.bf16.mxu0 0
      %597 = vmatpush1.bf16.msra.mxu0 0
      %598 = vmatprep.subr.bf16.mxu0 0
      %599 = vmatpush1.bf16.msra.mxu0 0
      %600 = vmatprep.subr.bf16.mxu0 0
      %601 = vmatpush1.bf16.msra.mxu0 0
      %602 = vmatprep.subr.bf16.mxu0 0
      %603 = vmatpush1.bf16.msra.mxu0 0
      %604 = vmatprep.subr.bf16.mxu0 0
      %605 = vmatpush1.bf16.msra.mxu0 0
      %606 = vmatprep.subr.bf16.mxu0 0
      %607 = vmatpush1.bf16.msra.mxu0 0
      %608 = vmatprep.subr.bf16.mxu0 0
      %609 = vmatpush1.bf16.msra.mxu0 0
      %610 = vmatprep.subr.bf16.mxu0 0
      %611 = vmatpush1.bf16.msra.mxu0 0
      %612 = vmatprep.subr.bf16.mxu0 0
      %613 = vmatpush1.bf16.msra.mxu0 0
      %614 = vmatprep.subr.bf16.mxu0 0
      %615 = vmatpush1.bf16.msra.mxu0 0
      %616 = vmatprep.mubr.bf16.mxu0 0
      %617 = vmatmul.mubr.bf16.gmra.mrb[0].mxu0 %v582
      %v618 = vpop.f32.mrb[0].mxu0
      %v619 = vadd.f32 0.0, %v618
      %v620 = vpop.f32.mrb[0].mxu0
      %v621 = vpop.f32.mrb[0].mxu0
      %v622 = vadd.f32 0.0, %v621
      %v623 = vpop.f32.mrb[0].mxu0
      %624 = vdwg.mxu0
      %v625 = vadd.f32 %v564, %v619
      %v626 = vadd.f32 %v565, %v622
      %s627 = scalar_lea.vmem %s231, 48
      %v628 = vld [vmem:[%s627] sm:$0xf]
      %v629 = vld [vmem:[%s627 + $0x4] sm:$0xf]
      %v632 = vunpack.c.l.b16 %v628
      %v633 = vunpack.c.l.b16 %v629
      %v634 = vpack.c.b16 %v633, %v632
      %635 = vrot.lane.b32.xlu0 %v328, 120
      %v636 = vpop.permute.xlu0 %635
      %637 = vrot.lane.b32.xlu0 %v329, 120
      %v638 = vpop.permute.xlu0 %637
      %vm639 = vcmask 982016
      %v640 = vsel %vm639, %v636, %v638
      %v643 = vsel %vm265, %v634, 0
      %645 = vmatprep.subr.bf16.mxu0 0
      %646 = vmatpush1.bf16.msra.mxu0 %v640
      %647 = vmatprep.subr.bf16.mxu0 0
      %648 = vmatpush1.bf16.msra.mxu0 0
      %649 = vmatprep.subr.bf16.mxu0 0
      %650 = vmatpush1.bf16.msra.mxu0 0
      %651 = vmatprep.subr.bf16.mxu0 0
      %652 = vmatpush1.bf16.msra.mxu0 0
      %653 = vmatprep.subr.bf16.mxu0 0
      %654 = vmatpush1.bf16.msra.mxu0 0
      %655 = vmatprep.subr.bf16.mxu0 0
      %656 = vmatpush1.bf16.msra.mxu0 0
      %657 = vmatprep.subr.bf16.mxu0 0
      %658 = vmatpush1.bf16.msra.mxu0 0
      %659 = vmatprep.subr.bf16.mxu0 0
      %660 = vmatpush1.bf16.msra.mxu0 0
      %661 = vmatprep.subr.bf16.mxu0 0
      %662 = vmatpush1.bf16.msra.mxu0 0
      %663 = vmatprep.subr.bf16.mxu0 0
      %664 = vmatpush1.bf16.msra.mxu0 0
      %665 = vmatprep.subr.bf16.mxu0 0
      %666 = vmatpush1.bf16.msra.mxu0 0
      %667 = vmatprep.subr.bf16.mxu0 0
      %668 = vmatpush1.bf16.msra.mxu0 0
      %669 = vmatprep.subr.bf16.mxu0 0
      %670 = vmatpush1.bf16.msra.mxu0 0
      %671 = vmatprep.subr.bf16.mxu0 0
      %672 = vmatpush1.bf16.msra.mxu0 0
      %673 = vmatprep.subr.bf16.mxu0 0
      %674 = vmatpush1.bf16.msra.mxu0 0
      %675 = vmatprep.subr.bf16.mxu0 0
      %676 = vmatpush1.bf16.msra.mxu0 0
      %677 = vmatprep.mubr.bf16.mxu0 0
      %678 = vmatmul.mubr.bf16.gmra.mrb[0].mxu0 %v643
      %v679 = vpop.f32.mrb[0].mxu0
      %v680 = vadd.f32 0.0, %v679
      %v681 = vpop.f32.mrb[0].mxu0
      %v682 = vpop.f32.mrb[0].mxu0
      %v683 = vadd.f32 0.0, %v682
      %v684 = vpop.f32.mrb[0].mxu0
      %685 = vdwg.mxu0
      %v686 = vadd.f32 %v625, %v680
      %v687 = vadd.f32 %v626, %v683
      %s688 = scalar_lea.vmem %s231, 56
      %v689 = vld [vmem:[%s688] sm:$0xf]
      %v690 = vld [vmem:[%s688 + $0x4] sm:$0xf]
      %v693 = vunpack.c.l.b16 %v689
      %v694 = vunpack.c.l.b16 %v690
      %v695 = vpack.c.b16 %v694, %v693
      %696 = vrot.lane.b32.xlu0 %v328, 119
      %v697 = vpop.permute.xlu0 %696
      %698 = vrot.lane.b32.xlu0 %v329, 119
      %v699 = vpop.permute.xlu0 %698
      %vm700 = vcmask 973824
      %v701 = vsel %vm700, %v697, %v699
      %v704 = vsel %vm265, %v695, 0
      %706 = vmatprep.subr.bf16.mxu0 0
      %707 = vmatpush1.bf16.msra.mxu0 %v701
      %708 = vmatprep.subr.bf16.mxu0 0
      %709 = vmatpush1.bf16.msra.mxu0 0
      %710 = vmatprep.subr.bf16.mxu0 0
      %711 = vmatpush1.bf16.msra.mxu0 0
      %712 = vmatprep.subr.bf16.mxu0 0
      %713 = vmatpush1.bf16.msra.mxu0 0
      %714 = vmatprep.subr.bf16.mxu0 0
      %715 = vmatpush1.bf16.msra.mxu0 0
      %716 = vmatprep.subr.bf16.mxu0 0
      %717 = vmatpush1.bf16.msra.mxu0 0
      %718 = vmatprep.subr.bf16.mxu0 0
      %719 = vmatpush1.bf16.msra.mxu0 0
      %720 = vmatprep.subr.bf16.mxu0 0
      %721 = vmatpush1.bf16.msra.mxu0 0
      %722 = vmatprep.subr.bf16.mxu0 0
      %723 = vmatpush1.bf16.msra.mxu0 0
      %724 = vmatprep.subr.bf16.mxu0 0
      %725 = vmatpush1.bf16.msra.mxu0 0
      %726 = vmatprep.subr.bf16.mxu0 0
      %727 = vmatpush1.bf16.msra.mxu0 0
      %728 = vmatprep.subr.bf16.mxu0 0
      %729 = vmatpush1.bf16.msra.mxu0 0
      %730 = vmatprep.subr.bf16.mxu0 0
      %731 = vmatpush1.bf16.msra.mxu0 0
      %732 = vmatprep.subr.bf16.mxu0 0
      %733 = vmatpush1.bf16.msra.mxu0 0
      %734 = vmatprep.subr.bf16.mxu0 0
      %735 = vmatpush1.bf16.msra.mxu0 0
      %736 = vmatprep.subr.bf16.mxu0 0
      %737 = vmatpush1.bf16.msra.mxu0 0
      %738 = vmatprep.mubr.bf16.mxu0 0
      %739 = vmatmul.mubr.bf16.gmra.mrb[0].mxu0 %v704
      %v740 = vpop.f32.mrb[0].mxu0
      %v741 = vadd.f32 0.0, %v740
      %v742 = vpop.f32.mrb[0].mxu0
      %v743 = vpop.f32.mrb[0].mxu0
      %v744 = vadd.f32 0.0, %v743
      %v745 = vpop.f32.mrb[0].mxu0
      %746 = vdwg.mxu0
      %v747 = vadd.f32 %v686, %v741
      %v748 = vadd.f32 %v687, %v744
      %s749 = scalar_lea.vmem %s231, 64
      %v750 = vld [vmem:[%s749] sm:$0xf]
      %v751 = vld [vmem:[%s749 + $0x4] sm:$0xf]
      %v754 = vunpack.c.l.b16 %v750
      %v755 = vunpack.c.l.b16 %v751
      %v756 = vpack.c.b16 %v755, %v754
      %757 = vrot.lane.b32.xlu0 %v328, 118
      %v758 = vpop.permute.xlu0 %757
      %759 = vrot.lane.b32.xlu0 %v329, 118
      %v760 = vpop.permute.xlu0 %759
      %vm761 = vcmask 965632
      %v762 = vsel %vm761, %v758, %v760
      %v765 = vsel %vm265, %v756, 0
      %767 = vmatprep.subr.bf16.mxu0 0
      %768 = vmatpush1.bf16.msra.mxu0 %v762
      %769 = vmatprep.subr.bf16.mxu0 0
      %770 = vmatpush1.bf16.msra.mxu0 0
      %771 = vmatprep.subr.bf16.mxu0 0
      %772 = vmatpush1.bf16.msra.mxu0 0
      %773 = vmatprep.subr.bf16.mxu0 0
      %774 = vmatpush1.bf16.msra.mxu0 0
      %775 = vmatprep.subr.bf16.mxu0 0
      %776 = vmatpush1.bf16.msra.mxu0 0
      %777 = vmatprep.subr.bf16.mxu0 0
      %778 = vmatpush1.bf16.msra.mxu0 0
      %779 = vmatprep.subr.bf16.mxu0 0
      %780 = vmatpush1.bf16.msra.mxu0 0
      %781 = vmatprep.subr.bf16.mxu0 0
      %782 = vmatpush1.bf16.msra.mxu0 0
      %783 = vmatprep.subr.bf16.mxu0 0
      %784 = vmatpush1.bf16.msra.mxu0 0
      %785 = vmatprep.subr.bf16.mxu0 0
      %786 = vmatpush1.bf16.msra.mxu0 0
      %787 = vmatprep.subr.bf16.mxu0 0
      %788 = vmatpush1.bf16.msra.mxu0 0
      %789 = vmatprep.subr.bf16.mxu0 0
      %790 = vmatpush1.bf16.msra.mxu0 0
      %791 = vmatprep.subr.bf16.mxu0 0
      %792 = vmatpush1.bf16.msra.mxu0 0
      %793 = vmatprep.subr.bf16.mxu0 0
      %794 = vmatpush1.bf16.msra.mxu0 0
      %795 = vmatprep.subr.bf16.mxu0 0
      %796 = vmatpush1.bf16.msra.mxu0 0
      %797 = vmatprep.subr.bf16.mxu0 0
      %798 = vmatpush1.bf16.msra.mxu0 0
      %799 = vmatprep.mubr.bf16.mxu0 0
      %800 = vmatmul.mubr.bf16.gmra.mrb[0].mxu0 %v765
      %v801 = vpop.f32.mrb[0].mxu0
      %v802 = vadd.f32 0.0, %v801
      %v803 = vpop.f32.mrb[0].mxu0
      %v804 = vpop.f32.mrb[0].mxu0
      %v805 = vadd.f32 0.0, %v804
      %v806 = vpop.f32.mrb[0].mxu0
      %807 = vdwg.mxu0
      %v808 = vadd.f32 %v747, %v802
      %v809 = vadd.f32 %v748, %v805
      %810 = vst [vmem:[#allocation2] sm:$0xff] %v808
      %811 = vst [vmem:[#allocation2 + $0x8] sm:$0xff] %v809
      %p812 = scmp.eq.s32.totalorder %s21, 2
      // Predicated region
      $region37: #{_lambda_.14} parent=31 // pred_check
        %p813 = pneg %p812
      $region38: #{_lambda_.14} parent=31 // pred_check_branch
        %815 = sbr.rel (%p813) target = $region40
      $region39: #{_lambda_.14} parent=31 // pred_region
        %v816 = vld [vmem:[#allocation2] sm:$0xff]
        %v817 = vld [vmem:[#allocation2 + $0x8] sm:$0xff]
        %v818 = vld [vmem:[%s2] sm:$0xff]
        %v819 = vld [vmem:[%s2 + $0x8] sm:$0xff]
        %821 = vset.pattern.permute.xlu0 0
        %822 = vperm.xlu0 %821, %v818
        %v823 = vpop.permute.xlu0 %822
        %826 = vset.pattern.permute.xlu0 0
        %827 = vperm.xlu0 %826, %v819
        %v828 = vpop.permute.xlu0 %827
        %v830 = vadd.f32 %v816, %v823
        %v831 = vadd.f32 %v817, %v828
        %v832 = vmax.f32 %v830, 0.0
        %v833 = vmax.f32 %v831, 0.0
        %834 = vst [vmem:[%s240] sm:$0xff] %v832
        %835 = vst [vmem:[%s240 + $0x8] sm:$0xff] %v833
      $region40: #{_lambda_.14} parent=31 // pred_fallthru
        _
      %p836 = scmp.lt.s32.totalorder %s19, 1
      %s837 = scalar_select %p836, %s19, 1
      %p838 = scmp.lt.s32.totalorder %s20, 1
      %s839 = scalar_select %p838, %s20, 1
      %s840 = smul.addr %s839, 2
      %s841 = smul.addr %s837, 4
      %s842 = sadd.s32 %s840, %s841
      %s843 = smul.addr %s842, 8
      %s844 = scalar_lea.vmem %s3, %s843
      // Predicated region
      $region41: #{_lambda_.14} parent=31 // pred_check
        %p845 = pneg %p130
      $region42: #{_lambda_.14} parent=31 // pred_check_branch
        %847 = sbr.rel (%p845) target = $region44
      $region43: #{_lambda_.14} parent=31 // pred_region
        _
      $region44: #{_lambda_.14} parent=31 // pred_fallthru
        _
    $region32: #{_lambda_.14} parent=5 // pred_fallthru
      _
    %p848 = scmp.le.s32.totalorder 2, %s9
    // Predicated region
    $region45: #{_lambda_.14} parent=5 // pred_check
      %p849 = pneg %p848
    $region46: #{_lambda_.14} parent=5 // pred_check_branch
      %851 = sbr.rel (%p849) target = $region48
    $region47: #{_lambda_.14} parent=5 // pred_region
      %s852 = ssub.s32 %s9, 2
      // Predicated region
      $region49: #{_lambda_.14} parent=47 // pred_check
        %p853 = pneg %p136
      $region50: #{_lambda_.14} parent=47 // pred_check_branch
        %855 = sbr.rel (%p853) target = $region52
      $region51: #{_lambda_.14} parent=47 // pred_region
        %p856 = scmp.lt.s32.totalorder %s22, 1
        %s857 = scalar_select %p856, %s22, 1
        %p858 = scmp.lt.s32.totalorder %s23, 1
        %s859 = scalar_select %p858, %s23, 1
        %s860 = smul.addr %s859, 2
        %s861 = smul.addr %s857, 4
        %s862 = sadd.s32 %s860, %s861
        %s863 = smul.addr %s862, 8
        %s864 = scalar_lea.vmem %s3, %s863
      $region52: #{_lambda_.14} parent=47 // pred_fallthru
        _
    $region48: #{_lambda_.14} parent=5 // pred_fallthru
      _
  $region6: #{_lambda_.14} parent=0 // loop_footer
    %s13 = sadd.s32 1, %s9
  $region7: #{_lambda_.14} parent=0 // loop_footer_branch
    %8 = sbr.rel target = $region3
  $region8: #{_lambda_.14} parent=0 // loop_exit
    _

</llo_original>
